<compile_context>
chip_gen: v5e
topology: v5e:2x2
jax: 0.10.0
libtpu: 0.0.40
codegen_flags: <defaults>
</compile_context>

<pallas_src>
import jax
import jax.numpy as jnp
from jax.experimental import pallas as pl
from jax.experimental.pallas import tpu as pltpu


def _round_up(x, m):
    return (x + m - 1) // m * m


def init_params(key):
    """Deterministic synthetic parameters; weights stored as (C_in, C_out)."""
    def lin(k, cin, cout):
        kw, kb = jax.random.split(k)
        bound = 1.0 / jnp.sqrt(cin)
        w = jax.random.uniform(kw, (cin, cout), jnp.float32, -bound, bound)
        b = jax.random.uniform(kb, (1, cout), jnp.float32, -bound, bound)
        return w, b

    ks = jax.random.split(key, 6)
    w1, b1 = lin(ks[0], 3, 64)        # conv1
    we1, be1 = lin(ks[1], 32, 64)     # e_conv1
    w2, b2 = lin(ks[2], 64, 128)      # conv2
    we2, be2 = lin(ks[3], 64, 128)    # e_conv2
    w5, b5 = lin(ks[4], 384, 512)     # conv5
    w6, b6 = lin(ks[5], 512, 1024)    # conv6
    return dict(w1=w1, b1=b1, we1=we1, be1=be1,
                w2=w2, b2=b2, we2=we2, be2=be2,
                w5=w5, b5=b5, w6=w6, b6=b6)


def _kernel(xe_ref, w12_ref, w34_ref, b34_ref, w51_ref, w52_ref, b5_ref,
            w6_ref, b6_ref, out_ref):
    f32, bf16 = jnp.float32, jnp.bfloat16

    xe = xe_ref[0]                                               # (tn, 64) bf16

    # fused conv1 | e_conv1 (+ReLU); biases live in row 35 of w12 (ones channel)
    h1 = jnp.maximum(jnp.dot(xe, w12_ref[...], preferred_element_type=f32), 0.0)
    h1b = h1.astype(bf16)                                        # (tn, 128)

    # fused conv2 | e_conv2 (+ReLU)
    h2 = jnp.maximum(
        jnp.dot(h1b, w34_ref[...], preferred_element_type=f32) + b34_ref[...],
        0.0)
    h2b = h2.astype(bf16)                                        # (tn, 256)

    # conv5 over pointfeat_3 = [hx1|he1|hx2|he2] expressed as two matmuls (+ReLU)
    h5 = jnp.maximum(
        jnp.dot(h1b, w51_ref[...], preferred_element_type=f32)
        + jnp.dot(h2b, w52_ref[...], preferred_element_type=f32)
        + b5_ref[...],
        0.0)
    h5b = h5.astype(bf16)                                        # (tn, 512)

    # conv6 (+ReLU), chunked over 4 x 256 output channels; emit per-tile row
    # sums (partial sums are reduced + bias-corrected + averaged in the wrapper).
    parts = []
    for c in range(4):
        lo, hi = c * 256, (c + 1) * 256
        h6c = jnp.maximum(
            jnp.dot(h5b, w6_ref[:, lo:hi], preferred_element_type=f32)
            + b6_ref[:, lo:hi],
            0.0)                                                 # (tn, 256) f32
        parts.append(jnp.sum(h6c, axis=0))                       # (256,)

    out_ref[...] = jnp.concatenate(parts, axis=0).reshape(1, 1, 1024)


def pose_refine_net_feat(x_ncw, emb_ncw, p, tn_max=1024):
    """x_ncw: (B, 3, N), emb_ncw: (B, 32, N)  (PyTorch NCW) -> (B, 1024)."""
    B, _, N = x_ncw.shape
    f32, bf16 = jnp.float32, jnp.bfloat16

    # Point tile: multiple of 256 (MXU-friendly), capped so the working set is
    # comfortable on every generation (v7x has only 64 MiB total VMEM).
    tn = min(tn_max, _round_up(N, 256))
    n_pad = _round_up(N, tn)
    n_tiles = n_pad // tn

    # Points-major / channels-last; concat [x | emb | 1] -> 36 channels, pad to
    # 64 lanes.  Channel 35 is a constant 1.0 "bias channel" so the conv1 /
    # e_conv1 biases fold into the fused first matmul.  Padded point rows are
    # all-zero (including the bias channel), so their conv chain is a constant
    # vector subtracted once in the wrapper -> no in-kernel masking at all.
    x = jnp.transpose(x_ncw, (0, 2, 1))        # (B, N, 3)
    emb = jnp.transpose(emb_ncw, (0, 2, 1))    # (B, N, 32)
    ones = jnp.ones((B, N, 1), f32)
    xe = jnp.concatenate([x, emb, ones], axis=-1)                # (B, N, 36)
    xe = jnp.pad(xe, ((0, 0), (0, n_pad - N), (0, 64 - 36))).astype(bf16)
    # TODO(synk): xe still round-trips HBM; CompilerParams(allow_input_fusion=[0])
    # could fuse the transpose/concat/pad producer if that traffic ever matters.

    # Block-diagonal fused weights; layer-1 biases folded into row 35.
    w12 = jnp.zeros((64, 128), f32)
    w12 = (w12.at[0:3, 0:64].set(p["w1"])
               .at[3:35, 64:128].set(p["we1"])
               .at[35:36, 0:64].set(p["b1"])
               .at[35:36, 64:128].set(p["be1"]))

    w34 = jnp.zeros((128, 256), f32)
    w34 = w34.at[0:64, 0:128].set(p["w2"]).at[64:128, 128:256].set(p["we2"])
    b34 = jnp.concatenate([p["b2"], p["be2"]], axis=-1)          # (1, 256)

    w51 = p["w5"][0:128]       # multiplies [hx1|he1]
    w52 = p["w5"][128:384]     # multiplies [hx2|he2]

    w12, w34, w51, w52, w6 = (a.astype(bf16)
                              for a in (w12, w34, w51, w52, p["w6"]))
    b5, b6 = p["b5"], p["b6"]

    def _const_spec(shape):
        zeros = (0,) * len(shape)
        return pl.BlockSpec(shape, lambda b, k, _z=zeros: _z)

    in_specs = [
        pl.BlockSpec((1, tn, 64), lambda b, k: (b, k, 0)),
        _const_spec((64, 128)),
        _const_spec((128, 256)), _const_spec((1, 256)),
        _const_spec((128, 512)), _const_spec((256, 512)), _const_spec((1, 512)),
        _const_spec((512, 1024)), _const_spec((1, 1024)),
    ]
    operands = (xe, w12, w34, b34, w51, w52, b5, w6, b6)

    flops = 2 * B * n_pad * (64 * 128 + 128 * 256 + 128 * 512
                             + 256 * 512 + 512 * 1024)
    bytes_accessed = (sum(int(a.size) * a.dtype.itemsize for a in operands)
                      + B * n_tiles * 1024 * 4)
    cost = pl.CostEstimate(flops=flops, transcendentals=0,
                           bytes_accessed=bytes_accessed)

    partial = pl.pallas_call(
        _kernel,
        out_shape=jax.ShapeDtypeStruct((B, n_tiles, 1024), jnp.float32),
        grid_spec=pltpu.PrefetchScalarGridSpec(
            num_scalar_prefetch=0,
            grid=(B, n_tiles),
            in_specs=in_specs,
            out_specs=pl.BlockSpec((1, 1, 1024), lambda b, k: (b, k, 0)),
        ),
        compiler_params=pltpu.CompilerParams(
            dimension_semantics=("parallel", "parallel"),
            vmem_limit_bytes=32 * 1024 * 1024),
        cost_estimate=cost,
    )(*operands)

    psum = jnp.sum(partial, axis=1)                              # (B, 1024)

    if n_pad != N:
        # Constant contribution of each all-zero padded row (same bf16/f32
        # dataflow as the kernel): h1=0 (bias folded into the zeroed ones
        # channel), h2=relu(b34), then the conv5/conv6 chain on that constant.
        h2p = jnp.maximum(b34, 0.0)
        h5p = jnp.maximum(
            jnp.dot(h2p.astype(bf16), w52, preferred_element_type=f32) + b5, 0.0)
        h6p = jnp.maximum(
            jnp.dot(h5p.astype(bf16), w6, preferred_element_type=f32) + b6, 0.0)
        psum = psum - (n_pad - N) * h6p                          # (B, 1024)

    # AvgPool1d(num_points): mean over the real points only.
    return psum * (1.0 / N)


def _reference(x_ncw, emb_ncw, p):
    """Pure-JAX f32 reference mirroring the PyTorch forward (NCW semantics)."""
    x = jnp.transpose(x_ncw, (0, 2, 1))      # (B, N, 3)
    emb = jnp.transpose(emb_ncw, (0, 2, 1))  # (B, N, 32)
    relu = jax.nn.relu
    hx1 = relu(x @ p["w1"] + p["b1"])
    he1 = relu(emb @ p["we1"] + p["be1"])
    hx2 = relu(hx1 @ p["w2"] + p["b2"])
    he2 = relu(he1 @ p["we2"] + p["be2"])
    pf3 = jnp.concatenate([hx1, he1, hx2, he2], axis=-1)     # (B, N, 384)
    h5 = relu(pf3 @ p["w5"] + p["b5"])
    h6 = relu(h5 @ p["w6"] + p["b6"])
    return jnp.mean(h6, axis=1)                              # (B, 1024)


if __name__ == "__main__":
    key = jax.random.PRNGKey(0)
    k_param, k_x, k_emb = jax.random.split(key, 3)

    B = 2
    num_points = 16
    params = init_params(k_param)

    x = jax.random.normal(k_x, (B, 3, num_points), jnp.float32)       # NCW, like PyTorch
    emb = jax.random.normal(k_emb, (B, 32, num_points), jnp.float32)  # NCW, like PyTorch

    out = pose_refine_net_feat(x, emb, params)
    out = jax.block_until_ready(out)
    assert out.shape == (B, 1024), out.shape

    ref = _reference(x, emb, params)
    # bf16 matmul operands (f32 accumulation) -> loosened tolerance vs f32 ref.
    assert jnp.allclose(out, ref, atol=5e-2, rtol=5e-2), "mismatch vs reference"

    print("KERNEL_OK")
</pallas_src>

<mosaic_0001>
module attributes {stable_mosaic.version = 11 : i64} {
  func.func @_kernel(%arg0: i32, %arg1: i32, %arg2: memref<1x256x64xbf16, #tpu.memory_space<vmem>>, %arg3: memref<64x128xbf16, #tpu.memory_space<vmem>>, %arg4: memref<128x256xbf16, #tpu.memory_space<vmem>>, %arg5: memref<1x256xf32, #tpu.memory_space<vmem>>, %arg6: memref<128x512xbf16, #tpu.memory_space<vmem>>, %arg7: memref<256x512xbf16, #tpu.memory_space<vmem>>, %arg8: memref<1x512xf32, #tpu.memory_space<vmem>>, %arg9: memref<512x1024xbf16, #tpu.memory_space<vmem>>, %arg10: memref<1x1024xf32, #tpu.memory_space<vmem>>, %arg11: memref<1x1x1024xf32, #tpu.memory_space<vmem>>) attributes {dimension_semantics = [#tpu.dimension_semantics<parallel>, #tpu.dimension_semantics<parallel>], iteration_bounds = array<i64: 2, 1>, scalar_prefetch = 0 : i64, scratch_operands = 0 : i64, tpu.core_type = #tpu.core_type<tc>, window_params = [{transform_indices = @transform_0, window_bounds = array<i64: 1, 256, 64>}, {pipeline_mode = #tpu.pipeline_mode<synchronous>, transform_indices = @transform_1, window_bounds = array<i64: 64, 128>}, {pipeline_mode = #tpu.pipeline_mode<synchronous>, transform_indices = @transform_2, window_bounds = array<i64: 128, 256>}, {pipeline_mode = #tpu.pipeline_mode<synchronous>, transform_indices = @transform_3, window_bounds = array<i64: 1, 256>}, {pipeline_mode = #tpu.pipeline_mode<synchronous>, transform_indices = @transform_4, window_bounds = array<i64: 128, 512>}, {pipeline_mode = #tpu.pipeline_mode<synchronous>, transform_indices = @transform_5, window_bounds = array<i64: 256, 512>}, {pipeline_mode = #tpu.pipeline_mode<synchronous>, transform_indices = @transform_6, window_bounds = array<i64: 1, 512>}, {pipeline_mode = #tpu.pipeline_mode<synchronous>, transform_indices = @transform_7, window_bounds = array<i64: 512, 1024>}, {pipeline_mode = #tpu.pipeline_mode<synchronous>, transform_indices = @transform_8, window_bounds = array<i64: 1, 1024>}, {transform_indices = @transform_9, window_bounds = array<i64: 1, 1, 1024>}]} {
    %c0 = arith.constant 0 : index
    %c0_0 = arith.constant 0 : index
    %c0_1 = arith.constant 0 : index
    %0 = vector.load %arg2[%c0, %c0_0, %c0_1] : memref<1x256x64xbf16, #tpu.memory_space<vmem>>, vector<1x256x64xbf16>
    %1 = vector.shape_cast %0 : vector<1x256x64xbf16> to vector<256x64xbf16>
    %c0_2 = arith.constant 0 : index
    %c0_3 = arith.constant 0 : index
    %2 = vector.load %arg3[%c0_2, %c0_3] : memref<64x128xbf16, #tpu.memory_space<vmem>>, vector<64x128xbf16>
    %cst = arith.constant dense<0.000000e+00> : vector<256x128xf32>
    %3 = tpu.matmul %1, %2, %cst {dimension_numbers = #tpu.dot_dimension_numbers<[1], [0], [0], [1], [0, 0, 1, 1], [], []>} : vector<256x64xbf16>, vector<64x128xbf16>, vector<256x128xf32> -> vector<256x128xf32>
    %cst_4 = arith.constant 0.000000e+00 : f32
    %4 = vector.broadcast %cst_4 : f32 to vector<256x128xf32>
    %5 = arith.maximumf %3, %4 : vector<256x128xf32>
    %6 = arith.truncf %5 : vector<256x128xf32> to vector<256x128xbf16>
    %c0_5 = arith.constant 0 : index
    %c0_6 = arith.constant 0 : index
    %7 = vector.load %arg4[%c0_5, %c0_6] : memref<128x256xbf16, #tpu.memory_space<vmem>>, vector<128x256xbf16>
    %cst_7 = arith.constant dense<0.000000e+00> : vector<256x256xf32>
    %8 = tpu.matmul %6, %7, %cst_7 {dimension_numbers = #tpu.dot_dimension_numbers<[1], [0], [0], [1], [0, 0, 1, 1], [], []>} : vector<256x128xbf16>, vector<128x256xbf16>, vector<256x256xf32> -> vector<256x256xf32>
    %c0_8 = arith.constant 0 : index
    %c0_9 = arith.constant 0 : index
    %9 = vector.load %arg5[%c0_8, %c0_9] : memref<1x256xf32, #tpu.memory_space<vmem>>, vector<1x256xf32>
    %10 = vector.broadcast %9 : vector<1x256xf32> to vector<256x256xf32>
    %11 = arith.addf %8, %10 : vector<256x256xf32>
    %cst_10 = arith.constant 0.000000e+00 : f32
    %12 = vector.broadcast %cst_10 : f32 to vector<256x256xf32>
    %13 = arith.maximumf %11, %12 : vector<256x256xf32>
    %14 = arith.truncf %13 : vector<256x256xf32> to vector<256x256xbf16>
    %c0_11 = arith.constant 0 : index
    %c0_12 = arith.constant 0 : index
    %15 = vector.load %arg6[%c0_11, %c0_12] : memref<128x512xbf16, #tpu.memory_space<vmem>>, vector<128x512xbf16>
    %cst_13 = arith.constant dense<0.000000e+00> : vector<256x512xf32>
    %16 = tpu.matmul %6, %15, %cst_13 {dimension_numbers = #tpu.dot_dimension_numbers<[1], [0], [0], [1], [0, 0, 1, 1], [], []>} : vector<256x128xbf16>, vector<128x512xbf16>, vector<256x512xf32> -> vector<256x512xf32>
    %c0_14 = arith.constant 0 : index
    %c0_15 = arith.constant 0 : index
    %17 = vector.load %arg7[%c0_14, %c0_15] : memref<256x512xbf16, #tpu.memory_space<vmem>>, vector<256x512xbf16>
    %cst_16 = arith.constant dense<0.000000e+00> : vector<256x512xf32>
    %18 = tpu.matmul %14, %17, %cst_16 {dimension_numbers = #tpu.dot_dimension_numbers<[1], [0], [0], [1], [0, 0, 1, 1], [], []>} : vector<256x256xbf16>, vector<256x512xbf16>, vector<256x512xf32> -> vector<256x512xf32>
    %19 = arith.addf %16, %18 : vector<256x512xf32>
    %c0_17 = arith.constant 0 : index
    %c0_18 = arith.constant 0 : index
    %20 = vector.load %arg8[%c0_17, %c0_18] : memref<1x512xf32, #tpu.memory_space<vmem>>, vector<1x512xf32>
    %21 = vector.broadcast %20 : vector<1x512xf32> to vector<256x512xf32>
    %22 = arith.addf %19, %21 : vector<256x512xf32>
    %cst_19 = arith.constant 0.000000e+00 : f32
    %23 = vector.broadcast %cst_19 : f32 to vector<256x512xf32>
    %24 = arith.maximumf %22, %23 : vector<256x512xf32>
    %25 = arith.truncf %24 : vector<256x512xf32> to vector<256x512xbf16>
    %c0_20 = arith.constant 0 : index
    %c0_21 = arith.constant 0 : index
    %26 = vector.load %arg9[%c0_20, %c0_21] : memref<512x1024xbf16, #tpu.memory_space<vmem>>, vector<512x256xbf16>
    %cst_22 = arith.constant dense<0.000000e+00> : vector<256x256xf32>
    %27 = tpu.matmul %25, %26, %cst_22 {dimension_numbers = #tpu.dot_dimension_numbers<[1], [0], [0], [1], [0, 0, 1, 1], [], []>} : vector<256x512xbf16>, vector<512x256xbf16>, vector<256x256xf32> -> vector<256x256xf32>
    %c0_23 = arith.constant 0 : index
    %c0_24 = arith.constant 0 : index
    %28 = vector.load %arg10[%c0_23, %c0_24] : memref<1x1024xf32, #tpu.memory_space<vmem>>, vector<1x256xf32>
    %29 = vector.broadcast %28 : vector<1x256xf32> to vector<256x256xf32>
    %30 = arith.addf %27, %29 : vector<256x256xf32>
    %cst_25 = arith.constant 0.000000e+00 : f32
    %31 = vector.broadcast %cst_25 : f32 to vector<256x256xf32>
    %32 = arith.maximumf %30, %31 : vector<256x256xf32>
    %cst_26 = arith.constant dense<0.000000e+00> : vector<256xf32>
    %33 = vector.multi_reduction <add>, %32, %cst_26 [0] : vector<256x256xf32> to vector<256xf32>
    %c0_27 = arith.constant 0 : index
    %c256 = arith.constant 256 : index
    %34 = vector.load %arg9[%c0_27, %c256] : memref<512x1024xbf16, #tpu.memory_space<vmem>>, vector<512x256xbf16>
    %cst_28 = arith.constant dense<0.000000e+00> : vector<256x256xf32>
    %35 = tpu.matmul %25, %34, %cst_28 {dimension_numbers = #tpu.dot_dimension_numbers<[1], [0], [0], [1], [0, 0, 1, 1], [], []>} : vector<256x512xbf16>, vector<512x256xbf16>, vector<256x256xf32> -> vector<256x256xf32>
    %c0_29 = arith.constant 0 : index
    %c256_30 = arith.constant 256 : index
    %36 = vector.load %arg10[%c0_29, %c256_30] : memref<1x1024xf32, #tpu.memory_space<vmem>>, vector<1x256xf32>
    %37 = vector.broadcast %36 : vector<1x256xf32> to vector<256x256xf32>
    %38 = arith.addf %35, %37 : vector<256x256xf32>
    %cst_31 = arith.constant 0.000000e+00 : f32
    %39 = vector.broadcast %cst_31 : f32 to vector<256x256xf32>
    %40 = arith.maximumf %38, %39 : vector<256x256xf32>
    %cst_32 = arith.constant dense<0.000000e+00> : vector<256xf32>
    %41 = vector.multi_reduction <add>, %40, %cst_32 [0] : vector<256x256xf32> to vector<256xf32>
    %c0_33 = arith.constant 0 : index
    %c512 = arith.constant 512 : index
    %42 = vector.load %arg9[%c0_33, %c512] : memref<512x1024xbf16, #tpu.memory_space<vmem>>, vector<512x256xbf16>
    %cst_34 = arith.constant dense<0.000000e+00> : vector<256x256xf32>
    %43 = tpu.matmul %25, %42, %cst_34 {dimension_numbers = #tpu.dot_dimension_numbers<[1], [0], [0], [1], [0, 0, 1, 1], [], []>} : vector<256x512xbf16>, vector<512x256xbf16>, vector<256x256xf32> -> vector<256x256xf32>
    %c0_35 = arith.constant 0 : index
    %c512_36 = arith.constant 512 : index
    %44 = vector.load %arg10[%c0_35, %c512_36] : memref<1x1024xf32, #tpu.memory_space<vmem>>, vector<1x256xf32>
    %45 = vector.broadcast %44 : vector<1x256xf32> to vector<256x256xf32>
    %46 = arith.addf %43, %45 : vector<256x256xf32>
    %cst_37 = arith.constant 0.000000e+00 : f32
    %47 = vector.broadcast %cst_37 : f32 to vector<256x256xf32>
    %48 = arith.maximumf %46, %47 : vector<256x256xf32>
    %cst_38 = arith.constant dense<0.000000e+00> : vector<256xf32>
    %49 = vector.multi_reduction <add>, %48, %cst_38 [0] : vector<256x256xf32> to vector<256xf32>
    %c0_39 = arith.constant 0 : index
    %c768 = arith.constant 768 : index
    %50 = vector.load %arg9[%c0_39, %c768] : memref<512x1024xbf16, #tpu.memory_space<vmem>>, vector<512x256xbf16>
    %cst_40 = arith.constant dense<0.000000e+00> : vector<256x256xf32>
    %51 = tpu.matmul %25, %50, %cst_40 {dimension_numbers = #tpu.dot_dimension_numbers<[1], [0], [0], [1], [0, 0, 1, 1], [], []>} : vector<256x512xbf16>, vector<512x256xbf16>, vector<256x256xf32> -> vector<256x256xf32>
    %c0_41 = arith.constant 0 : index
    %c768_42 = arith.constant 768 : index
    %52 = vector.load %arg10[%c0_41, %c768_42] : memref<1x1024xf32, #tpu.memory_space<vmem>>, vector<1x256xf32>
    %53 = vector.broadcast %52 : vector<1x256xf32> to vector<256x256xf32>
    %54 = arith.addf %51, %53 : vector<256x256xf32>
    %cst_43 = arith.constant 0.000000e+00 : f32
    %55 = vector.broadcast %cst_43 : f32 to vector<256x256xf32>
    %56 = arith.maximumf %54, %55 : vector<256x256xf32>
    %cst_44 = arith.constant dense<0.000000e+00> : vector<256xf32>
    %57 = vector.multi_reduction <add>, %56, %cst_44 [0] : vector<256x256xf32> to vector<256xf32>
    %58 = tpu.concatenate %33, %41, %49, %57 in 0 : vector<256xf32>, vector<256xf32>, vector<256xf32>, vector<256xf32> -> vector<1024xf32>
    %59 = vector.shape_cast %58 : vector<1024xf32> to vector<1x1x1024xf32>
    %c0_45 = arith.constant 0 : index
    %c0_46 = arith.constant 0 : index
    %c0_47 = arith.constant 0 : index
    %60 = vector.load %arg11[%c0_45, %c0_46, %c0_47] : memref<1x1x1024xf32, #tpu.memory_space<vmem>>, vector<1x1x1024xf32>
    tpu.vector_store %arg11[%c0_45, %c0_46, %c0_47], %59 {strides = array<i32>} : memref<1x1x1024xf32, #tpu.memory_space<vmem>>, vector<1x1x1024xf32>,
    return
  }
  func.func @transform_0(%arg0: i32, %arg1: i32) -> (i32, i32, i32) {
    %c0_i32 = arith.constant 0 : i32
    %c0_i32_0 = arith.constant 0 : i32
    return %arg0, %arg1, %c0_i32 : i32, i32, i32
  }
  func.func @transform_1(%arg0: i32, %arg1: i32) -> (i32, i32) {
    %c0_i32 = arith.constant 0 : i32
    %c0_i32_0 = arith.constant 0 : i32
    %c0_i32_1 = arith.constant 0 : i32
    return %c0_i32, %c0_i32_0 : i32, i32
  }
  func.func @transform_2(%arg0: i32, %arg1: i32) -> (i32, i32) {
    %c0_i32 = arith.constant 0 : i32
    %c0_i32_0 = arith.constant 0 : i32
    %c0_i32_1 = arith.constant 0 : i32
    return %c0_i32, %c0_i32_0 : i32, i32
  }
  func.func @transform_3(%arg0: i32, %arg1: i32) -> (i32, i32) {
    %c0_i32 = arith.constant 0 : i32
    %c0_i32_0 = arith.constant 0 : i32
    %c0_i32_1 = arith.constant 0 : i32
    return %c0_i32, %c0_i32_0 : i32, i32
  }
  func.func @transform_4(%arg0: i32, %arg1: i32) -> (i32, i32) {
    %c0_i32 = arith.constant 0 : i32
    %c0_i32_0 = arith.constant 0 : i32
    %c0_i32_1 = arith.constant 0 : i32
    return %c0_i32, %c0_i32_0 : i32, i32
  }
  func.func @transform_5(%arg0: i32, %arg1: i32) -> (i32, i32) {
    %c0_i32 = arith.constant 0 : i32
    %c0_i32_0 = arith.constant 0 : i32
    %c0_i32_1 = arith.constant 0 : i32
    return %c0_i32, %c0_i32_0 : i32, i32
  }
  func.func @transform_6(%arg0: i32, %arg1: i32) -> (i32, i32) {
    %c0_i32 = arith.constant 0 : i32
    %c0_i32_0 = arith.constant 0 : i32
    %c0_i32_1 = arith.constant 0 : i32
    return %c0_i32, %c0_i32_0 : i32, i32
  }
  func.func @transform_7(%arg0: i32, %arg1: i32) -> (i32, i32) {
    %c0_i32 = arith.constant 0 : i32
    %c0_i32_0 = arith.constant 0 : i32
    %c0_i32_1 = arith.constant 0 : i32
    return %c0_i32, %c0_i32_0 : i32, i32
  }
  func.func @transform_8(%arg0: i32, %arg1: i32) -> (i32, i32) {
    %c0_i32 = arith.constant 0 : i32
    %c0_i32_0 = arith.constant 0 : i32
    %c0_i32_1 = arith.constant 0 : i32
    return %c0_i32, %c0_i32_0 : i32, i32
  }
  func.func @transform_9(%arg0: i32, %arg1: i32) -> (i32, i32, i32) {
    %c0_i32 = arith.constant 0 : i32
    %c0_i32_0 = arith.constant 0 : i32
    return %arg0, %arg1, %c0_i32 : i32, i32, i32
  }
}

</mosaic_0001>

<llo_original>
// kernel: tpu_custom_call.1
$region0: #{tpu_custom_call.1}
  #allocation0 [shape = 'u32[]', space=smem, size = 0x4, offset = 0x4, fixed_abs, tag = 'smem constant byte address 0x4 - core index']
  #allocation1 [shape = 'u32[72,128]{1,0:T(1,128)}', space=vmem, size = 0x9000, scoped, tag = 'internal scratch']
  %s0 = inlined_call_operand.vmem [shape: bf16[2,256,64], index: 0, kind: input, shape index: {}]
  %s1 = inlined_call_operand.hbm [shape: bf16[64,128], index: 1, kind: input, shape index: {}]
  %s2 = inlined_call_operand.vmem [shape: bf16[128,256], index: 2, kind: input, shape index: {}]
  %s3 = inlined_call_operand.hbm [shape: f32[1,256], index: 3, kind: input, shape index: {}]
  %s4 = inlined_call_operand.vmem [shape: bf16[128,512], index: 4, kind: input, shape index: {}]
  %s5 = inlined_call_operand.hbm [shape: bf16[256,512], index: 5, kind: input, shape index: {}]
  %s6 = inlined_call_operand.vmem [shape: f32[1,512], index: 6, kind: input, shape index: {}]
  %s7 = inlined_call_operand.hbm [shape: bf16[512,1024], index: 7, kind: input, shape index: {}]
  %s8 = inlined_call_operand.hbm [shape: f32[1,1024], index: 8, kind: input, shape index: {}]
  %s9 = inlined_call_operand.hbm [shape: f32[2,1,1024], index: 9, kind: output, shape index: {}]
  %s10 = sld [smem:[#allocation0]]
  $region89: #{tpu_custom_call.1} parent=0
    _
  %s12 = ssub.s32 1, %s10
  %s13 = scalar_select 0, %s12, %s10
  $region1: #{tpu_custom_call.1} parent=0
    #allocation2 [shape = 'u8[16384]{0}', space=vmem, size = 0x4000, scoped, tag = 'input window, operand 1, single buffered']
    #allocation3 [shape = 's32[2]{0}', space=sflag, size = 0x8, scoped, tag = 'scoped memory for tpu_custom_call.1']
    #allocation4 [shape = 's32[2]{0}', space=sflag, size = 0x8, scoped, tag = 'scoped memory for tpu_custom_call.1']
    #allocation5 [shape = 'u8[1024]{0}', space=vmem, size = 0x400, scoped, tag = 'input window, operand 3, single buffered']
    #allocation6 [shape = 's32[1]{0}', space=sflag, size = 0x4, scoped, tag = 'scoped memory for tpu_custom_call.1']
    #allocation7 [shape = 'u8[262144]{0}', space=vmem, size = 0x40000, scoped, tag = 'input window, operand 5, single buffered']
    #allocation8 [shape = 'u8[1048576]{0}', space=vmem, size = 0x100000, scoped, tag = 'input window, operand 7, single buffered']
    #allocation9 [shape = 's32[1]{0}', space=sflag, size = 0x4, scoped, tag = 'scoped memory for tpu_custom_call.1']
    #allocation10 [shape = 'u8[4096]{0}', space=vmem, size = 0x1000, scoped, tag = 'input window, operand 8, single buffered']
    #allocation11 [shape = 'u8[8192]{0}', space=vmem, size = 0x2000, scoped, tag = 'output window, operand 0']
    %14 = vsyncpa [#allocation3], 0
    %15 = vsyncpa [#allocation6], 0
    %16 = vsyncpa [#allocation9], 0
    %17 = vsyncpa [#allocation4], 0
    %s18 = scalar_lea.sflag [#allocation4], 1
    %19 = vsyncpa %s18, 0
    loop: start=0, step=1, limit=4
    $region2: #{tpu_custom_call.1} parent=1 // loop_pre_header
      _
    $region3: #{tpu_custom_call.1} parent=1 // loop_header
      %s21 = sphi 0, %s25
      %p22 = scmp.ge.s32.totalorder %s21, 4
      %s28 = sphi 0, %s40
      %s29 = sphi 0, %s36
      %s30 = sphi 0, %s28
      %s31 = sphi 0, %s29
      %s32 = sphi 0, %s30
      %s33 = sphi 0, %s31
      %s45 = sphi 0, %s47
      %s48 = sphi 0, %s45
      %s49 = sphi 0, %s48
      %s65 = sphi 0, %s49
      %s69 = sphi 0, %s69
      %s71 = sphi 0, %s69
      %s72 = sphi 0, %s71
      %s86 = sphi 0, %s72
      %s90 = sphi 0, %s90
      %s92 = sphi 0, %s90
      %s93 = sphi 0, %s92
      %s107 = sphi 0, %s93
      %s111 = sphi 0, %s111
      %s113 = sphi 0, %s111
      %s114 = sphi 0, %s113
      %s128 = sphi 0, %s114
      %s132 = sphi 0, %s132
      %s134 = sphi 0, %s132
      %s135 = sphi 0, %s134
      %s149 = sphi 0, %s135
      %s153 = sphi 0, %s153
      %s155 = sphi 0, %s153
      %s156 = sphi 0, %s155
      %s170 = sphi 0, %s156
      %s174 = sphi 0, %s174
      %s176 = sphi 0, %s174
      %s177 = sphi 0, %s176
      %s191 = sphi 0, %s177
      %s195 = sphi 0, %s195
      %s197 = sphi 0, %s195
      %s198 = sphi 0, %s197
      %s212 = sphi 0, %s198
      %s216 = sphi 0, %s216
      %s218 = sphi 0, %s216
      %s219 = sphi 0, %s218
      %s233 = sphi 0, %s219
      %s241 = sphi 0, %s243
      %s244 = sphi 0, %s241
      %s245 = sphi 0, %s244
      %s261 = sphi 0, %s245
    $region4: #{tpu_custom_call.1} parent=1 // loop_header_branch
      %24 = sbr.rel (%p22) target = $region8
    $region5: #{tpu_custom_call.1} parent=1 // loop_body
      %s26 = ssub.s32 %s21, 1
      %s27 = ssub.s32 %s21, 2
      %s34 = sadd.s32 1, %s29
      %p35 = scmp.ge.s32.totalorder %s34, 1
      %s36 = scalar_select %p35, 0, %s34
      %s37 = sadd.s32 1, %s28
      %s38 = scalar_select %p35, %s37, %s28
      %p39 = scmp.ge.s32.totalorder %s38, 2
      %s40 = scalar_select %p39, 0, %s38
      %s41 = ssub.s32 %s28, %s40
      %s42 = ssub.s32 %s29, %s36
      %s43 = sor.u32 %s41, %s42
      %p44 = scmp.eq.s32.totalorder %s43, 0
      %s46 = sadd.s32 %s45, 1
      %s47 = scalar_select %p44, %s45, %s46
      %p50 = pneg %p44
      %p51 = scmp.eq.s32.totalorder %s21, 1
      %p52 = por %p50, %p51
      %p53 = scmp.ne.s32.totalorder %s45, %s48
      %p54 = scmp.eq.s32.totalorder %s21, 0
      %p55 = por %p53, %p54
      %p56 = scmp.ne.s32.totalorder %s45, %s48
      %p57 = scmp.eq.s32.totalorder %s26, 1
      %p58 = por %p56, %p57
      %p59 = scmp.ne.s32.totalorder %s48, %s49
      %p60 = scmp.eq.s32.totalorder %s26, 0
      %p61 = por %p59, %p60
      %p62 = scmp.ne.s32.totalorder %s48, %s49
      %p63 = scmp.eq.s32.totalorder %s27, 1
      %p64 = por %p62, %p63
      %p66 = scmp.ne.s32.totalorder %s49, %s65
      %p67 = scmp.eq.s32.totalorder %s27, 0
      %p68 = por %p66, %p67
      %s70 = sadd.s32 %s69, 1
      %p73 = scmp.eq.s32.totalorder %s21, 1
      %p74 = scmp.ne.s32.totalorder %s69, %s71
      %p75 = scmp.eq.s32.totalorder %s21, 0
      %p76 = por %p74, %p75
      %p77 = scmp.ne.s32.totalorder %s69, %s71
      %p78 = scmp.eq.s32.totalorder %s26, 1
      %p79 = por %p77, %p78
      %p80 = scmp.ne.s32.totalorder %s71, %s72
      %p81 = scmp.eq.s32.totalorder %s26, 0
      %p82 = por %p80, %p81
      %p83 = scmp.ne.s32.totalorder %s71, %s72
      %p84 = scmp.eq.s32.totalorder %s27, 1
      %p85 = por %p83, %p84
      %p87 = scmp.ne.s32.totalorder %s72, %s86
      %p88 = scmp.eq.s32.totalorder %s27, 0
      %p89 = por %p87, %p88
      %s91 = sadd.s32 %s90, 1
      %p94 = scmp.eq.s32.totalorder %s21, 1
      %p95 = scmp.ne.s32.totalorder %s90, %s92
      %p96 = scmp.eq.s32.totalorder %s21, 0
      %p97 = por %p95, %p96
      %p98 = scmp.ne.s32.totalorder %s90, %s92
      %p99 = scmp.eq.s32.totalorder %s26, 1
      %p100 = por %p98, %p99
      %p101 = scmp.ne.s32.totalorder %s92, %s93
      %p102 = scmp.eq.s32.totalorder %s26, 0
      %p103 = por %p101, %p102
      %p104 = scmp.ne.s32.totalorder %s92, %s93
      %p105 = scmp.eq.s32.totalorder %s27, 1
      %p106 = por %p104, %p105
      %p108 = scmp.ne.s32.totalorder %s93, %s107
      %p109 = scmp.eq.s32.totalorder %s27, 0
      %p110 = por %p108, %p109
      %s112 = sadd.s32 %s111, 1
      %p115 = scmp.eq.s32.totalorder %s21, 1
      %p116 = scmp.ne.s32.totalorder %s111, %s113
      %p117 = scmp.eq.s32.totalorder %s21, 0
      %p118 = por %p116, %p117
      %p119 = scmp.ne.s32.totalorder %s111, %s113
      %p120 = scmp.eq.s32.totalorder %s26, 1
      %p121 = por %p119, %p120
      %p122 = scmp.ne.s32.totalorder %s113, %s114
      %p123 = scmp.eq.s32.totalorder %s26, 0
      %p124 = por %p122, %p123
      %p125 = scmp.ne.s32.totalorder %s113, %s114
      %p126 = scmp.eq.s32.totalorder %s27, 1
      %p127 = por %p125, %p126
      %p129 = scmp.ne.s32.totalorder %s114, %s128
      %p130 = scmp.eq.s32.totalorder %s27, 0
      %p131 = por %p129, %p130
      %s133 = sadd.s32 %s132, 1
      %p136 = scmp.eq.s32.totalorder %s21, 1
      %p137 = scmp.ne.s32.totalorder %s132, %s134
      %p138 = scmp.eq.s32.totalorder %s21, 0
      %p139 = por %p137, %p138
      %p140 = scmp.ne.s32.totalorder %s132, %s134
      %p141 = scmp.eq.s32.totalorder %s26, 1
      %p142 = por %p140, %p141
      %p143 = scmp.ne.s32.totalorder %s134, %s135
      %p144 = scmp.eq.s32.totalorder %s26, 0
      %p145 = por %p143, %p144
      %p146 = scmp.ne.s32.totalorder %s134, %s135
      %p147 = scmp.eq.s32.totalorder %s27, 1
      %p148 = por %p146, %p147
      %p150 = scmp.ne.s32.totalorder %s135, %s149
      %p151 = scmp.eq.s32.totalorder %s27, 0
      %p152 = por %p150, %p151
      %s154 = sadd.s32 %s153, 1
      %p157 = scmp.eq.s32.totalorder %s21, 1
      %p158 = scmp.ne.s32.totalorder %s153, %s155
      %p159 = scmp.eq.s32.totalorder %s21, 0
      %p160 = por %p158, %p159
      %p161 = scmp.ne.s32.totalorder %s153, %s155
      %p162 = scmp.eq.s32.totalorder %s26, 1
      %p163 = por %p161, %p162
      %p164 = scmp.ne.s32.totalorder %s155, %s156
      %p165 = scmp.eq.s32.totalorder %s26, 0
      %p166 = por %p164, %p165
      %p167 = scmp.ne.s32.totalorder %s155, %s156
      %p168 = scmp.eq.s32.totalorder %s27, 1
      %p169 = por %p167, %p168
      %p171 = scmp.ne.s32.totalorder %s156, %s170
      %p172 = scmp.eq.s32.totalorder %s27, 0
      %p173 = por %p171, %p172
      %s175 = sadd.s32 %s174, 1
      %p178 = scmp.eq.s32.totalorder %s21, 1
      %p179 = scmp.ne.s32.totalorder %s174, %s176
      %p180 = scmp.eq.s32.totalorder %s21, 0
      %p181 = por %p179, %p180
      %p182 = scmp.ne.s32.totalorder %s174, %s176
      %p183 = scmp.eq.s32.totalorder %s26, 1
      %p184 = por %p182, %p183
      %p185 = scmp.ne.s32.totalorder %s176, %s177
      %p186 = scmp.eq.s32.totalorder %s26, 0
      %p187 = por %p185, %p186
      %p188 = scmp.ne.s32.totalorder %s176, %s177
      %p189 = scmp.eq.s32.totalorder %s27, 1
      %p190 = por %p188, %p189
      %p192 = scmp.ne.s32.totalorder %s177, %s191
      %p193 = scmp.eq.s32.totalorder %s27, 0
      %p194 = por %p192, %p193
      %s196 = sadd.s32 %s195, 1
      %p199 = scmp.eq.s32.totalorder %s21, 1
      %p200 = scmp.ne.s32.totalorder %s195, %s197
      %p201 = scmp.eq.s32.totalorder %s21, 0
      %p202 = por %p200, %p201
      %p203 = scmp.ne.s32.totalorder %s195, %s197
      %p204 = scmp.eq.s32.totalorder %s26, 1
      %p205 = por %p203, %p204
      %p206 = scmp.ne.s32.totalorder %s197, %s198
      %p207 = scmp.eq.s32.totalorder %s26, 0
      %p208 = por %p206, %p207
      %p209 = scmp.ne.s32.totalorder %s197, %s198
      %p210 = scmp.eq.s32.totalorder %s27, 1
      %p211 = por %p209, %p210
      %p213 = scmp.ne.s32.totalorder %s198, %s212
      %p214 = scmp.eq.s32.totalorder %s27, 0
      %p215 = por %p213, %p214
      %s217 = sadd.s32 %s216, 1
      %p220 = scmp.eq.s32.totalorder %s21, 1
      %p221 = scmp.ne.s32.totalorder %s216, %s218
      %p222 = scmp.eq.s32.totalorder %s21, 0
      %p223 = por %p221, %p222
      %p224 = scmp.ne.s32.totalorder %s216, %s218
      %p225 = scmp.eq.s32.totalorder %s26, 1
      %p226 = por %p224, %p225
      %p227 = scmp.ne.s32.totalorder %s218, %s219
      %p228 = scmp.eq.s32.totalorder %s26, 0
      %p229 = por %p227, %p228
      %p230 = scmp.ne.s32.totalorder %s218, %s219
      %p231 = scmp.eq.s32.totalorder %s27, 1
      %p232 = por %p230, %p231
      %p234 = scmp.ne.s32.totalorder %s219, %s233
      %p235 = scmp.eq.s32.totalorder %s27, 0
      %p236 = por %p234, %p235
      %s237 = ssub.s32 %s28, %s40
      %s238 = ssub.s32 %s29, %s36
      %s239 = sor.u32 %s237, %s238
      %p240 = scmp.eq.s32.totalorder %s239, 0
      %s242 = sadd.s32 %s241, 1
      %s243 = scalar_select %p240, %s241, %s242
      %p246 = pneg %p240
      %p247 = scmp.eq.s32.totalorder %s21, 1
      %p248 = por %p246, %p247
      %p249 = scmp.ne.s32.totalorder %s241, %s244
      %p250 = scmp.eq.s32.totalorder %s21, 0
      %p251 = por %p249, %p250
      %p252 = scmp.ne.s32.totalorder %s241, %s244
      %p253 = scmp.eq.s32.totalorder %s26, 1
      %p254 = por %p252, %p253
      %p255 = scmp.ne.s32.totalorder %s244, %s245
      %p256 = scmp.eq.s32.totalorder %s26, 0
      %p257 = por %p255, %p256
      %p258 = scmp.ne.s32.totalorder %s244, %s245
      %p259 = scmp.eq.s32.totalorder %s27, 1
      %p260 = por %p258, %p259
      %p262 = scmp.ne.s32.totalorder %s245, %s261
      %p263 = scmp.eq.s32.totalorder %s27, 0
      %p264 = por %p262, %p263
      %p265 = scmp.le.s32.totalorder 1, %s21
      %p266 = scmp.lt.s32.totalorder %s21, 3
      %p267 = pnand %p265, %p266
      %p268 = pneg %p267
      // Predicated region
      $region9: #{tpu_custom_call.1} parent=5 // pred_check
        _
      $region10: #{tpu_custom_call.1} parent=5 // pred_check_branch
        %270 = sbr.rel (%p267) target = $region12
      $region11: #{tpu_custom_call.1} parent=5 // pred_region
        %s271 = ssub.s32 %s21, 1
        // Predicated region
        $region13: #{tpu_custom_call.1} parent=11 // pred_check
          %p272 = pneg %p82
        $region14: #{tpu_custom_call.1} parent=11 // pred_check_branch
          %274 = sbr.rel (%p272) target = $region16
        $region15: #{tpu_custom_call.1} parent=11 // pred_region
          %276 = vsyncadd [#allocation3], 0
          %s277 = sshll.u32 %s1, 4
          %s278 = int_to_ptr.hbm [resolvable:$true] %s277
          %s279 = sshll.u32 [#allocation2], 4
          %s280 = int_to_ptr.vmem [resolvable:$true] %s279
          %285 = dma.hbm_to_vmem [thread:$0]  %s278, 512, %s280, [#allocation3], 64, 64, 4
        $region16: #{tpu_custom_call.1} parent=11 // pred_fallthru
          _
        // Predicated region
        $region17: #{tpu_custom_call.1} parent=11 // pred_check
          %p286 = pneg %p103
        $region18: #{tpu_custom_call.1} parent=11 // pred_check_branch
          %288 = sbr.rel (%p286) target = $region20
        $region19: #{tpu_custom_call.1} parent=11 // pred_region
          _
        $region20: #{tpu_custom_call.1} parent=11 // pred_fallthru
          _
        // Predicated region
        $region21: #{tpu_custom_call.1} parent=11 // pred_check
          %p289 = pneg %p124
        $region22: #{tpu_custom_call.1} parent=11 // pred_check_branch
          %291 = sbr.rel (%p289) target = $region24
        $region23: #{tpu_custom_call.1} parent=11 // pred_region
          %293 = vsyncadd [#allocation6], 0
          %s295 = sshll.u32 %s3, 4
          %s296 = int_to_ptr.hbm [resolvable:$true] %s295
          %s297 = sshll.u32 [#allocation5], 4
          %s298 = int_to_ptr.vmem [resolvable:$true] %s297
          %300 = dma.hbm_to_vmem [thread:$0]  %s296, 32, %s298, [#allocation6]
        $region24: #{tpu_custom_call.1} parent=11 // pred_fallthru
          _
        // Predicated region
        $region25: #{tpu_custom_call.1} parent=11 // pred_check
          %p301 = pneg %p145
        $region26: #{tpu_custom_call.1} parent=11 // pred_check_branch
          %303 = sbr.rel (%p301) target = $region28
        $region27: #{tpu_custom_call.1} parent=11 // pred_region
          _
        $region28: #{tpu_custom_call.1} parent=11 // pred_fallthru
          _
        // Predicated region
        $region29: #{tpu_custom_call.1} parent=11 // pred_check
          %p304 = pneg %p166
        $region30: #{tpu_custom_call.1} parent=11 // pred_check_branch
          %306 = sbr.rel (%p304) target = $region32
        $region31: #{tpu_custom_call.1} parent=11 // pred_region
          %308 = vsyncadd [#allocation6], 0
          %s309 = sshll.u32 %s5, 4
          %s310 = int_to_ptr.hbm [resolvable:$true] %s309
          %s311 = sshll.u32 [#allocation7], 4
          %s312 = int_to_ptr.vmem [resolvable:$true] %s311
          %317 = dma.hbm_to_vmem [thread:$0]  %s310, 8192, %s312, [#allocation6], 256, 256, 16
        $region32: #{tpu_custom_call.1} parent=11 // pred_fallthru
          _
        // Predicated region
        $region33: #{tpu_custom_call.1} parent=11 // pred_check
          %p318 = pneg %p187
        $region34: #{tpu_custom_call.1} parent=11 // pred_check_branch
          %320 = sbr.rel (%p318) target = $region36
        $region35: #{tpu_custom_call.1} parent=11 // pred_region
          _
        $region36: #{tpu_custom_call.1} parent=11 // pred_fallthru
          _
        // Predicated region
        $region37: #{tpu_custom_call.1} parent=11 // pred_check
          %p321 = pneg %p208
        $region38: #{tpu_custom_call.1} parent=11 // pred_check_branch
          %323 = sbr.rel (%p321) target = $region40
        $region39: #{tpu_custom_call.1} parent=11 // pred_region
          %325 = vsyncadd [#allocation9], 0
          %s326 = sshll.u32 %s7, 4
          %s327 = int_to_ptr.hbm [resolvable:$true] %s326
          %s328 = sshll.u32 [#allocation8], 4
          %s329 = int_to_ptr.vmem [resolvable:$true] %s328
          %334 = dma.hbm_to_vmem [thread:$0]  %s327, 32768, %s329, [#allocation9], 512, 512, 32
        $region40: #{tpu_custom_call.1} parent=11 // pred_fallthru
          _
        // Predicated region
        $region41: #{tpu_custom_call.1} parent=11 // pred_check
          %p335 = pneg %p229
        $region42: #{tpu_custom_call.1} parent=11 // pred_check_branch
          %337 = sbr.rel (%p335) target = $region44
        $region43: #{tpu_custom_call.1} parent=11 // pred_region
          %339 = vsyncadd [#allocation9], 0
          %s341 = sshll.u32 %s8, 4
          %s342 = int_to_ptr.hbm [resolvable:$true] %s341
          %s343 = sshll.u32 [#allocation10], 4
          %s344 = int_to_ptr.vmem [resolvable:$true] %s343
          %346 = dma.hbm_to_vmem [thread:$0]  %s342, 128, %s344, [#allocation9]
        $region44: #{tpu_custom_call.1} parent=11 // pred_fallthru
          _
      $region12: #{tpu_custom_call.1} parent=5 // pred_fallthru
        _
      %p347 = scmp.lt.s32.totalorder %s21, 2
      // Predicated region
      $region45: #{tpu_custom_call.1} parent=5 // pred_check
        %p348 = pneg %p347
      $region46: #{tpu_custom_call.1} parent=5 // pred_check_branch
        %350 = sbr.rel (%p348) target = $region48
      $region47: #{tpu_custom_call.1} parent=5 // pred_region
        // Predicated region
        $region49: #{tpu_custom_call.1} parent=47 // pred_check
          %p351 = pneg %p55
        $region50: #{tpu_custom_call.1} parent=47 // pred_check_branch
          %353 = sbr.rel (%p351) target = $region52
        $region51: #{tpu_custom_call.1} parent=47 // pred_region
          %s354 = smul.u32 32, %s29
          %p355 = scmp.lt.s32.totalorder %s28, 1
          %s356 = scalar_select %p355, %s28, 1
          %p357 = scmp.lt.s32.totalorder %s354, 31
          %s358 = scalar_select %p357, %s354, 31
          %s359 = smul.addr %s356, 32
          %s360 = sadd.s32 %s358, %s359
          %s361 = smul.addr %s360, 4
          %s362 = scalar_lea.vmem %s0, %s361
          %s363 = smul.u32 32, %s29
        $region52: #{tpu_custom_call.1} parent=47 // pred_fallthru
          _
      $region48: #{tpu_custom_call.1} parent=5 // pred_fallthru
        _
      %p364 = scmp.le.s32.totalorder 1, %s21
      %p365 = scmp.lt.s32.totalorder %s21, 3
      %p366 = pnand %p364, %p365
      %p367 = pneg %p366
      // Predicated region
      $region53: #{tpu_custom_call.1} parent=5 // pred_check
        _
      $region54: #{tpu_custom_call.1} parent=5 // pred_check_branch
        %369 = sbr.rel (%p366) target = $region56
      $region55: #{tpu_custom_call.1} parent=5 // pred_region
        %s370 = ssub.s32 %s21, 1
        // Predicated region
        $region57: #{tpu_custom_call.1} parent=55 // pred_check
          %p371 = pneg %p82
        $region58: #{tpu_custom_call.1} parent=55 // pred_check_branch
          %373 = sbr.rel (%p371) target = $region60
        $region59: #{tpu_custom_call.1} parent=55 // pred_region
          %375 = dma.done [#allocation3], 512
        $region60: #{tpu_custom_call.1} parent=55 // pred_fallthru
          _
        // Predicated region
        $region61: #{tpu_custom_call.1} parent=55 // pred_check
          %p376 = pneg %p124
        $region62: #{tpu_custom_call.1} parent=55 // pred_check_branch
          %378 = sbr.rel (%p376) target = $region64
        $region63: #{tpu_custom_call.1} parent=55 // pred_region
          %380 = dma.done [#allocation6], 32
        $region64: #{tpu_custom_call.1} parent=55 // pred_fallthru
          _
        // Predicated region
        $region65: #{tpu_custom_call.1} parent=55 // pred_check
          %p381 = pneg %p166
        $region66: #{tpu_custom_call.1} parent=55 // pred_check_branch
          %383 = sbr.rel (%p381) target = $region68
        $region67: #{tpu_custom_call.1} parent=55 // pred_region
          %385 = dma.done [#allocation6], 8192
        $region68: #{tpu_custom_call.1} parent=55 // pred_fallthru
          _
        // Predicated region
        $region69: #{tpu_custom_call.1} parent=55 // pred_check
          %p386 = pneg %p208
        $region70: #{tpu_custom_call.1} parent=55 // pred_check_branch
          %388 = sbr.rel (%p386) target = $region72
        $region71: #{tpu_custom_call.1} parent=55 // pred_region
          %390 = dma.done [#allocation9], 32768
        $region72: #{tpu_custom_call.1} parent=55 // pred_fallthru
          _
        // Predicated region
        $region73: #{tpu_custom_call.1} parent=55 // pred_check
          %p391 = pneg %p229
        $region74: #{tpu_custom_call.1} parent=55 // pred_check_branch
          %393 = sbr.rel (%p391) target = $region76
        $region75: #{tpu_custom_call.1} parent=55 // pred_region
          %395 = dma.done [#allocation9], 128
        $region76: #{tpu_custom_call.1} parent=55 // pred_fallthru
          _
        %s396 = smul.u32 32, %s31
        %p397 = scmp.lt.s32.totalorder %s30, 1
        %s398 = scalar_select %p397, %s30, 1
        %p399 = scmp.lt.s32.totalorder %s396, 31
        %s400 = scalar_select %p399, %s396, 31
        %s401 = smul.addr %s398, 32
        %s402 = sadd.s32 %s400, %s401
        %s403 = smul.addr %s402, 4
        %s404 = scalar_lea.vmem %s0, %s403
        %p405 = pneg %p61
        %p406 = pneg %p58
        %p407 = pneg %p82
        %p408 = pneg %p79
        %p409 = pneg %p103
        %p410 = pneg %p100
        %p411 = pneg %p124
        %p412 = pneg %p121
        %p413 = pneg %p145
        %p414 = pneg %p142
        %p415 = pneg %p166
        %p416 = pneg %p163
        %p417 = pneg %p187
        %p418 = pneg %p184
        %p419 = pneg %p208
        %p420 = pneg %p205
        %p421 = pneg %p229
        %p422 = pneg %p226
        %p423 = pneg %p257
        %p424 = pneg %p254
        %s425 = sand.u32 %s244, 1
        %s426 = scalar_lea.sflag [#allocation4], %s425
        %s427 = sand.u32 %s244, 1
        %s428 = smul.addr %s427, 8
        %s429 = scalar_lea.vmem [#allocation11], %s428
        %s430 = smul.u32 32, %s31
        %p431 = scmp.lt.s32.totalorder %s30, 1
        %s432 = scalar_select %p431, %s30, 1
        %p433 = scmp.lt.s32.totalorder %s430, 31
        %s434 = scalar_select %p433, %s430, 31
        %s435 = smul.addr %s432, 32
        %s436 = sadd.s32 %s434, %s435
        %s437 = smul.addr %s436, 4
        %s438 = scalar_lea.vmem %s0, %s437
        %s439 = smul.u32 32, %s31
        %v441 = vld [vmem:[%s438] sm:$0xf]
        %v442 = vld [vmem:[%s438 + $0x4] sm:$0xf]
        %v443 = vld [vmem:[%s438 + $0x8] sm:$0xf]
        %v444 = vld [vmem:[%s438 + $0xc] sm:$0xf]
        %v445 = vld [vmem:[%s438 + $0x10] sm:$0xf]
        %v446 = vld [vmem:[%s438 + $0x14] sm:$0xf]
        %v447 = vld [vmem:[%s438 + $0x18] sm:$0xf]
        %v448 = vld [vmem:[%s438 + $0x1c] sm:$0xf]
        %v449 = vld [vmem:[%s438 + $0x20] sm:$0xf]
        %v450 = vld [vmem:[%s438 + $0x24] sm:$0xf]
        %v451 = vld [vmem:[%s438 + $0x28] sm:$0xf]
        %v452 = vld [vmem:[%s438 + $0x2c] sm:$0xf]
        %v453 = vld [vmem:[%s438 + $0x30] sm:$0xf]
        %v454 = vld [vmem:[%s438 + $0x34] sm:$0xf]
        %v455 = vld [vmem:[%s438 + $0x38] sm:$0xf]
        %v456 = vld [vmem:[%s438 + $0x3c] sm:$0xf]
        %v457 = vld [vmem:[%s438 + $0x40] sm:$0xf]
        %v458 = vld [vmem:[%s438 + $0x44] sm:$0xf]
        %v459 = vld [vmem:[%s438 + $0x48] sm:$0xf]
        %v460 = vld [vmem:[%s438 + $0x4c] sm:$0xf]
        %v461 = vld [vmem:[%s438 + $0x50] sm:$0xf]
        %v462 = vld [vmem:[%s438 + $0x54] sm:$0xf]
        %v463 = vld [vmem:[%s438 + $0x58] sm:$0xf]
        %v464 = vld [vmem:[%s438 + $0x5c] sm:$0xf]
        %v465 = vld [vmem:[%s438 + $0x60] sm:$0xf]
        %v466 = vld [vmem:[%s438 + $0x64] sm:$0xf]
        %v467 = vld [vmem:[%s438 + $0x68] sm:$0xf]
        %v468 = vld [vmem:[%s438 + $0x6c] sm:$0xf]
        %v469 = vld [vmem:[%s438 + $0x70] sm:$0xf]
        %v470 = vld [vmem:[%s438 + $0x74] sm:$0xf]
        %v471 = vld [vmem:[%s438 + $0x78] sm:$0xf]
        %v472 = vld [vmem:[%s438 + $0x7c] sm:$0xf]
        %v473 = vld [vmem:[#allocation2] sm:$0xf]
        %v474 = vld [vmem:[#allocation2 + $0x4] sm:$0xf]
        %v475 = vld [vmem:[#allocation2 + $0x8] sm:$0xf]
        %v476 = vld [vmem:[#allocation2 + $0xc] sm:$0xf]
        %v477 = vld [vmem:[#allocation2 + $0x10] sm:$0xf]
        %v478 = vld [vmem:[#allocation2 + $0x14] sm:$0xf]
        %v479 = vld [vmem:[#allocation2 + $0x18] sm:$0xf]
        %v480 = vld [vmem:[#allocation2 + $0x1c] sm:$0xf]
        %v513 = vunpack.c.l.b16 %v441
        %v514 = vunpack.c.l.b16 %v442
        %v515 = vunpack.c.l.b16 %v443
        %v516 = vunpack.c.l.b16 %v444
        %v517 = vunpack.c.l.b16 %v445
        %v518 = vunpack.c.l.b16 %v446
        %v519 = vunpack.c.l.b16 %v447
        %v520 = vunpack.c.l.b16 %v448
        %v521 = vunpack.c.l.b16 %v449
        %v522 = vunpack.c.l.b16 %v450
        %v523 = vunpack.c.l.b16 %v451
        %v524 = vunpack.c.l.b16 %v452
        %v525 = vunpack.c.l.b16 %v453
        %v526 = vunpack.c.l.b16 %v454
        %v527 = vunpack.c.l.b16 %v455
        %v528 = vunpack.c.l.b16 %v456
        %v529 = vunpack.c.l.b16 %v457
        %v530 = vunpack.c.l.b16 %v458
        %v531 = vunpack.c.l.b16 %v459
        %v532 = vunpack.c.l.b16 %v460
        %v533 = vunpack.c.l.b16 %v461
        %v534 = vunpack.c.l.b16 %v462
        %v535 = vunpack.c.l.b16 %v463
        %v536 = vunpack.c.l.b16 %v464
        %v537 = vunpack.c.l.b16 %v465
        %v538 = vunpack.c.l.b16 %v466
        %v539 = vunpack.c.l.b16 %v467
        %v540 = vunpack.c.l.b16 %v468
        %v541 = vunpack.c.l.b16 %v469
        %v542 = vunpack.c.l.b16 %v470
        %v543 = vunpack.c.l.b16 %v471
        %v544 = vunpack.c.l.b16 %v472
        %v545 = vpack.c.b16 %v514, %v513
        %v546 = vpack.c.b16 %v516, %v515
        %v547 = vpack.c.b16 %v518, %v517
        %v548 = vpack.c.b16 %v520, %v519
        %v549 = vpack.c.b16 %v522, %v521
        %v550 = vpack.c.b16 %v524, %v523
        %v551 = vpack.c.b16 %v526, %v525
        %v552 = vpack.c.b16 %v528, %v527
        %v553 = vpack.c.b16 %v530, %v529
        %v554 = vpack.c.b16 %v532, %v531
        %v555 = vpack.c.b16 %v534, %v533
        %v556 = vpack.c.b16 %v536, %v535
        %v557 = vpack.c.b16 %v538, %v537
        %v558 = vpack.c.b16 %v540, %v539
        %v559 = vpack.c.b16 %v542, %v541
        %v560 = vpack.c.b16 %v544, %v543
        %v569 = vunpack.c.l.b16 %v473
        %v570 = vunpack.c.l.b16 %v474
        %v571 = vunpack.c.l.b16 %v475
        %v572 = vunpack.c.l.b16 %v476
        %v573 = vunpack.c.l.b16 %v477
        %v574 = vunpack.c.l.b16 %v478
        %v575 = vunpack.c.l.b16 %v479
        %v576 = vunpack.c.l.b16 %v480
        %v577 = vpack.c.b16 %v570, %v569
        %v578 = vpack.c.b16 %v572, %v571
        %v579 = vpack.c.b16 %v574, %v573
        %v580 = vpack.c.b16 %v576, %v575
        %vm585 = vcmask 523264
        %v587 = vsel %vm585, %v545, 0
        %v590 = vsel %vm585, %v546, 0
        %v593 = vsel %vm585, %v547, 0
        %v596 = vsel %vm585, %v548, 0
        %v599 = vsel %vm585, %v549, 0
        %v602 = vsel %vm585, %v550, 0
        %v605 = vsel %vm585, %v551, 0
        %v608 = vsel %vm585, %v552, 0
        %v611 = vsel %vm585, %v553, 0
        %v614 = vsel %vm585, %v554, 0
        %v617 = vsel %vm585, %v555, 0
        %v620 = vsel %vm585, %v556, 0
        %v623 = vsel %vm585, %v557, 0
        %v626 = vsel %vm585, %v558, 0
        %v629 = vsel %vm585, %v559, 0
        %v632 = vsel %vm585, %v560, 0
        %634 = vmatpush.bf16.msra.mxu0 0
        %635 = vmatpush.bf16.msra.mxu0 0
        %636 = vmatpush.bf16.msra.mxu0 0
        %637 = vmatpush.bf16.msra.mxu0 0
        %638 = vmatpush.bf16.msra.mxu0 %v580
        %639 = vmatpush.bf16.msra.mxu0 %v579
        %640 = vmatpush.bf16.msra.mxu0 %v578
        %641 = vmatpush.bf16.msra.mxu0 %v577
        %642 = vmatmul.bf16.gmra.mxu0 %v587
        %v643 = vpop.f32.mrf.mxu0
        %v644 = vadd.f32 0.0, %v643
        %v645 = vpop.f32.mrf.mxu0
        %v646 = vadd.f32 0.0, %v645
        %647 = vmatmul.bf16.gmra.mxu0 %v590
        %v648 = vpop.f32.mrf.mxu0
        %v649 = vadd.f32 0.0, %v648
        %v650 = vpop.f32.mrf.mxu0
        %v651 = vadd.f32 0.0, %v650
        %652 = vmatmul.bf16.gmra.mxu0 %v593
        %v653 = vpop.f32.mrf.mxu0
        %v654 = vadd.f32 0.0, %v653
        %v655 = vpop.f32.mrf.mxu0
        %v656 = vadd.f32 0.0, %v655
        %657 = vmatmul.bf16.gmra.mxu0 %v596
        %v658 = vpop.f32.mrf.mxu0
        %v659 = vadd.f32 0.0, %v658
        %v660 = vpop.f32.mrf.mxu0
        %v661 = vadd.f32 0.0, %v660
        %662 = vmatmul.bf16.gmra.mxu0 %v599
        %v663 = vpop.f32.mrf.mxu0
        %v664 = vadd.f32 0.0, %v663
        %v665 = vpop.f32.mrf.mxu0
        %v666 = vadd.f32 0.0, %v665
        %667 = vmatmul.bf16.gmra.mxu0 %v602
        %v668 = vpop.f32.mrf.mxu0
        %v669 = vadd.f32 0.0, %v668
        %v670 = vpop.f32.mrf.mxu0
        %v671 = vadd.f32 0.0, %v670
        %672 = vmatmul.bf16.gmra.mxu0 %v605
        %v673 = vpop.f32.mrf.mxu0
        %v674 = vadd.f32 0.0, %v673
        %v675 = vpop.f32.mrf.mxu0
        %v676 = vadd.f32 0.0, %v675
        %677 = vmatmul.bf16.gmra.mxu0 %v608
        %v678 = vpop.f32.mrf.mxu0
        %v679 = vadd.f32 0.0, %v678
        %v680 = vpop.f32.mrf.mxu0
        %v681 = vadd.f32 0.0, %v680
        %682 = vmatmul.bf16.gmra.mxu0 %v611
        %v683 = vpop.f32.mrf.mxu0
        %v684 = vadd.f32 0.0, %v683
        %v685 = vpop.f32.mrf.mxu0
        %v686 = vadd.f32 0.0, %v685
        %687 = vmatmul.bf16.gmra.mxu0 %v614
        %v688 = vpop.f32.mrf.mxu0
        %v689 = vadd.f32 0.0, %v688
        %v690 = vpop.f32.mrf.mxu0
        %v691 = vadd.f32 0.0, %v690
        %692 = vmatmul.bf16.gmra.mxu0 %v617
        %v693 = vpop.f32.mrf.mxu0
        %v694 = vadd.f32 0.0, %v693
        %v695 = vpop.f32.mrf.mxu0
        %v696 = vadd.f32 0.0, %v695
        %697 = vmatmul.bf16.gmra.mxu0 %v620
        %v698 = vpop.f32.mrf.mxu0
        %v699 = vadd.f32 0.0, %v698
        %v700 = vpop.f32.mrf.mxu0
        %v701 = vadd.f32 0.0, %v700
        %702 = vmatmul.bf16.gmra.mxu0 %v623
        %v703 = vpop.f32.mrf.mxu0
        %v704 = vadd.f32 0.0, %v703
        %v705 = vpop.f32.mrf.mxu0
        %v706 = vadd.f32 0.0, %v705
        %707 = vmatmul.bf16.gmra.mxu0 %v626
        %v708 = vpop.f32.mrf.mxu0
        %v709 = vadd.f32 0.0, %v708
        %v710 = vpop.f32.mrf.mxu0
        %v711 = vadd.f32 0.0, %v710
        %712 = vmatmul.bf16.gmra.mxu0 %v629
        %v713 = vpop.f32.mrf.mxu0
        %v714 = vadd.f32 0.0, %v713
        %v715 = vpop.f32.mrf.mxu0
        %v716 = vadd.f32 0.0, %v715
        %717 = vmatmul.bf16.gmra.mxu0 %v632
        %v718 = vpop.f32.mrf.mxu0
        %v719 = vadd.f32 0.0, %v718
        %v720 = vpop.f32.mrf.mxu0
        %v721 = vadd.f32 0.0, %v720
        %722 = vdwg.mxu0
        %v723 = vmax.f32 %v644, 0.0
        %v724 = vmax.f32 %v646, 0.0
        %v725 = vmax.f32 %v649, 0.0
        %v726 = vmax.f32 %v651, 0.0
        %v727 = vmax.f32 %v654, 0.0
        %v728 = vmax.f32 %v656, 0.0
        %v729 = vmax.f32 %v659, 0.0
        %v730 = vmax.f32 %v661, 0.0
        %v731 = vmax.f32 %v664, 0.0
        %v732 = vmax.f32 %v666, 0.0
        %v733 = vmax.f32 %v669, 0.0
        %v734 = vmax.f32 %v671, 0.0
        %v735 = vmax.f32 %v674, 0.0
        %v736 = vmax.f32 %v676, 0.0
        %v737 = vmax.f32 %v679, 0.0
        %v738 = vmax.f32 %v681, 0.0
        %v739 = vmax.f32 %v684, 0.0
        %v740 = vmax.f32 %v686, 0.0
        %v741 = vmax.f32 %v689, 0.0
        %v742 = vmax.f32 %v691, 0.0
        %v743 = vmax.f32 %v694, 0.0
        %v744 = vmax.f32 %v696, 0.0
        %v745 = vmax.f32 %v699, 0.0
        %v746 = vmax.f32 %v701, 0.0
        %v747 = vmax.f32 %v704, 0.0
        %v748 = vmax.f32 %v706, 0.0
        %v749 = vmax.f32 %v709, 0.0
        %v750 = vmax.f32 %v711, 0.0
        %v751 = vmax.f32 %v714, 0.0
        %v752 = vmax.f32 %v716, 0.0
        %v753 = vmax.f32 %v719, 0.0
        %v754 = vmax.f32 %v721, 0.0
        %v755 = vpack.c.bf16 %v724, %v723
        %v756 = vpack.c.bf16 %v726, %v725
        %v757 = vpack.c.bf16 %v728, %v727
        %v758 = vpack.c.bf16 %v730, %v729
        %v759 = vpack.c.bf16 %v732, %v731
        %v760 = vpack.c.bf16 %v734, %v733
        %v761 = vpack.c.bf16 %v736, %v735
        %v762 = vpack.c.bf16 %v738, %v737
        %v763 = vpack.c.bf16 %v740, %v739
        %v764 = vpack.c.bf16 %v742, %v741
        %v765 = vpack.c.bf16 %v744, %v743
        %v766 = vpack.c.bf16 %v746, %v745
        %v767 = vpack.c.bf16 %v748, %v747
        %v768 = vpack.c.bf16 %v750, %v749
        %v769 = vpack.c.bf16 %v752, %v751
        %v770 = vpack.c.bf16 %v754, %v753
        %v771 = vld [vmem:[%s2] sm:$0xff]
        %v772 = vld [vmem:[%s2 + $0x8] sm:$0xff]
        %v773 = vld [vmem:[%s2 + $0x10] sm:$0xff]
        %v774 = vld [vmem:[%s2 + $0x18] sm:$0xff]
        %v775 = vld [vmem:[%s2 + $0x20] sm:$0xff]
        %v776 = vld [vmem:[%s2 + $0x28] sm:$0xff]
        %v777 = vld [vmem:[%s2 + $0x30] sm:$0xff]
        %v778 = vld [vmem:[%s2 + $0x38] sm:$0xff]
        %v779 = vld [vmem:[%s2 + $0x40] sm:$0xff]
        %v780 = vld [vmem:[%s2 + $0x48] sm:$0xff]
        %v781 = vld [vmem:[%s2 + $0x50] sm:$0xff]
        %v782 = vld [vmem:[%s2 + $0x58] sm:$0xff]
        %v783 = vld [vmem:[%s2 + $0x60] sm:$0xff]
        %v784 = vld [vmem:[%s2 + $0x68] sm:$0xff]
        %v785 = vld [vmem:[%s2 + $0x70] sm:$0xff]
        %v786 = vld [vmem:[%s2 + $0x78] sm:$0xff]
        %v787 = vld [vmem:[#allocation5] sm:$0x3]
        %v789 = vperm.slane %v787, 0
        %v790 = vperm.slane %v787, 1
        %v809 = vunpack.c.l.b16 %v771
        %v810 = vunpack.c.h.b16 %v771
        %v811 = vunpack.c.l.b16 %v772
        %v812 = vunpack.c.h.b16 %v772
        %v813 = vunpack.c.l.b16 %v773
        %v814 = vunpack.c.h.b16 %v773
        %v815 = vunpack.c.l.b16 %v774
        %v816 = vunpack.c.h.b16 %v774
        %v817 = vunpack.c.l.b16 %v775
        %v818 = vunpack.c.h.b16 %v775
        %v819 = vunpack.c.l.b16 %v776
        %v820 = vunpack.c.h.b16 %v776
        %v821 = vunpack.c.l.b16 %v777
        %v822 = vunpack.c.h.b16 %v777
        %v823 = vunpack.c.l.b16 %v778
        %v824 = vunpack.c.h.b16 %v778
        %v825 = vunpack.c.l.b16 %v779
        %v826 = vunpack.c.h.b16 %v779
        %v827 = vunpack.c.l.b16 %v780
        %v828 = vunpack.c.h.b16 %v780
        %v829 = vunpack.c.l.b16 %v781
        %v830 = vunpack.c.h.b16 %v781
        %v831 = vunpack.c.l.b16 %v782
        %v832 = vunpack.c.h.b16 %v782
        %v833 = vunpack.c.l.b16 %v783
        %v834 = vunpack.c.h.b16 %v783
        %v835 = vunpack.c.l.b16 %v784
        %v836 = vunpack.c.h.b16 %v784
        %v837 = vunpack.c.l.b16 %v785
        %v838 = vunpack.c.h.b16 %v785
        %v839 = vunpack.c.l.b16 %v786
        %v840 = vunpack.c.h.b16 %v786
        %v841 = vpack.c.b16 %v811, %v809
        %v842 = vpack.c.b16 %v812, %v810
        %v843 = vpack.c.b16 %v815, %v813
        %v844 = vpack.c.b16 %v816, %v814
        %v845 = vpack.c.b16 %v819, %v817
        %v846 = vpack.c.b16 %v820, %v818
        %v847 = vpack.c.b16 %v823, %v821
        %v848 = vpack.c.b16 %v824, %v822
        %v849 = vpack.c.b16 %v827, %v825
        %v850 = vpack.c.b16 %v828, %v826
        %v851 = vpack.c.b16 %v831, %v829
        %v852 = vpack.c.b16 %v832, %v830
        %v853 = vpack.c.b16 %v835, %v833
        %v854 = vpack.c.b16 %v836, %v834
        %v855 = vpack.c.b16 %v839, %v837
        %v856 = vpack.c.b16 %v840, %v838
        %873 = vmatpush.bf16.msra.mxu0 %v855
        %874 = vmatpush.bf16.msra.mxu0 %v853
        %875 = vmatpush.bf16.msra.mxu0 %v851
        %876 = vmatpush.bf16.msra.mxu0 %v849
        %877 = vmatpush.bf16.msra.mxu0 %v847
        %878 = vmatpush.bf16.msra.mxu0 %v845
        %879 = vmatpush.bf16.msra.mxu0 %v843
        %880 = vmatpush.bf16.msra.mxu0 %v841
        %881 = vmatmul.bf16.gmra.mxu0 %v755
        %v882 = vpop.f32.mrf.mxu0
        %v883 = vadd.f32 %v789, %v882
        %v884 = vpop.f32.mrf.mxu0
        %v885 = vadd.f32 %v789, %v884
        %886 = vmatmul.bf16.gmra.mxu0 %v756
        %v887 = vpop.f32.mrf.mxu0
        %v888 = vadd.f32 %v789, %v887
        %v889 = vpop.f32.mrf.mxu0
        %v890 = vadd.f32 %v789, %v889
        %891 = vmatmul.bf16.gmra.mxu0 %v757
        %v892 = vpop.f32.mrf.mxu0
        %v893 = vadd.f32 %v789, %v892
        %v894 = vpop.f32.mrf.mxu0
        %v895 = vadd.f32 %v789, %v894
        %896 = vmatmul.bf16.gmra.mxu0 %v758
        %v897 = vpop.f32.mrf.mxu0
        %v898 = vadd.f32 %v789, %v897
        %v899 = vpop.f32.mrf.mxu0
        %v900 = vadd.f32 %v789, %v899
        %901 = vmatmul.bf16.gmra.mxu0 %v759
        %v902 = vpop.f32.mrf.mxu0
        %v903 = vadd.f32 %v789, %v902
        %v904 = vpop.f32.mrf.mxu0
        %v905 = vadd.f32 %v789, %v904
        %906 = vmatmul.bf16.gmra.mxu0 %v760
        %v907 = vpop.f32.mrf.mxu0
        %v908 = vadd.f32 %v789, %v907
        %v909 = vpop.f32.mrf.mxu0
        %v910 = vadd.f32 %v789, %v909
        %911 = vmatmul.bf16.gmra.mxu0 %v761
        %v912 = vpop.f32.mrf.mxu0
        %v913 = vadd.f32 %v789, %v912
        %v914 = vpop.f32.mrf.mxu0
        %v915 = vadd.f32 %v789, %v914
        %916 = vmatmul.bf16.gmra.mxu0 %v762
        %v917 = vpop.f32.mrf.mxu0
        %v918 = vadd.f32 %v789, %v917
        %v919 = vpop.f32.mrf.mxu0
        %v920 = vadd.f32 %v789, %v919
        %921 = vmatmul.bf16.gmra.mxu0 %v763
        %v922 = vpop.f32.mrf.mxu0
        %v923 = vadd.f32 %v789, %v922
        %v924 = vpop.f32.mrf.mxu0
        %v925 = vadd.f32 %v789, %v924
        %926 = vmatmul.bf16.gmra.mxu0 %v764
        %v927 = vpop.f32.mrf.mxu0
        %v928 = vadd.f32 %v789, %v927
        %v929 = vpop.f32.mrf.mxu0
        %v930 = vadd.f32 %v789, %v929
        %931 = vmatmul.bf16.gmra.mxu0 %v765
        %v932 = vpop.f32.mrf.mxu0
        %v933 = vadd.f32 %v789, %v932
        %v934 = vpop.f32.mrf.mxu0
        %v935 = vadd.f32 %v789, %v934
        %936 = vmatmul.bf16.gmra.mxu0 %v766
        %v937 = vpop.f32.mrf.mxu0
        %v938 = vadd.f32 %v789, %v937
        %v939 = vpop.f32.mrf.mxu0
        %v940 = vadd.f32 %v789, %v939
        %941 = vmatmul.bf16.gmra.mxu0 %v767
        %v942 = vpop.f32.mrf.mxu0
        %v943 = vadd.f32 %v789, %v942
        %v944 = vpop.f32.mrf.mxu0
        %v945 = vadd.f32 %v789, %v944
        %946 = vmatmul.bf16.gmra.mxu0 %v768
        %v947 = vpop.f32.mrf.mxu0
        %v948 = vadd.f32 %v789, %v947
        %v949 = vpop.f32.mrf.mxu0
        %v950 = vadd.f32 %v789, %v949
        %951 = vmatmul.bf16.gmra.mxu0 %v769
        %v952 = vpop.f32.mrf.mxu0
        %v953 = vadd.f32 %v789, %v952
        %v954 = vpop.f32.mrf.mxu0
        %v955 = vadd.f32 %v789, %v954
        %956 = vmatmul.bf16.gmra.mxu0 %v770
        %v957 = vpop.f32.mrf.mxu0
        %v958 = vadd.f32 %v789, %v957
        %v959 = vpop.f32.mrf.mxu0
        %v960 = vadd.f32 %v789, %v959
        %961 = vdwg.mxu0
        %962 = vmatpush.bf16.msra.mxu0 %v856
        %963 = vmatpush.bf16.msra.mxu0 %v854
        %964 = vmatpush.bf16.msra.mxu0 %v852
        %965 = vmatpush.bf16.msra.mxu0 %v850
        %966 = vmatpush.bf16.msra.mxu0 %v848
        %967 = vmatpush.bf16.msra.mxu0 %v846
        %968 = vmatpush.bf16.msra.mxu0 %v844
        %969 = vmatpush.bf16.msra.mxu0 %v842
        %970 = vmatmul.bf16.gmra.mxu0 %v755
        %v971 = vpop.f32.mrf.mxu0
        %v972 = vadd.f32 %v790, %v971
        %v973 = vpop.f32.mrf.mxu0
        %v974 = vadd.f32 %v790, %v973
        %975 = vmatmul.bf16.gmra.mxu0 %v756
        %v976 = vpop.f32.mrf.mxu0
        %v977 = vadd.f32 %v790, %v976
        %v978 = vpop.f32.mrf.mxu0
        %v979 = vadd.f32 %v790, %v978
        %980 = vmatmul.bf16.gmra.mxu0 %v757
        %v981 = vpop.f32.mrf.mxu0
        %v982 = vadd.f32 %v790, %v981
        %v983 = vpop.f32.mrf.mxu0
        %v984 = vadd.f32 %v790, %v983
        %985 = vmatmul.bf16.gmra.mxu0 %v758
        %v986 = vpop.f32.mrf.mxu0
        %v987 = vadd.f32 %v790, %v986
        %v988 = vpop.f32.mrf.mxu0
        %v989 = vadd.f32 %v790, %v988
        %990 = vmatmul.bf16.gmra.mxu0 %v759
        %v991 = vpop.f32.mrf.mxu0
        %v992 = vadd.f32 %v790, %v991
        %v993 = vpop.f32.mrf.mxu0
        %v994 = vadd.f32 %v790, %v993
        %995 = vmatmul.bf16.gmra.mxu0 %v760
        %v996 = vpop.f32.mrf.mxu0
        %v997 = vadd.f32 %v790, %v996
        %v998 = vpop.f32.mrf.mxu0
        %v999 = vadd.f32 %v790, %v998
        %1000 = vmatmul.bf16.gmra.mxu0 %v761
        %v1001 = vpop.f32.mrf.mxu0
        %v1002 = vadd.f32 %v790, %v1001
        %v1003 = vpop.f32.mrf.mxu0
        %v1004 = vadd.f32 %v790, %v1003
        %1005 = vmatmul.bf16.gmra.mxu0 %v762
        %v1006 = vpop.f32.mrf.mxu0
        %v1007 = vadd.f32 %v790, %v1006
        %v1008 = vpop.f32.mrf.mxu0
        %v1009 = vadd.f32 %v790, %v1008
        %1010 = vmatmul.bf16.gmra.mxu0 %v763
        %v1011 = vpop.f32.mrf.mxu0
        %v1012 = vadd.f32 %v790, %v1011
        %v1013 = vpop.f32.mrf.mxu0
        %v1014 = vadd.f32 %v790, %v1013
        %1015 = vmatmul.bf16.gmra.mxu0 %v764
        %v1016 = vpop.f32.mrf.mxu0
        %v1017 = vadd.f32 %v790, %v1016
        %v1018 = vpop.f32.mrf.mxu0
        %v1019 = vadd.f32 %v790, %v1018
        %1020 = vmatmul.bf16.gmra.mxu0 %v765
        %v1021 = vpop.f32.mrf.mxu0
        %v1022 = vadd.f32 %v790, %v1021
        %v1023 = vpop.f32.mrf.mxu0
        %v1024 = vadd.f32 %v790, %v1023
        %1025 = vmatmul.bf16.gmra.mxu0 %v766
        %v1026 = vpop.f32.mrf.mxu0
        %v1027 = vadd.f32 %v790, %v1026
        %v1028 = vpop.f32.mrf.mxu0
        %v1029 = vadd.f32 %v790, %v1028
        %1030 = vmatmul.bf16.gmra.mxu0 %v767
        %v1031 = vpop.f32.mrf.mxu0
        %v1032 = vadd.f32 %v790, %v1031
        %v1033 = vpop.f32.mrf.mxu0
        %v1034 = vadd.f32 %v790, %v1033
        %1035 = vmatmul.bf16.gmra.mxu0 %v768
        %v1036 = vpop.f32.mrf.mxu0
        %v1037 = vadd.f32 %v790, %v1036
        %v1038 = vpop.f32.mrf.mxu0
        %v1039 = vadd.f32 %v790, %v1038
        %1040 = vmatmul.bf16.gmra.mxu0 %v769
        %v1041 = vpop.f32.mrf.mxu0
        %v1042 = vadd.f32 %v790, %v1041
        %v1043 = vpop.f32.mrf.mxu0
        %v1044 = vadd.f32 %v790, %v1043
        %1045 = vmatmul.bf16.gmra.mxu0 %v770
        %v1046 = vpop.f32.mrf.mxu0
        %v1047 = vadd.f32 %v790, %v1046
        %v1048 = vpop.f32.mrf.mxu0
        %v1049 = vadd.f32 %v790, %v1048
        %1050 = vdwg.mxu0
        %v1051 = vmax.f32 %v883, 0.0
        %v1052 = vmax.f32 %v972, 0.0
        %v1053 = vmax.f32 %v885, 0.0
        %v1054 = vmax.f32 %v974, 0.0
        %v1055 = vmax.f32 %v888, 0.0
        %v1056 = vmax.f32 %v977, 0.0
        %v1057 = vmax.f32 %v890, 0.0
        %v1058 = vmax.f32 %v979, 0.0
        %v1059 = vmax.f32 %v893, 0.0
        %v1060 = vmax.f32 %v982, 0.0
        %v1061 = vmax.f32 %v895, 0.0
        %v1062 = vmax.f32 %v984, 0.0
        %v1063 = vmax.f32 %v898, 0.0
        %v1064 = vmax.f32 %v987, 0.0
        %v1065 = vmax.f32 %v900, 0.0
        %v1066 = vmax.f32 %v989, 0.0
        %v1067 = vmax.f32 %v903, 0.0
        %v1068 = vmax.f32 %v992, 0.0
        %v1069 = vmax.f32 %v905, 0.0
        %v1070 = vmax.f32 %v994, 0.0
        %v1071 = vmax.f32 %v908, 0.0
        %v1072 = vmax.f32 %v997, 0.0
        %v1073 = vmax.f32 %v910, 0.0
        %v1074 = vmax.f32 %v999, 0.0
        %v1075 = vmax.f32 %v913, 0.0
        %v1076 = vmax.f32 %v1002, 0.0
        %v1077 = vmax.f32 %v915, 0.0
        %v1078 = vmax.f32 %v1004, 0.0
        %v1079 = vmax.f32 %v918, 0.0
        %v1080 = vmax.f32 %v1007, 0.0
        %v1081 = vmax.f32 %v920, 0.0
        %v1082 = vmax.f32 %v1009, 0.0
        %v1083 = vmax.f32 %v923, 0.0
        %v1084 = vmax.f32 %v1012, 0.0
        %v1085 = vmax.f32 %v925, 0.0
        %v1086 = vmax.f32 %v1014, 0.0
        %v1087 = vmax.f32 %v928, 0.0
        %v1088 = vmax.f32 %v1017, 0.0
        %v1089 = vmax.f32 %v930, 0.0
        %v1090 = vmax.f32 %v1019, 0.0
        %v1091 = vmax.f32 %v933, 0.0
        %v1092 = vmax.f32 %v1022, 0.0
        %v1093 = vmax.f32 %v935, 0.0
        %v1094 = vmax.f32 %v1024, 0.0
        %v1095 = vmax.f32 %v938, 0.0
        %v1096 = vmax.f32 %v1027, 0.0
        %v1097 = vmax.f32 %v940, 0.0
        %v1098 = vmax.f32 %v1029, 0.0
        %v1099 = vmax.f32 %v943, 0.0
        %v1100 = vmax.f32 %v1032, 0.0
        %v1101 = vmax.f32 %v945, 0.0
        %v1102 = vmax.f32 %v1034, 0.0
        %v1103 = vmax.f32 %v948, 0.0
        %v1104 = vmax.f32 %v1037, 0.0
        %v1105 = vmax.f32 %v950, 0.0
        %v1106 = vmax.f32 %v1039, 0.0
        %v1107 = vmax.f32 %v953, 0.0
        %v1108 = vmax.f32 %v1042, 0.0
        %v1109 = vmax.f32 %v955, 0.0
        %v1110 = vmax.f32 %v1044, 0.0
        %v1111 = vmax.f32 %v958, 0.0
        %v1112 = vmax.f32 %v1047, 0.0
        %v1113 = vmax.f32 %v960, 0.0
        %v1114 = vmax.f32 %v1049, 0.0
        %v1115 = vpack.c.bf16 %v1053, %v1051
        %v1116 = vpack.c.bf16 %v1054, %v1052
        %v1117 = vpack.c.bf16 %v1057, %v1055
        %v1118 = vpack.c.bf16 %v1058, %v1056
        %v1119 = vpack.c.bf16 %v1061, %v1059
        %v1120 = vpack.c.bf16 %v1062, %v1060
        %v1121 = vpack.c.bf16 %v1065, %v1063
        %v1122 = vpack.c.bf16 %v1066, %v1064
        %v1123 = vpack.c.bf16 %v1069, %v1067
        %v1124 = vpack.c.bf16 %v1070, %v1068
        %v1125 = vpack.c.bf16 %v1073, %v1071
        %v1126 = vpack.c.bf16 %v1074, %v1072
        %v1127 = vpack.c.bf16 %v1077, %v1075
        %v1128 = vpack.c.bf16 %v1078, %v1076
        %v1129 = vpack.c.bf16 %v1081, %v1079
        %v1130 = vpack.c.bf16 %v1082, %v1080
        %v1131 = vpack.c.bf16 %v1085, %v1083
        %v1132 = vpack.c.bf16 %v1086, %v1084
        %v1133 = vpack.c.bf16 %v1089, %v1087
        %v1134 = vpack.c.bf16 %v1090, %v1088
        %v1135 = vpack.c.bf16 %v1093, %v1091
        %v1136 = vpack.c.bf16 %v1094, %v1092
        %v1137 = vpack.c.bf16 %v1097, %v1095
        %v1138 = vpack.c.bf16 %v1098, %v1096
        %v1139 = vpack.c.bf16 %v1101, %v1099
        %v1140 = vpack.c.bf16 %v1102, %v1100
        %v1141 = vpack.c.bf16 %v1105, %v1103
        %v1142 = vpack.c.bf16 %v1106, %v1104
        %v1143 = vpack.c.bf16 %v1109, %v1107
        %v1144 = vpack.c.bf16 %v1110, %v1108
        %v1145 = vpack.c.bf16 %v1113, %v1111
        %v1146 = vpack.c.bf16 %v1114, %v1112
        %v1147 = vld [vmem:[%s4] sm:$0xff]
        %v1148 = vld [vmem:[%s4 + $0x8] sm:$0xff]
        %v1149 = vld [vmem:[%s4 + $0x10] sm:$0xff]
        %v1150 = vld [vmem:[%s4 + $0x18] sm:$0xff]
        %v1151 = vld [vmem:[%s4 + $0x20] sm:$0xff]
        %v1152 = vld [vmem:[%s4 + $0x28] sm:$0xff]
        %v1153 = vld [vmem:[%s4 + $0x30] sm:$0xff]
        %v1154 = vld [vmem:[%s4 + $0x38] sm:$0xff]
        %v1155 = vld [vmem:[%s4 + $0x40] sm:$0xff]
        %v1156 = vld [vmem:[%s4 + $0x48] sm:$0xff]
        %v1157 = vld [vmem:[%s4 + $0x50] sm:$0xff]
        %v1158 = vld [vmem:[%s4 + $0x58] sm:$0xff]
        %v1159 = vld [vmem:[%s4 + $0x60] sm:$0xff]
        %v1160 = vld [vmem:[%s4 + $0x68] sm:$0xff]
        %v1161 = vld [vmem:[%s4 + $0x70] sm:$0xff]
        %v1162 = vld [vmem:[%s4 + $0x78] sm:$0xff]
        %v1163 = vld [vmem:[%s4 + $0x80] sm:$0xff]
        %v1164 = vld [vmem:[%s4 + $0x88] sm:$0xff]
        %v1165 = vld [vmem:[%s4 + $0x90] sm:$0xff]
        %v1166 = vld [vmem:[%s4 + $0x98] sm:$0xff]
        %v1167 = vld [vmem:[%s4 + $0xa0] sm:$0xff]
        %v1168 = vld [vmem:[%s4 + $0xa8] sm:$0xff]
        %v1169 = vld [vmem:[%s4 + $0xb0] sm:$0xff]
        %v1170 = vld [vmem:[%s4 + $0xb8] sm:$0xff]
        %v1171 = vld [vmem:[%s4 + $0xc0] sm:$0xff]
        %v1172 = vld [vmem:[%s4 + $0xc8] sm:$0xff]
        %v1173 = vld [vmem:[%s4 + $0xd0] sm:$0xff]
        %v1174 = vld [vmem:[%s4 + $0xd8] sm:$0xff]
        %v1175 = vld [vmem:[%s4 + $0xe0] sm:$0xff]
        %v1176 = vld [vmem:[%s4 + $0xe8] sm:$0xff]
        %v1177 = vld [vmem:[%s4 + $0xf0] sm:$0xff]
        %v1178 = vld [vmem:[%s4 + $0xf8] sm:$0xff]
        %v1179 = vld [vmem:[#allocation7] sm:$0xff]
        %v1180 = vld [vmem:[#allocation7 + $0x8] sm:$0xff]
        %v1181 = vld [vmem:[#allocation7 + $0x10] sm:$0xff]
        %v1182 = vld [vmem:[#allocation7 + $0x18] sm:$0xff]
        %v1183 = vld [vmem:[#allocation7 + $0x20] sm:$0xff]
        %v1184 = vld [vmem:[#allocation7 + $0x28] sm:$0xff]
        %v1185 = vld [vmem:[#allocation7 + $0x30] sm:$0xff]
        %v1186 = vld [vmem:[#allocation7 + $0x38] sm:$0xff]
        %v1187 = vld [vmem:[#allocation7 + $0x40] sm:$0xff]
        %v1188 = vld [vmem:[#allocation7 + $0x48] sm:$0xff]
        %v1189 = vld [vmem:[#allocation7 + $0x50] sm:$0xff]
        %v1190 = vld [vmem:[#allocation7 + $0x58] sm:$0xff]
        %v1191 = vld [vmem:[#allocation7 + $0x60] sm:$0xff]
        %v1192 = vld [vmem:[#allocation7 + $0x68] sm:$0xff]
        %v1193 = vld [vmem:[#allocation7 + $0x70] sm:$0xff]
        %v1194 = vld [vmem:[#allocation7 + $0x78] sm:$0xff]
        %v1195 = vld [vmem:[#allocation7 + $0x80] sm:$0xff]
        %v1196 = vld [vmem:[#allocation7 + $0x88] sm:$0xff]
        %v1197 = vld [vmem:[#allocation7 + $0x90] sm:$0xff]
        %v1198 = vld [vmem:[#allocation7 + $0x98] sm:$0xff]
        %v1199 = vld [vmem:[#allocation7 + $0xa0] sm:$0xff]
        %v1200 = vld [vmem:[#allocation7 + $0xa8] sm:$0xff]
        %v1201 = vld [vmem:[#allocation7 + $0xb0] sm:$0xff]
        %v1202 = vld [vmem:[#allocation7 + $0xb8] sm:$0xff]
        %v1203 = vld [vmem:[#allocation7 + $0xc0] sm:$0xff]
        %v1204 = vld [vmem:[#allocation7 + $0xc8] sm:$0xff]
        %v1205 = vld [vmem:[#allocation7 + $0xd0] sm:$0xff]
        %v1206 = vld [vmem:[#allocation7 + $0xd8] sm:$0xff]
        %v1207 = vld [vmem:[#allocation7 + $0xe0] sm:$0xff]
        %v1208 = vld [vmem:[#allocation7 + $0xe8] sm:$0xff]
        %v1209 = vld [vmem:[#allocation7 + $0xf0] sm:$0xff]
        %v1210 = vld [vmem:[#allocation7 + $0xf8] sm:$0xff]
        %v1211 = vld [vmem:[#allocation7 + $0x100] sm:$0xff]
        %v1212 = vld [vmem:[#allocation7 + $0x108] sm:$0xff]
        %v1213 = vld [vmem:[#allocation7 + $0x110] sm:$0xff]
        %v1214 = vld [vmem:[#allocation7 + $0x118] sm:$0xff]
        %v1215 = vld [vmem:[#allocation7 + $0x120] sm:$0xff]
        %v1216 = vld [vmem:[#allocation7 + $0x128] sm:$0xff]
        %v1217 = vld [vmem:[#allocation7 + $0x130] sm:$0xff]
        %v1218 = vld [vmem:[#allocation7 + $0x138] sm:$0xff]
        %v1219 = vld [vmem:[#allocation7 + $0x140] sm:$0xff]
        %v1220 = vld [vmem:[#allocation7 + $0x148] sm:$0xff]
        %v1221 = vld [vmem:[#allocation7 + $0x150] sm:$0xff]
        %v1222 = vld [vmem:[#allocation7 + $0x158] sm:$0xff]
        %v1223 = vld [vmem:[#allocation7 + $0x160] sm:$0xff]
        %v1224 = vld [vmem:[#allocation7 + $0x168] sm:$0xff]
        %v1225 = vld [vmem:[#allocation7 + $0x170] sm:$0xff]
        %v1226 = vld [vmem:[#allocation7 + $0x178] sm:$0xff]
        %v1227 = vld [vmem:[#allocation7 + $0x180] sm:$0xff]
        %v1228 = vld [vmem:[#allocation7 + $0x188] sm:$0xff]
        %v1229 = vld [vmem:[#allocation7 + $0x190] sm:$0xff]
        %v1230 = vld [vmem:[#allocation7 + $0x198] sm:$0xff]
        %v1231 = vld [vmem:[#allocation7 + $0x1a0] sm:$0xff]
        %v1232 = vld [vmem:[#allocation7 + $0x1a8] sm:$0xff]
        %v1233 = vld [vmem:[#allocation7 + $0x1b0] sm:$0xff]
        %v1234 = vld [vmem:[#allocation7 + $0x1b8] sm:$0xff]
        %v1235 = vld [vmem:[#allocation7 + $0x1c0] sm:$0xff]
        %v1236 = vld [vmem:[#allocation7 + $0x1c8] sm:$0xff]
        %v1237 = vld [vmem:[#allocation7 + $0x1d0] sm:$0xff]
        %v1238 = vld [vmem:[#allocation7 + $0x1d8] sm:$0xff]
        %v1239 = vld [vmem:[#allocation7 + $0x1e0] sm:$0xff]
        %v1240 = vld [vmem:[#allocation7 + $0x1e8] sm:$0xff]
        %v1241 = vld [vmem:[#allocation7 + $0x1f0] sm:$0xff]
        %v1242 = vld [vmem:[#allocation7 + $0x1f8] sm:$0xff]
        %v1307 = vunpack.c.l.b16 %v1179
        %v1308 = vunpack.c.h.b16 %v1179
        %v1309 = vunpack.c.l.b16 %v1180
        %v1310 = vunpack.c.h.b16 %v1180
        %v1311 = vunpack.c.l.b16 %v1181
        %v1312 = vunpack.c.h.b16 %v1181
        %v1313 = vunpack.c.l.b16 %v1182
        %v1314 = vunpack.c.h.b16 %v1182
        %v1315 = vunpack.c.l.b16 %v1183
        %v1316 = vunpack.c.h.b16 %v1183
        %v1317 = vunpack.c.l.b16 %v1184
        %v1318 = vunpack.c.h.b16 %v1184
        %v1319 = vunpack.c.l.b16 %v1185
        %v1320 = vunpack.c.h.b16 %v1185
        %v1321 = vunpack.c.l.b16 %v1186
        %v1322 = vunpack.c.h.b16 %v1186
        %v1323 = vunpack.c.l.b16 %v1187
        %v1324 = vunpack.c.h.b16 %v1187
        %v1325 = vunpack.c.l.b16 %v1188
        %v1326 = vunpack.c.h.b16 %v1188
        %v1327 = vunpack.c.l.b16 %v1189
        %v1328 = vunpack.c.h.b16 %v1189
        %v1329 = vunpack.c.l.b16 %v1190
        %v1330 = vunpack.c.h.b16 %v1190
        %v1331 = vunpack.c.l.b16 %v1191
        %v1332 = vunpack.c.h.b16 %v1191
        %v1333 = vunpack.c.l.b16 %v1192
        %v1334 = vunpack.c.h.b16 %v1192
        %v1335 = vunpack.c.l.b16 %v1193
        %v1336 = vunpack.c.h.b16 %v1193
        %v1337 = vunpack.c.l.b16 %v1194
        %v1338 = vunpack.c.h.b16 %v1194
        %v1339 = vunpack.c.l.b16 %v1195
        %v1340 = vunpack.c.h.b16 %v1195
        %v1341 = vunpack.c.l.b16 %v1196
        %v1342 = vunpack.c.h.b16 %v1196
        %v1343 = vunpack.c.l.b16 %v1197
        %v1344 = vunpack.c.h.b16 %v1197
        %v1345 = vunpack.c.l.b16 %v1198
        %v1346 = vunpack.c.h.b16 %v1198
        %v1347 = vunpack.c.l.b16 %v1199
        %v1348 = vunpack.c.h.b16 %v1199
        %v1349 = vunpack.c.l.b16 %v1200
        %v1350 = vunpack.c.h.b16 %v1200
        %v1351 = vunpack.c.l.b16 %v1201
        %v1352 = vunpack.c.h.b16 %v1201
        %v1353 = vunpack.c.l.b16 %v1202
        %v1354 = vunpack.c.h.b16 %v1202
        %v1355 = vunpack.c.l.b16 %v1203
        %v1356 = vunpack.c.h.b16 %v1203
        %v1357 = vunpack.c.l.b16 %v1204
        %v1358 = vunpack.c.h.b16 %v1204
        %v1359 = vunpack.c.l.b16 %v1205
        %v1360 = vunpack.c.h.b16 %v1205
        %v1361 = vunpack.c.l.b16 %v1206
        %v1362 = vunpack.c.h.b16 %v1206
        %v1363 = vunpack.c.l.b16 %v1207
        %v1364 = vunpack.c.h.b16 %v1207
        %v1365 = vunpack.c.l.b16 %v1208
        %v1366 = vunpack.c.h.b16 %v1208
        %v1367 = vunpack.c.l.b16 %v1209
        %v1368 = vunpack.c.h.b16 %v1209
        %v1369 = vunpack.c.l.b16 %v1210
        %v1370 = vunpack.c.h.b16 %v1210
        %v1371 = vunpack.c.l.b16 %v1211
        %v1372 = vunpack.c.h.b16 %v1211
        %v1373 = vunpack.c.l.b16 %v1212
        %v1374 = vunpack.c.h.b16 %v1212
        %v1375 = vunpack.c.l.b16 %v1213
        %v1376 = vunpack.c.h.b16 %v1213
        %v1377 = vunpack.c.l.b16 %v1214
        %v1378 = vunpack.c.h.b16 %v1214
        %v1379 = vunpack.c.l.b16 %v1215
        %v1380 = vunpack.c.h.b16 %v1215
        %v1381 = vunpack.c.l.b16 %v1216
        %v1382 = vunpack.c.h.b16 %v1216
        %v1383 = vunpack.c.l.b16 %v1217
        %v1384 = vunpack.c.h.b16 %v1217
        %v1385 = vunpack.c.l.b16 %v1218
        %v1386 = vunpack.c.h.b16 %v1218
        %v1387 = vunpack.c.l.b16 %v1219
        %v1388 = vunpack.c.h.b16 %v1219
        %v1389 = vunpack.c.l.b16 %v1220
        %v1390 = vunpack.c.h.b16 %v1220
        %v1391 = vunpack.c.l.b16 %v1221
        %v1392 = vunpack.c.h.b16 %v1221
        %v1393 = vunpack.c.l.b16 %v1222
        %v1394 = vunpack.c.h.b16 %v1222
        %v1395 = vunpack.c.l.b16 %v1223
        %v1396 = vunpack.c.h.b16 %v1223
        %v1397 = vunpack.c.l.b16 %v1224
        %v1398 = vunpack.c.h.b16 %v1224
        %v1399 = vunpack.c.l.b16 %v1225
        %v1400 = vunpack.c.h.b16 %v1225
        %v1401 = vunpack.c.l.b16 %v1226
        %v1402 = vunpack.c.h.b16 %v1226
        %v1403 = vunpack.c.l.b16 %v1227
        %v1404 = vunpack.c.h.b16 %v1227
        %v1405 = vunpack.c.l.b16 %v1228
        %v1406 = vunpack.c.h.b16 %v1228
        %v1407 = vunpack.c.l.b16 %v1229
        %v1408 = vunpack.c.h.b16 %v1229
        %v1409 = vunpack.c.l.b16 %v1230
        %v1410 = vunpack.c.h.b16 %v1230
        %v1411 = vunpack.c.l.b16 %v1231
        %v1412 = vunpack.c.h.b16 %v1231
        %v1413 = vunpack.c.l.b16 %v1232
        %v1414 = vunpack.c.h.b16 %v1232
        %v1415 = vunpack.c.l.b16 %v1233
        %v1416 = vunpack.c.h.b16 %v1233
        %v1417 = vunpack.c.l.b16 %v1234
        %v1418 = vunpack.c.h.b16 %v1234
        %v1419 = vunpack.c.l.b16 %v1235
        %v1420 = vunpack.c.h.b16 %v1235
        %v1421 = vunpack.c.l.b16 %v1236
        %v1422 = vunpack.c.h.b16 %v1236
        %v1423 = vunpack.c.l.b16 %v1237
        %v1424 = vunpack.c.h.b16 %v1237
        %v1425 = vunpack.c.l.b16 %v1238
        %v1426 = vunpack.c.h.b16 %v1238
        %v1427 = vunpack.c.l.b16 %v1239
        %v1428 = vunpack.c.h.b16 %v1239
        %v1429 = vunpack.c.l.b16 %v1240
        %v1430 = vunpack.c.h.b16 %v1240
        %v1431 = vunpack.c.l.b16 %v1241
        %v1432 = vunpack.c.h.b16 %v1241
        %v1433 = vunpack.c.l.b16 %v1242
        %v1434 = vunpack.c.h.b16 %v1242
        %v1435 = vpack.c.b16 %v1311, %v1307
        %v1436 = vpack.c.b16 %v1312, %v1308
        %v1437 = vpack.c.b16 %v1313, %v1309
        %v1438 = vpack.c.b16 %v1314, %v1310
        %v1439 = vpack.c.b16 %v1319, %v1315
        %v1440 = vpack.c.b16 %v1320, %v1316
        %v1441 = vpack.c.b16 %v1321, %v1317
        %v1442 = vpack.c.b16 %v1322, %v1318
        %v1443 = vpack.c.b16 %v1327, %v1323
        %v1444 = vpack.c.b16 %v1328, %v1324
        %v1445 = vpack.c.b16 %v1329, %v1325
        %v1446 = vpack.c.b16 %v1330, %v1326
        %v1447 = vpack.c.b16 %v1335, %v1331
        %v1448 = vpack.c.b16 %v1336, %v1332
        %v1449 = vpack.c.b16 %v1337, %v1333
        %v1450 = vpack.c.b16 %v1338, %v1334
        %v1451 = vpack.c.b16 %v1343, %v1339
        %v1452 = vpack.c.b16 %v1344, %v1340
        %v1453 = vpack.c.b16 %v1345, %v1341
        %v1454 = vpack.c.b16 %v1346, %v1342
        %v1455 = vpack.c.b16 %v1351, %v1347
        %v1456 = vpack.c.b16 %v1352, %v1348
        %v1457 = vpack.c.b16 %v1353, %v1349
        %v1458 = vpack.c.b16 %v1354, %v1350
        %v1459 = vpack.c.b16 %v1359, %v1355
        %v1460 = vpack.c.b16 %v1360, %v1356
        %v1461 = vpack.c.b16 %v1361, %v1357
        %v1462 = vpack.c.b16 %v1362, %v1358
        %v1463 = vpack.c.b16 %v1367, %v1363
        %v1464 = vpack.c.b16 %v1368, %v1364
        %v1465 = vpack.c.b16 %v1369, %v1365
        %v1466 = vpack.c.b16 %v1370, %v1366
        %v1467 = vpack.c.b16 %v1375, %v1371
        %v1468 = vpack.c.b16 %v1376, %v1372
        %v1469 = vpack.c.b16 %v1377, %v1373
        %v1470 = vpack.c.b16 %v1378, %v1374
        %v1471 = vpack.c.b16 %v1383, %v1379
        %v1472 = vpack.c.b16 %v1384, %v1380
        %v1473 = vpack.c.b16 %v1385, %v1381
        %v1474 = vpack.c.b16 %v1386, %v1382
        %v1475 = vpack.c.b16 %v1391, %v1387
        %v1476 = vpack.c.b16 %v1392, %v1388
        %v1477 = vpack.c.b16 %v1393, %v1389
        %v1478 = vpack.c.b16 %v1394, %v1390
        %v1479 = vpack.c.b16 %v1399, %v1395
        %v1480 = vpack.c.b16 %v1400, %v1396
        %v1481 = vpack.c.b16 %v1401, %v1397
        %v1482 = vpack.c.b16 %v1402, %v1398
        %v1483 = vpack.c.b16 %v1407, %v1403
        %v1484 = vpack.c.b16 %v1408, %v1404
        %v1485 = vpack.c.b16 %v1409, %v1405
        %v1486 = vpack.c.b16 %v1410, %v1406
        %v1487 = vpack.c.b16 %v1415, %v1411
        %v1488 = vpack.c.b16 %v1416, %v1412
        %v1489 = vpack.c.b16 %v1417, %v1413
        %v1490 = vpack.c.b16 %v1418, %v1414
        %v1491 = vpack.c.b16 %v1423, %v1419
        %v1492 = vpack.c.b16 %v1424, %v1420
        %v1493 = vpack.c.b16 %v1425, %v1421
        %v1494 = vpack.c.b16 %v1426, %v1422
        %v1495 = vpack.c.b16 %v1431, %v1427
        %v1496 = vpack.c.b16 %v1432, %v1428
        %v1497 = vpack.c.b16 %v1433, %v1429
        %v1498 = vpack.c.b16 %v1434, %v1430
        %1563 = vmatpush.bf16.msra.mxu0 %v1463
        %1564 = vmatpush.bf16.msra.mxu0 %v1459
        %1565 = vmatpush.bf16.msra.mxu0 %v1455
        %1566 = vmatpush.bf16.msra.mxu0 %v1451
        %1567 = vmatpush.bf16.msra.mxu0 %v1447
        %1568 = vmatpush.bf16.msra.mxu0 %v1443
        %1569 = vmatpush.bf16.msra.mxu0 %v1439
        %1570 = vmatpush.bf16.msra.mxu0 %v1435
        %1571 = vmatmul.bf16.gmra.mxu0 %v1115
        %v1572 = vpop.f32.mrf.mxu0
        %v1573 = vadd.f32 0.0, %v1572
        %v1574 = vpop.f32.mrf.mxu0
        %v1575 = vadd.f32 0.0, %v1574
        %1576 = vmatmul.bf16.gmra.mxu0 %v1117
        %v1577 = vpop.f32.mrf.mxu0
        %v1578 = vadd.f32 0.0, %v1577
        %v1579 = vpop.f32.mrf.mxu0
        %v1580 = vadd.f32 0.0, %v1579
        %1581 = vmatmul.bf16.gmra.mxu0 %v1119
        %v1582 = vpop.f32.mrf.mxu0
        %v1583 = vadd.f32 0.0, %v1582
        %v1584 = vpop.f32.mrf.mxu0
        %v1585 = vadd.f32 0.0, %v1584
        %1586 = vmatmul.bf16.gmra.mxu0 %v1121
        %v1587 = vpop.f32.mrf.mxu0
        %v1588 = vadd.f32 0.0, %v1587
        %v1589 = vpop.f32.mrf.mxu0
        %v1590 = vadd.f32 0.0, %v1589
        %1591 = vmatmul.bf16.gmra.mxu0 %v1123
        %v1592 = vpop.f32.mrf.mxu0
        %v1593 = vadd.f32 0.0, %v1592
        %v1594 = vpop.f32.mrf.mxu0
        %v1595 = vadd.f32 0.0, %v1594
        %1596 = vmatmul.bf16.gmra.mxu0 %v1125
        %v1597 = vpop.f32.mrf.mxu0
        %v1598 = vadd.f32 0.0, %v1597
        %v1599 = vpop.f32.mrf.mxu0
        %v1600 = vadd.f32 0.0, %v1599
        %1601 = vmatmul.bf16.gmra.mxu0 %v1127
        %v1602 = vpop.f32.mrf.mxu0
        %v1603 = vadd.f32 0.0, %v1602
        %v1604 = vpop.f32.mrf.mxu0
        %v1605 = vadd.f32 0.0, %v1604
        %1606 = vmatmul.bf16.gmra.mxu0 %v1129
        %v1607 = vpop.f32.mrf.mxu0
        %v1608 = vadd.f32 0.0, %v1607
        %v1609 = vpop.f32.mrf.mxu0
        %v1610 = vadd.f32 0.0, %v1609
        %1611 = vmatmul.bf16.gmra.mxu0 %v1131
        %v1612 = vpop.f32.mrf.mxu0
        %v1613 = vadd.f32 0.0, %v1612
        %v1614 = vpop.f32.mrf.mxu0
        %v1615 = vadd.f32 0.0, %v1614
        %1616 = vmatmul.bf16.gmra.mxu0 %v1133
        %v1617 = vpop.f32.mrf.mxu0
        %v1618 = vadd.f32 0.0, %v1617
        %v1619 = vpop.f32.mrf.mxu0
        %v1620 = vadd.f32 0.0, %v1619
        %1621 = vmatmul.bf16.gmra.mxu0 %v1135
        %v1622 = vpop.f32.mrf.mxu0
        %v1623 = vadd.f32 0.0, %v1622
        %v1624 = vpop.f32.mrf.mxu0
        %v1625 = vadd.f32 0.0, %v1624
        %1626 = vmatmul.bf16.gmra.mxu0 %v1137
        %v1627 = vpop.f32.mrf.mxu0
        %v1628 = vadd.f32 0.0, %v1627
        %v1629 = vpop.f32.mrf.mxu0
        %v1630 = vadd.f32 0.0, %v1629
        %1631 = vmatmul.bf16.gmra.mxu0 %v1139
        %v1632 = vpop.f32.mrf.mxu0
        %v1633 = vadd.f32 0.0, %v1632
        %v1634 = vpop.f32.mrf.mxu0
        %v1635 = vadd.f32 0.0, %v1634
        %1636 = vmatmul.bf16.gmra.mxu0 %v1141
        %v1637 = vpop.f32.mrf.mxu0
        %v1638 = vadd.f32 0.0, %v1637
        %v1639 = vpop.f32.mrf.mxu0
        %v1640 = vadd.f32 0.0, %v1639
        %1641 = vmatmul.bf16.gmra.mxu0 %v1143
        %v1642 = vpop.f32.mrf.mxu0
        %v1643 = vadd.f32 0.0, %v1642
        %v1644 = vpop.f32.mrf.mxu0
        %v1645 = vadd.f32 0.0, %v1644
        %1646 = vmatmul.bf16.gmra.mxu0 %v1145
        %v1647 = vpop.f32.mrf.mxu0
        %v1648 = vadd.f32 0.0, %v1647
        %v1649 = vpop.f32.mrf.mxu0
        %v1650 = vadd.f32 0.0, %v1649
        %1651 = vdwg.mxu0
        %1652 = vmatpush.bf16.msra.mxu0 %v1495
        %1653 = vmatpush.bf16.msra.mxu0 %v1491
        %1654 = vmatpush.bf16.msra.mxu0 %v1487
        %1655 = vmatpush.bf16.msra.mxu0 %v1483
        %1656 = vmatpush.bf16.msra.mxu0 %v1479
        %1657 = vmatpush.bf16.msra.mxu0 %v1475
        %1658 = vmatpush.bf16.msra.mxu0 %v1471
        %1659 = vmatpush.bf16.msra.mxu0 %v1467
        %1660 = vmatmul.bf16.gmra.mxu0 %v1116
        %v1661 = vpop.f32.mrf.mxu0
        %v1662 = vadd.f32 %v1573, %v1661
        %v1663 = vpop.f32.mrf.mxu0
        %v1664 = vadd.f32 %v1575, %v1663
        %1665 = vmatmul.bf16.gmra.mxu0 %v1118
        %v1666 = vpop.f32.mrf.mxu0
        %v1667 = vadd.f32 %v1578, %v1666
        %v1668 = vpop.f32.mrf.mxu0
        %v1669 = vadd.f32 %v1580, %v1668
        %1670 = vmatmul.bf16.gmra.mxu0 %v1120
        %v1671 = vpop.f32.mrf.mxu0
        %v1672 = vadd.f32 %v1583, %v1671
        %v1673 = vpop.f32.mrf.mxu0
        %v1674 = vadd.f32 %v1585, %v1673
        %1675 = vmatmul.bf16.gmra.mxu0 %v1122
        %v1676 = vpop.f32.mrf.mxu0
        %v1677 = vadd.f32 %v1588, %v1676
        %v1678 = vpop.f32.mrf.mxu0
        %v1679 = vadd.f32 %v1590, %v1678
        %1680 = vmatmul.bf16.gmra.mxu0 %v1124
        %v1681 = vpop.f32.mrf.mxu0
        %v1682 = vadd.f32 %v1593, %v1681
        %v1683 = vpop.f32.mrf.mxu0
        %v1684 = vadd.f32 %v1595, %v1683
        %1685 = vmatmul.bf16.gmra.mxu0 %v1126
        %v1686 = vpop.f32.mrf.mxu0
        %v1687 = vadd.f32 %v1598, %v1686
        %v1688 = vpop.f32.mrf.mxu0
        %v1689 = vadd.f32 %v1600, %v1688
        %1690 = vmatmul.bf16.gmra.mxu0 %v1128
        %v1691 = vpop.f32.mrf.mxu0
        %v1692 = vadd.f32 %v1603, %v1691
        %v1693 = vpop.f32.mrf.mxu0
        %v1694 = vadd.f32 %v1605, %v1693
        %1695 = vmatmul.bf16.gmra.mxu0 %v1130
        %v1696 = vpop.f32.mrf.mxu0
        %v1697 = vadd.f32 %v1608, %v1696
        %v1698 = vpop.f32.mrf.mxu0
        %v1699 = vadd.f32 %v1610, %v1698
        %1700 = vmatmul.bf16.gmra.mxu0 %v1132
        %v1701 = vpop.f32.mrf.mxu0
        %v1702 = vadd.f32 %v1613, %v1701
        %v1703 = vpop.f32.mrf.mxu0
        %v1704 = vadd.f32 %v1615, %v1703
        %1705 = vmatmul.bf16.gmra.mxu0 %v1134
        %v1706 = vpop.f32.mrf.mxu0
        %v1707 = vadd.f32 %v1618, %v1706
        %v1708 = vpop.f32.mrf.mxu0
        %v1709 = vadd.f32 %v1620, %v1708
        %1710 = vmatmul.bf16.gmra.mxu0 %v1136
        %v1711 = vpop.f32.mrf.mxu0
        %v1712 = vadd.f32 %v1623, %v1711
        %v1713 = vpop.f32.mrf.mxu0
        %v1714 = vadd.f32 %v1625, %v1713
        %1715 = vmatmul.bf16.gmra.mxu0 %v1138
        %v1716 = vpop.f32.mrf.mxu0
        %v1717 = vadd.f32 %v1628, %v1716
        %v1718 = vpop.f32.mrf.mxu0
        %v1719 = vadd.f32 %v1630, %v1718
        %1720 = vmatmul.bf16.gmra.mxu0 %v1140
        %v1721 = vpop.f32.mrf.mxu0
        %v1722 = vadd.f32 %v1633, %v1721
        %v1723 = vpop.f32.mrf.mxu0
        %v1724 = vadd.f32 %v1635, %v1723
        %1725 = vmatmul.bf16.gmra.mxu0 %v1142
        %v1726 = vpop.f32.mrf.mxu0
        %v1727 = vadd.f32 %v1638, %v1726
        %v1728 = vpop.f32.mrf.mxu0
        %v1729 = vadd.f32 %v1640, %v1728
        %1730 = vmatmul.bf16.gmra.mxu0 %v1144
        %v1731 = vpop.f32.mrf.mxu0
        %v1732 = vadd.f32 %v1643, %v1731
        %v1733 = vpop.f32.mrf.mxu0
        %v1734 = vadd.f32 %v1645, %v1733
        %1735 = vmatmul.bf16.gmra.mxu0 %v1146
        %v1736 = vpop.f32.mrf.mxu0
        %v1737 = vadd.f32 %v1648, %v1736
        %v1738 = vpop.f32.mrf.mxu0
        %v1739 = vadd.f32 %v1650, %v1738
        %1740 = vdwg.mxu0
        %1741 = vmatpush.bf16.msra.mxu0 %v1464
        %1742 = vmatpush.bf16.msra.mxu0 %v1460
        %1743 = vmatpush.bf16.msra.mxu0 %v1456
        %1744 = vmatpush.bf16.msra.mxu0 %v1452
        %1745 = vmatpush.bf16.msra.mxu0 %v1448
        %1746 = vmatpush.bf16.msra.mxu0 %v1444
        %1747 = vmatpush.bf16.msra.mxu0 %v1440
        %1748 = vmatpush.bf16.msra.mxu0 %v1436
        %1749 = vmatmul.bf16.gmra.mxu0 %v1115
        %v1750 = vpop.f32.mrf.mxu0
        %v1751 = vadd.f32 0.0, %v1750
        %v1752 = vpop.f32.mrf.mxu0
        %v1753 = vadd.f32 0.0, %v1752
        %1754 = vmatmul.bf16.gmra.mxu0 %v1117
        %v1755 = vpop.f32.mrf.mxu0
        %v1756 = vadd.f32 0.0, %v1755
        %v1757 = vpop.f32.mrf.mxu0
        %v1758 = vadd.f32 0.0, %v1757
        %1759 = vmatmul.bf16.gmra.mxu0 %v1119
        %v1760 = vpop.f32.mrf.mxu0
        %v1761 = vadd.f32 0.0, %v1760
        %v1762 = vpop.f32.mrf.mxu0
        %v1763 = vadd.f32 0.0, %v1762
        %1764 = vmatmul.bf16.gmra.mxu0 %v1121
        %v1765 = vpop.f32.mrf.mxu0
        %v1766 = vadd.f32 0.0, %v1765
        %v1767 = vpop.f32.mrf.mxu0
        %v1768 = vadd.f32 0.0, %v1767
        %1769 = vmatmul.bf16.gmra.mxu0 %v1123
        %v1770 = vpop.f32.mrf.mxu0
        %v1771 = vadd.f32 0.0, %v1770
        %v1772 = vpop.f32.mrf.mxu0
        %v1773 = vadd.f32 0.0, %v1772
        %1774 = vmatmul.bf16.gmra.mxu0 %v1125
        %v1775 = vpop.f32.mrf.mxu0
        %v1776 = vadd.f32 0.0, %v1775
        %v1777 = vpop.f32.mrf.mxu0
        %v1778 = vadd.f32 0.0, %v1777
        %1779 = vmatmul.bf16.gmra.mxu0 %v1127
        %v1780 = vpop.f32.mrf.mxu0
        %v1781 = vadd.f32 0.0, %v1780
        %v1782 = vpop.f32.mrf.mxu0
        %v1783 = vadd.f32 0.0, %v1782
        %1784 = vmatmul.bf16.gmra.mxu0 %v1129
        %v1785 = vpop.f32.mrf.mxu0
        %v1786 = vadd.f32 0.0, %v1785
        %v1787 = vpop.f32.mrf.mxu0
        %v1788 = vadd.f32 0.0, %v1787
        %1789 = vmatmul.bf16.gmra.mxu0 %v1131
        %v1790 = vpop.f32.mrf.mxu0
        %v1791 = vadd.f32 0.0, %v1790
        %v1792 = vpop.f32.mrf.mxu0
        %v1793 = vadd.f32 0.0, %v1792
        %1794 = vmatmul.bf16.gmra.mxu0 %v1133
        %v1795 = vpop.f32.mrf.mxu0
        %v1796 = vadd.f32 0.0, %v1795
        %v1797 = vpop.f32.mrf.mxu0
        %v1798 = vadd.f32 0.0, %v1797
        %1799 = vmatmul.bf16.gmra.mxu0 %v1135
        %v1800 = vpop.f32.mrf.mxu0
        %v1801 = vadd.f32 0.0, %v1800
        %v1802 = vpop.f32.mrf.mxu0
        %v1803 = vadd.f32 0.0, %v1802
        %1804 = vmatmul.bf16.gmra.mxu0 %v1137
        %v1805 = vpop.f32.mrf.mxu0
        %v1806 = vadd.f32 0.0, %v1805
        %v1807 = vpop.f32.mrf.mxu0
        %v1808 = vadd.f32 0.0, %v1807
        %1809 = vmatmul.bf16.gmra.mxu0 %v1139
        %v1810 = vpop.f32.mrf.mxu0
        %v1811 = vadd.f32 0.0, %v1810
        %v1812 = vpop.f32.mrf.mxu0
        %v1813 = vadd.f32 0.0, %v1812
        %1814 = vmatmul.bf16.gmra.mxu0 %v1141
        %v1815 = vpop.f32.mrf.mxu0
        %v1816 = vadd.f32 0.0, %v1815
        %v1817 = vpop.f32.mrf.mxu0
        %v1818 = vadd.f32 0.0, %v1817
        %1819 = vmatmul.bf16.gmra.mxu0 %v1143
        %v1820 = vpop.f32.mrf.mxu0
        %v1821 = vadd.f32 0.0, %v1820
        %v1822 = vpop.f32.mrf.mxu0
        %v1823 = vadd.f32 0.0, %v1822
        %1824 = vmatmul.bf16.gmra.mxu0 %v1145
        %v1825 = vpop.f32.mrf.mxu0
        %v1826 = vadd.f32 0.0, %v1825
        %v1827 = vpop.f32.mrf.mxu0
        %v1828 = vadd.f32 0.0, %v1827
        %1829 = vdwg.mxu0
        %1830 = vmatpush.bf16.msra.mxu0 %v1496
        %1831 = vmatpush.bf16.msra.mxu0 %v1492
        %1832 = vmatpush.bf16.msra.mxu0 %v1488
        %1833 = vmatpush.bf16.msra.mxu0 %v1484
        %1834 = vmatpush.bf16.msra.mxu0 %v1480
        %1835 = vmatpush.bf16.msra.mxu0 %v1476
        %1836 = vmatpush.bf16.msra.mxu0 %v1472
        %1837 = vmatpush.bf16.msra.mxu0 %v1468
        %1838 = vmatmul.bf16.gmra.mxu0 %v1116
        %v1839 = vpop.f32.mrf.mxu0
        %v1840 = vadd.f32 %v1751, %v1839
        %v1841 = vpop.f32.mrf.mxu0
        %v1842 = vadd.f32 %v1753, %v1841
        %1843 = vmatmul.bf16.gmra.mxu0 %v1118
        %v1844 = vpop.f32.mrf.mxu0
        %v1845 = vadd.f32 %v1756, %v1844
        %v1846 = vpop.f32.mrf.mxu0
        %v1847 = vadd.f32 %v1758, %v1846
        %1848 = vmatmul.bf16.gmra.mxu0 %v1120
        %v1849 = vpop.f32.mrf.mxu0
        %v1850 = vadd.f32 %v1761, %v1849
        %v1851 = vpop.f32.mrf.mxu0
        %v1852 = vadd.f32 %v1763, %v1851
        %1853 = vmatmul.bf16.gmra.mxu0 %v1122
        %v1854 = vpop.f32.mrf.mxu0
        %v1855 = vadd.f32 %v1766, %v1854
        %v1856 = vpop.f32.mrf.mxu0
        %v1857 = vadd.f32 %v1768, %v1856
        %1858 = vmatmul.bf16.gmra.mxu0 %v1124
        %v1859 = vpop.f32.mrf.mxu0
        %v1860 = vadd.f32 %v1771, %v1859
        %v1861 = vpop.f32.mrf.mxu0
        %v1862 = vadd.f32 %v1773, %v1861
        %1863 = vmatmul.bf16.gmra.mxu0 %v1126
        %v1864 = vpop.f32.mrf.mxu0
        %v1865 = vadd.f32 %v1776, %v1864
        %v1866 = vpop.f32.mrf.mxu0
        %v1867 = vadd.f32 %v1778, %v1866
        %1868 = vmatmul.bf16.gmra.mxu0 %v1128
        %v1869 = vpop.f32.mrf.mxu0
        %v1870 = vadd.f32 %v1781, %v1869
        %v1871 = vpop.f32.mrf.mxu0
        %v1872 = vadd.f32 %v1783, %v1871
        %1873 = vmatmul.bf16.gmra.mxu0 %v1130
        %v1874 = vpop.f32.mrf.mxu0
        %v1875 = vadd.f32 %v1786, %v1874
        %v1876 = vpop.f32.mrf.mxu0
        %v1877 = vadd.f32 %v1788, %v1876
        %1878 = vmatmul.bf16.gmra.mxu0 %v1132
        %v1879 = vpop.f32.mrf.mxu0
        %v1880 = vadd.f32 %v1791, %v1879
        %v1881 = vpop.f32.mrf.mxu0
        %v1882 = vadd.f32 %v1793, %v1881
        %1883 = vmatmul.bf16.gmra.mxu0 %v1134
        %v1884 = vpop.f32.mrf.mxu0
        %v1885 = vadd.f32 %v1796, %v1884
        %v1886 = vpop.f32.mrf.mxu0
        %v1887 = vadd.f32 %v1798, %v1886
        %1888 = vmatmul.bf16.gmra.mxu0 %v1136
        %v1889 = vpop.f32.mrf.mxu0
        %v1890 = vadd.f32 %v1801, %v1889
        %v1891 = vpop.f32.mrf.mxu0
        %v1892 = vadd.f32 %v1803, %v1891
        %1893 = vmatmul.bf16.gmra.mxu0 %v1138
        %v1894 = vpop.f32.mrf.mxu0
        %v1895 = vadd.f32 %v1806, %v1894
        %v1896 = vpop.f32.mrf.mxu0
        %v1897 = vadd.f32 %v1808, %v1896
        %1898 = vmatmul.bf16.gmra.mxu0 %v1140
        %v1899 = vpop.f32.mrf.mxu0
        %v1900 = vadd.f32 %v1811, %v1899
        %v1901 = vpop.f32.mrf.mxu0
        %v1902 = vadd.f32 %v1813, %v1901
        %1903 = vmatmul.bf16.gmra.mxu0 %v1142
        %v1904 = vpop.f32.mrf.mxu0
        %v1905 = vadd.f32 %v1816, %v1904
        %v1906 = vpop.f32.mrf.mxu0
        %v1907 = vadd.f32 %v1818, %v1906
        %1908 = vmatmul.bf16.gmra.mxu0 %v1144
        %v1909 = vpop.f32.mrf.mxu0
        %v1910 = vadd.f32 %v1821, %v1909
        %v1911 = vpop.f32.mrf.mxu0
        %v1912 = vadd.f32 %v1823, %v1911
        %1913 = vmatmul.bf16.gmra.mxu0 %v1146
        %v1914 = vpop.f32.mrf.mxu0
        %v1915 = vadd.f32 %v1826, %v1914
        %v1916 = vpop.f32.mrf.mxu0
        %v1917 = vadd.f32 %v1828, %v1916
        %1918 = vdwg.mxu0
        %1919 = vmatpush.bf16.msra.mxu0 %v1465
        %1920 = vmatpush.bf16.msra.mxu0 %v1461
        %1921 = vmatpush.bf16.msra.mxu0 %v1457
        %1922 = vmatpush.bf16.msra.mxu0 %v1453
        %1923 = vmatpush.bf16.msra.mxu0 %v1449
        %1924 = vmatpush.bf16.msra.mxu0 %v1445
        %1925 = vmatpush.bf16.msra.mxu0 %v1441
        %1926 = vmatpush.bf16.msra.mxu0 %v1437
        %1927 = vmatmul.bf16.gmra.mxu0 %v1115
        %v1928 = vpop.f32.mrf.mxu0
        %v1929 = vadd.f32 0.0, %v1928
        %v1930 = vpop.f32.mrf.mxu0
        %v1931 = vadd.f32 0.0, %v1930
        %1932 = vmatmul.bf16.gmra.mxu0 %v1117
        %v1933 = vpop.f32.mrf.mxu0
        %v1934 = vadd.f32 0.0, %v1933
        %v1935 = vpop.f32.mrf.mxu0
        %v1936 = vadd.f32 0.0, %v1935
        %1937 = vmatmul.bf16.gmra.mxu0 %v1119
        %v1938 = vpop.f32.mrf.mxu0
        %v1939 = vadd.f32 0.0, %v1938
        %v1940 = vpop.f32.mrf.mxu0
        %v1941 = vadd.f32 0.0, %v1940
        %1942 = vmatmul.bf16.gmra.mxu0 %v1121
        %v1943 = vpop.f32.mrf.mxu0
        %v1944 = vadd.f32 0.0, %v1943
        %v1945 = vpop.f32.mrf.mxu0
        %v1946 = vadd.f32 0.0, %v1945
        %1947 = vmatmul.bf16.gmra.mxu0 %v1123
        %v1948 = vpop.f32.mrf.mxu0
        %v1949 = vadd.f32 0.0, %v1948
        %v1950 = vpop.f32.mrf.mxu0
        %v1951 = vadd.f32 0.0, %v1950
        %1952 = vmatmul.bf16.gmra.mxu0 %v1125
        %v1953 = vpop.f32.mrf.mxu0
        %v1954 = vadd.f32 0.0, %v1953
        %v1955 = vpop.f32.mrf.mxu0
        %v1956 = vadd.f32 0.0, %v1955
        %1957 = vmatmul.bf16.gmra.mxu0 %v1127
        %v1958 = vpop.f32.mrf.mxu0
        %v1959 = vadd.f32 0.0, %v1958
        %v1960 = vpop.f32.mrf.mxu0
        %v1961 = vadd.f32 0.0, %v1960
        %1962 = vmatmul.bf16.gmra.mxu0 %v1129
        %v1963 = vpop.f32.mrf.mxu0
        %v1964 = vadd.f32 0.0, %v1963
        %v1965 = vpop.f32.mrf.mxu0
        %v1966 = vadd.f32 0.0, %v1965
        %1967 = vmatmul.bf16.gmra.mxu0 %v1131
        %v1968 = vpop.f32.mrf.mxu0
        %v1969 = vadd.f32 0.0, %v1968
        %v1970 = vpop.f32.mrf.mxu0
        %v1971 = vadd.f32 0.0, %v1970
        %1972 = vmatmul.bf16.gmra.mxu0 %v1133
        %v1973 = vpop.f32.mrf.mxu0
        %v1974 = vadd.f32 0.0, %v1973
        %v1975 = vpop.f32.mrf.mxu0
        %v1976 = vadd.f32 0.0, %v1975
        %1977 = vmatmul.bf16.gmra.mxu0 %v1135
        %v1978 = vpop.f32.mrf.mxu0
        %v1979 = vadd.f32 0.0, %v1978
        %v1980 = vpop.f32.mrf.mxu0
        %v1981 = vadd.f32 0.0, %v1980
        %1982 = vmatmul.bf16.gmra.mxu0 %v1137
        %v1983 = vpop.f32.mrf.mxu0
        %v1984 = vadd.f32 0.0, %v1983
        %v1985 = vpop.f32.mrf.mxu0
        %v1986 = vadd.f32 0.0, %v1985
        %1987 = vmatmul.bf16.gmra.mxu0 %v1139
        %v1988 = vpop.f32.mrf.mxu0
        %v1989 = vadd.f32 0.0, %v1988
        %v1990 = vpop.f32.mrf.mxu0
        %v1991 = vadd.f32 0.0, %v1990
        %1992 = vmatmul.bf16.gmra.mxu0 %v1141
        %v1993 = vpop.f32.mrf.mxu0
        %v1994 = vadd.f32 0.0, %v1993
        %v1995 = vpop.f32.mrf.mxu0
        %v1996 = vadd.f32 0.0, %v1995
        %1997 = vmatmul.bf16.gmra.mxu0 %v1143
        %v1998 = vpop.f32.mrf.mxu0
        %v1999 = vadd.f32 0.0, %v1998
        %v2000 = vpop.f32.mrf.mxu0
        %v2001 = vadd.f32 0.0, %v2000
        %2002 = vmatmul.bf16.gmra.mxu0 %v1145
        %v2003 = vpop.f32.mrf.mxu0
        %v2004 = vadd.f32 0.0, %v2003
        %v2005 = vpop.f32.mrf.mxu0
        %v2006 = vadd.f32 0.0, %v2005
        %2007 = vdwg.mxu0
        %2008 = vmatpush.bf16.msra.mxu0 %v1497
        %2009 = vmatpush.bf16.msra.mxu0 %v1493
        %2010 = vmatpush.bf16.msra.mxu0 %v1489
        %2011 = vmatpush.bf16.msra.mxu0 %v1485
        %2012 = vmatpush.bf16.msra.mxu0 %v1481
        %2013 = vmatpush.bf16.msra.mxu0 %v1477
        %2014 = vmatpush.bf16.msra.mxu0 %v1473
        %2015 = vmatpush.bf16.msra.mxu0 %v1469
        %2016 = vmatmul.bf16.gmra.mxu0 %v1116
        %v2017 = vpop.f32.mrf.mxu0
        %v2018 = vadd.f32 %v1929, %v2017
        %v2019 = vpop.f32.mrf.mxu0
        %v2020 = vadd.f32 %v1931, %v2019
        %2021 = vmatmul.bf16.gmra.mxu0 %v1118
        %v2022 = vpop.f32.mrf.mxu0
        %v2023 = vadd.f32 %v1934, %v2022
        %v2024 = vpop.f32.mrf.mxu0
        %v2025 = vadd.f32 %v1936, %v2024
        %2026 = vmatmul.bf16.gmra.mxu0 %v1120
        %v2027 = vpop.f32.mrf.mxu0
        %v2028 = vadd.f32 %v1939, %v2027
        %v2029 = vpop.f32.mrf.mxu0
        %v2030 = vadd.f32 %v1941, %v2029
        %2031 = vmatmul.bf16.gmra.mxu0 %v1122
        %v2032 = vpop.f32.mrf.mxu0
        %v2033 = vadd.f32 %v1944, %v2032
        %v2034 = vpop.f32.mrf.mxu0
        %v2035 = vadd.f32 %v1946, %v2034
        %2036 = vmatmul.bf16.gmra.mxu0 %v1124
        %v2037 = vpop.f32.mrf.mxu0
        %v2038 = vadd.f32 %v1949, %v2037
        %v2039 = vpop.f32.mrf.mxu0
        %v2040 = vadd.f32 %v1951, %v2039
        %2041 = vmatmul.bf16.gmra.mxu0 %v1126
        %v2042 = vpop.f32.mrf.mxu0
        %v2043 = vadd.f32 %v1954, %v2042
        %v2044 = vpop.f32.mrf.mxu0
        %v2045 = vadd.f32 %v1956, %v2044
        %2046 = vmatmul.bf16.gmra.mxu0 %v1128
        %v2047 = vpop.f32.mrf.mxu0
        %v2048 = vadd.f32 %v1959, %v2047
        %v2049 = vpop.f32.mrf.mxu0
        %v2050 = vadd.f32 %v1961, %v2049
        %2051 = vmatmul.bf16.gmra.mxu0 %v1130
        %v2052 = vpop.f32.mrf.mxu0
        %v2053 = vadd.f32 %v1964, %v2052
        %v2054 = vpop.f32.mrf.mxu0
        %v2055 = vadd.f32 %v1966, %v2054
        %2056 = vmatmul.bf16.gmra.mxu0 %v1132
        %v2057 = vpop.f32.mrf.mxu0
        %v2058 = vadd.f32 %v1969, %v2057
        %v2059 = vpop.f32.mrf.mxu0
        %v2060 = vadd.f32 %v1971, %v2059
        %2061 = vmatmul.bf16.gmra.mxu0 %v1134
        %v2062 = vpop.f32.mrf.mxu0
        %v2063 = vadd.f32 %v1974, %v2062
        %v2064 = vpop.f32.mrf.mxu0
        %v2065 = vadd.f32 %v1976, %v2064
        %2066 = vmatmul.bf16.gmra.mxu0 %v1136
        %v2067 = vpop.f32.mrf.mxu0
        %v2068 = vadd.f32 %v1979, %v2067
        %v2069 = vpop.f32.mrf.mxu0
        %v2070 = vadd.f32 %v1981, %v2069
        %2071 = vmatmul.bf16.gmra.mxu0 %v1138
        %v2072 = vpop.f32.mrf.mxu0
        %v2073 = vadd.f32 %v1984, %v2072
        %v2074 = vpop.f32.mrf.mxu0
        %v2075 = vadd.f32 %v1986, %v2074
        %2076 = vmatmul.bf16.gmra.mxu0 %v1140
        %v2077 = vpop.f32.mrf.mxu0
        %v2078 = vadd.f32 %v1989, %v2077
        %v2079 = vpop.f32.mrf.mxu0
        %v2080 = vadd.f32 %v1991, %v2079
        %2081 = vmatmul.bf16.gmra.mxu0 %v1142
        %v2082 = vpop.f32.mrf.mxu0
        %v2083 = vadd.f32 %v1994, %v2082
        %v2084 = vpop.f32.mrf.mxu0
        %v2085 = vadd.f32 %v1996, %v2084
        %2086 = vmatmul.bf16.gmra.mxu0 %v1144
        %v2087 = vpop.f32.mrf.mxu0
        %v2088 = vadd.f32 %v1999, %v2087
        %v2089 = vpop.f32.mrf.mxu0
        %v2090 = vadd.f32 %v2001, %v2089
        %2091 = vmatmul.bf16.gmra.mxu0 %v1146
        %v2092 = vpop.f32.mrf.mxu0
        %v2093 = vadd.f32 %v2004, %v2092
        %v2094 = vpop.f32.mrf.mxu0
        %v2095 = vadd.f32 %v2006, %v2094
        %2096 = vdwg.mxu0
        %2097 = vmatpush.bf16.msra.mxu0 %v1466
        %2098 = vmatpush.bf16.msra.mxu0 %v1462
        %2099 = vmatpush.bf16.msra.mxu0 %v1458
        %2100 = vmatpush.bf16.msra.mxu0 %v1454
        %2101 = vmatpush.bf16.msra.mxu0 %v1450
        %2102 = vmatpush.bf16.msra.mxu0 %v1446
        %2103 = vmatpush.bf16.msra.mxu0 %v1442
        %2104 = vmatpush.bf16.msra.mxu0 %v1438
        %2105 = vmatmul.bf16.gmra.mxu0 %v1115
        %v2106 = vpop.f32.mrf.mxu0
        %v2107 = vadd.f32 0.0, %v2106
        %v2108 = vpop.f32.mrf.mxu0
        %v2109 = vadd.f32 0.0, %v2108
        %2110 = vmatmul.bf16.gmra.mxu0 %v1117
        %v2111 = vpop.f32.mrf.mxu0
        %v2112 = vadd.f32 0.0, %v2111
        %v2113 = vpop.f32.mrf.mxu0
        %v2114 = vadd.f32 0.0, %v2113
        %2115 = vmatmul.bf16.gmra.mxu0 %v1119
        %v2116 = vpop.f32.mrf.mxu0
        %v2117 = vadd.f32 0.0, %v2116
        %v2118 = vpop.f32.mrf.mxu0
        %v2119 = vadd.f32 0.0, %v2118
        %2120 = vmatmul.bf16.gmra.mxu0 %v1121
        %v2121 = vpop.f32.mrf.mxu0
        %v2122 = vadd.f32 0.0, %v2121
        %v2123 = vpop.f32.mrf.mxu0
        %v2124 = vadd.f32 0.0, %v2123
        %2125 = vmatmul.bf16.gmra.mxu0 %v1123
        %v2126 = vpop.f32.mrf.mxu0
        %v2127 = vadd.f32 0.0, %v2126
        %v2128 = vpop.f32.mrf.mxu0
        %v2129 = vadd.f32 0.0, %v2128
        %2130 = vmatmul.bf16.gmra.mxu0 %v1125
        %v2131 = vpop.f32.mrf.mxu0
        %v2132 = vadd.f32 0.0, %v2131
        %v2133 = vpop.f32.mrf.mxu0
        %v2134 = vadd.f32 0.0, %v2133
        %2135 = vmatmul.bf16.gmra.mxu0 %v1127
        %v2136 = vpop.f32.mrf.mxu0
        %v2137 = vadd.f32 0.0, %v2136
        %v2138 = vpop.f32.mrf.mxu0
        %v2139 = vadd.f32 0.0, %v2138
        %2140 = vmatmul.bf16.gmra.mxu0 %v1129
        %v2141 = vpop.f32.mrf.mxu0
        %v2142 = vadd.f32 0.0, %v2141
        %v2143 = vpop.f32.mrf.mxu0
        %v2144 = vadd.f32 0.0, %v2143
        %2145 = vmatmul.bf16.gmra.mxu0 %v1131
        %v2146 = vpop.f32.mrf.mxu0
        %v2147 = vadd.f32 0.0, %v2146
        %v2148 = vpop.f32.mrf.mxu0
        %v2149 = vadd.f32 0.0, %v2148
        %2150 = vmatmul.bf16.gmra.mxu0 %v1133
        %v2151 = vpop.f32.mrf.mxu0
        %v2152 = vadd.f32 0.0, %v2151
        %v2153 = vpop.f32.mrf.mxu0
        %v2154 = vadd.f32 0.0, %v2153
        %2155 = vmatmul.bf16.gmra.mxu0 %v1135
        %v2156 = vpop.f32.mrf.mxu0
        %v2157 = vadd.f32 0.0, %v2156
        %v2158 = vpop.f32.mrf.mxu0
        %v2159 = vadd.f32 0.0, %v2158
        %2160 = vmatmul.bf16.gmra.mxu0 %v1137
        %v2161 = vpop.f32.mrf.mxu0
        %v2162 = vadd.f32 0.0, %v2161
        %v2163 = vpop.f32.mrf.mxu0
        %v2164 = vadd.f32 0.0, %v2163
        %2165 = vmatmul.bf16.gmra.mxu0 %v1139
        %v2166 = vpop.f32.mrf.mxu0
        %v2167 = vadd.f32 0.0, %v2166
        %v2168 = vpop.f32.mrf.mxu0
        %v2169 = vadd.f32 0.0, %v2168
        %2170 = vmatmul.bf16.gmra.mxu0 %v1141
        %v2171 = vpop.f32.mrf.mxu0
        %v2172 = vadd.f32 0.0, %v2171
        %v2173 = vpop.f32.mrf.mxu0
        %v2174 = vadd.f32 0.0, %v2173
        %2175 = vmatmul.bf16.gmra.mxu0 %v1143
        %v2176 = vpop.f32.mrf.mxu0
        %v2177 = vadd.f32 0.0, %v2176
        %v2178 = vpop.f32.mrf.mxu0
        %v2179 = vadd.f32 0.0, %v2178
        %2180 = vmatmul.bf16.gmra.mxu0 %v1145
        %v2181 = vpop.f32.mrf.mxu0
        %v2182 = vadd.f32 0.0, %v2181
        %v2183 = vpop.f32.mrf.mxu0
        %v2184 = vadd.f32 0.0, %v2183
        %2185 = vdwg.mxu0
        %2186 = vmatpush.bf16.msra.mxu0 %v1498
        %2187 = vmatpush.bf16.msra.mxu0 %v1494
        %2188 = vmatpush.bf16.msra.mxu0 %v1490
        %2189 = vmatpush.bf16.msra.mxu0 %v1486
        %2190 = vmatpush.bf16.msra.mxu0 %v1482
        %2191 = vmatpush.bf16.msra.mxu0 %v1478
        %2192 = vmatpush.bf16.msra.mxu0 %v1474
        %2193 = vmatpush.bf16.msra.mxu0 %v1470
        %2194 = vmatmul.bf16.gmra.mxu0 %v1116
        %v2195 = vpop.f32.mrf.mxu0
        %v2196 = vadd.f32 %v2107, %v2195
        %v2197 = vpop.f32.mrf.mxu0
        %v2198 = vadd.f32 %v2109, %v2197
        %2199 = vmatmul.bf16.gmra.mxu0 %v1118
        %v2200 = vpop.f32.mrf.mxu0
        %v2201 = vadd.f32 %v2112, %v2200
        %v2202 = vpop.f32.mrf.mxu0
        %v2203 = vadd.f32 %v2114, %v2202
        %2204 = vmatmul.bf16.gmra.mxu0 %v1120
        %v2205 = vpop.f32.mrf.mxu0
        %v2206 = vadd.f32 %v2117, %v2205
        %v2207 = vpop.f32.mrf.mxu0
        %v2208 = vadd.f32 %v2119, %v2207
        %2209 = vmatmul.bf16.gmra.mxu0 %v1122
        %v2210 = vpop.f32.mrf.mxu0
        %v2211 = vadd.f32 %v2122, %v2210
        %v2212 = vpop.f32.mrf.mxu0
        %v2213 = vadd.f32 %v2124, %v2212
        %2214 = vmatmul.bf16.gmra.mxu0 %v1124
        %v2215 = vpop.f32.mrf.mxu0
        %v2216 = vadd.f32 %v2127, %v2215
        %v2217 = vpop.f32.mrf.mxu0
        %v2218 = vadd.f32 %v2129, %v2217
        %2219 = vmatmul.bf16.gmra.mxu0 %v1126
        %v2220 = vpop.f32.mrf.mxu0
        %v2221 = vadd.f32 %v2132, %v2220
        %v2222 = vpop.f32.mrf.mxu0
        %v2223 = vadd.f32 %v2134, %v2222
        %2224 = vmatmul.bf16.gmra.mxu0 %v1128
        %v2225 = vpop.f32.mrf.mxu0
        %v2226 = vadd.f32 %v2137, %v2225
        %v2227 = vpop.f32.mrf.mxu0
        %v2228 = vadd.f32 %v2139, %v2227
        %2229 = vmatmul.bf16.gmra.mxu0 %v1130
        %v2230 = vpop.f32.mrf.mxu0
        %v2231 = vadd.f32 %v2142, %v2230
        %v2232 = vpop.f32.mrf.mxu0
        %v2233 = vadd.f32 %v2144, %v2232
        %2234 = vmatmul.bf16.gmra.mxu0 %v1132
        %v2235 = vpop.f32.mrf.mxu0
        %v2236 = vadd.f32 %v2147, %v2235
        %v2237 = vpop.f32.mrf.mxu0
        %v2238 = vadd.f32 %v2149, %v2237
        %2239 = vmatmul.bf16.gmra.mxu0 %v1134
        %v2240 = vpop.f32.mrf.mxu0
        %v2241 = vadd.f32 %v2152, %v2240
        %v2242 = vpop.f32.mrf.mxu0
        %v2243 = vadd.f32 %v2154, %v2242
        %2244 = vmatmul.bf16.gmra.mxu0 %v1136
        %v2245 = vpop.f32.mrf.mxu0
        %v2246 = vadd.f32 %v2157, %v2245
        %v2247 = vpop.f32.mrf.mxu0
        %v2248 = vadd.f32 %v2159, %v2247
        %2249 = vmatmul.bf16.gmra.mxu0 %v1138
        %v2250 = vpop.f32.mrf.mxu0
        %v2251 = vadd.f32 %v2162, %v2250
        %v2252 = vpop.f32.mrf.mxu0
        %v2253 = vadd.f32 %v2164, %v2252
        %2254 = vmatmul.bf16.gmra.mxu0 %v1140
        %v2255 = vpop.f32.mrf.mxu0
        %v2256 = vadd.f32 %v2167, %v2255
        %v2257 = vpop.f32.mrf.mxu0
        %v2258 = vadd.f32 %v2169, %v2257
        %2259 = vmatmul.bf16.gmra.mxu0 %v1142
        %v2260 = vpop.f32.mrf.mxu0
        %v2261 = vadd.f32 %v2172, %v2260
        %v2262 = vpop.f32.mrf.mxu0
        %v2263 = vadd.f32 %v2174, %v2262
        %2264 = vmatmul.bf16.gmra.mxu0 %v1144
        %v2265 = vpop.f32.mrf.mxu0
        %v2266 = vadd.f32 %v2177, %v2265
        %v2267 = vpop.f32.mrf.mxu0
        %v2268 = vadd.f32 %v2179, %v2267
        %2269 = vmatmul.bf16.gmra.mxu0 %v1146
        %v2270 = vpop.f32.mrf.mxu0
        %v2271 = vadd.f32 %v2182, %v2270
        %v2272 = vpop.f32.mrf.mxu0
        %v2273 = vadd.f32 %v2184, %v2272
        %2274 = vdwg.mxu0
        %v2307 = vunpack.c.l.b16 %v1147
        %v2308 = vunpack.c.h.b16 %v1147
        %v2309 = vunpack.c.l.b16 %v1148
        %v2310 = vunpack.c.h.b16 %v1148
        %v2311 = vunpack.c.l.b16 %v1149
        %v2312 = vunpack.c.h.b16 %v1149
        %v2313 = vunpack.c.l.b16 %v1150
        %v2314 = vunpack.c.h.b16 %v1150
        %v2315 = vunpack.c.l.b16 %v1151
        %v2316 = vunpack.c.h.b16 %v1151
        %v2317 = vunpack.c.l.b16 %v1152
        %v2318 = vunpack.c.h.b16 %v1152
        %v2319 = vunpack.c.l.b16 %v1153
        %v2320 = vunpack.c.h.b16 %v1153
        %v2321 = vunpack.c.l.b16 %v1154
        %v2322 = vunpack.c.h.b16 %v1154
        %v2323 = vunpack.c.l.b16 %v1155
        %v2324 = vunpack.c.h.b16 %v1155
        %v2325 = vunpack.c.l.b16 %v1156
        %v2326 = vunpack.c.h.b16 %v1156
        %v2327 = vunpack.c.l.b16 %v1157
        %v2328 = vunpack.c.h.b16 %v1157
        %v2329 = vunpack.c.l.b16 %v1158
        %v2330 = vunpack.c.h.b16 %v1158
        %v2331 = vunpack.c.l.b16 %v1159
        %v2332 = vunpack.c.h.b16 %v1159
        %v2333 = vunpack.c.l.b16 %v1160
        %v2334 = vunpack.c.h.b16 %v1160
        %v2335 = vunpack.c.l.b16 %v1161
        %v2336 = vunpack.c.h.b16 %v1161
        %v2337 = vunpack.c.l.b16 %v1162
        %v2338 = vunpack.c.h.b16 %v1162
        %v2339 = vunpack.c.l.b16 %v1163
        %v2340 = vunpack.c.h.b16 %v1163
        %v2341 = vunpack.c.l.b16 %v1164
        %v2342 = vunpack.c.h.b16 %v1164
        %v2343 = vunpack.c.l.b16 %v1165
        %v2344 = vunpack.c.h.b16 %v1165
        %v2345 = vunpack.c.l.b16 %v1166
        %v2346 = vunpack.c.h.b16 %v1166
        %v2347 = vunpack.c.l.b16 %v1167
        %v2348 = vunpack.c.h.b16 %v1167
        %v2349 = vunpack.c.l.b16 %v1168
        %v2350 = vunpack.c.h.b16 %v1168
        %v2351 = vunpack.c.l.b16 %v1169
        %v2352 = vunpack.c.h.b16 %v1169
        %v2353 = vunpack.c.l.b16 %v1170
        %v2354 = vunpack.c.h.b16 %v1170
        %v2355 = vunpack.c.l.b16 %v1171
        %v2356 = vunpack.c.h.b16 %v1171
        %v2357 = vunpack.c.l.b16 %v1172
        %v2358 = vunpack.c.h.b16 %v1172
        %v2359 = vunpack.c.l.b16 %v1173
        %v2360 = vunpack.c.h.b16 %v1173
        %v2361 = vunpack.c.l.b16 %v1174
        %v2362 = vunpack.c.h.b16 %v1174
        %v2363 = vunpack.c.l.b16 %v1175
        %v2364 = vunpack.c.h.b16 %v1175
        %v2365 = vunpack.c.l.b16 %v1176
        %v2366 = vunpack.c.h.b16 %v1176
        %v2367 = vunpack.c.l.b16 %v1177
        %v2368 = vunpack.c.h.b16 %v1177
        %v2369 = vunpack.c.l.b16 %v1178
        %v2370 = vunpack.c.h.b16 %v1178
        %v2371 = vpack.c.b16 %v2311, %v2307
        %v2372 = vpack.c.b16 %v2312, %v2308
        %v2373 = vpack.c.b16 %v2313, %v2309
        %v2374 = vpack.c.b16 %v2314, %v2310
        %v2375 = vpack.c.b16 %v2319, %v2315
        %v2376 = vpack.c.b16 %v2320, %v2316
        %v2377 = vpack.c.b16 %v2321, %v2317
        %v2378 = vpack.c.b16 %v2322, %v2318
        %v2379 = vpack.c.b16 %v2327, %v2323
        %v2380 = vpack.c.b16 %v2328, %v2324
        %v2381 = vpack.c.b16 %v2329, %v2325
        %v2382 = vpack.c.b16 %v2330, %v2326
        %v2383 = vpack.c.b16 %v2335, %v2331
        %v2384 = vpack.c.b16 %v2336, %v2332
        %v2385 = vpack.c.b16 %v2337, %v2333
        %v2386 = vpack.c.b16 %v2338, %v2334
        %v2387 = vpack.c.b16 %v2343, %v2339
        %v2388 = vpack.c.b16 %v2344, %v2340
        %v2389 = vpack.c.b16 %v2345, %v2341
        %v2390 = vpack.c.b16 %v2346, %v2342
        %v2391 = vpack.c.b16 %v2351, %v2347
        %v2392 = vpack.c.b16 %v2352, %v2348
        %v2393 = vpack.c.b16 %v2353, %v2349
        %v2394 = vpack.c.b16 %v2354, %v2350
        %v2395 = vpack.c.b16 %v2359, %v2355
        %v2396 = vpack.c.b16 %v2360, %v2356
        %v2397 = vpack.c.b16 %v2361, %v2357
        %v2398 = vpack.c.b16 %v2362, %v2358
        %v2399 = vpack.c.b16 %v2367, %v2363
        %v2400 = vpack.c.b16 %v2368, %v2364
        %v2401 = vpack.c.b16 %v2369, %v2365
        %v2402 = vpack.c.b16 %v2370, %v2366
        %2435 = vmatpush.bf16.msra.mxu0 %v2399
        %2436 = vmatpush.bf16.msra.mxu0 %v2395
        %2437 = vmatpush.bf16.msra.mxu0 %v2391
        %2438 = vmatpush.bf16.msra.mxu0 %v2387
        %2439 = vmatpush.bf16.msra.mxu0 %v2383
        %2440 = vmatpush.bf16.msra.mxu0 %v2379
        %2441 = vmatpush.bf16.msra.mxu0 %v2375
        %2442 = vmatpush.bf16.msra.mxu0 %v2371
        %2443 = vmatmul.bf16.gmra.mxu0 %v755
        %v2444 = vpop.f32.mrf.mxu0
        %v2445 = vadd.f32 %v1662, %v2444
        %v2446 = vpop.f32.mrf.mxu0
        %v2447 = vadd.f32 %v1664, %v2446
        %2448 = vmatmul.bf16.gmra.mxu0 %v756
        %v2449 = vpop.f32.mrf.mxu0
        %v2450 = vadd.f32 %v1667, %v2449
        %v2451 = vpop.f32.mrf.mxu0
        %v2452 = vadd.f32 %v1669, %v2451
        %2453 = vmatmul.bf16.gmra.mxu0 %v757
        %v2454 = vpop.f32.mrf.mxu0
        %v2455 = vadd.f32 %v1672, %v2454
        %v2456 = vpop.f32.mrf.mxu0
        %v2457 = vadd.f32 %v1674, %v2456
        %2458 = vmatmul.bf16.gmra.mxu0 %v758
        %v2459 = vpop.f32.mrf.mxu0
        %v2460 = vadd.f32 %v1677, %v2459
        %v2461 = vpop.f32.mrf.mxu0
        %v2462 = vadd.f32 %v1679, %v2461
        %2463 = vmatmul.bf16.gmra.mxu0 %v759
        %v2464 = vpop.f32.mrf.mxu0
        %v2465 = vadd.f32 %v1682, %v2464
        %v2466 = vpop.f32.mrf.mxu0
        %v2467 = vadd.f32 %v1684, %v2466
        %2468 = vmatmul.bf16.gmra.mxu0 %v760
        %v2469 = vpop.f32.mrf.mxu0
        %v2470 = vadd.f32 %v1687, %v2469
        %v2471 = vpop.f32.mrf.mxu0
        %v2472 = vadd.f32 %v1689, %v2471
        %2473 = vmatmul.bf16.gmra.mxu0 %v761
        %v2474 = vpop.f32.mrf.mxu0
        %v2475 = vadd.f32 %v1692, %v2474
        %v2476 = vpop.f32.mrf.mxu0
        %v2477 = vadd.f32 %v1694, %v2476
        %2478 = vmatmul.bf16.gmra.mxu0 %v762
        %v2479 = vpop.f32.mrf.mxu0
        %v2480 = vadd.f32 %v1697, %v2479
        %v2481 = vpop.f32.mrf.mxu0
        %v2482 = vadd.f32 %v1699, %v2481
        %2483 = vmatmul.bf16.gmra.mxu0 %v763
        %v2484 = vpop.f32.mrf.mxu0
        %v2485 = vadd.f32 %v1702, %v2484
        %v2486 = vpop.f32.mrf.mxu0
        %v2487 = vadd.f32 %v1704, %v2486
        %2488 = vmatmul.bf16.gmra.mxu0 %v764
        %v2489 = vpop.f32.mrf.mxu0
        %v2490 = vadd.f32 %v1707, %v2489
        %v2491 = vpop.f32.mrf.mxu0
        %v2492 = vadd.f32 %v1709, %v2491
        %2493 = vmatmul.bf16.gmra.mxu0 %v765
        %v2494 = vpop.f32.mrf.mxu0
        %v2495 = vadd.f32 %v1712, %v2494
        %v2496 = vpop.f32.mrf.mxu0
        %v2497 = vadd.f32 %v1714, %v2496
        %2498 = vmatmul.bf16.gmra.mxu0 %v766
        %v2499 = vpop.f32.mrf.mxu0
        %v2500 = vadd.f32 %v1717, %v2499
        %v2501 = vpop.f32.mrf.mxu0
        %v2502 = vadd.f32 %v1719, %v2501
        %2503 = vmatmul.bf16.gmra.mxu0 %v767
        %v2504 = vpop.f32.mrf.mxu0
        %v2505 = vadd.f32 %v1722, %v2504
        %v2506 = vpop.f32.mrf.mxu0
        %v2507 = vadd.f32 %v1724, %v2506
        %2508 = vmatmul.bf16.gmra.mxu0 %v768
        %v2509 = vpop.f32.mrf.mxu0
        %v2510 = vadd.f32 %v1727, %v2509
        %v2511 = vpop.f32.mrf.mxu0
        %v2512 = vadd.f32 %v1729, %v2511
        %2513 = vmatmul.bf16.gmra.mxu0 %v769
        %v2514 = vpop.f32.mrf.mxu0
        %v2515 = vadd.f32 %v1732, %v2514
        %v2516 = vpop.f32.mrf.mxu0
        %v2517 = vadd.f32 %v1734, %v2516
        %2518 = vmatmul.bf16.gmra.mxu0 %v770
        %v2519 = vpop.f32.mrf.mxu0
        %v2520 = vadd.f32 %v1737, %v2519
        %v2521 = vpop.f32.mrf.mxu0
        %v2522 = vadd.f32 %v1739, %v2521
        %2523 = vdwg.mxu0
        %2524 = vmatpush.bf16.msra.mxu0 %v2400
        %2525 = vmatpush.bf16.msra.mxu0 %v2396
        %2526 = vmatpush.bf16.msra.mxu0 %v2392
        %2527 = vmatpush.bf16.msra.mxu0 %v2388
        %2528 = vmatpush.bf16.msra.mxu0 %v2384
        %2529 = vmatpush.bf16.msra.mxu0 %v2380
        %2530 = vmatpush.bf16.msra.mxu0 %v2376
        %2531 = vmatpush.bf16.msra.mxu0 %v2372
        %2532 = vmatmul.bf16.gmra.mxu0 %v755
        %v2533 = vpop.f32.mrf.mxu0
        %v2534 = vadd.f32 %v1840, %v2533
        %v2535 = vpop.f32.mrf.mxu0
        %v2536 = vadd.f32 %v1842, %v2535
        %2537 = vmatmul.bf16.gmra.mxu0 %v756
        %v2538 = vpop.f32.mrf.mxu0
        %v2539 = vadd.f32 %v1845, %v2538
        %v2540 = vpop.f32.mrf.mxu0
        %v2541 = vadd.f32 %v1847, %v2540
        %2542 = vmatmul.bf16.gmra.mxu0 %v757
        %v2543 = vpop.f32.mrf.mxu0
        %v2544 = vadd.f32 %v1850, %v2543
        %v2545 = vpop.f32.mrf.mxu0
        %v2546 = vadd.f32 %v1852, %v2545
        %2547 = vmatmul.bf16.gmra.mxu0 %v758
        %v2548 = vpop.f32.mrf.mxu0
        %v2549 = vadd.f32 %v1855, %v2548
        %v2550 = vpop.f32.mrf.mxu0
        %v2551 = vadd.f32 %v1857, %v2550
        %2552 = vmatmul.bf16.gmra.mxu0 %v759
        %v2553 = vpop.f32.mrf.mxu0
        %v2554 = vadd.f32 %v1860, %v2553
        %v2555 = vpop.f32.mrf.mxu0
        %v2556 = vadd.f32 %v1862, %v2555
        %2557 = vmatmul.bf16.gmra.mxu0 %v760
        %v2558 = vpop.f32.mrf.mxu0
        %v2559 = vadd.f32 %v1865, %v2558
        %v2560 = vpop.f32.mrf.mxu0
        %v2561 = vadd.f32 %v1867, %v2560
        %2562 = vmatmul.bf16.gmra.mxu0 %v761
        %v2563 = vpop.f32.mrf.mxu0
        %v2564 = vadd.f32 %v1870, %v2563
        %v2565 = vpop.f32.mrf.mxu0
        %v2566 = vadd.f32 %v1872, %v2565
        %2567 = vmatmul.bf16.gmra.mxu0 %v762
        %v2568 = vpop.f32.mrf.mxu0
        %v2569 = vadd.f32 %v1875, %v2568
        %v2570 = vpop.f32.mrf.mxu0
        %v2571 = vadd.f32 %v1877, %v2570
        %2572 = vmatmul.bf16.gmra.mxu0 %v763
        %v2573 = vpop.f32.mrf.mxu0
        %v2574 = vadd.f32 %v1880, %v2573
        %v2575 = vpop.f32.mrf.mxu0
        %v2576 = vadd.f32 %v1882, %v2575
        %2577 = vmatmul.bf16.gmra.mxu0 %v764
        %v2578 = vpop.f32.mrf.mxu0
        %v2579 = vadd.f32 %v1885, %v2578
        %v2580 = vpop.f32.mrf.mxu0
        %v2581 = vadd.f32 %v1887, %v2580
        %2582 = vmatmul.bf16.gmra.mxu0 %v765
        %v2583 = vpop.f32.mrf.mxu0
        %v2584 = vadd.f32 %v1890, %v2583
        %v2585 = vpop.f32.mrf.mxu0
        %v2586 = vadd.f32 %v1892, %v2585
        %2587 = vmatmul.bf16.gmra.mxu0 %v766
        %v2588 = vpop.f32.mrf.mxu0
        %v2589 = vadd.f32 %v1895, %v2588
        %v2590 = vpop.f32.mrf.mxu0
        %v2591 = vadd.f32 %v1897, %v2590
        %2592 = vmatmul.bf16.gmra.mxu0 %v767
        %v2593 = vpop.f32.mrf.mxu0
        %v2594 = vadd.f32 %v1900, %v2593
        %v2595 = vpop.f32.mrf.mxu0
        %v2596 = vadd.f32 %v1902, %v2595
        %2597 = vmatmul.bf16.gmra.mxu0 %v768
        %v2598 = vpop.f32.mrf.mxu0
        %v2599 = vadd.f32 %v1905, %v2598
        %v2600 = vpop.f32.mrf.mxu0
        %v2601 = vadd.f32 %v1907, %v2600
        %2602 = vmatmul.bf16.gmra.mxu0 %v769
        %v2603 = vpop.f32.mrf.mxu0
        %v2604 = vadd.f32 %v1910, %v2603
        %v2605 = vpop.f32.mrf.mxu0
        %v2606 = vadd.f32 %v1912, %v2605
        %2607 = vmatmul.bf16.gmra.mxu0 %v770
        %v2608 = vpop.f32.mrf.mxu0
        %v2609 = vadd.f32 %v1915, %v2608
        %v2610 = vpop.f32.mrf.mxu0
        %v2611 = vadd.f32 %v1917, %v2610
        %2612 = vdwg.mxu0
        %2613 = vmatpush.bf16.msra.mxu0 %v2401
        %2614 = vmatpush.bf16.msra.mxu0 %v2397
        %2615 = vmatpush.bf16.msra.mxu0 %v2393
        %2616 = vmatpush.bf16.msra.mxu0 %v2389
        %2617 = vmatpush.bf16.msra.mxu0 %v2385
        %2618 = vmatpush.bf16.msra.mxu0 %v2381
        %2619 = vmatpush.bf16.msra.mxu0 %v2377
        %2620 = vmatpush.bf16.msra.mxu0 %v2373
        %2621 = vmatmul.bf16.gmra.mxu0 %v755
        %v2622 = vpop.f32.mrf.mxu0
        %v2623 = vadd.f32 %v2018, %v2622
        %v2624 = vpop.f32.mrf.mxu0
        %v2625 = vadd.f32 %v2020, %v2624
        %2626 = vmatmul.bf16.gmra.mxu0 %v756
        %v2627 = vpop.f32.mrf.mxu0
        %v2628 = vadd.f32 %v2023, %v2627
        %v2629 = vpop.f32.mrf.mxu0
        %v2630 = vadd.f32 %v2025, %v2629
        %2631 = vmatmul.bf16.gmra.mxu0 %v757
        %v2632 = vpop.f32.mrf.mxu0
        %v2633 = vadd.f32 %v2028, %v2632
        %v2634 = vpop.f32.mrf.mxu0
        %v2635 = vadd.f32 %v2030, %v2634
        %2636 = vmatmul.bf16.gmra.mxu0 %v758
        %v2637 = vpop.f32.mrf.mxu0
        %v2638 = vadd.f32 %v2033, %v2637
        %v2639 = vpop.f32.mrf.mxu0
        %v2640 = vadd.f32 %v2035, %v2639
        %2641 = vmatmul.bf16.gmra.mxu0 %v759
        %v2642 = vpop.f32.mrf.mxu0
        %v2643 = vadd.f32 %v2038, %v2642
        %v2644 = vpop.f32.mrf.mxu0
        %v2645 = vadd.f32 %v2040, %v2644
        %2646 = vmatmul.bf16.gmra.mxu0 %v760
        %v2647 = vpop.f32.mrf.mxu0
        %v2648 = vadd.f32 %v2043, %v2647
        %v2649 = vpop.f32.mrf.mxu0
        %v2650 = vadd.f32 %v2045, %v2649
        %2651 = vmatmul.bf16.gmra.mxu0 %v761
        %v2652 = vpop.f32.mrf.mxu0
        %v2653 = vadd.f32 %v2048, %v2652
        %v2654 = vpop.f32.mrf.mxu0
        %v2655 = vadd.f32 %v2050, %v2654
        %2656 = vmatmul.bf16.gmra.mxu0 %v762
        %v2657 = vpop.f32.mrf.mxu0
        %v2658 = vadd.f32 %v2053, %v2657
        %v2659 = vpop.f32.mrf.mxu0
        %v2660 = vadd.f32 %v2055, %v2659
        %2661 = vmatmul.bf16.gmra.mxu0 %v763
        %v2662 = vpop.f32.mrf.mxu0
        %v2663 = vadd.f32 %v2058, %v2662
        %v2664 = vpop.f32.mrf.mxu0
        %v2665 = vadd.f32 %v2060, %v2664
        %2666 = vmatmul.bf16.gmra.mxu0 %v764
        %v2667 = vpop.f32.mrf.mxu0
        %v2668 = vadd.f32 %v2063, %v2667
        %v2669 = vpop.f32.mrf.mxu0
        %v2670 = vadd.f32 %v2065, %v2669
        %2671 = vmatmul.bf16.gmra.mxu0 %v765
        %v2672 = vpop.f32.mrf.mxu0
        %v2673 = vadd.f32 %v2068, %v2672
        %v2674 = vpop.f32.mrf.mxu0
        %v2675 = vadd.f32 %v2070, %v2674
        %2676 = vmatmul.bf16.gmra.mxu0 %v766
        %v2677 = vpop.f32.mrf.mxu0
        %v2678 = vadd.f32 %v2073, %v2677
        %v2679 = vpop.f32.mrf.mxu0
        %v2680 = vadd.f32 %v2075, %v2679
        %2681 = vmatmul.bf16.gmra.mxu0 %v767
        %v2682 = vpop.f32.mrf.mxu0
        %v2683 = vadd.f32 %v2078, %v2682
        %v2684 = vpop.f32.mrf.mxu0
        %v2685 = vadd.f32 %v2080, %v2684
        %2686 = vmatmul.bf16.gmra.mxu0 %v768
        %v2687 = vpop.f32.mrf.mxu0
        %v2688 = vadd.f32 %v2083, %v2687
        %v2689 = vpop.f32.mrf.mxu0
        %v2690 = vadd.f32 %v2085, %v2689
        %2691 = vmatmul.bf16.gmra.mxu0 %v769
        %v2692 = vpop.f32.mrf.mxu0
        %v2693 = vadd.f32 %v2088, %v2692
        %v2694 = vpop.f32.mrf.mxu0
        %v2695 = vadd.f32 %v2090, %v2694
        %2696 = vmatmul.bf16.gmra.mxu0 %v770
        %v2697 = vpop.f32.mrf.mxu0
        %v2698 = vadd.f32 %v2093, %v2697
        %v2699 = vpop.f32.mrf.mxu0
        %v2700 = vadd.f32 %v2095, %v2699
        %2701 = vdwg.mxu0
        %2702 = vmatpush.bf16.msra.mxu0 %v2402
        %2703 = vmatpush.bf16.msra.mxu0 %v2398
        %2704 = vmatpush.bf16.msra.mxu0 %v2394
        %2705 = vmatpush.bf16.msra.mxu0 %v2390
        %2706 = vmatpush.bf16.msra.mxu0 %v2386
        %2707 = vmatpush.bf16.msra.mxu0 %v2382
        %2708 = vmatpush.bf16.msra.mxu0 %v2378
        %2709 = vmatpush.bf16.msra.mxu0 %v2374
        %2710 = vmatmul.bf16.gmra.mxu0 %v755
        %v2711 = vpop.f32.mrf.mxu0
        %v2712 = vadd.f32 %v2196, %v2711
        %v2713 = vpop.f32.mrf.mxu0
        %v2714 = vadd.f32 %v2198, %v2713
        %2715 = vmatmul.bf16.gmra.mxu0 %v756
        %v2716 = vpop.f32.mrf.mxu0
        %v2717 = vadd.f32 %v2201, %v2716
        %v2718 = vpop.f32.mrf.mxu0
        %v2719 = vadd.f32 %v2203, %v2718
        %2720 = vmatmul.bf16.gmra.mxu0 %v757
        %v2721 = vpop.f32.mrf.mxu0
        %v2722 = vadd.f32 %v2206, %v2721
        %v2723 = vpop.f32.mrf.mxu0
        %v2724 = vadd.f32 %v2208, %v2723
        %2725 = vmatmul.bf16.gmra.mxu0 %v758
        %v2726 = vpop.f32.mrf.mxu0
        %v2727 = vadd.f32 %v2211, %v2726
        %v2728 = vpop.f32.mrf.mxu0
        %v2729 = vadd.f32 %v2213, %v2728
        %2730 = vmatmul.bf16.gmra.mxu0 %v759
        %v2731 = vpop.f32.mrf.mxu0
        %v2732 = vadd.f32 %v2216, %v2731
        %v2733 = vpop.f32.mrf.mxu0
        %v2734 = vadd.f32 %v2218, %v2733
        %2735 = vmatmul.bf16.gmra.mxu0 %v760
        %v2736 = vpop.f32.mrf.mxu0
        %v2737 = vadd.f32 %v2221, %v2736
        %v2738 = vpop.f32.mrf.mxu0
        %v2739 = vadd.f32 %v2223, %v2738
        %2740 = vmatmul.bf16.gmra.mxu0 %v761
        %v2741 = vpop.f32.mrf.mxu0
        %v2742 = vadd.f32 %v2226, %v2741
        %v2743 = vpop.f32.mrf.mxu0
        %v2744 = vadd.f32 %v2228, %v2743
        %2745 = vmatmul.bf16.gmra.mxu0 %v762
        %v2746 = vpop.f32.mrf.mxu0
        %v2747 = vadd.f32 %v2231, %v2746
        %v2748 = vpop.f32.mrf.mxu0
        %v2749 = vadd.f32 %v2233, %v2748
        %2750 = vmatmul.bf16.gmra.mxu0 %v763
        %v2751 = vpop.f32.mrf.mxu0
        %v2752 = vadd.f32 %v2236, %v2751
        %v2753 = vpop.f32.mrf.mxu0
        %v2754 = vadd.f32 %v2238, %v2753
        %2755 = vmatmul.bf16.gmra.mxu0 %v764
        %v2756 = vpop.f32.mrf.mxu0
        %v2757 = vadd.f32 %v2241, %v2756
        %v2758 = vpop.f32.mrf.mxu0
        %v2759 = vadd.f32 %v2243, %v2758
        %2760 = vmatmul.bf16.gmra.mxu0 %v765
        %v2761 = vpop.f32.mrf.mxu0
        %v2762 = vadd.f32 %v2246, %v2761
        %v2763 = vpop.f32.mrf.mxu0
        %v2764 = vadd.f32 %v2248, %v2763
        %2765 = vmatmul.bf16.gmra.mxu0 %v766
        %v2766 = vpop.f32.mrf.mxu0
        %v2767 = vadd.f32 %v2251, %v2766
        %v2768 = vpop.f32.mrf.mxu0
        %v2769 = vadd.f32 %v2253, %v2768
        %2770 = vmatmul.bf16.gmra.mxu0 %v767
        %v2771 = vpop.f32.mrf.mxu0
        %v2772 = vadd.f32 %v2256, %v2771
        %v2773 = vpop.f32.mrf.mxu0
        %v2774 = vadd.f32 %v2258, %v2773
        %2775 = vmatmul.bf16.gmra.mxu0 %v768
        %v2776 = vpop.f32.mrf.mxu0
        %v2777 = vadd.f32 %v2261, %v2776
        %v2778 = vpop.f32.mrf.mxu0
        %v2779 = vadd.f32 %v2263, %v2778
        %2780 = vmatmul.bf16.gmra.mxu0 %v769
        %v2781 = vpop.f32.mrf.mxu0
        %v2782 = vadd.f32 %v2266, %v2781
        %v2783 = vpop.f32.mrf.mxu0
        %v2784 = vadd.f32 %v2268, %v2783
        %2785 = vmatmul.bf16.gmra.mxu0 %v770
        %v2786 = vpop.f32.mrf.mxu0
        %v2787 = vadd.f32 %v2271, %v2786
        %v2788 = vpop.f32.mrf.mxu0
        %v2789 = vadd.f32 %v2273, %v2788
        %2790 = vdwg.mxu0
        %v2791 = vld [vmem:[%s6] sm:$0xf]
        %v2793 = vperm.slane %v2791, 0
        %v2794 = vperm.slane %v2791, 1
        %v2795 = vperm.slane %v2791, 2
        %v2796 = vperm.slane %v2791, 3
        %v2801 = vadd.f32 %v2445, %v2793
        %v2802 = vadd.f32 %v2534, %v2794
        %v2803 = vadd.f32 %v2623, %v2795
        %v2804 = vadd.f32 %v2712, %v2796
        %v2805 = vadd.f32 %v2447, %v2793
        %v2806 = vadd.f32 %v2536, %v2794
        %v2807 = vadd.f32 %v2625, %v2795
        %v2808 = vadd.f32 %v2714, %v2796
        %v2809 = vadd.f32 %v2450, %v2793
        %v2810 = vadd.f32 %v2539, %v2794
        %v2811 = vadd.f32 %v2628, %v2795
        %v2812 = vadd.f32 %v2717, %v2796
        %v2813 = vadd.f32 %v2452, %v2793
        %v2814 = vadd.f32 %v2541, %v2794
        %v2815 = vadd.f32 %v2630, %v2795
        %v2816 = vadd.f32 %v2719, %v2796
        %v2817 = vadd.f32 %v2455, %v2793
        %v2818 = vadd.f32 %v2544, %v2794
        %v2819 = vadd.f32 %v2633, %v2795
        %v2820 = vadd.f32 %v2722, %v2796
        %v2821 = vadd.f32 %v2457, %v2793
        %v2822 = vadd.f32 %v2546, %v2794
        %v2823 = vadd.f32 %v2635, %v2795
        %v2824 = vadd.f32 %v2724, %v2796
        %v2825 = vadd.f32 %v2460, %v2793
        %v2826 = vadd.f32 %v2549, %v2794
        %v2827 = vadd.f32 %v2638, %v2795
        %v2828 = vadd.f32 %v2727, %v2796
        %v2829 = vadd.f32 %v2462, %v2793
        %v2830 = vadd.f32 %v2551, %v2794
        %v2831 = vadd.f32 %v2640, %v2795
        %v2832 = vadd.f32 %v2729, %v2796
        %v2833 = vadd.f32 %v2465, %v2793
        %v2834 = vadd.f32 %v2554, %v2794
        %v2835 = vadd.f32 %v2643, %v2795
        %v2836 = vadd.f32 %v2732, %v2796
        %v2837 = vadd.f32 %v2467, %v2793
        %v2838 = vadd.f32 %v2556, %v2794
        %v2839 = vadd.f32 %v2645, %v2795
        %v2840 = vadd.f32 %v2734, %v2796
        %v2841 = vadd.f32 %v2470, %v2793
        %v2842 = vadd.f32 %v2559, %v2794
        %v2843 = vadd.f32 %v2648, %v2795
        %v2844 = vadd.f32 %v2737, %v2796
        %v2845 = vadd.f32 %v2472, %v2793
        %v2846 = vadd.f32 %v2561, %v2794
        %v2847 = vadd.f32 %v2650, %v2795
        %v2848 = vadd.f32 %v2739, %v2796
        %v2849 = vadd.f32 %v2475, %v2793
        %v2850 = vadd.f32 %v2564, %v2794
        %v2851 = vadd.f32 %v2653, %v2795
        %v2852 = vadd.f32 %v2742, %v2796
        %v2853 = vadd.f32 %v2477, %v2793
        %v2854 = vadd.f32 %v2566, %v2794
        %v2855 = vadd.f32 %v2655, %v2795
        %v2856 = vadd.f32 %v2744, %v2796
        %v2857 = vadd.f32 %v2480, %v2793
        %v2858 = vadd.f32 %v2569, %v2794
        %v2859 = vadd.f32 %v2658, %v2795
        %v2860 = vadd.f32 %v2747, %v2796
        %v2861 = vadd.f32 %v2482, %v2793
        %v2862 = vadd.f32 %v2571, %v2794
        %v2863 = vadd.f32 %v2660, %v2795
        %v2864 = vadd.f32 %v2749, %v2796
        %v2865 = vadd.f32 %v2485, %v2793
        %v2866 = vadd.f32 %v2574, %v2794
        %v2867 = vadd.f32 %v2663, %v2795
        %v2868 = vadd.f32 %v2752, %v2796
        %v2869 = vadd.f32 %v2487, %v2793
        %v2870 = vadd.f32 %v2576, %v2794
        %v2871 = vadd.f32 %v2665, %v2795
        %v2872 = vadd.f32 %v2754, %v2796
        %v2873 = vadd.f32 %v2490, %v2793
        %v2874 = vadd.f32 %v2579, %v2794
        %v2875 = vadd.f32 %v2668, %v2795
        %v2876 = vadd.f32 %v2757, %v2796
        %v2877 = vadd.f32 %v2492, %v2793
        %v2878 = vadd.f32 %v2581, %v2794
        %v2879 = vadd.f32 %v2670, %v2795
        %v2880 = vadd.f32 %v2759, %v2796
        %v2881 = vadd.f32 %v2495, %v2793
        %v2882 = vadd.f32 %v2584, %v2794
        %v2883 = vadd.f32 %v2673, %v2795
        %v2884 = vadd.f32 %v2762, %v2796
        %v2885 = vadd.f32 %v2497, %v2793
        %v2886 = vadd.f32 %v2586, %v2794
        %v2887 = vadd.f32 %v2675, %v2795
        %v2888 = vadd.f32 %v2764, %v2796
        %v2889 = vadd.f32 %v2500, %v2793
        %v2890 = vadd.f32 %v2589, %v2794
        %v2891 = vadd.f32 %v2678, %v2795
        %v2892 = vadd.f32 %v2767, %v2796
        %v2893 = vadd.f32 %v2502, %v2793
        %v2894 = vadd.f32 %v2591, %v2794
        %v2895 = vadd.f32 %v2680, %v2795
        %v2896 = vadd.f32 %v2769, %v2796
        %v2897 = vadd.f32 %v2505, %v2793
        %v2898 = vadd.f32 %v2594, %v2794
        %v2899 = vadd.f32 %v2683, %v2795
        %v2900 = vadd.f32 %v2772, %v2796
        %v2901 = vadd.f32 %v2507, %v2793
        %v2902 = vadd.f32 %v2596, %v2794
        %v2903 = vadd.f32 %v2685, %v2795
        %v2904 = vadd.f32 %v2774, %v2796
        %v2905 = vadd.f32 %v2510, %v2793
        %v2906 = vadd.f32 %v2599, %v2794
        %v2907 = vadd.f32 %v2688, %v2795
        %v2908 = vadd.f32 %v2777, %v2796
        %v2909 = vadd.f32 %v2512, %v2793
        %v2910 = vadd.f32 %v2601, %v2794
        %v2911 = vadd.f32 %v2690, %v2795
        %v2912 = vadd.f32 %v2779, %v2796
        %v2913 = vadd.f32 %v2515, %v2793
        %v2914 = vadd.f32 %v2604, %v2794
        %v2915 = vadd.f32 %v2693, %v2795
        %v2916 = vadd.f32 %v2782, %v2796
        %v2917 = vadd.f32 %v2517, %v2793
        %v2918 = vadd.f32 %v2606, %v2794
        %v2919 = vadd.f32 %v2695, %v2795
        %v2920 = vadd.f32 %v2784, %v2796
        %v2921 = vadd.f32 %v2520, %v2793
        %v2922 = vadd.f32 %v2609, %v2794
        %v2923 = vadd.f32 %v2698, %v2795
        %v2924 = vadd.f32 %v2787, %v2796
        %v2925 = vadd.f32 %v2522, %v2793
        %v2926 = vadd.f32 %v2611, %v2794
        %v2927 = vadd.f32 %v2700, %v2795
        %v2928 = vadd.f32 %v2789, %v2796
        %v2929 = vmax.f32 %v2801, 0.0
        %v2930 = vmax.f32 %v2802, 0.0
        %v2931 = vmax.f32 %v2803, 0.0
        %v2932 = vmax.f32 %v2804, 0.0
        %v2933 = vmax.f32 %v2805, 0.0
        %v2934 = vmax.f32 %v2806, 0.0
        %v2935 = vmax.f32 %v2807, 0.0
        %v2936 = vmax.f32 %v2808, 0.0
        %v2937 = vmax.f32 %v2809, 0.0
        %v2938 = vmax.f32 %v2810, 0.0
        %v2939 = vmax.f32 %v2811, 0.0
        %v2940 = vmax.f32 %v2812, 0.0
        %v2941 = vmax.f32 %v2813, 0.0
        %v2942 = vmax.f32 %v2814, 0.0
        %v2943 = vmax.f32 %v2815, 0.0
        %v2944 = vmax.f32 %v2816, 0.0
        %v2945 = vmax.f32 %v2817, 0.0
        %v2946 = vmax.f32 %v2818, 0.0
        %v2947 = vmax.f32 %v2819, 0.0
        %v2948 = vmax.f32 %v2820, 0.0
        %v2949 = vmax.f32 %v2821, 0.0
        %v2950 = vmax.f32 %v2822, 0.0
        %v2951 = vmax.f32 %v2823, 0.0
        %v2952 = vmax.f32 %v2824, 0.0
        %v2953 = vmax.f32 %v2825, 0.0
        %v2954 = vmax.f32 %v2826, 0.0
        %v2955 = vmax.f32 %v2827, 0.0
        %v2956 = vmax.f32 %v2828, 0.0
        %v2957 = vmax.f32 %v2829, 0.0
        %v2958 = vmax.f32 %v2830, 0.0
        %v2959 = vmax.f32 %v2831, 0.0
        %v2960 = vmax.f32 %v2832, 0.0
        %v2961 = vmax.f32 %v2833, 0.0
        %v2962 = vmax.f32 %v2834, 0.0
        %v2963 = vmax.f32 %v2835, 0.0
        %v2964 = vmax.f32 %v2836, 0.0
        %v2965 = vmax.f32 %v2837, 0.0
        %v2966 = vmax.f32 %v2838, 0.0
        %v2967 = vmax.f32 %v2839, 0.0
        %v2968 = vmax.f32 %v2840, 0.0
        %v2969 = vmax.f32 %v2841, 0.0
        %v2970 = vmax.f32 %v2842, 0.0
        %v2971 = vmax.f32 %v2843, 0.0
        %v2972 = vmax.f32 %v2844, 0.0
        %v2973 = vmax.f32 %v2845, 0.0
        %v2974 = vmax.f32 %v2846, 0.0
        %v2975 = vmax.f32 %v2847, 0.0
        %v2976 = vmax.f32 %v2848, 0.0
        %v2977 = vmax.f32 %v2849, 0.0
        %v2978 = vmax.f32 %v2850, 0.0
        %v2979 = vmax.f32 %v2851, 0.0
        %v2980 = vmax.f32 %v2852, 0.0
        %v2981 = vmax.f32 %v2853, 0.0
        %v2982 = vmax.f32 %v2854, 0.0
        %v2983 = vmax.f32 %v2855, 0.0
        %v2984 = vmax.f32 %v2856, 0.0
        %v2985 = vmax.f32 %v2857, 0.0
        %v2986 = vmax.f32 %v2858, 0.0
        %v2987 = vmax.f32 %v2859, 0.0
        %v2988 = vmax.f32 %v2860, 0.0
        %v2989 = vmax.f32 %v2861, 0.0
        %v2990 = vmax.f32 %v2862, 0.0
        %v2991 = vmax.f32 %v2863, 0.0
        %v2992 = vmax.f32 %v2864, 0.0
        %v2993 = vmax.f32 %v2865, 0.0
        %v2994 = vmax.f32 %v2866, 0.0
        %v2995 = vmax.f32 %v2867, 0.0
        %v2996 = vmax.f32 %v2868, 0.0
        %v2997 = vmax.f32 %v2869, 0.0
        %v2998 = vmax.f32 %v2870, 0.0
        %v2999 = vmax.f32 %v2871, 0.0
        %v3000 = vmax.f32 %v2872, 0.0
        %v3001 = vmax.f32 %v2873, 0.0
        %v3002 = vmax.f32 %v2874, 0.0
        %v3003 = vmax.f32 %v2875, 0.0
        %v3004 = vmax.f32 %v2876, 0.0
        %v3005 = vmax.f32 %v2877, 0.0
        %v3006 = vmax.f32 %v2878, 0.0
        %v3007 = vmax.f32 %v2879, 0.0
        %v3008 = vmax.f32 %v2880, 0.0
        %v3009 = vmax.f32 %v2881, 0.0
        %v3010 = vmax.f32 %v2882, 0.0
        %v3011 = vmax.f32 %v2883, 0.0
        %v3012 = vmax.f32 %v2884, 0.0
        %v3013 = vmax.f32 %v2885, 0.0
        %v3014 = vmax.f32 %v2886, 0.0
        %v3015 = vmax.f32 %v2887, 0.0
        %v3016 = vmax.f32 %v2888, 0.0
        %v3017 = vmax.f32 %v2889, 0.0
        %v3018 = vmax.f32 %v2890, 0.0
        %v3019 = vmax.f32 %v2891, 0.0
        %v3020 = vmax.f32 %v2892, 0.0
        %v3021 = vmax.f32 %v2893, 0.0
        %v3022 = vmax.f32 %v2894, 0.0
        %v3023 = vmax.f32 %v2895, 0.0
        %v3024 = vmax.f32 %v2896, 0.0
        %v3025 = vmax.f32 %v2897, 0.0
        %v3026 = vmax.f32 %v2898, 0.0
        %v3027 = vmax.f32 %v2899, 0.0
        %v3028 = vmax.f32 %v2900, 0.0
        %v3029 = vmax.f32 %v2901, 0.0
        %v3030 = vmax.f32 %v2902, 0.0
        %v3031 = vmax.f32 %v2903, 0.0
        %v3032 = vmax.f32 %v2904, 0.0
        %v3033 = vmax.f32 %v2905, 0.0
        %v3034 = vmax.f32 %v2906, 0.0
        %v3035 = vmax.f32 %v2907, 0.0
        %v3036 = vmax.f32 %v2908, 0.0
        %v3037 = vmax.f32 %v2909, 0.0
        %v3038 = vmax.f32 %v2910, 0.0
        %v3039 = vmax.f32 %v2911, 0.0
        %v3040 = vmax.f32 %v2912, 0.0
        %v3041 = vmax.f32 %v2913, 0.0
        %v3042 = vmax.f32 %v2914, 0.0
        %v3043 = vmax.f32 %v2915, 0.0
        %v3044 = vmax.f32 %v2916, 0.0
        %v3045 = vmax.f32 %v2917, 0.0
        %v3046 = vmax.f32 %v2918, 0.0
        %v3047 = vmax.f32 %v2919, 0.0
        %v3048 = vmax.f32 %v2920, 0.0
        %v3049 = vmax.f32 %v2921, 0.0
        %v3050 = vmax.f32 %v2922, 0.0
        %v3051 = vmax.f32 %v2923, 0.0
        %v3052 = vmax.f32 %v2924, 0.0
        %v3053 = vmax.f32 %v2925, 0.0
        %v3054 = vmax.f32 %v2926, 0.0
        %v3055 = vmax.f32 %v2927, 0.0
        %v3056 = vmax.f32 %v2928, 0.0
        %v3057 = vpack.c.bf16 %v2933, %v2929
        %v3058 = vpack.c.bf16 %v2934, %v2930
        %v3059 = vpack.c.bf16 %v2935, %v2931
        %v3060 = vpack.c.bf16 %v2936, %v2932
        %v3061 = vpack.c.bf16 %v2941, %v2937
        %v3062 = vpack.c.bf16 %v2942, %v2938
        %v3063 = vpack.c.bf16 %v2943, %v2939
        %v3064 = vpack.c.bf16 %v2944, %v2940
        %v3065 = vpack.c.bf16 %v2949, %v2945
        %v3066 = vpack.c.bf16 %v2950, %v2946
        %v3067 = vpack.c.bf16 %v2951, %v2947
        %v3068 = vpack.c.bf16 %v2952, %v2948
        %v3069 = vpack.c.bf16 %v2957, %v2953
        %v3070 = vpack.c.bf16 %v2958, %v2954
        %v3071 = vpack.c.bf16 %v2959, %v2955
        %v3072 = vpack.c.bf16 %v2960, %v2956
        %v3073 = vpack.c.bf16 %v2965, %v2961
        %v3074 = vpack.c.bf16 %v2966, %v2962
        %v3075 = vpack.c.bf16 %v2967, %v2963
        %v3076 = vpack.c.bf16 %v2968, %v2964
        %v3077 = vpack.c.bf16 %v2973, %v2969
        %v3078 = vpack.c.bf16 %v2974, %v2970
        %v3079 = vpack.c.bf16 %v2975, %v2971
        %v3080 = vpack.c.bf16 %v2976, %v2972
        %v3081 = vpack.c.bf16 %v2981, %v2977
        %v3082 = vpack.c.bf16 %v2982, %v2978
        %v3083 = vpack.c.bf16 %v2983, %v2979
        %v3084 = vpack.c.bf16 %v2984, %v2980
        %v3085 = vpack.c.bf16 %v2989, %v2985
        %v3086 = vpack.c.bf16 %v2990, %v2986
        %v3087 = vpack.c.bf16 %v2991, %v2987
        %v3088 = vpack.c.bf16 %v2992, %v2988
        %v3089 = vpack.c.bf16 %v2997, %v2993
        %v3090 = vpack.c.bf16 %v2998, %v2994
        %v3091 = vpack.c.bf16 %v2999, %v2995
        %v3092 = vpack.c.bf16 %v3000, %v2996
        %v3093 = vpack.c.bf16 %v3005, %v3001
        %v3094 = vpack.c.bf16 %v3006, %v3002
        %v3095 = vpack.c.bf16 %v3007, %v3003
        %v3096 = vpack.c.bf16 %v3008, %v3004
        %v3097 = vpack.c.bf16 %v3013, %v3009
        %v3098 = vpack.c.bf16 %v3014, %v3010
        %v3099 = vpack.c.bf16 %v3015, %v3011
        %v3100 = vpack.c.bf16 %v3016, %v3012
        %v3101 = vpack.c.bf16 %v3021, %v3017
        %v3102 = vpack.c.bf16 %v3022, %v3018
        %v3103 = vpack.c.bf16 %v3023, %v3019
        %v3104 = vpack.c.bf16 %v3024, %v3020
        %v3105 = vpack.c.bf16 %v3029, %v3025
        %v3106 = vpack.c.bf16 %v3030, %v3026
        %v3107 = vpack.c.bf16 %v3031, %v3027
        %v3108 = vpack.c.bf16 %v3032, %v3028
        %v3109 = vpack.c.bf16 %v3037, %v3033
        %v3110 = vpack.c.bf16 %v3038, %v3034
        %v3111 = vpack.c.bf16 %v3039, %v3035
        %v3112 = vpack.c.bf16 %v3040, %v3036
        %v3113 = vpack.c.bf16 %v3045, %v3041
        %v3114 = vpack.c.bf16 %v3046, %v3042
        %v3115 = vpack.c.bf16 %v3047, %v3043
        %v3116 = vpack.c.bf16 %v3048, %v3044
        %v3117 = vpack.c.bf16 %v3053, %v3049
        %v3118 = vpack.c.bf16 %v3054, %v3050
        %v3119 = vpack.c.bf16 %v3055, %v3051
        %v3120 = vpack.c.bf16 %v3056, %v3052
        %v3121 = vld [vmem:[#allocation8] sm:$0xff]
        %v3122 = vld [vmem:[#allocation8 + $0x20] sm:$0xff]
        %v3123 = vld [vmem:[#allocation8 + $0x40] sm:$0xff]
        %v3124 = vld [vmem:[#allocation8 + $0x60] sm:$0xff]
        %v3125 = vld [vmem:[#allocation8 + $0x80] sm:$0xff]
        %v3126 = vld [vmem:[#allocation8 + $0xa0] sm:$0xff]
        %v3127 = vld [vmem:[#allocation8 + $0xc0] sm:$0xff]
        %v3128 = vld [vmem:[#allocation8 + $0xe0] sm:$0xff]
        %v3129 = vld [vmem:[#allocation8 + $0x100] sm:$0xff]
        %v3130 = vld [vmem:[#allocation8 + $0x120] sm:$0xff]
        %v3131 = vld [vmem:[#allocation8 + $0x140] sm:$0xff]
        %v3132 = vld [vmem:[#allocation8 + $0x160] sm:$0xff]
        %v3133 = vld [vmem:[#allocation8 + $0x180] sm:$0xff]
        %v3134 = vld [vmem:[#allocation8 + $0x1a0] sm:$0xff]
        %v3135 = vld [vmem:[#allocation8 + $0x1c0] sm:$0xff]
        %v3136 = vld [vmem:[#allocation8 + $0x1e0] sm:$0xff]
        %v3137 = vld [vmem:[#allocation8 + $0x200] sm:$0xff]
        %v3138 = vld [vmem:[#allocation8 + $0x220] sm:$0xff]
        %v3139 = vld [vmem:[#allocation8 + $0x240] sm:$0xff]
        %v3140 = vld [vmem:[#allocation8 + $0x260] sm:$0xff]
        %v3141 = vld [vmem:[#allocation8 + $0x280] sm:$0xff]
        %v3142 = vld [vmem:[#allocation8 + $0x2a0] sm:$0xff]
        %v3143 = vld [vmem:[#allocation8 + $0x2c0] sm:$0xff]
        %v3144 = vld [vmem:[#allocation8 + $0x2e0] sm:$0xff]
        %v3145 = vld [vmem:[#allocation8 + $0x300] sm:$0xff]
        %v3146 = vld [vmem:[#allocation8 + $0x320] sm:$0xff]
        %v3147 = vld [vmem:[#allocation8 + $0x340] sm:$0xff]
        %v3148 = vld [vmem:[#allocation8 + $0x360] sm:$0xff]
        %v3149 = vld [vmem:[#allocation8 + $0x380] sm:$0xff]
        %v3150 = vld [vmem:[#allocation8 + $0x3a0] sm:$0xff]
        %v3151 = vld [vmem:[#allocation8 + $0x3c0] sm:$0xff]
        %v3152 = vld [vmem:[#allocation8 + $0x3e0] sm:$0xff]
        %v3153 = vld [vmem:[#allocation8 + $0x400] sm:$0xff]
        %v3154 = vld [vmem:[#allocation8 + $0x420] sm:$0xff]
        %v3155 = vld [vmem:[#allocation8 + $0x440] sm:$0xff]
        %v3156 = vld [vmem:[#allocation8 + $0x460] sm:$0xff]
        %v3157 = vld [vmem:[#allocation8 + $0x480] sm:$0xff]
        %v3158 = vld [vmem:[#allocation8 + $0x4a0] sm:$0xff]
        %v3159 = vld [vmem:[#allocation8 + $0x4c0] sm:$0xff]
        %v3160 = vld [vmem:[#allocation8 + $0x4e0] sm:$0xff]
        %v3161 = vld [vmem:[#allocation8 + $0x500] sm:$0xff]
        %v3162 = vld [vmem:[#allocation8 + $0x520] sm:$0xff]
        %v3163 = vld [vmem:[#allocation8 + $0x540] sm:$0xff]
        %v3164 = vld [vmem:[#allocation8 + $0x560] sm:$0xff]
        %v3165 = vld [vmem:[#allocation8 + $0x580] sm:$0xff]
        %v3166 = vld [vmem:[#allocation8 + $0x5a0] sm:$0xff]
        %v3167 = vld [vmem:[#allocation8 + $0x5c0] sm:$0xff]
        %v3168 = vld [vmem:[#allocation8 + $0x5e0] sm:$0xff]
        %v3169 = vld [vmem:[#allocation8 + $0x600] sm:$0xff]
        %v3170 = vld [vmem:[#allocation8 + $0x620] sm:$0xff]
        %v3171 = vld [vmem:[#allocation8 + $0x640] sm:$0xff]
        %v3172 = vld [vmem:[#allocation8 + $0x660] sm:$0xff]
        %v3173 = vld [vmem:[#allocation8 + $0x680] sm:$0xff]
        %v3174 = vld [vmem:[#allocation8 + $0x6a0] sm:$0xff]
        %v3175 = vld [vmem:[#allocation8 + $0x6c0] sm:$0xff]
        %v3176 = vld [vmem:[#allocation8 + $0x6e0] sm:$0xff]
        %v3177 = vld [vmem:[#allocation8 + $0x700] sm:$0xff]
        %v3178 = vld [vmem:[#allocation8 + $0x720] sm:$0xff]
        %v3179 = vld [vmem:[#allocation8 + $0x740] sm:$0xff]
        %v3180 = vld [vmem:[#allocation8 + $0x760] sm:$0xff]
        %v3181 = vld [vmem:[#allocation8 + $0x780] sm:$0xff]
        %v3182 = vld [vmem:[#allocation8 + $0x7a0] sm:$0xff]
        %v3183 = vld [vmem:[#allocation8 + $0x7c0] sm:$0xff]
        %v3184 = vld [vmem:[#allocation8 + $0x7e0] sm:$0xff]
        %v3185 = vld [vmem:[#allocation10] sm:$0x3]
        %v3187 = vperm.slane %v3185, 0
        %v3188 = vperm.slane %v3185, 1
        %v3255 = vunpack.c.l.b16 %v3121
        %v3256 = vunpack.c.h.b16 %v3121
        %v3257 = vunpack.c.l.b16 %v3122
        %v3258 = vunpack.c.h.b16 %v3122
        %v3259 = vunpack.c.l.b16 %v3123
        %v3260 = vunpack.c.h.b16 %v3123
        %v3261 = vunpack.c.l.b16 %v3124
        %v3262 = vunpack.c.h.b16 %v3124
        %v3263 = vunpack.c.l.b16 %v3125
        %v3264 = vunpack.c.h.b16 %v3125
        %v3265 = vunpack.c.l.b16 %v3126
        %v3266 = vunpack.c.h.b16 %v3126
        %v3267 = vunpack.c.l.b16 %v3127
        %v3268 = vunpack.c.h.b16 %v3127
        %v3269 = vunpack.c.l.b16 %v3128
        %v3270 = vunpack.c.h.b16 %v3128
        %v3271 = vunpack.c.l.b16 %v3129
        %v3272 = vunpack.c.h.b16 %v3129
        %v3273 = vunpack.c.l.b16 %v3130
        %v3274 = vunpack.c.h.b16 %v3130
        %v3275 = vunpack.c.l.b16 %v3131
        %v3276 = vunpack.c.h.b16 %v3131
        %v3277 = vunpack.c.l.b16 %v3132
        %v3278 = vunpack.c.h.b16 %v3132
        %v3279 = vunpack.c.l.b16 %v3133
        %v3280 = vunpack.c.h.b16 %v3133
        %v3281 = vunpack.c.l.b16 %v3134
        %v3282 = vunpack.c.h.b16 %v3134
        %v3283 = vunpack.c.l.b16 %v3135
        %v3284 = vunpack.c.h.b16 %v3135
        %v3285 = vunpack.c.l.b16 %v3136
        %v3286 = vunpack.c.h.b16 %v3136
        %v3287 = vunpack.c.l.b16 %v3137
        %v3288 = vunpack.c.h.b16 %v3137
        %v3289 = vunpack.c.l.b16 %v3138
        %v3290 = vunpack.c.h.b16 %v3138
        %v3291 = vunpack.c.l.b16 %v3139
        %v3292 = vunpack.c.h.b16 %v3139
        %v3293 = vunpack.c.l.b16 %v3140
        %v3294 = vunpack.c.h.b16 %v3140
        %v3295 = vunpack.c.l.b16 %v3141
        %v3296 = vunpack.c.h.b16 %v3141
        %v3297 = vunpack.c.l.b16 %v3142
        %v3298 = vunpack.c.h.b16 %v3142
        %v3299 = vunpack.c.l.b16 %v3143
        %v3300 = vunpack.c.h.b16 %v3143
        %v3301 = vunpack.c.l.b16 %v3144
        %v3302 = vunpack.c.h.b16 %v3144
        %v3303 = vunpack.c.l.b16 %v3145
        %v3304 = vunpack.c.h.b16 %v3145
        %v3305 = vunpack.c.l.b16 %v3146
        %v3306 = vunpack.c.h.b16 %v3146
        %v3307 = vunpack.c.l.b16 %v3147
        %v3308 = vunpack.c.h.b16 %v3147
        %v3309 = vunpack.c.l.b16 %v3148
        %v3310 = vunpack.c.h.b16 %v3148
        %v3311 = vunpack.c.l.b16 %v3149
        %v3312 = vunpack.c.h.b16 %v3149
        %v3313 = vunpack.c.l.b16 %v3150
        %v3314 = vunpack.c.h.b16 %v3150
        %v3315 = vunpack.c.l.b16 %v3151
        %v3316 = vunpack.c.h.b16 %v3151
        %v3317 = vunpack.c.l.b16 %v3152
        %v3318 = vunpack.c.h.b16 %v3152
        %v3319 = vunpack.c.l.b16 %v3153
        %v3320 = vunpack.c.h.b16 %v3153
        %v3321 = vunpack.c.l.b16 %v3154
        %v3322 = vunpack.c.h.b16 %v3154
        %v3323 = vunpack.c.l.b16 %v3155
        %v3324 = vunpack.c.h.b16 %v3155
        %v3325 = vunpack.c.l.b16 %v3156
        %v3326 = vunpack.c.h.b16 %v3156
        %v3327 = vunpack.c.l.b16 %v3157
        %v3328 = vunpack.c.h.b16 %v3157
        %v3329 = vunpack.c.l.b16 %v3158
        %v3330 = vunpack.c.h.b16 %v3158
        %v3331 = vunpack.c.l.b16 %v3159
        %v3332 = vunpack.c.h.b16 %v3159
        %v3333 = vunpack.c.l.b16 %v3160
        %v3334 = vunpack.c.h.b16 %v3160
        %v3335 = vunpack.c.l.b16 %v3161
        %v3336 = vunpack.c.h.b16 %v3161
        %v3337 = vunpack.c.l.b16 %v3162
        %v3338 = vunpack.c.h.b16 %v3162
        %v3339 = vunpack.c.l.b16 %v3163
        %v3340 = vunpack.c.h.b16 %v3163
        %v3341 = vunpack.c.l.b16 %v3164
        %v3342 = vunpack.c.h.b16 %v3164
        %v3343 = vunpack.c.l.b16 %v3165
        %v3344 = vunpack.c.h.b16 %v3165
        %v3345 = vunpack.c.l.b16 %v3166
        %v3346 = vunpack.c.h.b16 %v3166
        %v3347 = vunpack.c.l.b16 %v3167
        %v3348 = vunpack.c.h.b16 %v3167
        %v3349 = vunpack.c.l.b16 %v3168
        %v3350 = vunpack.c.h.b16 %v3168
        %v3351 = vunpack.c.l.b16 %v3169
        %v3352 = vunpack.c.h.b16 %v3169
        %v3353 = vunpack.c.l.b16 %v3170
        %v3354 = vunpack.c.h.b16 %v3170
        %v3355 = vunpack.c.l.b16 %v3171
        %v3356 = vunpack.c.h.b16 %v3171
        %v3357 = vunpack.c.l.b16 %v3172
        %v3358 = vunpack.c.h.b16 %v3172
        %v3359 = vunpack.c.l.b16 %v3173
        %v3360 = vunpack.c.h.b16 %v3173
        %v3361 = vunpack.c.l.b16 %v3174
        %v3362 = vunpack.c.h.b16 %v3174
        %v3363 = vunpack.c.l.b16 %v3175
        %v3364 = vunpack.c.h.b16 %v3175
        %v3365 = vunpack.c.l.b16 %v3176
        %v3366 = vunpack.c.h.b16 %v3176
        %v3367 = vunpack.c.l.b16 %v3177
        %v3368 = vunpack.c.h.b16 %v3177
        %v3369 = vunpack.c.l.b16 %v3178
        %v3370 = vunpack.c.h.b16 %v3178
        %v3371 = vunpack.c.l.b16 %v3179
        %v3372 = vunpack.c.h.b16 %v3179
        %v3373 = vunpack.c.l.b16 %v3180
        %v3374 = vunpack.c.h.b16 %v3180
        %v3375 = vunpack.c.l.b16 %v3181
        %v3376 = vunpack.c.h.b16 %v3181
        %v3377 = vunpack.c.l.b16 %v3182
        %v3378 = vunpack.c.h.b16 %v3182
        %v3379 = vunpack.c.l.b16 %v3183
        %v3380 = vunpack.c.h.b16 %v3183
        %v3381 = vunpack.c.l.b16 %v3184
        %v3382 = vunpack.c.h.b16 %v3184
        %v3383 = vpack.c.b16 %v3257, %v3255
        %v3384 = vpack.c.b16 %v3258, %v3256
        %v3385 = vpack.c.b16 %v3261, %v3259
        %v3386 = vpack.c.b16 %v3262, %v3260
        %v3387 = vpack.c.b16 %v3265, %v3263
        %v3388 = vpack.c.b16 %v3266, %v3264
        %v3389 = vpack.c.b16 %v3269, %v3267
        %v3390 = vpack.c.b16 %v3270, %v3268
        %v3391 = vpack.c.b16 %v3273, %v3271
        %v3392 = vpack.c.b16 %v3274, %v3272
        %v3393 = vpack.c.b16 %v3277, %v3275
        %v3394 = vpack.c.b16 %v3278, %v3276
        %v3395 = vpack.c.b16 %v3281, %v3279
        %v3396 = vpack.c.b16 %v3282, %v3280
        %v3397 = vpack.c.b16 %v3285, %v3283
        %v3398 = vpack.c.b16 %v3286, %v3284
        %v3399 = vpack.c.b16 %v3289, %v3287
        %v3400 = vpack.c.b16 %v3290, %v3288
        %v3401 = vpack.c.b16 %v3293, %v3291
        %v3402 = vpack.c.b16 %v3294, %v3292
        %v3403 = vpack.c.b16 %v3297, %v3295
        %v3404 = vpack.c.b16 %v3298, %v3296
        %v3405 = vpack.c.b16 %v3301, %v3299
        %v3406 = vpack.c.b16 %v3302, %v3300
        %v3407 = vpack.c.b16 %v3305, %v3303
        %v3408 = vpack.c.b16 %v3306, %v3304
        %v3409 = vpack.c.b16 %v3309, %v3307
        %v3410 = vpack.c.b16 %v3310, %v3308
        %v3411 = vpack.c.b16 %v3313, %v3311
        %v3412 = vpack.c.b16 %v3314, %v3312
        %v3413 = vpack.c.b16 %v3317, %v3315
        %v3414 = vpack.c.b16 %v3318, %v3316
        %v3415 = vpack.c.b16 %v3321, %v3319
        %v3416 = vpack.c.b16 %v3322, %v3320
        %v3417 = vpack.c.b16 %v3325, %v3323
        %v3418 = vpack.c.b16 %v3326, %v3324
        %v3419 = vpack.c.b16 %v3329, %v3327
        %v3420 = vpack.c.b16 %v3330, %v3328
        %v3421 = vpack.c.b16 %v3333, %v3331
        %v3422 = vpack.c.b16 %v3334, %v3332
        %v3423 = vpack.c.b16 %v3337, %v3335
        %v3424 = vpack.c.b16 %v3338, %v3336
        %v3425 = vpack.c.b16 %v3341, %v3339
        %v3426 = vpack.c.b16 %v3342, %v3340
        %v3427 = vpack.c.b16 %v3345, %v3343
        %v3428 = vpack.c.b16 %v3346, %v3344
        %v3429 = vpack.c.b16 %v3349, %v3347
        %v3430 = vpack.c.b16 %v3350, %v3348
        %v3431 = vpack.c.b16 %v3353, %v3351
        %v3432 = vpack.c.b16 %v3354, %v3352
        %v3433 = vpack.c.b16 %v3357, %v3355
        %v3434 = vpack.c.b16 %v3358, %v3356
        %v3435 = vpack.c.b16 %v3361, %v3359
        %v3436 = vpack.c.b16 %v3362, %v3360
        %v3437 = vpack.c.b16 %v3365, %v3363
        %v3438 = vpack.c.b16 %v3366, %v3364
        %v3439 = vpack.c.b16 %v3369, %v3367
        %v3440 = vpack.c.b16 %v3370, %v3368
        %v3441 = vpack.c.b16 %v3373, %v3371
        %v3442 = vpack.c.b16 %v3374, %v3372
        %v3443 = vpack.c.b16 %v3377, %v3375
        %v3444 = vpack.c.b16 %v3378, %v3376
        %v3445 = vpack.c.b16 %v3381, %v3379
        %v3446 = vpack.c.b16 %v3382, %v3380
        %3511 = vmatpush.bf16.msra.mxu0 %v3397
        %3512 = vmatpush.bf16.msra.mxu0 %v3395
        %3513 = vmatpush.bf16.msra.mxu0 %v3393
        %3514 = vmatpush.bf16.msra.mxu0 %v3391
        %3515 = vmatpush.bf16.msra.mxu0 %v3389
        %3516 = vmatpush.bf16.msra.mxu0 %v3387
        %3517 = vmatpush.bf16.msra.mxu0 %v3385
        %3518 = vmatpush.bf16.msra.mxu0 %v3383
        %3519 = vmatmul.bf16.gmra.mxu0 %v3057
        %v3520 = vpop.f32.mrf.mxu0
        %v3521 = vadd.f32 %v3187, %v3520
        %v3522 = vpop.f32.mrf.mxu0
        %v3523 = vadd.f32 %v3187, %v3522
        %3524 = vmatmul.bf16.gmra.mxu0 %v3061
        %v3525 = vpop.f32.mrf.mxu0
        %v3526 = vadd.f32 %v3187, %v3525
        %v3527 = vpop.f32.mrf.mxu0
        %v3528 = vadd.f32 %v3187, %v3527
        %3529 = vmatmul.bf16.gmra.mxu0 %v3065
        %v3530 = vpop.f32.mrf.mxu0
        %v3531 = vadd.f32 %v3187, %v3530
        %v3532 = vpop.f32.mrf.mxu0
        %v3533 = vadd.f32 %v3187, %v3532
        %3534 = vmatmul.bf16.gmra.mxu0 %v3069
        %v3535 = vpop.f32.mrf.mxu0
        %v3536 = vadd.f32 %v3187, %v3535
        %v3537 = vpop.f32.mrf.mxu0
        %v3538 = vadd.f32 %v3187, %v3537
        %3539 = vmatmul.bf16.gmra.mxu0 %v3073
        %v3540 = vpop.f32.mrf.mxu0
        %v3541 = vadd.f32 %v3187, %v3540
        %v3542 = vpop.f32.mrf.mxu0
        %v3543 = vadd.f32 %v3187, %v3542
        %3544 = vmatmul.bf16.gmra.mxu0 %v3077
        %v3545 = vpop.f32.mrf.mxu0
        %v3546 = vadd.f32 %v3187, %v3545
        %v3547 = vpop.f32.mrf.mxu0
        %v3548 = vadd.f32 %v3187, %v3547
        %3549 = vmatmul.bf16.gmra.mxu0 %v3081
        %v3550 = vpop.f32.mrf.mxu0
        %v3551 = vadd.f32 %v3187, %v3550
        %v3552 = vpop.f32.mrf.mxu0
        %v3553 = vadd.f32 %v3187, %v3552
        %3554 = vmatmul.bf16.gmra.mxu0 %v3085
        %v3555 = vpop.f32.mrf.mxu0
        %v3556 = vadd.f32 %v3187, %v3555
        %v3557 = vpop.f32.mrf.mxu0
        %v3558 = vadd.f32 %v3187, %v3557
        %3559 = vmatmul.bf16.gmra.mxu0 %v3089
        %v3560 = vpop.f32.mrf.mxu0
        %v3561 = vadd.f32 %v3187, %v3560
        %v3562 = vpop.f32.mrf.mxu0
        %v3563 = vadd.f32 %v3187, %v3562
        %3564 = vmatmul.bf16.gmra.mxu0 %v3093
        %v3565 = vpop.f32.mrf.mxu0
        %v3566 = vadd.f32 %v3187, %v3565
        %v3567 = vpop.f32.mrf.mxu0
        %v3568 = vadd.f32 %v3187, %v3567
        %3569 = vmatmul.bf16.gmra.mxu0 %v3097
        %v3570 = vpop.f32.mrf.mxu0
        %v3571 = vadd.f32 %v3187, %v3570
        %v3572 = vpop.f32.mrf.mxu0
        %v3573 = vadd.f32 %v3187, %v3572
        %3574 = vmatmul.bf16.gmra.mxu0 %v3101
        %v3575 = vpop.f32.mrf.mxu0
        %v3576 = vadd.f32 %v3187, %v3575
        %v3577 = vpop.f32.mrf.mxu0
        %v3578 = vadd.f32 %v3187, %v3577
        %3579 = vmatmul.bf16.gmra.mxu0 %v3105
        %v3580 = vpop.f32.mrf.mxu0
        %v3581 = vadd.f32 %v3187, %v3580
        %v3582 = vpop.f32.mrf.mxu0
        %v3583 = vadd.f32 %v3187, %v3582
        %3584 = vmatmul.bf16.gmra.mxu0 %v3109
        %v3585 = vpop.f32.mrf.mxu0
        %v3586 = vadd.f32 %v3187, %v3585
        %v3587 = vpop.f32.mrf.mxu0
        %v3588 = vadd.f32 %v3187, %v3587
        %3589 = vmatmul.bf16.gmra.mxu0 %v3113
        %v3590 = vpop.f32.mrf.mxu0
        %v3591 = vadd.f32 %v3187, %v3590
        %v3592 = vpop.f32.mrf.mxu0
        %v3593 = vadd.f32 %v3187, %v3592
        %3594 = vmatmul.bf16.gmra.mxu0 %v3117
        %v3595 = vpop.f32.mrf.mxu0
        %v3596 = vadd.f32 %v3187, %v3595
        %v3597 = vpop.f32.mrf.mxu0
        %v3598 = vadd.f32 %v3187, %v3597
        %3599 = vdwg.mxu0
        %3600 = vmatpush.bf16.msra.mxu0 %v3413
        %3601 = vmatpush.bf16.msra.mxu0 %v3411
        %3602 = vmatpush.bf16.msra.mxu0 %v3409
        %3603 = vmatpush.bf16.msra.mxu0 %v3407
        %3604 = vmatpush.bf16.msra.mxu0 %v3405
        %3605 = vmatpush.bf16.msra.mxu0 %v3403
        %3606 = vmatpush.bf16.msra.mxu0 %v3401
        %3607 = vmatpush.bf16.msra.mxu0 %v3399
        %3608 = vmatmul.bf16.gmra.mxu0 %v3058
        %v3609 = vpop.f32.mrf.mxu0
        %v3610 = vadd.f32 %v3521, %v3609
        %v3611 = vpop.f32.mrf.mxu0
        %v3612 = vadd.f32 %v3523, %v3611
        %3613 = vmatmul.bf16.gmra.mxu0 %v3062
        %v3614 = vpop.f32.mrf.mxu0
        %v3615 = vadd.f32 %v3526, %v3614
        %v3616 = vpop.f32.mrf.mxu0
        %v3617 = vadd.f32 %v3528, %v3616
        %3618 = vmatmul.bf16.gmra.mxu0 %v3066
        %v3619 = vpop.f32.mrf.mxu0
        %v3620 = vadd.f32 %v3531, %v3619
        %v3621 = vpop.f32.mrf.mxu0
        %v3622 = vadd.f32 %v3533, %v3621
        %3623 = vmatmul.bf16.gmra.mxu0 %v3070
        %v3624 = vpop.f32.mrf.mxu0
        %v3625 = vadd.f32 %v3536, %v3624
        %v3626 = vpop.f32.mrf.mxu0
        %v3627 = vadd.f32 %v3538, %v3626
        %3628 = vmatmul.bf16.gmra.mxu0 %v3074
        %v3629 = vpop.f32.mrf.mxu0
        %v3630 = vadd.f32 %v3541, %v3629
        %v3631 = vpop.f32.mrf.mxu0
        %v3632 = vadd.f32 %v3543, %v3631
        %3633 = vmatmul.bf16.gmra.mxu0 %v3078
        %v3634 = vpop.f32.mrf.mxu0
        %v3635 = vadd.f32 %v3546, %v3634
        %v3636 = vpop.f32.mrf.mxu0
        %v3637 = vadd.f32 %v3548, %v3636
        %3638 = vmatmul.bf16.gmra.mxu0 %v3082
        %v3639 = vpop.f32.mrf.mxu0
        %v3640 = vadd.f32 %v3551, %v3639
        %v3641 = vpop.f32.mrf.mxu0
        %v3642 = vadd.f32 %v3553, %v3641
        %3643 = vmatmul.bf16.gmra.mxu0 %v3086
        %v3644 = vpop.f32.mrf.mxu0
        %v3645 = vadd.f32 %v3556, %v3644
        %v3646 = vpop.f32.mrf.mxu0
        %v3647 = vadd.f32 %v3558, %v3646
        %3648 = vmatmul.bf16.gmra.mxu0 %v3090
        %v3649 = vpop.f32.mrf.mxu0
        %v3650 = vadd.f32 %v3561, %v3649
        %v3651 = vpop.f32.mrf.mxu0
        %v3652 = vadd.f32 %v3563, %v3651
        %3653 = vmatmul.bf16.gmra.mxu0 %v3094
        %v3654 = vpop.f32.mrf.mxu0
        %v3655 = vadd.f32 %v3566, %v3654
        %v3656 = vpop.f32.mrf.mxu0
        %v3657 = vadd.f32 %v3568, %v3656
        %3658 = vmatmul.bf16.gmra.mxu0 %v3098
        %v3659 = vpop.f32.mrf.mxu0
        %v3660 = vadd.f32 %v3571, %v3659
        %v3661 = vpop.f32.mrf.mxu0
        %v3662 = vadd.f32 %v3573, %v3661
        %3663 = vmatmul.bf16.gmra.mxu0 %v3102
        %v3664 = vpop.f32.mrf.mxu0
        %v3665 = vadd.f32 %v3576, %v3664
        %v3666 = vpop.f32.mrf.mxu0
        %v3667 = vadd.f32 %v3578, %v3666
        %3668 = vmatmul.bf16.gmra.mxu0 %v3106
        %v3669 = vpop.f32.mrf.mxu0
        %v3670 = vadd.f32 %v3581, %v3669
        %v3671 = vpop.f32.mrf.mxu0
        %v3672 = vadd.f32 %v3583, %v3671
        %3673 = vmatmul.bf16.gmra.mxu0 %v3110
        %v3674 = vpop.f32.mrf.mxu0
        %v3675 = vadd.f32 %v3586, %v3674
        %v3676 = vpop.f32.mrf.mxu0
        %v3677 = vadd.f32 %v3588, %v3676
        %3678 = vmatmul.bf16.gmra.mxu0 %v3114
        %v3679 = vpop.f32.mrf.mxu0
        %v3680 = vadd.f32 %v3591, %v3679
        %v3681 = vpop.f32.mrf.mxu0
        %v3682 = vadd.f32 %v3593, %v3681
        %3683 = vmatmul.bf16.gmra.mxu0 %v3118
        %v3684 = vpop.f32.mrf.mxu0
        %v3685 = vadd.f32 %v3596, %v3684
        %v3686 = vpop.f32.mrf.mxu0
        %v3687 = vadd.f32 %v3598, %v3686
        %3688 = vdwg.mxu0
        %3689 = vmatpush.bf16.msra.mxu0 %v3429
        %3690 = vmatpush.bf16.msra.mxu0 %v3427
        %3691 = vmatpush.bf16.msra.mxu0 %v3425
        %3692 = vmatpush.bf16.msra.mxu0 %v3423
        %3693 = vmatpush.bf16.msra.mxu0 %v3421
        %3694 = vmatpush.bf16.msra.mxu0 %v3419
        %3695 = vmatpush.bf16.msra.mxu0 %v3417
        %3696 = vmatpush.bf16.msra.mxu0 %v3415
        %3697 = vmatmul.bf16.gmra.mxu0 %v3059
        %v3698 = vpop.f32.mrf.mxu0
        %v3699 = vadd.f32 %v3610, %v3698
        %v3700 = vpop.f32.mrf.mxu0
        %v3701 = vadd.f32 %v3612, %v3700
        %3702 = vmatmul.bf16.gmra.mxu0 %v3063
        %v3703 = vpop.f32.mrf.mxu0
        %v3704 = vadd.f32 %v3615, %v3703
        %v3705 = vpop.f32.mrf.mxu0
        %v3706 = vadd.f32 %v3617, %v3705
        %3707 = vmatmul.bf16.gmra.mxu0 %v3067
        %v3708 = vpop.f32.mrf.mxu0
        %v3709 = vadd.f32 %v3620, %v3708
        %v3710 = vpop.f32.mrf.mxu0
        %v3711 = vadd.f32 %v3622, %v3710
        %3712 = vmatmul.bf16.gmra.mxu0 %v3071
        %v3713 = vpop.f32.mrf.mxu0
        %v3714 = vadd.f32 %v3625, %v3713
        %v3715 = vpop.f32.mrf.mxu0
        %v3716 = vadd.f32 %v3627, %v3715
        %3717 = vmatmul.bf16.gmra.mxu0 %v3075
        %v3718 = vpop.f32.mrf.mxu0
        %v3719 = vadd.f32 %v3630, %v3718
        %v3720 = vpop.f32.mrf.mxu0
        %v3721 = vadd.f32 %v3632, %v3720
        %3722 = vmatmul.bf16.gmra.mxu0 %v3079
        %v3723 = vpop.f32.mrf.mxu0
        %v3724 = vadd.f32 %v3635, %v3723
        %v3725 = vpop.f32.mrf.mxu0
        %v3726 = vadd.f32 %v3637, %v3725
        %3727 = vmatmul.bf16.gmra.mxu0 %v3083
        %v3728 = vpop.f32.mrf.mxu0
        %v3729 = vadd.f32 %v3640, %v3728
        %v3730 = vpop.f32.mrf.mxu0
        %v3731 = vadd.f32 %v3642, %v3730
        %3732 = vmatmul.bf16.gmra.mxu0 %v3087
        %v3733 = vpop.f32.mrf.mxu0
        %v3734 = vadd.f32 %v3645, %v3733
        %v3735 = vpop.f32.mrf.mxu0
        %v3736 = vadd.f32 %v3647, %v3735
        %3737 = vmatmul.bf16.gmra.mxu0 %v3091
        %v3738 = vpop.f32.mrf.mxu0
        %v3739 = vadd.f32 %v3650, %v3738
        %v3740 = vpop.f32.mrf.mxu0
        %v3741 = vadd.f32 %v3652, %v3740
        %3742 = vmatmul.bf16.gmra.mxu0 %v3095
        %v3743 = vpop.f32.mrf.mxu0
        %v3744 = vadd.f32 %v3655, %v3743
        %v3745 = vpop.f32.mrf.mxu0
        %v3746 = vadd.f32 %v3657, %v3745
        %3747 = vmatmul.bf16.gmra.mxu0 %v3099
        %v3748 = vpop.f32.mrf.mxu0
        %v3749 = vadd.f32 %v3660, %v3748
        %v3750 = vpop.f32.mrf.mxu0
        %v3751 = vadd.f32 %v3662, %v3750
        %3752 = vmatmul.bf16.gmra.mxu0 %v3103
        %v3753 = vpop.f32.mrf.mxu0
        %v3754 = vadd.f32 %v3665, %v3753
        %v3755 = vpop.f32.mrf.mxu0
        %v3756 = vadd.f32 %v3667, %v3755
        %3757 = vmatmul.bf16.gmra.mxu0 %v3107
        %v3758 = vpop.f32.mrf.mxu0
        %v3759 = vadd.f32 %v3670, %v3758
        %v3760 = vpop.f32.mrf.mxu0
        %v3761 = vadd.f32 %v3672, %v3760
        %3762 = vmatmul.bf16.gmra.mxu0 %v3111
        %v3763 = vpop.f32.mrf.mxu0
        %v3764 = vadd.f32 %v3675, %v3763
        %v3765 = vpop.f32.mrf.mxu0
        %v3766 = vadd.f32 %v3677, %v3765
        %3767 = vmatmul.bf16.gmra.mxu0 %v3115
        %v3768 = vpop.f32.mrf.mxu0
        %v3769 = vadd.f32 %v3680, %v3768
        %v3770 = vpop.f32.mrf.mxu0
        %v3771 = vadd.f32 %v3682, %v3770
        %3772 = vmatmul.bf16.gmra.mxu0 %v3119
        %v3773 = vpop.f32.mrf.mxu0
        %v3774 = vadd.f32 %v3685, %v3773
        %v3775 = vpop.f32.mrf.mxu0
        %v3776 = vadd.f32 %v3687, %v3775
        %3777 = vdwg.mxu0
        %3778 = vmatpush.bf16.msra.mxu0 %v3445
        %3779 = vmatpush.bf16.msra.mxu0 %v3443
        %3780 = vmatpush.bf16.msra.mxu0 %v3441
        %3781 = vmatpush.bf16.msra.mxu0 %v3439
        %3782 = vmatpush.bf16.msra.mxu0 %v3437
        %3783 = vmatpush.bf16.msra.mxu0 %v3435
        %3784 = vmatpush.bf16.msra.mxu0 %v3433
        %3785 = vmatpush.bf16.msra.mxu0 %v3431
        %3786 = vmatmul.bf16.gmra.mxu0 %v3060
        %v3787 = vpop.f32.mrf.mxu0
        %v3788 = vadd.f32 %v3699, %v3787
        %v3789 = vpop.f32.mrf.mxu0
        %v3790 = vadd.f32 %v3701, %v3789
        %3791 = vmatmul.bf16.gmra.mxu0 %v3064
        %v3792 = vpop.f32.mrf.mxu0
        %v3793 = vadd.f32 %v3704, %v3792
        %v3794 = vpop.f32.mrf.mxu0
        %v3795 = vadd.f32 %v3706, %v3794
        %3796 = vmatmul.bf16.gmra.mxu0 %v3068
        %v3797 = vpop.f32.mrf.mxu0
        %v3798 = vadd.f32 %v3709, %v3797
        %v3799 = vpop.f32.mrf.mxu0
        %v3800 = vadd.f32 %v3711, %v3799
        %3801 = vmatmul.bf16.gmra.mxu0 %v3072
        %v3802 = vpop.f32.mrf.mxu0
        %v3803 = vadd.f32 %v3714, %v3802
        %v3804 = vpop.f32.mrf.mxu0
        %v3805 = vadd.f32 %v3716, %v3804
        %3806 = vmatmul.bf16.gmra.mxu0 %v3076
        %v3807 = vpop.f32.mrf.mxu0
        %v3808 = vadd.f32 %v3719, %v3807
        %v3809 = vpop.f32.mrf.mxu0
        %v3810 = vadd.f32 %v3721, %v3809
        %3811 = vmatmul.bf16.gmra.mxu0 %v3080
        %v3812 = vpop.f32.mrf.mxu0
        %v3813 = vadd.f32 %v3724, %v3812
        %v3814 = vpop.f32.mrf.mxu0
        %v3815 = vadd.f32 %v3726, %v3814
        %3816 = vmatmul.bf16.gmra.mxu0 %v3084
        %v3817 = vpop.f32.mrf.mxu0
        %v3818 = vadd.f32 %v3729, %v3817
        %v3819 = vpop.f32.mrf.mxu0
        %v3820 = vadd.f32 %v3731, %v3819
        %3821 = vmatmul.bf16.gmra.mxu0 %v3088
        %v3822 = vpop.f32.mrf.mxu0
        %v3823 = vadd.f32 %v3734, %v3822
        %v3824 = vpop.f32.mrf.mxu0
        %v3825 = vadd.f32 %v3736, %v3824
        %3826 = vmatmul.bf16.gmra.mxu0 %v3092
        %v3827 = vpop.f32.mrf.mxu0
        %v3828 = vadd.f32 %v3739, %v3827
        %v3829 = vpop.f32.mrf.mxu0
        %v3830 = vadd.f32 %v3741, %v3829
        %3831 = vmatmul.bf16.gmra.mxu0 %v3096
        %v3832 = vpop.f32.mrf.mxu0
        %v3833 = vadd.f32 %v3744, %v3832
        %v3834 = vpop.f32.mrf.mxu0
        %v3835 = vadd.f32 %v3746, %v3834
        %3836 = vmatmul.bf16.gmra.mxu0 %v3100
        %v3837 = vpop.f32.mrf.mxu0
        %v3838 = vadd.f32 %v3749, %v3837
        %v3839 = vpop.f32.mrf.mxu0
        %v3840 = vadd.f32 %v3751, %v3839
        %3841 = vmatmul.bf16.gmra.mxu0 %v3104
        %v3842 = vpop.f32.mrf.mxu0
        %v3843 = vadd.f32 %v3754, %v3842
        %v3844 = vpop.f32.mrf.mxu0
        %v3845 = vadd.f32 %v3756, %v3844
        %3846 = vmatmul.bf16.gmra.mxu0 %v3108
        %v3847 = vpop.f32.mrf.mxu0
        %v3848 = vadd.f32 %v3759, %v3847
        %v3849 = vpop.f32.mrf.mxu0
        %v3850 = vadd.f32 %v3761, %v3849
        %3851 = vmatmul.bf16.gmra.mxu0 %v3112
        %v3852 = vpop.f32.mrf.mxu0
        %v3853 = vadd.f32 %v3764, %v3852
        %v3854 = vpop.f32.mrf.mxu0
        %v3855 = vadd.f32 %v3766, %v3854
        %3856 = vmatmul.bf16.gmra.mxu0 %v3116
        %v3857 = vpop.f32.mrf.mxu0
        %v3858 = vadd.f32 %v3769, %v3857
        %v3859 = vpop.f32.mrf.mxu0
        %v3860 = vadd.f32 %v3771, %v3859
        %3861 = vmatmul.bf16.gmra.mxu0 %v3120
        %v3862 = vpop.f32.mrf.mxu0
        %v3863 = vadd.f32 %v3774, %v3862
        %v3864 = vpop.f32.mrf.mxu0
        %v3865 = vadd.f32 %v3776, %v3864
        %3866 = vdwg.mxu0
        %3867 = vmatpush.bf16.msra.mxu0 %v3398
        %3868 = vmatpush.bf16.msra.mxu0 %v3396
        %3869 = vmatpush.bf16.msra.mxu0 %v3394
        %3870 = vmatpush.bf16.msra.mxu0 %v3392
        %3871 = vmatpush.bf16.msra.mxu0 %v3390
        %3872 = vmatpush.bf16.msra.mxu0 %v3388
        %3873 = vmatpush.bf16.msra.mxu0 %v3386
        %3874 = vmatpush.bf16.msra.mxu0 %v3384
        %3875 = vmatmul.bf16.gmra.mxu0 %v3057
        %v3876 = vpop.f32.mrf.mxu0
        %v3877 = vadd.f32 %v3188, %v3876
        %v3878 = vpop.f32.mrf.mxu0
        %v3879 = vadd.f32 %v3188, %v3878
        %3880 = vmatmul.bf16.gmra.mxu0 %v3061
        %v3881 = vpop.f32.mrf.mxu0
        %v3882 = vadd.f32 %v3188, %v3881
        %v3883 = vpop.f32.mrf.mxu0
        %v3884 = vadd.f32 %v3188, %v3883
        %3885 = vmatmul.bf16.gmra.mxu0 %v3065
        %v3886 = vpop.f32.mrf.mxu0
        %v3887 = vadd.f32 %v3188, %v3886
        %v3888 = vpop.f32.mrf.mxu0
        %v3889 = vadd.f32 %v3188, %v3888
        %3890 = vmatmul.bf16.gmra.mxu0 %v3069
        %v3891 = vpop.f32.mrf.mxu0
        %v3892 = vadd.f32 %v3188, %v3891
        %v3893 = vpop.f32.mrf.mxu0
        %v3894 = vadd.f32 %v3188, %v3893
        %3895 = vmatmul.bf16.gmra.mxu0 %v3073
        %v3896 = vpop.f32.mrf.mxu0
        %v3897 = vadd.f32 %v3188, %v3896
        %v3898 = vpop.f32.mrf.mxu0
        %v3899 = vadd.f32 %v3188, %v3898
        %3900 = vmatmul.bf16.gmra.mxu0 %v3077
        %v3901 = vpop.f32.mrf.mxu0
        %v3902 = vadd.f32 %v3188, %v3901
        %v3903 = vpop.f32.mrf.mxu0
        %v3904 = vadd.f32 %v3188, %v3903
        %3905 = vmatmul.bf16.gmra.mxu0 %v3081
        %v3906 = vpop.f32.mrf.mxu0
        %v3907 = vadd.f32 %v3188, %v3906
        %v3908 = vpop.f32.mrf.mxu0
        %v3909 = vadd.f32 %v3188, %v3908
        %3910 = vmatmul.bf16.gmra.mxu0 %v3085
        %v3911 = vpop.f32.mrf.mxu0
        %v3912 = vadd.f32 %v3188, %v3911
        %v3913 = vpop.f32.mrf.mxu0
        %v3914 = vadd.f32 %v3188, %v3913
        %3915 = vmatmul.bf16.gmra.mxu0 %v3089
        %v3916 = vpop.f32.mrf.mxu0
        %v3917 = vadd.f32 %v3188, %v3916
        %v3918 = vpop.f32.mrf.mxu0
        %v3919 = vadd.f32 %v3188, %v3918
        %3920 = vmatmul.bf16.gmra.mxu0 %v3093
        %v3921 = vpop.f32.mrf.mxu0
        %v3922 = vadd.f32 %v3188, %v3921
        %v3923 = vpop.f32.mrf.mxu0
        %v3924 = vadd.f32 %v3188, %v3923
        %3925 = vmatmul.bf16.gmra.mxu0 %v3097
        %v3926 = vpop.f32.mrf.mxu0
        %v3927 = vadd.f32 %v3188, %v3926
        %v3928 = vpop.f32.mrf.mxu0
        %v3929 = vadd.f32 %v3188, %v3928
        %3930 = vmatmul.bf16.gmra.mxu0 %v3101
        %v3931 = vpop.f32.mrf.mxu0
        %v3932 = vadd.f32 %v3188, %v3931
        %v3933 = vpop.f32.mrf.mxu0
        %v3934 = vadd.f32 %v3188, %v3933
        %3935 = vmatmul.bf16.gmra.mxu0 %v3105
        %v3936 = vpop.f32.mrf.mxu0
        %v3937 = vadd.f32 %v3188, %v3936
        %v3938 = vpop.f32.mrf.mxu0
        %v3939 = vadd.f32 %v3188, %v3938
        %3940 = vmatmul.bf16.gmra.mxu0 %v3109
        %v3941 = vpop.f32.mrf.mxu0
        %v3942 = vadd.f32 %v3188, %v3941
        %v3943 = vpop.f32.mrf.mxu0
        %v3944 = vadd.f32 %v3188, %v3943
        %3945 = vmatmul.bf16.gmra.mxu0 %v3113
        %v3946 = vpop.f32.mrf.mxu0
        %v3947 = vadd.f32 %v3188, %v3946
        %v3948 = vpop.f32.mrf.mxu0
        %v3949 = vadd.f32 %v3188, %v3948
        %3950 = vmatmul.bf16.gmra.mxu0 %v3117
        %v3951 = vpop.f32.mrf.mxu0
        %v3952 = vadd.f32 %v3188, %v3951
        %v3953 = vpop.f32.mrf.mxu0
        %v3954 = vadd.f32 %v3188, %v3953
        %3955 = vdwg.mxu0
        %3956 = vmatpush.bf16.msra.mxu0 %v3414
        %3957 = vmatpush.bf16.msra.mxu0 %v3412
        %3958 = vmatpush.bf16.msra.mxu0 %v3410
        %3959 = vmatpush.bf16.msra.mxu0 %v3408
        %3960 = vmatpush.bf16.msra.mxu0 %v3406
        %3961 = vmatpush.bf16.msra.mxu0 %v3404
        %3962 = vmatpush.bf16.msra.mxu0 %v3402
        %3963 = vmatpush.bf16.msra.mxu0 %v3400
        %3964 = vmatmul.bf16.gmra.mxu0 %v3058
        %v3965 = vpop.f32.mrf.mxu0
        %v3966 = vadd.f32 %v3877, %v3965
        %v3967 = vpop.f32.mrf.mxu0
        %v3968 = vadd.f32 %v3879, %v3967
        %3969 = vmatmul.bf16.gmra.mxu0 %v3062
        %v3970 = vpop.f32.mrf.mxu0
        %v3971 = vadd.f32 %v3882, %v3970
        %v3972 = vpop.f32.mrf.mxu0
        %v3973 = vadd.f32 %v3884, %v3972
        %3974 = vmatmul.bf16.gmra.mxu0 %v3066
        %v3975 = vpop.f32.mrf.mxu0
        %v3976 = vadd.f32 %v3887, %v3975
        %v3977 = vpop.f32.mrf.mxu0
        %v3978 = vadd.f32 %v3889, %v3977
        %3979 = vmatmul.bf16.gmra.mxu0 %v3070
        %v3980 = vpop.f32.mrf.mxu0
        %v3981 = vadd.f32 %v3892, %v3980
        %v3982 = vpop.f32.mrf.mxu0
        %v3983 = vadd.f32 %v3894, %v3982
        %3984 = vmatmul.bf16.gmra.mxu0 %v3074
        %v3985 = vpop.f32.mrf.mxu0
        %v3986 = vadd.f32 %v3897, %v3985
        %v3987 = vpop.f32.mrf.mxu0
        %v3988 = vadd.f32 %v3899, %v3987
        %3989 = vmatmul.bf16.gmra.mxu0 %v3078
        %v3990 = vpop.f32.mrf.mxu0
        %v3991 = vadd.f32 %v3902, %v3990
        %v3992 = vpop.f32.mrf.mxu0
        %v3993 = vadd.f32 %v3904, %v3992
        %3994 = vmatmul.bf16.gmra.mxu0 %v3082
        %v3995 = vpop.f32.mrf.mxu0
        %v3996 = vadd.f32 %v3907, %v3995
        %v3997 = vpop.f32.mrf.mxu0
        %v3998 = vadd.f32 %v3909, %v3997
        %3999 = vmatmul.bf16.gmra.mxu0 %v3086
        %v4000 = vpop.f32.mrf.mxu0
        %v4001 = vadd.f32 %v3912, %v4000
        %v4002 = vpop.f32.mrf.mxu0
        %v4003 = vadd.f32 %v3914, %v4002
        %4004 = vmatmul.bf16.gmra.mxu0 %v3090
        %v4005 = vpop.f32.mrf.mxu0
        %v4006 = vadd.f32 %v3917, %v4005
        %v4007 = vpop.f32.mrf.mxu0
        %v4008 = vadd.f32 %v3919, %v4007
        %4009 = vmatmul.bf16.gmra.mxu0 %v3094
        %v4010 = vpop.f32.mrf.mxu0
        %v4011 = vadd.f32 %v3922, %v4010
        %v4012 = vpop.f32.mrf.mxu0
        %v4013 = vadd.f32 %v3924, %v4012
        %4014 = vmatmul.bf16.gmra.mxu0 %v3098
        %v4015 = vpop.f32.mrf.mxu0
        %v4016 = vadd.f32 %v3927, %v4015
        %v4017 = vpop.f32.mrf.mxu0
        %v4018 = vadd.f32 %v3929, %v4017
        %4019 = vmatmul.bf16.gmra.mxu0 %v3102
        %v4020 = vpop.f32.mrf.mxu0
        %v4021 = vadd.f32 %v3932, %v4020
        %v4022 = vpop.f32.mrf.mxu0
        %v4023 = vadd.f32 %v3934, %v4022
        %4024 = vmatmul.bf16.gmra.mxu0 %v3106
        %v4025 = vpop.f32.mrf.mxu0
        %v4026 = vadd.f32 %v3937, %v4025
        %v4027 = vpop.f32.mrf.mxu0
        %v4028 = vadd.f32 %v3939, %v4027
        %4029 = vmatmul.bf16.gmra.mxu0 %v3110
        %v4030 = vpop.f32.mrf.mxu0
        %v4031 = vadd.f32 %v3942, %v4030
        %v4032 = vpop.f32.mrf.mxu0
        %v4033 = vadd.f32 %v3944, %v4032
        %4034 = vmatmul.bf16.gmra.mxu0 %v3114
        %v4035 = vpop.f32.mrf.mxu0
        %v4036 = vadd.f32 %v3947, %v4035
        %v4037 = vpop.f32.mrf.mxu0
        %v4038 = vadd.f32 %v3949, %v4037
        %4039 = vmatmul.bf16.gmra.mxu0 %v3118
        %v4040 = vpop.f32.mrf.mxu0
        %v4041 = vadd.f32 %v3952, %v4040
        %v4042 = vpop.f32.mrf.mxu0
        %v4043 = vadd.f32 %v3954, %v4042
        %4044 = vdwg.mxu0
        %4045 = vmatpush.bf16.msra.mxu0 %v3430
        %4046 = vmatpush.bf16.msra.mxu0 %v3428
        %4047 = vmatpush.bf16.msra.mxu0 %v3426
        %4048 = vmatpush.bf16.msra.mxu0 %v3424
        %4049 = vmatpush.bf16.msra.mxu0 %v3422
        %4050 = vmatpush.bf16.msra.mxu0 %v3420
        %4051 = vmatpush.bf16.msra.mxu0 %v3418
        %4052 = vmatpush.bf16.msra.mxu0 %v3416
        %4053 = vmatmul.bf16.gmra.mxu0 %v3059
        %v4054 = vpop.f32.mrf.mxu0
        %v4055 = vadd.f32 %v3966, %v4054
        %v4056 = vpop.f32.mrf.mxu0
        %v4057 = vadd.f32 %v3968, %v4056
        %4058 = vmatmul.bf16.gmra.mxu0 %v3063
        %v4059 = vpop.f32.mrf.mxu0
        %v4060 = vadd.f32 %v3971, %v4059
        %v4061 = vpop.f32.mrf.mxu0
        %v4062 = vadd.f32 %v3973, %v4061
        %4063 = vmatmul.bf16.gmra.mxu0 %v3067
        %v4064 = vpop.f32.mrf.mxu0
        %v4065 = vadd.f32 %v3976, %v4064
        %v4066 = vpop.f32.mrf.mxu0
        %v4067 = vadd.f32 %v3978, %v4066
        %4068 = vmatmul.bf16.gmra.mxu0 %v3071
        %v4069 = vpop.f32.mrf.mxu0
        %v4070 = vadd.f32 %v3981, %v4069
        %v4071 = vpop.f32.mrf.mxu0
        %v4072 = vadd.f32 %v3983, %v4071
        %4073 = vmatmul.bf16.gmra.mxu0 %v3075
        %v4074 = vpop.f32.mrf.mxu0
        %v4075 = vadd.f32 %v3986, %v4074
        %v4076 = vpop.f32.mrf.mxu0
        %v4077 = vadd.f32 %v3988, %v4076
        %4078 = vmatmul.bf16.gmra.mxu0 %v3079
        %v4079 = vpop.f32.mrf.mxu0
        %v4080 = vadd.f32 %v3991, %v4079
        %v4081 = vpop.f32.mrf.mxu0
        %v4082 = vadd.f32 %v3993, %v4081
        %4083 = vmatmul.bf16.gmra.mxu0 %v3083
        %v4084 = vpop.f32.mrf.mxu0
        %v4085 = vadd.f32 %v3996, %v4084
        %v4086 = vpop.f32.mrf.mxu0
        %v4087 = vadd.f32 %v3998, %v4086
        %4088 = vmatmul.bf16.gmra.mxu0 %v3087
        %v4089 = vpop.f32.mrf.mxu0
        %v4090 = vadd.f32 %v4001, %v4089
        %v4091 = vpop.f32.mrf.mxu0
        %v4092 = vadd.f32 %v4003, %v4091
        %4093 = vmatmul.bf16.gmra.mxu0 %v3091
        %v4094 = vpop.f32.mrf.mxu0
        %v4095 = vadd.f32 %v4006, %v4094
        %v4096 = vpop.f32.mrf.mxu0
        %v4097 = vadd.f32 %v4008, %v4096
        %4098 = vmatmul.bf16.gmra.mxu0 %v3095
        %v4099 = vpop.f32.mrf.mxu0
        %v4100 = vadd.f32 %v4011, %v4099
        %v4101 = vpop.f32.mrf.mxu0
        %v4102 = vadd.f32 %v4013, %v4101
        %4103 = vmatmul.bf16.gmra.mxu0 %v3099
        %v4104 = vpop.f32.mrf.mxu0
        %v4105 = vadd.f32 %v4016, %v4104
        %v4106 = vpop.f32.mrf.mxu0
        %v4107 = vadd.f32 %v4018, %v4106
        %4108 = vmatmul.bf16.gmra.mxu0 %v3103
        %v4109 = vpop.f32.mrf.mxu0
        %v4110 = vadd.f32 %v4021, %v4109
        %v4111 = vpop.f32.mrf.mxu0
        %v4112 = vadd.f32 %v4023, %v4111
        %4113 = vmatmul.bf16.gmra.mxu0 %v3107
        %v4114 = vpop.f32.mrf.mxu0
        %v4115 = vadd.f32 %v4026, %v4114
        %v4116 = vpop.f32.mrf.mxu0
        %v4117 = vadd.f32 %v4028, %v4116
        %4118 = vmatmul.bf16.gmra.mxu0 %v3111
        %v4119 = vpop.f32.mrf.mxu0
        %v4120 = vadd.f32 %v4031, %v4119
        %v4121 = vpop.f32.mrf.mxu0
        %v4122 = vadd.f32 %v4033, %v4121
        %4123 = vmatmul.bf16.gmra.mxu0 %v3115
        %v4124 = vpop.f32.mrf.mxu0
        %v4125 = vadd.f32 %v4036, %v4124
        %v4126 = vpop.f32.mrf.mxu0
        %v4127 = vadd.f32 %v4038, %v4126
        %4128 = vmatmul.bf16.gmra.mxu0 %v3119
        %v4129 = vpop.f32.mrf.mxu0
        %v4130 = vadd.f32 %v4041, %v4129
        %v4131 = vpop.f32.mrf.mxu0
        %v4132 = vadd.f32 %v4043, %v4131
        %4133 = vdwg.mxu0
        %4134 = vmatpush.bf16.msra.mxu0 %v3446
        %4135 = vmatpush.bf16.msra.mxu0 %v3444
        %4136 = vmatpush.bf16.msra.mxu0 %v3442
        %4137 = vmatpush.bf16.msra.mxu0 %v3440
        %4138 = vmatpush.bf16.msra.mxu0 %v3438
        %4139 = vmatpush.bf16.msra.mxu0 %v3436
        %4140 = vmatpush.bf16.msra.mxu0 %v3434
        %4141 = vmatpush.bf16.msra.mxu0 %v3432
        %4142 = vmatmul.bf16.gmra.mxu0 %v3060
        %v4143 = vpop.f32.mrf.mxu0
        %v4144 = vadd.f32 %v4055, %v4143
        %v4145 = vpop.f32.mrf.mxu0
        %v4146 = vadd.f32 %v4057, %v4145
        %4147 = vmatmul.bf16.gmra.mxu0 %v3064
        %v4148 = vpop.f32.mrf.mxu0
        %v4149 = vadd.f32 %v4060, %v4148
        %v4150 = vpop.f32.mrf.mxu0
        %v4151 = vadd.f32 %v4062, %v4150
        %4152 = vmatmul.bf16.gmra.mxu0 %v3068
        %v4153 = vpop.f32.mrf.mxu0
        %v4154 = vadd.f32 %v4065, %v4153
        %v4155 = vpop.f32.mrf.mxu0
        %v4156 = vadd.f32 %v4067, %v4155
        %4157 = vmatmul.bf16.gmra.mxu0 %v3072
        %v4158 = vpop.f32.mrf.mxu0
        %v4159 = vadd.f32 %v4070, %v4158
        %v4160 = vpop.f32.mrf.mxu0
        %v4161 = vadd.f32 %v4072, %v4160
        %4162 = vmatmul.bf16.gmra.mxu0 %v3076
        %v4163 = vpop.f32.mrf.mxu0
        %v4164 = vadd.f32 %v4075, %v4163
        %v4165 = vpop.f32.mrf.mxu0
        %v4166 = vadd.f32 %v4077, %v4165
        %4167 = vmatmul.bf16.gmra.mxu0 %v3080
        %v4168 = vpop.f32.mrf.mxu0
        %v4169 = vadd.f32 %v4080, %v4168
        %v4170 = vpop.f32.mrf.mxu0
        %v4171 = vadd.f32 %v4082, %v4170
        %4172 = vmatmul.bf16.gmra.mxu0 %v3084
        %v4173 = vpop.f32.mrf.mxu0
        %v4174 = vadd.f32 %v4085, %v4173
        %v4175 = vpop.f32.mrf.mxu0
        %v4176 = vadd.f32 %v4087, %v4175
        %4177 = vmatmul.bf16.gmra.mxu0 %v3088
        %v4178 = vpop.f32.mrf.mxu0
        %v4179 = vadd.f32 %v4090, %v4178
        %v4180 = vpop.f32.mrf.mxu0
        %v4181 = vadd.f32 %v4092, %v4180
        %4182 = vmatmul.bf16.gmra.mxu0 %v3092
        %v4183 = vpop.f32.mrf.mxu0
        %v4184 = vadd.f32 %v4095, %v4183
        %v4185 = vpop.f32.mrf.mxu0
        %v4186 = vadd.f32 %v4097, %v4185
        %4187 = vmatmul.bf16.gmra.mxu0 %v3096
        %v4188 = vpop.f32.mrf.mxu0
        %v4189 = vadd.f32 %v4100, %v4188
        %v4190 = vpop.f32.mrf.mxu0
        %v4191 = vadd.f32 %v4102, %v4190
        %4192 = vmatmul.bf16.gmra.mxu0 %v3100
        %v4193 = vpop.f32.mrf.mxu0
        %v4194 = vadd.f32 %v4105, %v4193
        %v4195 = vpop.f32.mrf.mxu0
        %v4196 = vadd.f32 %v4107, %v4195
        %4197 = vmatmul.bf16.gmra.mxu0 %v3104
        %v4198 = vpop.f32.mrf.mxu0
        %v4199 = vadd.f32 %v4110, %v4198
        %v4200 = vpop.f32.mrf.mxu0
        %v4201 = vadd.f32 %v4112, %v4200
        %4202 = vmatmul.bf16.gmra.mxu0 %v3108
        %v4203 = vpop.f32.mrf.mxu0
        %v4204 = vadd.f32 %v4115, %v4203
        %v4205 = vpop.f32.mrf.mxu0
        %v4206 = vadd.f32 %v4117, %v4205
        %4207 = vmatmul.bf16.gmra.mxu0 %v3112
        %v4208 = vpop.f32.mrf.mxu0
        %v4209 = vadd.f32 %v4120, %v4208
        %v4210 = vpop.f32.mrf.mxu0
        %v4211 = vadd.f32 %v4122, %v4210
        %4212 = vmatmul.bf16.gmra.mxu0 %v3116
        %v4213 = vpop.f32.mrf.mxu0
        %v4214 = vadd.f32 %v4125, %v4213
        %v4215 = vpop.f32.mrf.mxu0
        %v4216 = vadd.f32 %v4127, %v4215
        %4217 = vmatmul.bf16.gmra.mxu0 %v3120
        %v4218 = vpop.f32.mrf.mxu0
        %v4219 = vadd.f32 %v4130, %v4218
        %v4220 = vpop.f32.mrf.mxu0
        %v4221 = vadd.f32 %v4132, %v4220
        %4222 = vdwg.mxu0
        %v4223 = vmax.f32 %v3788, 0.0
        %v4224 = vmax.f32 %v4144, 0.0
        %v4225 = vmax.f32 %v3790, 0.0
        %v4226 = vmax.f32 %v4146, 0.0
        %v4227 = vmax.f32 %v3793, 0.0
        %v4228 = vmax.f32 %v4149, 0.0
        %v4229 = vmax.f32 %v3795, 0.0
        %v4230 = vmax.f32 %v4151, 0.0
        %v4231 = vmax.f32 %v3798, 0.0
        %v4232 = vmax.f32 %v4154, 0.0
        %v4233 = vmax.f32 %v3800, 0.0
        %v4234 = vmax.f32 %v4156, 0.0
        %v4235 = vmax.f32 %v3803, 0.0
        %v4236 = vmax.f32 %v4159, 0.0
        %v4237 = vmax.f32 %v3805, 0.0
        %v4238 = vmax.f32 %v4161, 0.0
        %v4239 = vmax.f32 %v3808, 0.0
        %v4240 = vmax.f32 %v4164, 0.0
        %v4241 = vmax.f32 %v3810, 0.0
        %v4242 = vmax.f32 %v4166, 0.0
        %v4243 = vmax.f32 %v3813, 0.0
        %v4244 = vmax.f32 %v4169, 0.0
        %v4245 = vmax.f32 %v3815, 0.0
        %v4246 = vmax.f32 %v4171, 0.0
        %v4247 = vmax.f32 %v3818, 0.0
        %v4248 = vmax.f32 %v4174, 0.0
        %v4249 = vmax.f32 %v3820, 0.0
        %v4250 = vmax.f32 %v4176, 0.0
        %v4251 = vmax.f32 %v3823, 0.0
        %v4252 = vmax.f32 %v4179, 0.0
        %v4253 = vmax.f32 %v3825, 0.0
        %v4254 = vmax.f32 %v4181, 0.0
        %v4255 = vmax.f32 %v3828, 0.0
        %v4256 = vmax.f32 %v4184, 0.0
        %v4257 = vmax.f32 %v3830, 0.0
        %v4258 = vmax.f32 %v4186, 0.0
        %v4259 = vmax.f32 %v3833, 0.0
        %v4260 = vmax.f32 %v4189, 0.0
        %v4261 = vmax.f32 %v3835, 0.0
        %v4262 = vmax.f32 %v4191, 0.0
        %v4263 = vmax.f32 %v3838, 0.0
        %v4264 = vmax.f32 %v4194, 0.0
        %v4265 = vmax.f32 %v3840, 0.0
        %v4266 = vmax.f32 %v4196, 0.0
        %v4267 = vmax.f32 %v3843, 0.0
        %v4268 = vmax.f32 %v4199, 0.0
        %v4269 = vmax.f32 %v3845, 0.0
        %v4270 = vmax.f32 %v4201, 0.0
        %v4271 = vmax.f32 %v3848, 0.0
        %v4272 = vmax.f32 %v4204, 0.0
        %v4273 = vmax.f32 %v3850, 0.0
        %v4274 = vmax.f32 %v4206, 0.0
        %v4275 = vmax.f32 %v3853, 0.0
        %v4276 = vmax.f32 %v4209, 0.0
        %v4277 = vmax.f32 %v3855, 0.0
        %v4278 = vmax.f32 %v4211, 0.0
        %v4279 = vmax.f32 %v3858, 0.0
        %v4280 = vmax.f32 %v4214, 0.0
        %v4281 = vmax.f32 %v3860, 0.0
        %v4282 = vmax.f32 %v4216, 0.0
        %v4283 = vmax.f32 %v3863, 0.0
        %v4284 = vmax.f32 %v4219, 0.0
        %v4285 = vmax.f32 %v3865, 0.0
        %v4286 = vmax.f32 %v4221, 0.0
        %v4287 = vadd.f32 %v4223, %v4225
        %v4288 = vadd.f32 %v4287, %v4227
        %v4289 = vadd.f32 %v4288, %v4229
        %v4290 = vadd.f32 %v4289, %v4231
        %v4291 = vadd.f32 %v4290, %v4233
        %v4292 = vadd.f32 %v4291, %v4235
        %v4293 = vadd.f32 %v4292, %v4237
        %v4294 = vadd.f32 %v4293, %v4239
        %v4295 = vadd.f32 %v4294, %v4241
        %v4296 = vadd.f32 %v4295, %v4243
        %v4297 = vadd.f32 %v4296, %v4245
        %v4298 = vadd.f32 %v4297, %v4247
        %v4299 = vadd.f32 %v4298, %v4249
        %v4300 = vadd.f32 %v4299, %v4251
        %v4301 = vadd.f32 %v4300, %v4253
        %v4302 = vadd.f32 %v4301, %v4255
        %v4303 = vadd.f32 %v4302, %v4257
        %v4304 = vadd.f32 %v4303, %v4259
        %v4305 = vadd.f32 %v4304, %v4261
        %v4306 = vadd.f32 %v4305, %v4263
        %v4307 = vadd.f32 %v4306, %v4265
        %v4308 = vadd.f32 %v4307, %v4267
        %v4309 = vadd.f32 %v4308, %v4269
        %v4310 = vadd.f32 %v4309, %v4271
        %v4311 = vadd.f32 %v4310, %v4273
        %v4312 = vadd.f32 %v4311, %v4275
        %v4313 = vadd.f32 %v4312, %v4277
        %v4314 = vadd.f32 %v4313, %v4279
        %v4315 = vadd.f32 %v4314, %v4281
        %v4316 = vadd.f32 %v4315, %v4283
        %v4317 = vadd.f32 %v4316, %v4285
        %v4318 = vrot.slane %v4317, 4
        %v4319 = vadd.f32 %v4317, %v4318
        %v4320 = vrot.slane %v4319, 2
        %v4321 = vadd.f32 %v4319, %v4320
        %v4322 = vrot.slane %v4321, 1
        %v4323 = vadd.f32 %v4321, %v4322
        %v4324 = vadd.f32 %v4224, %v4226
        %v4325 = vadd.f32 %v4324, %v4228
        %v4326 = vadd.f32 %v4325, %v4230
        %v4327 = vadd.f32 %v4326, %v4232
        %v4328 = vadd.f32 %v4327, %v4234
        %v4329 = vadd.f32 %v4328, %v4236
        %v4330 = vadd.f32 %v4329, %v4238
        %v4331 = vadd.f32 %v4330, %v4240
        %v4332 = vadd.f32 %v4331, %v4242
        %v4333 = vadd.f32 %v4332, %v4244
        %v4334 = vadd.f32 %v4333, %v4246
        %v4335 = vadd.f32 %v4334, %v4248
        %v4336 = vadd.f32 %v4335, %v4250
        %v4337 = vadd.f32 %v4336, %v4252
        %v4338 = vadd.f32 %v4337, %v4254
        %v4339 = vadd.f32 %v4338, %v4256
        %v4340 = vadd.f32 %v4339, %v4258
        %v4341 = vadd.f32 %v4340, %v4260
        %v4342 = vadd.f32 %v4341, %v4262
        %v4343 = vadd.f32 %v4342, %v4264
        %v4344 = vadd.f32 %v4343, %v4266
        %v4345 = vadd.f32 %v4344, %v4268
        %v4346 = vadd.f32 %v4345, %v4270
        %v4347 = vadd.f32 %v4346, %v4272
        %v4348 = vadd.f32 %v4347, %v4274
        %v4349 = vadd.f32 %v4348, %v4276
        %v4350 = vadd.f32 %v4349, %v4278
        %v4351 = vadd.f32 %v4350, %v4280
        %v4352 = vadd.f32 %v4351, %v4282
        %v4353 = vadd.f32 %v4352, %v4284
        %v4354 = vadd.f32 %v4353, %v4286
        %v4355 = vrot.slane %v4354, 4
        %v4356 = vadd.f32 %v4354, %v4355
        %v4357 = vrot.slane %v4356, 2
        %v4358 = vadd.f32 %v4356, %v4357
        %v4359 = vrot.slane %v4358, 1
        %v4360 = vadd.f32 %v4358, %v4359
        %v4361 = vld [vmem:[#allocation8 + $0x8] sm:$0xff]
        %v4362 = vld [vmem:[#allocation8 + $0x28] sm:$0xff]
        %v4363 = vld [vmem:[#allocation8 + $0x48] sm:$0xff]
        %v4364 = vld [vmem:[#allocation8 + $0x68] sm:$0xff]
        %v4365 = vld [vmem:[#allocation8 + $0x88] sm:$0xff]
        %v4366 = vld [vmem:[#allocation8 + $0xa8] sm:$0xff]
        %v4367 = vld [vmem:[#allocation8 + $0xc8] sm:$0xff]
        %v4368 = vld [vmem:[#allocation8 + $0xe8] sm:$0xff]
        %v4369 = vld [vmem:[#allocation8 + $0x108] sm:$0xff]
        %v4370 = vld [vmem:[#allocation8 + $0x128] sm:$0xff]
        %v4371 = vld [vmem:[#allocation8 + $0x148] sm:$0xff]
        %v4372 = vld [vmem:[#allocation8 + $0x168] sm:$0xff]
        %v4373 = vld [vmem:[#allocation8 + $0x188] sm:$0xff]
        %v4374 = vld [vmem:[#allocation8 + $0x1a8] sm:$0xff]
        %v4375 = vld [vmem:[#allocation8 + $0x1c8] sm:$0xff]
        %v4376 = vld [vmem:[#allocation8 + $0x1e8] sm:$0xff]
        %v4377 = vld [vmem:[#allocation8 + $0x208] sm:$0xff]
        %v4378 = vld [vmem:[#allocation8 + $0x228] sm:$0xff]
        %v4379 = vld [vmem:[#allocation8 + $0x248] sm:$0xff]
        %v4380 = vld [vmem:[#allocation8 + $0x268] sm:$0xff]
        %v4381 = vld [vmem:[#allocation8 + $0x288] sm:$0xff]
        %v4382 = vld [vmem:[#allocation8 + $0x2a8] sm:$0xff]
        %v4383 = vld [vmem:[#allocation8 + $0x2c8] sm:$0xff]
        %v4384 = vld [vmem:[#allocation8 + $0x2e8] sm:$0xff]
        %v4385 = vld [vmem:[#allocation8 + $0x308] sm:$0xff]
        %v4386 = vld [vmem:[#allocation8 + $0x328] sm:$0xff]
        %v4387 = vld [vmem:[#allocation8 + $0x348] sm:$0xff]
        %v4388 = vld [vmem:[#allocation8 + $0x368] sm:$0xff]
        %v4389 = vld [vmem:[#allocation8 + $0x388] sm:$0xff]
        %v4390 = vld [vmem:[#allocation8 + $0x3a8] sm:$0xff]
        %v4391 = vld [vmem:[#allocation8 + $0x3c8] sm:$0xff]
        %v4392 = vld [vmem:[#allocation8 + $0x3e8] sm:$0xff]
        %v4393 = vld [vmem:[#allocation8 + $0x408] sm:$0xff]
        %v4394 = vld [vmem:[#allocation8 + $0x428] sm:$0xff]
        %v4395 = vld [vmem:[#allocation8 + $0x448] sm:$0xff]
        %v4396 = vld [vmem:[#allocation8 + $0x468] sm:$0xff]
        %v4397 = vld [vmem:[#allocation8 + $0x488] sm:$0xff]
        %v4398 = vld [vmem:[#allocation8 + $0x4a8] sm:$0xff]
        %v4399 = vld [vmem:[#allocation8 + $0x4c8] sm:$0xff]
        %v4400 = vld [vmem:[#allocation8 + $0x4e8] sm:$0xff]
        %v4401 = vld [vmem:[#allocation8 + $0x508] sm:$0xff]
        %v4402 = vld [vmem:[#allocation8 + $0x528] sm:$0xff]
        %v4403 = vld [vmem:[#allocation8 + $0x548] sm:$0xff]
        %v4404 = vld [vmem:[#allocation8 + $0x568] sm:$0xff]
        %v4405 = vld [vmem:[#allocation8 + $0x588] sm:$0xff]
        %v4406 = vld [vmem:[#allocation8 + $0x5a8] sm:$0xff]
        %v4407 = vld [vmem:[#allocation8 + $0x5c8] sm:$0xff]
        %v4408 = vld [vmem:[#allocation8 + $0x5e8] sm:$0xff]
        %v4409 = vld [vmem:[#allocation8 + $0x608] sm:$0xff]
        %v4410 = vld [vmem:[#allocation8 + $0x628] sm:$0xff]
        %v4411 = vld [vmem:[#allocation8 + $0x648] sm:$0xff]
        %v4412 = vld [vmem:[#allocation8 + $0x668] sm:$0xff]
        %v4413 = vld [vmem:[#allocation8 + $0x688] sm:$0xff]
        %v4414 = vld [vmem:[#allocation8 + $0x6a8] sm:$0xff]
        %v4415 = vld [vmem:[#allocation8 + $0x6c8] sm:$0xff]
        %v4416 = vld [vmem:[#allocation8 + $0x6e8] sm:$0xff]
        %v4417 = vld [vmem:[#allocation8 + $0x708] sm:$0xff]
        %v4418 = vld [vmem:[#allocation8 + $0x728] sm:$0xff]
        %v4419 = vld [vmem:[#allocation8 + $0x748] sm:$0xff]
        %v4420 = vld [vmem:[#allocation8 + $0x768] sm:$0xff]
        %v4421 = vld [vmem:[#allocation8 + $0x788] sm:$0xff]
        %v4422 = vld [vmem:[#allocation8 + $0x7a8] sm:$0xff]
        %v4423 = vld [vmem:[#allocation8 + $0x7c8] sm:$0xff]
        %v4424 = vld [vmem:[#allocation8 + $0x7e8] sm:$0xff]
        %v4425 = vld [vmem:[#allocation10 + $0x2] sm:$0x3]
        %v4427 = vperm.slane %v4425, 0
        %v4428 = vperm.slane %v4425, 1
        %v4495 = vunpack.c.l.b16 %v4361
        %v4496 = vunpack.c.h.b16 %v4361
        %v4497 = vunpack.c.l.b16 %v4362
        %v4498 = vunpack.c.h.b16 %v4362
        %v4499 = vunpack.c.l.b16 %v4363
        %v4500 = vunpack.c.h.b16 %v4363
        %v4501 = vunpack.c.l.b16 %v4364
        %v4502 = vunpack.c.h.b16 %v4364
        %v4503 = vunpack.c.l.b16 %v4365
        %v4504 = vunpack.c.h.b16 %v4365
        %v4505 = vunpack.c.l.b16 %v4366
        %v4506 = vunpack.c.h.b16 %v4366
        %v4507 = vunpack.c.l.b16 %v4367
        %v4508 = vunpack.c.h.b16 %v4367
        %v4509 = vunpack.c.l.b16 %v4368
        %v4510 = vunpack.c.h.b16 %v4368
        %v4511 = vunpack.c.l.b16 %v4369
        %v4512 = vunpack.c.h.b16 %v4369
        %v4513 = vunpack.c.l.b16 %v4370
        %v4514 = vunpack.c.h.b16 %v4370
        %v4515 = vunpack.c.l.b16 %v4371
        %v4516 = vunpack.c.h.b16 %v4371
        %v4517 = vunpack.c.l.b16 %v4372
        %v4518 = vunpack.c.h.b16 %v4372
        %v4519 = vunpack.c.l.b16 %v4373
        %v4520 = vunpack.c.h.b16 %v4373
        %v4521 = vunpack.c.l.b16 %v4374
        %v4522 = vunpack.c.h.b16 %v4374
        %v4523 = vunpack.c.l.b16 %v4375
        %v4524 = vunpack.c.h.b16 %v4375
        %v4525 = vunpack.c.l.b16 %v4376
        %v4526 = vunpack.c.h.b16 %v4376
        %v4527 = vunpack.c.l.b16 %v4377
        %v4528 = vunpack.c.h.b16 %v4377
        %v4529 = vunpack.c.l.b16 %v4378
        %v4530 = vunpack.c.h.b16 %v4378
        %v4531 = vunpack.c.l.b16 %v4379
        %v4532 = vunpack.c.h.b16 %v4379
        %v4533 = vunpack.c.l.b16 %v4380
        %v4534 = vunpack.c.h.b16 %v4380
        %v4535 = vunpack.c.l.b16 %v4381
        %v4536 = vunpack.c.h.b16 %v4381
        %v4537 = vunpack.c.l.b16 %v4382
        %v4538 = vunpack.c.h.b16 %v4382
        %v4539 = vunpack.c.l.b16 %v4383
        %v4540 = vunpack.c.h.b16 %v4383
        %v4541 = vunpack.c.l.b16 %v4384
        %v4542 = vunpack.c.h.b16 %v4384
        %v4543 = vunpack.c.l.b16 %v4385
        %v4544 = vunpack.c.h.b16 %v4385
        %v4545 = vunpack.c.l.b16 %v4386
        %v4546 = vunpack.c.h.b16 %v4386
        %v4547 = vunpack.c.l.b16 %v4387
        %v4548 = vunpack.c.h.b16 %v4387
        %v4549 = vunpack.c.l.b16 %v4388
        %v4550 = vunpack.c.h.b16 %v4388
        %v4551 = vunpack.c.l.b16 %v4389
        %v4552 = vunpack.c.h.b16 %v4389
        %v4553 = vunpack.c.l.b16 %v4390
        %v4554 = vunpack.c.h.b16 %v4390
        %v4555 = vunpack.c.l.b16 %v4391
        %v4556 = vunpack.c.h.b16 %v4391
        %v4557 = vunpack.c.l.b16 %v4392
        %v4558 = vunpack.c.h.b16 %v4392
        %v4559 = vunpack.c.l.b16 %v4393
        %v4560 = vunpack.c.h.b16 %v4393
        %v4561 = vunpack.c.l.b16 %v4394
        %v4562 = vunpack.c.h.b16 %v4394
        %v4563 = vunpack.c.l.b16 %v4395
        %v4564 = vunpack.c.h.b16 %v4395
        %v4565 = vunpack.c.l.b16 %v4396
        %v4566 = vunpack.c.h.b16 %v4396
        %v4567 = vunpack.c.l.b16 %v4397
        %v4568 = vunpack.c.h.b16 %v4397
        %v4569 = vunpack.c.l.b16 %v4398
        %v4570 = vunpack.c.h.b16 %v4398
        %v4571 = vunpack.c.l.b16 %v4399
        %v4572 = vunpack.c.h.b16 %v4399
        %v4573 = vunpack.c.l.b16 %v4400
        %v4574 = vunpack.c.h.b16 %v4400
        %v4575 = vunpack.c.l.b16 %v4401
        %v4576 = vunpack.c.h.b16 %v4401
        %v4577 = vunpack.c.l.b16 %v4402
        %v4578 = vunpack.c.h.b16 %v4402
        %v4579 = vunpack.c.l.b16 %v4403
        %v4580 = vunpack.c.h.b16 %v4403
        %v4581 = vunpack.c.l.b16 %v4404
        %v4582 = vunpack.c.h.b16 %v4404
        %v4583 = vunpack.c.l.b16 %v4405
        %v4584 = vunpack.c.h.b16 %v4405
        %v4585 = vunpack.c.l.b16 %v4406
        %v4586 = vunpack.c.h.b16 %v4406
        %v4587 = vunpack.c.l.b16 %v4407
        %v4588 = vunpack.c.h.b16 %v4407
        %v4589 = vunpack.c.l.b16 %v4408
        %v4590 = vunpack.c.h.b16 %v4408
        %v4591 = vunpack.c.l.b16 %v4409
        %v4592 = vunpack.c.h.b16 %v4409
        %v4593 = vunpack.c.l.b16 %v4410
        %v4594 = vunpack.c.h.b16 %v4410
        %v4595 = vunpack.c.l.b16 %v4411
        %v4596 = vunpack.c.h.b16 %v4411
        %v4597 = vunpack.c.l.b16 %v4412
        %v4598 = vunpack.c.h.b16 %v4412
        %v4599 = vunpack.c.l.b16 %v4413
        %v4600 = vunpack.c.h.b16 %v4413
        %v4601 = vunpack.c.l.b16 %v4414
        %v4602 = vunpack.c.h.b16 %v4414
        %v4603 = vunpack.c.l.b16 %v4415
        %v4604 = vunpack.c.h.b16 %v4415
        %v4605 = vunpack.c.l.b16 %v4416
        %v4606 = vunpack.c.h.b16 %v4416
        %v4607 = vunpack.c.l.b16 %v4417
        %v4608 = vunpack.c.h.b16 %v4417
        %v4609 = vunpack.c.l.b16 %v4418
        %v4610 = vunpack.c.h.b16 %v4418
        %v4611 = vunpack.c.l.b16 %v4419
        %v4612 = vunpack.c.h.b16 %v4419
        %v4613 = vunpack.c.l.b16 %v4420
        %v4614 = vunpack.c.h.b16 %v4420
        %v4615 = vunpack.c.l.b16 %v4421
        %v4616 = vunpack.c.h.b16 %v4421
        %v4617 = vunpack.c.l.b16 %v4422
        %v4618 = vunpack.c.h.b16 %v4422
        %v4619 = vunpack.c.l.b16 %v4423
        %v4620 = vunpack.c.h.b16 %v4423
        %v4621 = vunpack.c.l.b16 %v4424
        %v4622 = vunpack.c.h.b16 %v4424
        %v4623 = vpack.c.b16 %v4497, %v4495
        %v4624 = vpack.c.b16 %v4498, %v4496
        %v4625 = vpack.c.b16 %v4501, %v4499
        %v4626 = vpack.c.b16 %v4502, %v4500
        %v4627 = vpack.c.b16 %v4505, %v4503
        %v4628 = vpack.c.b16 %v4506, %v4504
        %v4629 = vpack.c.b16 %v4509, %v4507
        %v4630 = vpack.c.b16 %v4510, %v4508
        %v4631 = vpack.c.b16 %v4513, %v4511
        %v4632 = vpack.c.b16 %v4514, %v4512
        %v4633 = vpack.c.b16 %v4517, %v4515
        %v4634 = vpack.c.b16 %v4518, %v4516
        %v4635 = vpack.c.b16 %v4521, %v4519
        %v4636 = vpack.c.b16 %v4522, %v4520
        %v4637 = vpack.c.b16 %v4525, %v4523
        %v4638 = vpack.c.b16 %v4526, %v4524
        %v4639 = vpack.c.b16 %v4529, %v4527
        %v4640 = vpack.c.b16 %v4530, %v4528
        %v4641 = vpack.c.b16 %v4533, %v4531
        %v4642 = vpack.c.b16 %v4534, %v4532
        %v4643 = vpack.c.b16 %v4537, %v4535
        %v4644 = vpack.c.b16 %v4538, %v4536
        %v4645 = vpack.c.b16 %v4541, %v4539
        %v4646 = vpack.c.b16 %v4542, %v4540
        %v4647 = vpack.c.b16 %v4545, %v4543
        %v4648 = vpack.c.b16 %v4546, %v4544
        %v4649 = vpack.c.b16 %v4549, %v4547
        %v4650 = vpack.c.b16 %v4550, %v4548
        %v4651 = vpack.c.b16 %v4553, %v4551
        %v4652 = vpack.c.b16 %v4554, %v4552
        %v4653 = vpack.c.b16 %v4557, %v4555
        %v4654 = vpack.c.b16 %v4558, %v4556
        %v4655 = vpack.c.b16 %v4561, %v4559
        %v4656 = vpack.c.b16 %v4562, %v4560
        %v4657 = vpack.c.b16 %v4565, %v4563
        %v4658 = vpack.c.b16 %v4566, %v4564
        %v4659 = vpack.c.b16 %v4569, %v4567
        %v4660 = vpack.c.b16 %v4570, %v4568
        %v4661 = vpack.c.b16 %v4573, %v4571
        %v4662 = vpack.c.b16 %v4574, %v4572
        %v4663 = vpack.c.b16 %v4577, %v4575
        %v4664 = vpack.c.b16 %v4578, %v4576
        %v4665 = vpack.c.b16 %v4581, %v4579
        %v4666 = vpack.c.b16 %v4582, %v4580
        %v4667 = vpack.c.b16 %v4585, %v4583
        %v4668 = vpack.c.b16 %v4586, %v4584
        %v4669 = vpack.c.b16 %v4589, %v4587
        %v4670 = vpack.c.b16 %v4590, %v4588
        %v4671 = vpack.c.b16 %v4593, %v4591
        %v4672 = vpack.c.b16 %v4594, %v4592
        %v4673 = vpack.c.b16 %v4597, %v4595
        %v4674 = vpack.c.b16 %v4598, %v4596
        %v4675 = vpack.c.b16 %v4601, %v4599
        %v4676 = vpack.c.b16 %v4602, %v4600
        %v4677 = vpack.c.b16 %v4605, %v4603
        %v4678 = vpack.c.b16 %v4606, %v4604
        %v4679 = vpack.c.b16 %v4609, %v4607
        %v4680 = vpack.c.b16 %v4610, %v4608
        %v4681 = vpack.c.b16 %v4613, %v4611
        %v4682 = vpack.c.b16 %v4614, %v4612
        %v4683 = vpack.c.b16 %v4617, %v4615
        %v4684 = vpack.c.b16 %v4618, %v4616
        %v4685 = vpack.c.b16 %v4621, %v4619
        %v4686 = vpack.c.b16 %v4622, %v4620
        %4751 = vmatpush.bf16.msra.mxu0 %v4637
        %4752 = vmatpush.bf16.msra.mxu0 %v4635
        %4753 = vmatpush.bf16.msra.mxu0 %v4633
        %4754 = vmatpush.bf16.msra.mxu0 %v4631
        %4755 = vmatpush.bf16.msra.mxu0 %v4629
        %4756 = vmatpush.bf16.msra.mxu0 %v4627
        %4757 = vmatpush.bf16.msra.mxu0 %v4625
        %4758 = vmatpush.bf16.msra.mxu0 %v4623
        %4759 = vmatmul.bf16.gmra.mxu0 %v3057
        %v4760 = vpop.f32.mrf.mxu0
        %v4761 = vadd.f32 %v4427, %v4760
        %v4762 = vpop.f32.mrf.mxu0
        %v4763 = vadd.f32 %v4427, %v4762
        %4764 = vmatmul.bf16.gmra.mxu0 %v3061
        %v4765 = vpop.f32.mrf.mxu0
        %v4766 = vadd.f32 %v4427, %v4765
        %v4767 = vpop.f32.mrf.mxu0
        %v4768 = vadd.f32 %v4427, %v4767
        %4769 = vmatmul.bf16.gmra.mxu0 %v3065
        %v4770 = vpop.f32.mrf.mxu0
        %v4771 = vadd.f32 %v4427, %v4770
        %v4772 = vpop.f32.mrf.mxu0
        %v4773 = vadd.f32 %v4427, %v4772
        %4774 = vmatmul.bf16.gmra.mxu0 %v3069
        %v4775 = vpop.f32.mrf.mxu0
        %v4776 = vadd.f32 %v4427, %v4775
        %v4777 = vpop.f32.mrf.mxu0
        %v4778 = vadd.f32 %v4427, %v4777
        %4779 = vmatmul.bf16.gmra.mxu0 %v3073
        %v4780 = vpop.f32.mrf.mxu0
        %v4781 = vadd.f32 %v4427, %v4780
        %v4782 = vpop.f32.mrf.mxu0
        %v4783 = vadd.f32 %v4427, %v4782
        %4784 = vmatmul.bf16.gmra.mxu0 %v3077
        %v4785 = vpop.f32.mrf.mxu0
        %v4786 = vadd.f32 %v4427, %v4785
        %v4787 = vpop.f32.mrf.mxu0
        %v4788 = vadd.f32 %v4427, %v4787
        %4789 = vmatmul.bf16.gmra.mxu0 %v3081
        %v4790 = vpop.f32.mrf.mxu0
        %v4791 = vadd.f32 %v4427, %v4790
        %v4792 = vpop.f32.mrf.mxu0
        %v4793 = vadd.f32 %v4427, %v4792
        %4794 = vmatmul.bf16.gmra.mxu0 %v3085
        %v4795 = vpop.f32.mrf.mxu0
        %v4796 = vadd.f32 %v4427, %v4795
        %v4797 = vpop.f32.mrf.mxu0
        %v4798 = vadd.f32 %v4427, %v4797
        %4799 = vmatmul.bf16.gmra.mxu0 %v3089
        %v4800 = vpop.f32.mrf.mxu0
        %v4801 = vadd.f32 %v4427, %v4800
        %v4802 = vpop.f32.mrf.mxu0
        %v4803 = vadd.f32 %v4427, %v4802
        %4804 = vmatmul.bf16.gmra.mxu0 %v3093
        %v4805 = vpop.f32.mrf.mxu0
        %v4806 = vadd.f32 %v4427, %v4805
        %v4807 = vpop.f32.mrf.mxu0
        %v4808 = vadd.f32 %v4427, %v4807
        %4809 = vmatmul.bf16.gmra.mxu0 %v3097
        %v4810 = vpop.f32.mrf.mxu0
        %v4811 = vadd.f32 %v4427, %v4810
        %v4812 = vpop.f32.mrf.mxu0
        %v4813 = vadd.f32 %v4427, %v4812
        %4814 = vmatmul.bf16.gmra.mxu0 %v3101
        %v4815 = vpop.f32.mrf.mxu0
        %v4816 = vadd.f32 %v4427, %v4815
        %v4817 = vpop.f32.mrf.mxu0
        %v4818 = vadd.f32 %v4427, %v4817
        %4819 = vmatmul.bf16.gmra.mxu0 %v3105
        %v4820 = vpop.f32.mrf.mxu0
        %v4821 = vadd.f32 %v4427, %v4820
        %v4822 = vpop.f32.mrf.mxu0
        %v4823 = vadd.f32 %v4427, %v4822
        %4824 = vmatmul.bf16.gmra.mxu0 %v3109
        %v4825 = vpop.f32.mrf.mxu0
        %v4826 = vadd.f32 %v4427, %v4825
        %v4827 = vpop.f32.mrf.mxu0
        %v4828 = vadd.f32 %v4427, %v4827
        %4829 = vmatmul.bf16.gmra.mxu0 %v3113
        %v4830 = vpop.f32.mrf.mxu0
        %v4831 = vadd.f32 %v4427, %v4830
        %v4832 = vpop.f32.mrf.mxu0
        %v4833 = vadd.f32 %v4427, %v4832
        %4834 = vmatmul.bf16.gmra.mxu0 %v3117
        %v4835 = vpop.f32.mrf.mxu0
        %v4836 = vadd.f32 %v4427, %v4835
        %v4837 = vpop.f32.mrf.mxu0
        %v4838 = vadd.f32 %v4427, %v4837
        %4839 = vdwg.mxu0
        %4840 = vmatpush.bf16.msra.mxu0 %v4653
        %4841 = vmatpush.bf16.msra.mxu0 %v4651
        %4842 = vmatpush.bf16.msra.mxu0 %v4649
        %4843 = vmatpush.bf16.msra.mxu0 %v4647
        %4844 = vmatpush.bf16.msra.mxu0 %v4645
        %4845 = vmatpush.bf16.msra.mxu0 %v4643
        %4846 = vmatpush.bf16.msra.mxu0 %v4641
        %4847 = vmatpush.bf16.msra.mxu0 %v4639
        %4848 = vmatmul.bf16.gmra.mxu0 %v3058
        %v4849 = vpop.f32.mrf.mxu0
        %v4850 = vadd.f32 %v4761, %v4849
        %v4851 = vpop.f32.mrf.mxu0
        %v4852 = vadd.f32 %v4763, %v4851
        %4853 = vmatmul.bf16.gmra.mxu0 %v3062
        %v4854 = vpop.f32.mrf.mxu0
        %v4855 = vadd.f32 %v4766, %v4854
        %v4856 = vpop.f32.mrf.mxu0
        %v4857 = vadd.f32 %v4768, %v4856
        %4858 = vmatmul.bf16.gmra.mxu0 %v3066
        %v4859 = vpop.f32.mrf.mxu0
        %v4860 = vadd.f32 %v4771, %v4859
        %v4861 = vpop.f32.mrf.mxu0
        %v4862 = vadd.f32 %v4773, %v4861
        %4863 = vmatmul.bf16.gmra.mxu0 %v3070
        %v4864 = vpop.f32.mrf.mxu0
        %v4865 = vadd.f32 %v4776, %v4864
        %v4866 = vpop.f32.mrf.mxu0
        %v4867 = vadd.f32 %v4778, %v4866
        %4868 = vmatmul.bf16.gmra.mxu0 %v3074
        %v4869 = vpop.f32.mrf.mxu0
        %v4870 = vadd.f32 %v4781, %v4869
        %v4871 = vpop.f32.mrf.mxu0
        %v4872 = vadd.f32 %v4783, %v4871
        %4873 = vmatmul.bf16.gmra.mxu0 %v3078
        %v4874 = vpop.f32.mrf.mxu0
        %v4875 = vadd.f32 %v4786, %v4874
        %v4876 = vpop.f32.mrf.mxu0
        %v4877 = vadd.f32 %v4788, %v4876
        %4878 = vmatmul.bf16.gmra.mxu0 %v3082
        %v4879 = vpop.f32.mrf.mxu0
        %v4880 = vadd.f32 %v4791, %v4879
        %v4881 = vpop.f32.mrf.mxu0
        %v4882 = vadd.f32 %v4793, %v4881
        %4883 = vmatmul.bf16.gmra.mxu0 %v3086
        %v4884 = vpop.f32.mrf.mxu0
        %v4885 = vadd.f32 %v4796, %v4884
        %v4886 = vpop.f32.mrf.mxu0
        %v4887 = vadd.f32 %v4798, %v4886
        %4888 = vmatmul.bf16.gmra.mxu0 %v3090
        %v4889 = vpop.f32.mrf.mxu0
        %v4890 = vadd.f32 %v4801, %v4889
        %v4891 = vpop.f32.mrf.mxu0
        %v4892 = vadd.f32 %v4803, %v4891
        %4893 = vmatmul.bf16.gmra.mxu0 %v3094
        %v4894 = vpop.f32.mrf.mxu0
        %v4895 = vadd.f32 %v4806, %v4894
        %v4896 = vpop.f32.mrf.mxu0
        %v4897 = vadd.f32 %v4808, %v4896
        %4898 = vmatmul.bf16.gmra.mxu0 %v3098
        %v4899 = vpop.f32.mrf.mxu0
        %v4900 = vadd.f32 %v4811, %v4899
        %v4901 = vpop.f32.mrf.mxu0
        %v4902 = vadd.f32 %v4813, %v4901
        %4903 = vmatmul.bf16.gmra.mxu0 %v3102
        %v4904 = vpop.f32.mrf.mxu0
        %v4905 = vadd.f32 %v4816, %v4904
        %v4906 = vpop.f32.mrf.mxu0
        %v4907 = vadd.f32 %v4818, %v4906
        %4908 = vmatmul.bf16.gmra.mxu0 %v3106
        %v4909 = vpop.f32.mrf.mxu0
        %v4910 = vadd.f32 %v4821, %v4909
        %v4911 = vpop.f32.mrf.mxu0
        %v4912 = vadd.f32 %v4823, %v4911
        %4913 = vmatmul.bf16.gmra.mxu0 %v3110
        %v4914 = vpop.f32.mrf.mxu0
        %v4915 = vadd.f32 %v4826, %v4914
        %v4916 = vpop.f32.mrf.mxu0
        %v4917 = vadd.f32 %v4828, %v4916
        %4918 = vmatmul.bf16.gmra.mxu0 %v3114
        %v4919 = vpop.f32.mrf.mxu0
        %v4920 = vadd.f32 %v4831, %v4919
        %v4921 = vpop.f32.mrf.mxu0
        %v4922 = vadd.f32 %v4833, %v4921
        %4923 = vmatmul.bf16.gmra.mxu0 %v3118
        %v4924 = vpop.f32.mrf.mxu0
        %v4925 = vadd.f32 %v4836, %v4924
        %v4926 = vpop.f32.mrf.mxu0
        %v4927 = vadd.f32 %v4838, %v4926
        %4928 = vdwg.mxu0
        %4929 = vmatpush.bf16.msra.mxu0 %v4669
        %4930 = vmatpush.bf16.msra.mxu0 %v4667
        %4931 = vmatpush.bf16.msra.mxu0 %v4665
        %4932 = vmatpush.bf16.msra.mxu0 %v4663
        %4933 = vmatpush.bf16.msra.mxu0 %v4661
        %4934 = vmatpush.bf16.msra.mxu0 %v4659
        %4935 = vmatpush.bf16.msra.mxu0 %v4657
        %4936 = vmatpush.bf16.msra.mxu0 %v4655
        %4937 = vmatmul.bf16.gmra.mxu0 %v3059
        %v4938 = vpop.f32.mrf.mxu0
        %v4939 = vadd.f32 %v4850, %v4938
        %v4940 = vpop.f32.mrf.mxu0
        %v4941 = vadd.f32 %v4852, %v4940
        %4942 = vmatmul.bf16.gmra.mxu0 %v3063
        %v4943 = vpop.f32.mrf.mxu0
        %v4944 = vadd.f32 %v4855, %v4943
        %v4945 = vpop.f32.mrf.mxu0
        %v4946 = vadd.f32 %v4857, %v4945
        %4947 = vmatmul.bf16.gmra.mxu0 %v3067
        %v4948 = vpop.f32.mrf.mxu0
        %v4949 = vadd.f32 %v4860, %v4948
        %v4950 = vpop.f32.mrf.mxu0
        %v4951 = vadd.f32 %v4862, %v4950
        %4952 = vmatmul.bf16.gmra.mxu0 %v3071
        %v4953 = vpop.f32.mrf.mxu0
        %v4954 = vadd.f32 %v4865, %v4953
        %v4955 = vpop.f32.mrf.mxu0
        %v4956 = vadd.f32 %v4867, %v4955
        %4957 = vmatmul.bf16.gmra.mxu0 %v3075
        %v4958 = vpop.f32.mrf.mxu0
        %v4959 = vadd.f32 %v4870, %v4958
        %v4960 = vpop.f32.mrf.mxu0
        %v4961 = vadd.f32 %v4872, %v4960
        %4962 = vmatmul.bf16.gmra.mxu0 %v3079
        %v4963 = vpop.f32.mrf.mxu0
        %v4964 = vadd.f32 %v4875, %v4963
        %v4965 = vpop.f32.mrf.mxu0
        %v4966 = vadd.f32 %v4877, %v4965
        %4967 = vmatmul.bf16.gmra.mxu0 %v3083
        %v4968 = vpop.f32.mrf.mxu0
        %v4969 = vadd.f32 %v4880, %v4968
        %v4970 = vpop.f32.mrf.mxu0
        %v4971 = vadd.f32 %v4882, %v4970
        %4972 = vmatmul.bf16.gmra.mxu0 %v3087
        %v4973 = vpop.f32.mrf.mxu0
        %v4974 = vadd.f32 %v4885, %v4973
        %v4975 = vpop.f32.mrf.mxu0
        %v4976 = vadd.f32 %v4887, %v4975
        %4977 = vmatmul.bf16.gmra.mxu0 %v3091
        %v4978 = vpop.f32.mrf.mxu0
        %v4979 = vadd.f32 %v4890, %v4978
        %v4980 = vpop.f32.mrf.mxu0
        %v4981 = vadd.f32 %v4892, %v4980
        %4982 = vmatmul.bf16.gmra.mxu0 %v3095
        %v4983 = vpop.f32.mrf.mxu0
        %v4984 = vadd.f32 %v4895, %v4983
        %v4985 = vpop.f32.mrf.mxu0
        %v4986 = vadd.f32 %v4897, %v4985
        %4987 = vmatmul.bf16.gmra.mxu0 %v3099
        %v4988 = vpop.f32.mrf.mxu0
        %v4989 = vadd.f32 %v4900, %v4988
        %v4990 = vpop.f32.mrf.mxu0
        %v4991 = vadd.f32 %v4902, %v4990
        %4992 = vmatmul.bf16.gmra.mxu0 %v3103
        %v4993 = vpop.f32.mrf.mxu0
        %v4994 = vadd.f32 %v4905, %v4993
        %v4995 = vpop.f32.mrf.mxu0
        %v4996 = vadd.f32 %v4907, %v4995
        %4997 = vmatmul.bf16.gmra.mxu0 %v3107
        %v4998 = vpop.f32.mrf.mxu0
        %v4999 = vadd.f32 %v4910, %v4998
        %v5000 = vpop.f32.mrf.mxu0
        %v5001 = vadd.f32 %v4912, %v5000
        %5002 = vmatmul.bf16.gmra.mxu0 %v3111
        %v5003 = vpop.f32.mrf.mxu0
        %v5004 = vadd.f32 %v4915, %v5003
        %v5005 = vpop.f32.mrf.mxu0
        %v5006 = vadd.f32 %v4917, %v5005
        %5007 = vmatmul.bf16.gmra.mxu0 %v3115
        %v5008 = vpop.f32.mrf.mxu0
        %v5009 = vadd.f32 %v4920, %v5008
        %v5010 = vpop.f32.mrf.mxu0
        %v5011 = vadd.f32 %v4922, %v5010
        %5012 = vmatmul.bf16.gmra.mxu0 %v3119
        %v5013 = vpop.f32.mrf.mxu0
        %v5014 = vadd.f32 %v4925, %v5013
        %v5015 = vpop.f32.mrf.mxu0
        %v5016 = vadd.f32 %v4927, %v5015
        %5017 = vdwg.mxu0
        %5018 = vmatpush.bf16.msra.mxu0 %v4685
        %5019 = vmatpush.bf16.msra.mxu0 %v4683
        %5020 = vmatpush.bf16.msra.mxu0 %v4681
        %5021 = vmatpush.bf16.msra.mxu0 %v4679
        %5022 = vmatpush.bf16.msra.mxu0 %v4677
        %5023 = vmatpush.bf16.msra.mxu0 %v4675
        %5024 = vmatpush.bf16.msra.mxu0 %v4673
        %5025 = vmatpush.bf16.msra.mxu0 %v4671
        %5026 = vmatmul.bf16.gmra.mxu0 %v3060
        %v5027 = vpop.f32.mrf.mxu0
        %v5028 = vadd.f32 %v4939, %v5027
        %v5029 = vpop.f32.mrf.mxu0
        %v5030 = vadd.f32 %v4941, %v5029
        %5031 = vmatmul.bf16.gmra.mxu0 %v3064
        %v5032 = vpop.f32.mrf.mxu0
        %v5033 = vadd.f32 %v4944, %v5032
        %v5034 = vpop.f32.mrf.mxu0
        %v5035 = vadd.f32 %v4946, %v5034
        %5036 = vmatmul.bf16.gmra.mxu0 %v3068
        %v5037 = vpop.f32.mrf.mxu0
        %v5038 = vadd.f32 %v4949, %v5037
        %v5039 = vpop.f32.mrf.mxu0
        %v5040 = vadd.f32 %v4951, %v5039
        %5041 = vmatmul.bf16.gmra.mxu0 %v3072
        %v5042 = vpop.f32.mrf.mxu0
        %v5043 = vadd.f32 %v4954, %v5042
        %v5044 = vpop.f32.mrf.mxu0
        %v5045 = vadd.f32 %v4956, %v5044
        %5046 = vmatmul.bf16.gmra.mxu0 %v3076
        %v5047 = vpop.f32.mrf.mxu0
        %v5048 = vadd.f32 %v4959, %v5047
        %v5049 = vpop.f32.mrf.mxu0
        %v5050 = vadd.f32 %v4961, %v5049
        %5051 = vmatmul.bf16.gmra.mxu0 %v3080
        %v5052 = vpop.f32.mrf.mxu0
        %v5053 = vadd.f32 %v4964, %v5052
        %v5054 = vpop.f32.mrf.mxu0
        %v5055 = vadd.f32 %v4966, %v5054
        %5056 = vmatmul.bf16.gmra.mxu0 %v3084
        %v5057 = vpop.f32.mrf.mxu0
        %v5058 = vadd.f32 %v4969, %v5057
        %v5059 = vpop.f32.mrf.mxu0
        %v5060 = vadd.f32 %v4971, %v5059
        %5061 = vmatmul.bf16.gmra.mxu0 %v3088
        %v5062 = vpop.f32.mrf.mxu0
        %v5063 = vadd.f32 %v4974, %v5062
        %v5064 = vpop.f32.mrf.mxu0
        %v5065 = vadd.f32 %v4976, %v5064
        %5066 = vmatmul.bf16.gmra.mxu0 %v3092
        %v5067 = vpop.f32.mrf.mxu0
        %v5068 = vadd.f32 %v4979, %v5067
        %v5069 = vpop.f32.mrf.mxu0
        %v5070 = vadd.f32 %v4981, %v5069
        %5071 = vmatmul.bf16.gmra.mxu0 %v3096
        %v5072 = vpop.f32.mrf.mxu0
        %v5073 = vadd.f32 %v4984, %v5072
        %v5074 = vpop.f32.mrf.mxu0
        %v5075 = vadd.f32 %v4986, %v5074
        %5076 = vmatmul.bf16.gmra.mxu0 %v3100
        %v5077 = vpop.f32.mrf.mxu0
        %v5078 = vadd.f32 %v4989, %v5077
        %v5079 = vpop.f32.mrf.mxu0
        %v5080 = vadd.f32 %v4991, %v5079
        %5081 = vmatmul.bf16.gmra.mxu0 %v3104
        %v5082 = vpop.f32.mrf.mxu0
        %v5083 = vadd.f32 %v4994, %v5082
        %v5084 = vpop.f32.mrf.mxu0
        %v5085 = vadd.f32 %v4996, %v5084
        %5086 = vmatmul.bf16.gmra.mxu0 %v3108
        %v5087 = vpop.f32.mrf.mxu0
        %v5088 = vadd.f32 %v4999, %v5087
        %v5089 = vpop.f32.mrf.mxu0
        %v5090 = vadd.f32 %v5001, %v5089
        %5091 = vmatmul.bf16.gmra.mxu0 %v3112
        %v5092 = vpop.f32.mrf.mxu0
        %v5093 = vadd.f32 %v5004, %v5092
        %v5094 = vpop.f32.mrf.mxu0
        %v5095 = vadd.f32 %v5006, %v5094
        %5096 = vmatmul.bf16.gmra.mxu0 %v3116
        %v5097 = vpop.f32.mrf.mxu0
        %v5098 = vadd.f32 %v5009, %v5097
        %v5099 = vpop.f32.mrf.mxu0
        %v5100 = vadd.f32 %v5011, %v5099
        %5101 = vmatmul.bf16.gmra.mxu0 %v3120
        %v5102 = vpop.f32.mrf.mxu0
        %v5103 = vadd.f32 %v5014, %v5102
        %v5104 = vpop.f32.mrf.mxu0
        %v5105 = vadd.f32 %v5016, %v5104
        %5106 = vdwg.mxu0
        %5107 = vmatpush.bf16.msra.mxu0 %v4638
        %5108 = vmatpush.bf16.msra.mxu0 %v4636
        %5109 = vmatpush.bf16.msra.mxu0 %v4634
        %5110 = vmatpush.bf16.msra.mxu0 %v4632
        %5111 = vmatpush.bf16.msra.mxu0 %v4630
        %5112 = vmatpush.bf16.msra.mxu0 %v4628
        %5113 = vmatpush.bf16.msra.mxu0 %v4626
        %5114 = vmatpush.bf16.msra.mxu0 %v4624
        %5115 = vmatmul.bf16.gmra.mxu0 %v3057
        %v5116 = vpop.f32.mrf.mxu0
        %v5117 = vadd.f32 %v4428, %v5116
        %v5118 = vpop.f32.mrf.mxu0
        %v5119 = vadd.f32 %v4428, %v5118
        %5120 = vmatmul.bf16.gmra.mxu0 %v3061
        %v5121 = vpop.f32.mrf.mxu0
        %v5122 = vadd.f32 %v4428, %v5121
        %v5123 = vpop.f32.mrf.mxu0
        %v5124 = vadd.f32 %v4428, %v5123
        %5125 = vmatmul.bf16.gmra.mxu0 %v3065
        %v5126 = vpop.f32.mrf.mxu0
        %v5127 = vadd.f32 %v4428, %v5126
        %v5128 = vpop.f32.mrf.mxu0
        %v5129 = vadd.f32 %v4428, %v5128
        %5130 = vmatmul.bf16.gmra.mxu0 %v3069
        %v5131 = vpop.f32.mrf.mxu0
        %v5132 = vadd.f32 %v4428, %v5131
        %v5133 = vpop.f32.mrf.mxu0
        %v5134 = vadd.f32 %v4428, %v5133
        %5135 = vmatmul.bf16.gmra.mxu0 %v3073
        %v5136 = vpop.f32.mrf.mxu0
        %v5137 = vadd.f32 %v4428, %v5136
        %v5138 = vpop.f32.mrf.mxu0
        %v5139 = vadd.f32 %v4428, %v5138
        %5140 = vmatmul.bf16.gmra.mxu0 %v3077
        %v5141 = vpop.f32.mrf.mxu0
        %v5142 = vadd.f32 %v4428, %v5141
        %v5143 = vpop.f32.mrf.mxu0
        %v5144 = vadd.f32 %v4428, %v5143
        %5145 = vmatmul.bf16.gmra.mxu0 %v3081
        %v5146 = vpop.f32.mrf.mxu0
        %v5147 = vadd.f32 %v4428, %v5146
        %v5148 = vpop.f32.mrf.mxu0
        %v5149 = vadd.f32 %v4428, %v5148
        %5150 = vmatmul.bf16.gmra.mxu0 %v3085
        %v5151 = vpop.f32.mrf.mxu0
        %v5152 = vadd.f32 %v4428, %v5151
        %v5153 = vpop.f32.mrf.mxu0
        %v5154 = vadd.f32 %v4428, %v5153
        %5155 = vmatmul.bf16.gmra.mxu0 %v3089
        %v5156 = vpop.f32.mrf.mxu0
        %v5157 = vadd.f32 %v4428, %v5156
        %v5158 = vpop.f32.mrf.mxu0
        %v5159 = vadd.f32 %v4428, %v5158
        %5160 = vmatmul.bf16.gmra.mxu0 %v3093
        %v5161 = vpop.f32.mrf.mxu0
        %v5162 = vadd.f32 %v4428, %v5161
        %v5163 = vpop.f32.mrf.mxu0
        %v5164 = vadd.f32 %v4428, %v5163
        %5165 = vmatmul.bf16.gmra.mxu0 %v3097
        %v5166 = vpop.f32.mrf.mxu0
        %v5167 = vadd.f32 %v4428, %v5166
        %v5168 = vpop.f32.mrf.mxu0
        %v5169 = vadd.f32 %v4428, %v5168
        %5170 = vmatmul.bf16.gmra.mxu0 %v3101
        %v5171 = vpop.f32.mrf.mxu0
        %v5172 = vadd.f32 %v4428, %v5171
        %v5173 = vpop.f32.mrf.mxu0
        %v5174 = vadd.f32 %v4428, %v5173
        %5175 = vmatmul.bf16.gmra.mxu0 %v3105
        %v5176 = vpop.f32.mrf.mxu0
        %v5177 = vadd.f32 %v4428, %v5176
        %v5178 = vpop.f32.mrf.mxu0
        %v5179 = vadd.f32 %v4428, %v5178
        %5180 = vmatmul.bf16.gmra.mxu0 %v3109
        %v5181 = vpop.f32.mrf.mxu0
        %v5182 = vadd.f32 %v4428, %v5181
        %v5183 = vpop.f32.mrf.mxu0
        %v5184 = vadd.f32 %v4428, %v5183
        %5185 = vmatmul.bf16.gmra.mxu0 %v3113
        %v5186 = vpop.f32.mrf.mxu0
        %v5187 = vadd.f32 %v4428, %v5186
        %v5188 = vpop.f32.mrf.mxu0
        %v5189 = vadd.f32 %v4428, %v5188
        %5190 = vmatmul.bf16.gmra.mxu0 %v3117
        %v5191 = vpop.f32.mrf.mxu0
        %v5192 = vadd.f32 %v4428, %v5191
        %v5193 = vpop.f32.mrf.mxu0
        %v5194 = vadd.f32 %v4428, %v5193
        %5195 = vdwg.mxu0
        %5196 = vmatpush.bf16.msra.mxu0 %v4654
        %5197 = vmatpush.bf16.msra.mxu0 %v4652
        %5198 = vmatpush.bf16.msra.mxu0 %v4650
        %5199 = vmatpush.bf16.msra.mxu0 %v4648
        %5200 = vmatpush.bf16.msra.mxu0 %v4646
        %5201 = vmatpush.bf16.msra.mxu0 %v4644
        %5202 = vmatpush.bf16.msra.mxu0 %v4642
        %5203 = vmatpush.bf16.msra.mxu0 %v4640
        %5204 = vmatmul.bf16.gmra.mxu0 %v3058
        %v5205 = vpop.f32.mrf.mxu0
        %v5206 = vadd.f32 %v5117, %v5205
        %v5207 = vpop.f32.mrf.mxu0
        %v5208 = vadd.f32 %v5119, %v5207
        %5209 = vmatmul.bf16.gmra.mxu0 %v3062
        %v5210 = vpop.f32.mrf.mxu0
        %v5211 = vadd.f32 %v5122, %v5210
        %v5212 = vpop.f32.mrf.mxu0
        %v5213 = vadd.f32 %v5124, %v5212
        %5214 = vmatmul.bf16.gmra.mxu0 %v3066
        %v5215 = vpop.f32.mrf.mxu0
        %v5216 = vadd.f32 %v5127, %v5215
        %v5217 = vpop.f32.mrf.mxu0
        %v5218 = vadd.f32 %v5129, %v5217
        %5219 = vmatmul.bf16.gmra.mxu0 %v3070
        %v5220 = vpop.f32.mrf.mxu0
        %v5221 = vadd.f32 %v5132, %v5220
        %v5222 = vpop.f32.mrf.mxu0
        %v5223 = vadd.f32 %v5134, %v5222
        %5224 = vmatmul.bf16.gmra.mxu0 %v3074
        %v5225 = vpop.f32.mrf.mxu0
        %v5226 = vadd.f32 %v5137, %v5225
        %v5227 = vpop.f32.mrf.mxu0
        %v5228 = vadd.f32 %v5139, %v5227
        %5229 = vmatmul.bf16.gmra.mxu0 %v3078
        %v5230 = vpop.f32.mrf.mxu0
        %v5231 = vadd.f32 %v5142, %v5230
        %v5232 = vpop.f32.mrf.mxu0
        %v5233 = vadd.f32 %v5144, %v5232
        %5234 = vmatmul.bf16.gmra.mxu0 %v3082
        %v5235 = vpop.f32.mrf.mxu0
        %v5236 = vadd.f32 %v5147, %v5235
        %v5237 = vpop.f32.mrf.mxu0
        %v5238 = vadd.f32 %v5149, %v5237
        %5239 = vmatmul.bf16.gmra.mxu0 %v3086
        %v5240 = vpop.f32.mrf.mxu0
        %v5241 = vadd.f32 %v5152, %v5240
        %v5242 = vpop.f32.mrf.mxu0
        %v5243 = vadd.f32 %v5154, %v5242
        %5244 = vmatmul.bf16.gmra.mxu0 %v3090
        %v5245 = vpop.f32.mrf.mxu0
        %v5246 = vadd.f32 %v5157, %v5245
        %v5247 = vpop.f32.mrf.mxu0
        %v5248 = vadd.f32 %v5159, %v5247
        %5249 = vmatmul.bf16.gmra.mxu0 %v3094
        %v5250 = vpop.f32.mrf.mxu0
        %v5251 = vadd.f32 %v5162, %v5250
        %v5252 = vpop.f32.mrf.mxu0
        %v5253 = vadd.f32 %v5164, %v5252
        %5254 = vmatmul.bf16.gmra.mxu0 %v3098
        %v5255 = vpop.f32.mrf.mxu0
        %v5256 = vadd.f32 %v5167, %v5255
        %v5257 = vpop.f32.mrf.mxu0
        %v5258 = vadd.f32 %v5169, %v5257
        %5259 = vmatmul.bf16.gmra.mxu0 %v3102
        %v5260 = vpop.f32.mrf.mxu0
        %v5261 = vadd.f32 %v5172, %v5260
        %v5262 = vpop.f32.mrf.mxu0
        %v5263 = vadd.f32 %v5174, %v5262
        %5264 = vmatmul.bf16.gmra.mxu0 %v3106
        %v5265 = vpop.f32.mrf.mxu0
        %v5266 = vadd.f32 %v5177, %v5265
        %v5267 = vpop.f32.mrf.mxu0
        %v5268 = vadd.f32 %v5179, %v5267
        %5269 = vmatmul.bf16.gmra.mxu0 %v3110
        %v5270 = vpop.f32.mrf.mxu0
        %v5271 = vadd.f32 %v5182, %v5270
        %v5272 = vpop.f32.mrf.mxu0
        %v5273 = vadd.f32 %v5184, %v5272
        %5274 = vmatmul.bf16.gmra.mxu0 %v3114
        %v5275 = vpop.f32.mrf.mxu0
        %v5276 = vadd.f32 %v5187, %v5275
        %v5277 = vpop.f32.mrf.mxu0
        %v5278 = vadd.f32 %v5189, %v5277
        %5279 = vmatmul.bf16.gmra.mxu0 %v3118
        %v5280 = vpop.f32.mrf.mxu0
        %v5281 = vadd.f32 %v5192, %v5280
        %v5282 = vpop.f32.mrf.mxu0
        %v5283 = vadd.f32 %v5194, %v5282
        %5284 = vdwg.mxu0
        %5285 = vmatpush.bf16.msra.mxu0 %v4670
        %5286 = vmatpush.bf16.msra.mxu0 %v4668
        %5287 = vmatpush.bf16.msra.mxu0 %v4666
        %5288 = vmatpush.bf16.msra.mxu0 %v4664
        %5289 = vmatpush.bf16.msra.mxu0 %v4662
        %5290 = vmatpush.bf16.msra.mxu0 %v4660
        %5291 = vmatpush.bf16.msra.mxu0 %v4658
        %5292 = vmatpush.bf16.msra.mxu0 %v4656
        %5293 = vmatmul.bf16.gmra.mxu0 %v3059
        %v5294 = vpop.f32.mrf.mxu0
        %v5295 = vadd.f32 %v5206, %v5294
        %v5296 = vpop.f32.mrf.mxu0
        %v5297 = vadd.f32 %v5208, %v5296
        %5298 = vmatmul.bf16.gmra.mxu0 %v3063
        %v5299 = vpop.f32.mrf.mxu0
        %v5300 = vadd.f32 %v5211, %v5299
        %v5301 = vpop.f32.mrf.mxu0
        %v5302 = vadd.f32 %v5213, %v5301
        %5303 = vmatmul.bf16.gmra.mxu0 %v3067
        %v5304 = vpop.f32.mrf.mxu0
        %v5305 = vadd.f32 %v5216, %v5304
        %v5306 = vpop.f32.mrf.mxu0
        %v5307 = vadd.f32 %v5218, %v5306
        %5308 = vmatmul.bf16.gmra.mxu0 %v3071
        %v5309 = vpop.f32.mrf.mxu0
        %v5310 = vadd.f32 %v5221, %v5309
        %v5311 = vpop.f32.mrf.mxu0
        %v5312 = vadd.f32 %v5223, %v5311
        %5313 = vmatmul.bf16.gmra.mxu0 %v3075
        %v5314 = vpop.f32.mrf.mxu0
        %v5315 = vadd.f32 %v5226, %v5314
        %v5316 = vpop.f32.mrf.mxu0
        %v5317 = vadd.f32 %v5228, %v5316
        %5318 = vmatmul.bf16.gmra.mxu0 %v3079
        %v5319 = vpop.f32.mrf.mxu0
        %v5320 = vadd.f32 %v5231, %v5319
        %v5321 = vpop.f32.mrf.mxu0
        %v5322 = vadd.f32 %v5233, %v5321
        %5323 = vmatmul.bf16.gmra.mxu0 %v3083
        %v5324 = vpop.f32.mrf.mxu0
        %v5325 = vadd.f32 %v5236, %v5324
        %v5326 = vpop.f32.mrf.mxu0
        %v5327 = vadd.f32 %v5238, %v5326
        %5328 = vmatmul.bf16.gmra.mxu0 %v3087
        %v5329 = vpop.f32.mrf.mxu0
        %v5330 = vadd.f32 %v5241, %v5329
        %v5331 = vpop.f32.mrf.mxu0
        %v5332 = vadd.f32 %v5243, %v5331
        %5333 = vmatmul.bf16.gmra.mxu0 %v3091
        %v5334 = vpop.f32.mrf.mxu0
        %v5335 = vadd.f32 %v5246, %v5334
        %v5336 = vpop.f32.mrf.mxu0
        %v5337 = vadd.f32 %v5248, %v5336
        %5338 = vmatmul.bf16.gmra.mxu0 %v3095
        %v5339 = vpop.f32.mrf.mxu0
        %v5340 = vadd.f32 %v5251, %v5339
        %v5341 = vpop.f32.mrf.mxu0
        %v5342 = vadd.f32 %v5253, %v5341
        %5343 = vmatmul.bf16.gmra.mxu0 %v3099
        %v5344 = vpop.f32.mrf.mxu0
        %v5345 = vadd.f32 %v5256, %v5344
        %v5346 = vpop.f32.mrf.mxu0
        %v5347 = vadd.f32 %v5258, %v5346
        %5348 = vmatmul.bf16.gmra.mxu0 %v3103
        %v5349 = vpop.f32.mrf.mxu0
        %v5350 = vadd.f32 %v5261, %v5349
        %v5351 = vpop.f32.mrf.mxu0
        %v5352 = vadd.f32 %v5263, %v5351
        %5353 = vmatmul.bf16.gmra.mxu0 %v3107
        %v5354 = vpop.f32.mrf.mxu0
        %v5355 = vadd.f32 %v5266, %v5354
        %v5356 = vpop.f32.mrf.mxu0
        %v5357 = vadd.f32 %v5268, %v5356
        %5358 = vmatmul.bf16.gmra.mxu0 %v3111
        %v5359 = vpop.f32.mrf.mxu0
        %v5360 = vadd.f32 %v5271, %v5359
        %v5361 = vpop.f32.mrf.mxu0
        %v5362 = vadd.f32 %v5273, %v5361
        %5363 = vmatmul.bf16.gmra.mxu0 %v3115
        %v5364 = vpop.f32.mrf.mxu0
        %v5365 = vadd.f32 %v5276, %v5364
        %v5366 = vpop.f32.mrf.mxu0
        %v5367 = vadd.f32 %v5278, %v5366
        %5368 = vmatmul.bf16.gmra.mxu0 %v3119
        %v5369 = vpop.f32.mrf.mxu0
        %v5370 = vadd.f32 %v5281, %v5369
        %v5371 = vpop.f32.mrf.mxu0
        %v5372 = vadd.f32 %v5283, %v5371
        %5373 = vdwg.mxu0
        %5374 = vmatpush.bf16.msra.mxu0 %v4686
        %5375 = vmatpush.bf16.msra.mxu0 %v4684
        %5376 = vmatpush.bf16.msra.mxu0 %v4682
        %5377 = vmatpush.bf16.msra.mxu0 %v4680
        %5378 = vmatpush.bf16.msra.mxu0 %v4678
        %5379 = vmatpush.bf16.msra.mxu0 %v4676
        %5380 = vmatpush.bf16.msra.mxu0 %v4674
        %5381 = vmatpush.bf16.msra.mxu0 %v4672
        %5382 = vmatmul.bf16.gmra.mxu0 %v3060
        %v5383 = vpop.f32.mrf.mxu0
        %v5384 = vadd.f32 %v5295, %v5383
        %v5385 = vpop.f32.mrf.mxu0
        %v5386 = vadd.f32 %v5297, %v5385
        %5387 = vmatmul.bf16.gmra.mxu0 %v3064
        %v5388 = vpop.f32.mrf.mxu0
        %v5389 = vadd.f32 %v5300, %v5388
        %v5390 = vpop.f32.mrf.mxu0
        %v5391 = vadd.f32 %v5302, %v5390
        %5392 = vmatmul.bf16.gmra.mxu0 %v3068
        %v5393 = vpop.f32.mrf.mxu0
        %v5394 = vadd.f32 %v5305, %v5393
        %v5395 = vpop.f32.mrf.mxu0
        %v5396 = vadd.f32 %v5307, %v5395
        %5397 = vmatmul.bf16.gmra.mxu0 %v3072
        %v5398 = vpop.f32.mrf.mxu0
        %v5399 = vadd.f32 %v5310, %v5398
        %v5400 = vpop.f32.mrf.mxu0
        %v5401 = vadd.f32 %v5312, %v5400
        %5402 = vmatmul.bf16.gmra.mxu0 %v3076
        %v5403 = vpop.f32.mrf.mxu0
        %v5404 = vadd.f32 %v5315, %v5403
        %v5405 = vpop.f32.mrf.mxu0
        %v5406 = vadd.f32 %v5317, %v5405
        %5407 = vmatmul.bf16.gmra.mxu0 %v3080
        %v5408 = vpop.f32.mrf.mxu0
        %v5409 = vadd.f32 %v5320, %v5408
        %v5410 = vpop.f32.mrf.mxu0
        %v5411 = vadd.f32 %v5322, %v5410
        %5412 = vmatmul.bf16.gmra.mxu0 %v3084
        %v5413 = vpop.f32.mrf.mxu0
        %v5414 = vadd.f32 %v5325, %v5413
        %v5415 = vpop.f32.mrf.mxu0
        %v5416 = vadd.f32 %v5327, %v5415
        %5417 = vmatmul.bf16.gmra.mxu0 %v3088
        %v5418 = vpop.f32.mrf.mxu0
        %v5419 = vadd.f32 %v5330, %v5418
        %v5420 = vpop.f32.mrf.mxu0
        %v5421 = vadd.f32 %v5332, %v5420
        %5422 = vmatmul.bf16.gmra.mxu0 %v3092
        %v5423 = vpop.f32.mrf.mxu0
        %v5424 = vadd.f32 %v5335, %v5423
        %v5425 = vpop.f32.mrf.mxu0
        %v5426 = vadd.f32 %v5337, %v5425
        %5427 = vmatmul.bf16.gmra.mxu0 %v3096
        %v5428 = vpop.f32.mrf.mxu0
        %v5429 = vadd.f32 %v5340, %v5428
        %v5430 = vpop.f32.mrf.mxu0
        %v5431 = vadd.f32 %v5342, %v5430
        %5432 = vmatmul.bf16.gmra.mxu0 %v3100
        %v5433 = vpop.f32.mrf.mxu0
        %v5434 = vadd.f32 %v5345, %v5433
        %v5435 = vpop.f32.mrf.mxu0
        %v5436 = vadd.f32 %v5347, %v5435
        %5437 = vmatmul.bf16.gmra.mxu0 %v3104
        %v5438 = vpop.f32.mrf.mxu0
        %v5439 = vadd.f32 %v5350, %v5438
        %v5440 = vpop.f32.mrf.mxu0
        %v5441 = vadd.f32 %v5352, %v5440
        %5442 = vmatmul.bf16.gmra.mxu0 %v3108
        %v5443 = vpop.f32.mrf.mxu0
        %v5444 = vadd.f32 %v5355, %v5443
        %v5445 = vpop.f32.mrf.mxu0
        %v5446 = vadd.f32 %v5357, %v5445
        %5447 = vmatmul.bf16.gmra.mxu0 %v3112
        %v5448 = vpop.f32.mrf.mxu0
        %v5449 = vadd.f32 %v5360, %v5448
        %v5450 = vpop.f32.mrf.mxu0
        %v5451 = vadd.f32 %v5362, %v5450
        %5452 = vmatmul.bf16.gmra.mxu0 %v3116
        %v5453 = vpop.f32.mrf.mxu0
        %v5454 = vadd.f32 %v5365, %v5453
        %v5455 = vpop.f32.mrf.mxu0
        %v5456 = vadd.f32 %v5367, %v5455
        %5457 = vmatmul.bf16.gmra.mxu0 %v3120
        %v5458 = vpop.f32.mrf.mxu0
        %v5459 = vadd.f32 %v5370, %v5458
        %v5460 = vpop.f32.mrf.mxu0
        %v5461 = vadd.f32 %v5372, %v5460
        %5462 = vdwg.mxu0
        %v5463 = vmax.f32 %v5028, 0.0
        %v5464 = vmax.f32 %v5384, 0.0
        %v5465 = vmax.f32 %v5030, 0.0
        %v5466 = vmax.f32 %v5386, 0.0
        %v5467 = vmax.f32 %v5033, 0.0
        %v5468 = vmax.f32 %v5389, 0.0
        %v5469 = vmax.f32 %v5035, 0.0
        %v5470 = vmax.f32 %v5391, 0.0
        %v5471 = vmax.f32 %v5038, 0.0
        %v5472 = vmax.f32 %v5394, 0.0
        %v5473 = vmax.f32 %v5040, 0.0
        %v5474 = vmax.f32 %v5396, 0.0
        %v5475 = vmax.f32 %v5043, 0.0
        %v5476 = vmax.f32 %v5399, 0.0
        %v5477 = vmax.f32 %v5045, 0.0
        %v5478 = vmax.f32 %v5401, 0.0
        %v5479 = vmax.f32 %v5048, 0.0
        %v5480 = vmax.f32 %v5404, 0.0
        %v5481 = vmax.f32 %v5050, 0.0
        %v5482 = vmax.f32 %v5406, 0.0
        %v5483 = vmax.f32 %v5053, 0.0
        %v5484 = vmax.f32 %v5409, 0.0
        %v5485 = vmax.f32 %v5055, 0.0
        %v5486 = vmax.f32 %v5411, 0.0
        %v5487 = vmax.f32 %v5058, 0.0
        %v5488 = vmax.f32 %v5414, 0.0
        %v5489 = vmax.f32 %v5060, 0.0
        %v5490 = vmax.f32 %v5416, 0.0
        %v5491 = vmax.f32 %v5063, 0.0
        %v5492 = vmax.f32 %v5419, 0.0
        %v5493 = vmax.f32 %v5065, 0.0
        %v5494 = vmax.f32 %v5421, 0.0
        %v5495 = vmax.f32 %v5068, 0.0
        %v5496 = vmax.f32 %v5424, 0.0
        %v5497 = vmax.f32 %v5070, 0.0
        %v5498 = vmax.f32 %v5426, 0.0
        %v5499 = vmax.f32 %v5073, 0.0
        %v5500 = vmax.f32 %v5429, 0.0
        %v5501 = vmax.f32 %v5075, 0.0
        %v5502 = vmax.f32 %v5431, 0.0
        %v5503 = vmax.f32 %v5078, 0.0
        %v5504 = vmax.f32 %v5434, 0.0
        %v5505 = vmax.f32 %v5080, 0.0
        %v5506 = vmax.f32 %v5436, 0.0
        %v5507 = vmax.f32 %v5083, 0.0
        %v5508 = vmax.f32 %v5439, 0.0
        %v5509 = vmax.f32 %v5085, 0.0
        %v5510 = vmax.f32 %v5441, 0.0
        %v5511 = vmax.f32 %v5088, 0.0
        %v5512 = vmax.f32 %v5444, 0.0
        %v5513 = vmax.f32 %v5090, 0.0
        %v5514 = vmax.f32 %v5446, 0.0
        %v5515 = vmax.f32 %v5093, 0.0
        %v5516 = vmax.f32 %v5449, 0.0
        %v5517 = vmax.f32 %v5095, 0.0
        %v5518 = vmax.f32 %v5451, 0.0
        %v5519 = vmax.f32 %v5098, 0.0
        %v5520 = vmax.f32 %v5454, 0.0
        %v5521 = vmax.f32 %v5100, 0.0
        %v5522 = vmax.f32 %v5456, 0.0
        %v5523 = vmax.f32 %v5103, 0.0
        %v5524 = vmax.f32 %v5459, 0.0
        %v5525 = vmax.f32 %v5105, 0.0
        %v5526 = vmax.f32 %v5461, 0.0
        %v5527 = vadd.f32 %v5463, %v5465
        %v5528 = vadd.f32 %v5527, %v5467
        %v5529 = vadd.f32 %v5528, %v5469
        %v5530 = vadd.f32 %v5529, %v5471
        %v5531 = vadd.f32 %v5530, %v5473
        %v5532 = vadd.f32 %v5531, %v5475
        %v5533 = vadd.f32 %v5532, %v5477
        %v5534 = vadd.f32 %v5533, %v5479
        %v5535 = vadd.f32 %v5534, %v5481
        %v5536 = vadd.f32 %v5535, %v5483
        %v5537 = vadd.f32 %v5536, %v5485
        %v5538 = vadd.f32 %v5537, %v5487
        %v5539 = vadd.f32 %v5538, %v5489
        %v5540 = vadd.f32 %v5539, %v5491
        %v5541 = vadd.f32 %v5540, %v5493
        %v5542 = vadd.f32 %v5541, %v5495
        %v5543 = vadd.f32 %v5542, %v5497
        %v5544 = vadd.f32 %v5543, %v5499
        %v5545 = vadd.f32 %v5544, %v5501
        %v5546 = vadd.f32 %v5545, %v5503
        %v5547 = vadd.f32 %v5546, %v5505
        %v5548 = vadd.f32 %v5547, %v5507
        %v5549 = vadd.f32 %v5548, %v5509
        %v5550 = vadd.f32 %v5549, %v5511
        %v5551 = vadd.f32 %v5550, %v5513
        %v5552 = vadd.f32 %v5551, %v5515
        %v5553 = vadd.f32 %v5552, %v5517
        %v5554 = vadd.f32 %v5553, %v5519
        %v5555 = vadd.f32 %v5554, %v5521
        %v5556 = vadd.f32 %v5555, %v5523
        %v5557 = vadd.f32 %v5556, %v5525
        %v5558 = vrot.slane %v5557, 4
        %v5559 = vadd.f32 %v5557, %v5558
        %v5560 = vrot.slane %v5559, 2
        %v5561 = vadd.f32 %v5559, %v5560
        %v5562 = vrot.slane %v5561, 1
        %v5563 = vadd.f32 %v5561, %v5562
        %v5564 = vadd.f32 %v5464, %v5466
        %v5565 = vadd.f32 %v5564, %v5468
        %v5566 = vadd.f32 %v5565, %v5470
        %v5567 = vadd.f32 %v5566, %v5472
        %v5568 = vadd.f32 %v5567, %v5474
        %v5569 = vadd.f32 %v5568, %v5476
        %v5570 = vadd.f32 %v5569, %v5478
        %v5571 = vadd.f32 %v5570, %v5480
        %v5572 = vadd.f32 %v5571, %v5482
        %v5573 = vadd.f32 %v5572, %v5484
        %v5574 = vadd.f32 %v5573, %v5486
        %v5575 = vadd.f32 %v5574, %v5488
        %v5576 = vadd.f32 %v5575, %v5490
        %v5577 = vadd.f32 %v5576, %v5492
        %v5578 = vadd.f32 %v5577, %v5494
        %v5579 = vadd.f32 %v5578, %v5496
        %v5580 = vadd.f32 %v5579, %v5498
        %v5581 = vadd.f32 %v5580, %v5500
        %v5582 = vadd.f32 %v5581, %v5502
        %v5583 = vadd.f32 %v5582, %v5504
        %v5584 = vadd.f32 %v5583, %v5506
        %v5585 = vadd.f32 %v5584, %v5508
        %v5586 = vadd.f32 %v5585, %v5510
        %v5587 = vadd.f32 %v5586, %v5512
        %v5588 = vadd.f32 %v5587, %v5514
        %v5589 = vadd.f32 %v5588, %v5516
        %v5590 = vadd.f32 %v5589, %v5518
        %v5591 = vadd.f32 %v5590, %v5520
        %v5592 = vadd.f32 %v5591, %v5522
        %v5593 = vadd.f32 %v5592, %v5524
        %v5594 = vadd.f32 %v5593, %v5526
        %v5595 = vrot.slane %v5594, 4
        %v5596 = vadd.f32 %v5594, %v5595
        %v5597 = vrot.slane %v5596, 2
        %v5598 = vadd.f32 %v5596, %v5597
        %v5599 = vrot.slane %v5598, 1
        %v5600 = vadd.f32 %v5598, %v5599
        %v5601 = vld [vmem:[#allocation8 + $0x10] sm:$0xff]
        %v5602 = vld [vmem:[#allocation8 + $0x30] sm:$0xff]
        %v5603 = vld [vmem:[#allocation8 + $0x50] sm:$0xff]
        %v5604 = vld [vmem:[#allocation8 + $0x70] sm:$0xff]
        %v5605 = vld [vmem:[#allocation8 + $0x90] sm:$0xff]
        %v5606 = vld [vmem:[#allocation8 + $0xb0] sm:$0xff]
        %v5607 = vld [vmem:[#allocation8 + $0xd0] sm:$0xff]
        %v5608 = vld [vmem:[#allocation8 + $0xf0] sm:$0xff]
        %v5609 = vld [vmem:[#allocation8 + $0x110] sm:$0xff]
        %v5610 = vld [vmem:[#allocation8 + $0x130] sm:$0xff]
        %v5611 = vld [vmem:[#allocation8 + $0x150] sm:$0xff]
        %v5612 = vld [vmem:[#allocation8 + $0x170] sm:$0xff]
        %v5613 = vld [vmem:[#allocation8 + $0x190] sm:$0xff]
        %v5614 = vld [vmem:[#allocation8 + $0x1b0] sm:$0xff]
        %v5615 = vld [vmem:[#allocation8 + $0x1d0] sm:$0xff]
        %v5616 = vld [vmem:[#allocation8 + $0x1f0] sm:$0xff]
        %v5617 = vld [vmem:[#allocation8 + $0x210] sm:$0xff]
        %v5618 = vld [vmem:[#allocation8 + $0x230] sm:$0xff]
        %v5619 = vld [vmem:[#allocation8 + $0x250] sm:$0xff]
        %v5620 = vld [vmem:[#allocation8 + $0x270] sm:$0xff]
        %v5621 = vld [vmem:[#allocation8 + $0x290] sm:$0xff]
        %v5622 = vld [vmem:[#allocation8 + $0x2b0] sm:$0xff]
        %v5623 = vld [vmem:[#allocation8 + $0x2d0] sm:$0xff]
        %v5624 = vld [vmem:[#allocation8 + $0x2f0] sm:$0xff]
        %v5625 = vld [vmem:[#allocation8 + $0x310] sm:$0xff]
        %v5626 = vld [vmem:[#allocation8 + $0x330] sm:$0xff]
        %v5627 = vld [vmem:[#allocation8 + $0x350] sm:$0xff]
        %v5628 = vld [vmem:[#allocation8 + $0x370] sm:$0xff]
        %v5629 = vld [vmem:[#allocation8 + $0x390] sm:$0xff]
        %v5630 = vld [vmem:[#allocation8 + $0x3b0] sm:$0xff]
        %v5631 = vld [vmem:[#allocation8 + $0x3d0] sm:$0xff]
        %v5632 = vld [vmem:[#allocation8 + $0x3f0] sm:$0xff]
        %v5633 = vld [vmem:[#allocation8 + $0x410] sm:$0xff]
        %v5634 = vld [vmem:[#allocation8 + $0x430] sm:$0xff]
        %v5635 = vld [vmem:[#allocation8 + $0x450] sm:$0xff]
        %v5636 = vld [vmem:[#allocation8 + $0x470] sm:$0xff]
        %v5637 = vld [vmem:[#allocation8 + $0x490] sm:$0xff]
        %v5638 = vld [vmem:[#allocation8 + $0x4b0] sm:$0xff]
        %v5639 = vld [vmem:[#allocation8 + $0x4d0] sm:$0xff]
        %v5640 = vld [vmem:[#allocation8 + $0x4f0] sm:$0xff]
        %v5641 = vld [vmem:[#allocation8 + $0x510] sm:$0xff]
        %v5642 = vld [vmem:[#allocation8 + $0x530] sm:$0xff]
        %v5643 = vld [vmem:[#allocation8 + $0x550] sm:$0xff]
        %v5644 = vld [vmem:[#allocation8 + $0x570] sm:$0xff]
        %v5645 = vld [vmem:[#allocation8 + $0x590] sm:$0xff]
        %v5646 = vld [vmem:[#allocation8 + $0x5b0] sm:$0xff]
        %v5647 = vld [vmem:[#allocation8 + $0x5d0] sm:$0xff]
        %v5648 = vld [vmem:[#allocation8 + $0x5f0] sm:$0xff]
        %v5649 = vld [vmem:[#allocation8 + $0x610] sm:$0xff]
        %v5650 = vld [vmem:[#allocation8 + $0x630] sm:$0xff]
        %v5651 = vld [vmem:[#allocation8 + $0x650] sm:$0xff]
        %v5652 = vld [vmem:[#allocation8 + $0x670] sm:$0xff]
        %v5653 = vld [vmem:[#allocation8 + $0x690] sm:$0xff]
        %v5654 = vld [vmem:[#allocation8 + $0x6b0] sm:$0xff]
        %v5655 = vld [vmem:[#allocation8 + $0x6d0] sm:$0xff]
        %v5656 = vld [vmem:[#allocation8 + $0x6f0] sm:$0xff]
        %v5657 = vld [vmem:[#allocation8 + $0x710] sm:$0xff]
        %v5658 = vld [vmem:[#allocation8 + $0x730] sm:$0xff]
        %v5659 = vld [vmem:[#allocation8 + $0x750] sm:$0xff]
        %v5660 = vld [vmem:[#allocation8 + $0x770] sm:$0xff]
        %v5661 = vld [vmem:[#allocation8 + $0x790] sm:$0xff]
        %v5662 = vld [vmem:[#allocation8 + $0x7b0] sm:$0xff]
        %v5663 = vld [vmem:[#allocation8 + $0x7d0] sm:$0xff]
        %v5664 = vld [vmem:[#allocation8 + $0x7f0] sm:$0xff]
        %v5665 = vld [vmem:[#allocation10 + $0x4] sm:$0x3]
        %v5667 = vperm.slane %v5665, 0
        %v5668 = vperm.slane %v5665, 1
        %v5735 = vunpack.c.l.b16 %v5601
        %v5736 = vunpack.c.h.b16 %v5601
        %v5737 = vunpack.c.l.b16 %v5602
        %v5738 = vunpack.c.h.b16 %v5602
        %v5739 = vunpack.c.l.b16 %v5603
        %v5740 = vunpack.c.h.b16 %v5603
        %v5741 = vunpack.c.l.b16 %v5604
        %v5742 = vunpack.c.h.b16 %v5604
        %v5743 = vunpack.c.l.b16 %v5605
        %v5744 = vunpack.c.h.b16 %v5605
        %v5745 = vunpack.c.l.b16 %v5606
        %v5746 = vunpack.c.h.b16 %v5606
        %v5747 = vunpack.c.l.b16 %v5607
        %v5748 = vunpack.c.h.b16 %v5607
        %v5749 = vunpack.c.l.b16 %v5608
        %v5750 = vunpack.c.h.b16 %v5608
        %v5751 = vunpack.c.l.b16 %v5609
        %v5752 = vunpack.c.h.b16 %v5609
        %v5753 = vunpack.c.l.b16 %v5610
        %v5754 = vunpack.c.h.b16 %v5610
        %v5755 = vunpack.c.l.b16 %v5611
        %v5756 = vunpack.c.h.b16 %v5611
        %v5757 = vunpack.c.l.b16 %v5612
        %v5758 = vunpack.c.h.b16 %v5612
        %v5759 = vunpack.c.l.b16 %v5613
        %v5760 = vunpack.c.h.b16 %v5613
        %v5761 = vunpack.c.l.b16 %v5614
        %v5762 = vunpack.c.h.b16 %v5614
        %v5763 = vunpack.c.l.b16 %v5615
        %v5764 = vunpack.c.h.b16 %v5615
        %v5765 = vunpack.c.l.b16 %v5616
        %v5766 = vunpack.c.h.b16 %v5616
        %v5767 = vunpack.c.l.b16 %v5617
        %v5768 = vunpack.c.h.b16 %v5617
        %v5769 = vunpack.c.l.b16 %v5618
        %v5770 = vunpack.c.h.b16 %v5618
        %v5771 = vunpack.c.l.b16 %v5619
        %v5772 = vunpack.c.h.b16 %v5619
        %v5773 = vunpack.c.l.b16 %v5620
        %v5774 = vunpack.c.h.b16 %v5620
        %v5775 = vunpack.c.l.b16 %v5621
        %v5776 = vunpack.c.h.b16 %v5621
        %v5777 = vunpack.c.l.b16 %v5622
        %v5778 = vunpack.c.h.b16 %v5622
        %v5779 = vunpack.c.l.b16 %v5623
        %v5780 = vunpack.c.h.b16 %v5623
        %v5781 = vunpack.c.l.b16 %v5624
        %v5782 = vunpack.c.h.b16 %v5624
        %v5783 = vunpack.c.l.b16 %v5625
        %v5784 = vunpack.c.h.b16 %v5625
        %v5785 = vunpack.c.l.b16 %v5626
        %v5786 = vunpack.c.h.b16 %v5626
        %v5787 = vunpack.c.l.b16 %v5627
        %v5788 = vunpack.c.h.b16 %v5627
        %v5789 = vunpack.c.l.b16 %v5628
        %v5790 = vunpack.c.h.b16 %v5628
        %v5791 = vunpack.c.l.b16 %v5629
        %v5792 = vunpack.c.h.b16 %v5629
        %v5793 = vunpack.c.l.b16 %v5630
        %v5794 = vunpack.c.h.b16 %v5630
        %v5795 = vunpack.c.l.b16 %v5631
        %v5796 = vunpack.c.h.b16 %v5631
        %v5797 = vunpack.c.l.b16 %v5632
        %v5798 = vunpack.c.h.b16 %v5632
        %v5799 = vunpack.c.l.b16 %v5633
        %v5800 = vunpack.c.h.b16 %v5633
        %v5801 = vunpack.c.l.b16 %v5634
        %v5802 = vunpack.c.h.b16 %v5634
        %v5803 = vunpack.c.l.b16 %v5635
        %v5804 = vunpack.c.h.b16 %v5635
        %v5805 = vunpack.c.l.b16 %v5636
        %v5806 = vunpack.c.h.b16 %v5636
        %v5807 = vunpack.c.l.b16 %v5637
        %v5808 = vunpack.c.h.b16 %v5637
        %v5809 = vunpack.c.l.b16 %v5638
        %v5810 = vunpack.c.h.b16 %v5638
        %v5811 = vunpack.c.l.b16 %v5639
        %v5812 = vunpack.c.h.b16 %v5639
        %v5813 = vunpack.c.l.b16 %v5640
        %v5814 = vunpack.c.h.b16 %v5640
        %v5815 = vunpack.c.l.b16 %v5641
        %v5816 = vunpack.c.h.b16 %v5641
        %v5817 = vunpack.c.l.b16 %v5642
        %v5818 = vunpack.c.h.b16 %v5642
        %v5819 = vunpack.c.l.b16 %v5643
        %v5820 = vunpack.c.h.b16 %v5643
        %v5821 = vunpack.c.l.b16 %v5644
        %v5822 = vunpack.c.h.b16 %v5644
        %v5823 = vunpack.c.l.b16 %v5645
        %v5824 = vunpack.c.h.b16 %v5645
        %v5825 = vunpack.c.l.b16 %v5646
        %v5826 = vunpack.c.h.b16 %v5646
        %v5827 = vunpack.c.l.b16 %v5647
        %v5828 = vunpack.c.h.b16 %v5647
        %v5829 = vunpack.c.l.b16 %v5648
        %v5830 = vunpack.c.h.b16 %v5648
        %v5831 = vunpack.c.l.b16 %v5649
        %v5832 = vunpack.c.h.b16 %v5649
        %v5833 = vunpack.c.l.b16 %v5650
        %v5834 = vunpack.c.h.b16 %v5650
        %v5835 = vunpack.c.l.b16 %v5651
        %v5836 = vunpack.c.h.b16 %v5651
        %v5837 = vunpack.c.l.b16 %v5652
        %v5838 = vunpack.c.h.b16 %v5652
        %v5839 = vunpack.c.l.b16 %v5653
        %v5840 = vunpack.c.h.b16 %v5653
        %v5841 = vunpack.c.l.b16 %v5654
        %v5842 = vunpack.c.h.b16 %v5654
        %v5843 = vunpack.c.l.b16 %v5655
        %v5844 = vunpack.c.h.b16 %v5655
        %v5845 = vunpack.c.l.b16 %v5656
        %v5846 = vunpack.c.h.b16 %v5656
        %v5847 = vunpack.c.l.b16 %v5657
        %v5848 = vunpack.c.h.b16 %v5657
        %v5849 = vunpack.c.l.b16 %v5658
        %v5850 = vunpack.c.h.b16 %v5658
        %v5851 = vunpack.c.l.b16 %v5659
        %v5852 = vunpack.c.h.b16 %v5659
        %v5853 = vunpack.c.l.b16 %v5660
        %v5854 = vunpack.c.h.b16 %v5660
        %v5855 = vunpack.c.l.b16 %v5661
        %v5856 = vunpack.c.h.b16 %v5661
        %v5857 = vunpack.c.l.b16 %v5662
        %v5858 = vunpack.c.h.b16 %v5662
        %v5859 = vunpack.c.l.b16 %v5663
        %v5860 = vunpack.c.h.b16 %v5663
        %v5861 = vunpack.c.l.b16 %v5664
        %v5862 = vunpack.c.h.b16 %v5664
        %v5863 = vpack.c.b16 %v5737, %v5735
        %v5864 = vpack.c.b16 %v5738, %v5736
        %v5865 = vpack.c.b16 %v5741, %v5739
        %v5866 = vpack.c.b16 %v5742, %v5740
        %v5867 = vpack.c.b16 %v5745, %v5743
        %v5868 = vpack.c.b16 %v5746, %v5744
        %v5869 = vpack.c.b16 %v5749, %v5747
        %v5870 = vpack.c.b16 %v5750, %v5748
        %v5871 = vpack.c.b16 %v5753, %v5751
        %v5872 = vpack.c.b16 %v5754, %v5752
        %v5873 = vpack.c.b16 %v5757, %v5755
        %v5874 = vpack.c.b16 %v5758, %v5756
        %v5875 = vpack.c.b16 %v5761, %v5759
        %v5876 = vpack.c.b16 %v5762, %v5760
        %v5877 = vpack.c.b16 %v5765, %v5763
        %v5878 = vpack.c.b16 %v5766, %v5764
        %v5879 = vpack.c.b16 %v5769, %v5767
        %v5880 = vpack.c.b16 %v5770, %v5768
        %v5881 = vpack.c.b16 %v5773, %v5771
        %v5882 = vpack.c.b16 %v5774, %v5772
        %v5883 = vpack.c.b16 %v5777, %v5775
        %v5884 = vpack.c.b16 %v5778, %v5776
        %v5885 = vpack.c.b16 %v5781, %v5779
        %v5886 = vpack.c.b16 %v5782, %v5780
        %v5887 = vpack.c.b16 %v5785, %v5783
        %v5888 = vpack.c.b16 %v5786, %v5784
        %v5889 = vpack.c.b16 %v5789, %v5787
        %v5890 = vpack.c.b16 %v5790, %v5788
        %v5891 = vpack.c.b16 %v5793, %v5791
        %v5892 = vpack.c.b16 %v5794, %v5792
        %v5893 = vpack.c.b16 %v5797, %v5795
        %v5894 = vpack.c.b16 %v5798, %v5796
        %v5895 = vpack.c.b16 %v5801, %v5799
        %v5896 = vpack.c.b16 %v5802, %v5800
        %v5897 = vpack.c.b16 %v5805, %v5803
        %v5898 = vpack.c.b16 %v5806, %v5804
        %v5899 = vpack.c.b16 %v5809, %v5807
        %v5900 = vpack.c.b16 %v5810, %v5808
        %v5901 = vpack.c.b16 %v5813, %v5811
        %v5902 = vpack.c.b16 %v5814, %v5812
        %v5903 = vpack.c.b16 %v5817, %v5815
        %v5904 = vpack.c.b16 %v5818, %v5816
        %v5905 = vpack.c.b16 %v5821, %v5819
        %v5906 = vpack.c.b16 %v5822, %v5820
        %v5907 = vpack.c.b16 %v5825, %v5823
        %v5908 = vpack.c.b16 %v5826, %v5824
        %v5909 = vpack.c.b16 %v5829, %v5827
        %v5910 = vpack.c.b16 %v5830, %v5828
        %v5911 = vpack.c.b16 %v5833, %v5831
        %v5912 = vpack.c.b16 %v5834, %v5832
        %v5913 = vpack.c.b16 %v5837, %v5835
        %v5914 = vpack.c.b16 %v5838, %v5836
        %v5915 = vpack.c.b16 %v5841, %v5839
        %v5916 = vpack.c.b16 %v5842, %v5840
        %v5917 = vpack.c.b16 %v5845, %v5843
        %v5918 = vpack.c.b16 %v5846, %v5844
        %v5919 = vpack.c.b16 %v5849, %v5847
        %v5920 = vpack.c.b16 %v5850, %v5848
        %v5921 = vpack.c.b16 %v5853, %v5851
        %v5922 = vpack.c.b16 %v5854, %v5852
        %v5923 = vpack.c.b16 %v5857, %v5855
        %v5924 = vpack.c.b16 %v5858, %v5856
        %v5925 = vpack.c.b16 %v5861, %v5859
        %v5926 = vpack.c.b16 %v5862, %v5860
        %5991 = vmatpush.bf16.msra.mxu0 %v5877
        %5992 = vmatpush.bf16.msra.mxu0 %v5875
        %5993 = vmatpush.bf16.msra.mxu0 %v5873
        %5994 = vmatpush.bf16.msra.mxu0 %v5871
        %5995 = vmatpush.bf16.msra.mxu0 %v5869
        %5996 = vmatpush.bf16.msra.mxu0 %v5867
        %5997 = vmatpush.bf16.msra.mxu0 %v5865
        %5998 = vmatpush.bf16.msra.mxu0 %v5863
        %5999 = vmatmul.bf16.gmra.mxu0 %v3057
        %v6000 = vpop.f32.mrf.mxu0
        %v6001 = vadd.f32 %v5667, %v6000
        %v6002 = vpop.f32.mrf.mxu0
        %v6003 = vadd.f32 %v5667, %v6002
        %6004 = vmatmul.bf16.gmra.mxu0 %v3061
        %v6005 = vpop.f32.mrf.mxu0
        %v6006 = vadd.f32 %v5667, %v6005
        %v6007 = vpop.f32.mrf.mxu0
        %v6008 = vadd.f32 %v5667, %v6007
        %6009 = vmatmul.bf16.gmra.mxu0 %v3065
        %v6010 = vpop.f32.mrf.mxu0
        %v6011 = vadd.f32 %v5667, %v6010
        %v6012 = vpop.f32.mrf.mxu0
        %v6013 = vadd.f32 %v5667, %v6012
        %6014 = vmatmul.bf16.gmra.mxu0 %v3069
        %v6015 = vpop.f32.mrf.mxu0
        %v6016 = vadd.f32 %v5667, %v6015
        %v6017 = vpop.f32.mrf.mxu0
        %v6018 = vadd.f32 %v5667, %v6017
        %6019 = vmatmul.bf16.gmra.mxu0 %v3073
        %v6020 = vpop.f32.mrf.mxu0
        %v6021 = vadd.f32 %v5667, %v6020
        %v6022 = vpop.f32.mrf.mxu0
        %v6023 = vadd.f32 %v5667, %v6022
        %6024 = vmatmul.bf16.gmra.mxu0 %v3077
        %v6025 = vpop.f32.mrf.mxu0
        %v6026 = vadd.f32 %v5667, %v6025
        %v6027 = vpop.f32.mrf.mxu0
        %v6028 = vadd.f32 %v5667, %v6027
        %6029 = vmatmul.bf16.gmra.mxu0 %v3081
        %v6030 = vpop.f32.mrf.mxu0
        %v6031 = vadd.f32 %v5667, %v6030
        %v6032 = vpop.f32.mrf.mxu0
        %v6033 = vadd.f32 %v5667, %v6032
        %6034 = vmatmul.bf16.gmra.mxu0 %v3085
        %v6035 = vpop.f32.mrf.mxu0
        %v6036 = vadd.f32 %v5667, %v6035
        %v6037 = vpop.f32.mrf.mxu0
        %v6038 = vadd.f32 %v5667, %v6037
        %6039 = vmatmul.bf16.gmra.mxu0 %v3089
        %v6040 = vpop.f32.mrf.mxu0
        %v6041 = vadd.f32 %v5667, %v6040
        %v6042 = vpop.f32.mrf.mxu0
        %v6043 = vadd.f32 %v5667, %v6042
        %6044 = vmatmul.bf16.gmra.mxu0 %v3093
        %v6045 = vpop.f32.mrf.mxu0
        %v6046 = vadd.f32 %v5667, %v6045
        %v6047 = vpop.f32.mrf.mxu0
        %v6048 = vadd.f32 %v5667, %v6047
        %6049 = vmatmul.bf16.gmra.mxu0 %v3097
        %v6050 = vpop.f32.mrf.mxu0
        %v6051 = vadd.f32 %v5667, %v6050
        %v6052 = vpop.f32.mrf.mxu0
        %v6053 = vadd.f32 %v5667, %v6052
        %6054 = vmatmul.bf16.gmra.mxu0 %v3101
        %v6055 = vpop.f32.mrf.mxu0
        %v6056 = vadd.f32 %v5667, %v6055
        %v6057 = vpop.f32.mrf.mxu0
        %v6058 = vadd.f32 %v5667, %v6057
        %6059 = vmatmul.bf16.gmra.mxu0 %v3105
        %v6060 = vpop.f32.mrf.mxu0
        %v6061 = vadd.f32 %v5667, %v6060
        %v6062 = vpop.f32.mrf.mxu0
        %v6063 = vadd.f32 %v5667, %v6062
        %6064 = vmatmul.bf16.gmra.mxu0 %v3109
        %v6065 = vpop.f32.mrf.mxu0
        %v6066 = vadd.f32 %v5667, %v6065
        %v6067 = vpop.f32.mrf.mxu0
        %v6068 = vadd.f32 %v5667, %v6067
        %6069 = vmatmul.bf16.gmra.mxu0 %v3113
        %v6070 = vpop.f32.mrf.mxu0
        %v6071 = vadd.f32 %v5667, %v6070
        %v6072 = vpop.f32.mrf.mxu0
        %v6073 = vadd.f32 %v5667, %v6072
        %6074 = vmatmul.bf16.gmra.mxu0 %v3117
        %v6075 = vpop.f32.mrf.mxu0
        %v6076 = vadd.f32 %v5667, %v6075
        %v6077 = vpop.f32.mrf.mxu0
        %v6078 = vadd.f32 %v5667, %v6077
        %6079 = vdwg.mxu0
        %6080 = vmatpush.bf16.msra.mxu0 %v5893
        %6081 = vmatpush.bf16.msra.mxu0 %v5891
        %6082 = vmatpush.bf16.msra.mxu0 %v5889
        %6083 = vmatpush.bf16.msra.mxu0 %v5887
        %6084 = vmatpush.bf16.msra.mxu0 %v5885
        %6085 = vmatpush.bf16.msra.mxu0 %v5883
        %6086 = vmatpush.bf16.msra.mxu0 %v5881
        %6087 = vmatpush.bf16.msra.mxu0 %v5879
        %6088 = vmatmul.bf16.gmra.mxu0 %v3058
        %v6089 = vpop.f32.mrf.mxu0
        %v6090 = vadd.f32 %v6001, %v6089
        %v6091 = vpop.f32.mrf.mxu0
        %v6092 = vadd.f32 %v6003, %v6091
        %6093 = vmatmul.bf16.gmra.mxu0 %v3062
        %v6094 = vpop.f32.mrf.mxu0
        %v6095 = vadd.f32 %v6006, %v6094
        %v6096 = vpop.f32.mrf.mxu0
        %v6097 = vadd.f32 %v6008, %v6096
        %6098 = vmatmul.bf16.gmra.mxu0 %v3066
        %v6099 = vpop.f32.mrf.mxu0
        %v6100 = vadd.f32 %v6011, %v6099
        %v6101 = vpop.f32.mrf.mxu0
        %v6102 = vadd.f32 %v6013, %v6101
        %6103 = vmatmul.bf16.gmra.mxu0 %v3070
        %v6104 = vpop.f32.mrf.mxu0
        %v6105 = vadd.f32 %v6016, %v6104
        %v6106 = vpop.f32.mrf.mxu0
        %v6107 = vadd.f32 %v6018, %v6106
        %6108 = vmatmul.bf16.gmra.mxu0 %v3074
        %v6109 = vpop.f32.mrf.mxu0
        %v6110 = vadd.f32 %v6021, %v6109
        %v6111 = vpop.f32.mrf.mxu0
        %v6112 = vadd.f32 %v6023, %v6111
        %6113 = vmatmul.bf16.gmra.mxu0 %v3078
        %v6114 = vpop.f32.mrf.mxu0
        %v6115 = vadd.f32 %v6026, %v6114
        %v6116 = vpop.f32.mrf.mxu0
        %v6117 = vadd.f32 %v6028, %v6116
        %6118 = vmatmul.bf16.gmra.mxu0 %v3082
        %v6119 = vpop.f32.mrf.mxu0
        %v6120 = vadd.f32 %v6031, %v6119
        %v6121 = vpop.f32.mrf.mxu0
        %v6122 = vadd.f32 %v6033, %v6121
        %6123 = vmatmul.bf16.gmra.mxu0 %v3086
        %v6124 = vpop.f32.mrf.mxu0
        %v6125 = vadd.f32 %v6036, %v6124
        %v6126 = vpop.f32.mrf.mxu0
        %v6127 = vadd.f32 %v6038, %v6126
        %6128 = vmatmul.bf16.gmra.mxu0 %v3090
        %v6129 = vpop.f32.mrf.mxu0
        %v6130 = vadd.f32 %v6041, %v6129
        %v6131 = vpop.f32.mrf.mxu0
        %v6132 = vadd.f32 %v6043, %v6131
        %6133 = vmatmul.bf16.gmra.mxu0 %v3094
        %v6134 = vpop.f32.mrf.mxu0
        %v6135 = vadd.f32 %v6046, %v6134
        %v6136 = vpop.f32.mrf.mxu0
        %v6137 = vadd.f32 %v6048, %v6136
        %6138 = vmatmul.bf16.gmra.mxu0 %v3098
        %v6139 = vpop.f32.mrf.mxu0
        %v6140 = vadd.f32 %v6051, %v6139
        %v6141 = vpop.f32.mrf.mxu0
        %v6142 = vadd.f32 %v6053, %v6141
        %6143 = vmatmul.bf16.gmra.mxu0 %v3102
        %v6144 = vpop.f32.mrf.mxu0
        %v6145 = vadd.f32 %v6056, %v6144
        %v6146 = vpop.f32.mrf.mxu0
        %v6147 = vadd.f32 %v6058, %v6146
        %6148 = vmatmul.bf16.gmra.mxu0 %v3106
        %v6149 = vpop.f32.mrf.mxu0
        %v6150 = vadd.f32 %v6061, %v6149
        %v6151 = vpop.f32.mrf.mxu0
        %v6152 = vadd.f32 %v6063, %v6151
        %6153 = vmatmul.bf16.gmra.mxu0 %v3110
        %v6154 = vpop.f32.mrf.mxu0
        %v6155 = vadd.f32 %v6066, %v6154
        %v6156 = vpop.f32.mrf.mxu0
        %v6157 = vadd.f32 %v6068, %v6156
        %6158 = vmatmul.bf16.gmra.mxu0 %v3114
        %v6159 = vpop.f32.mrf.mxu0
        %v6160 = vadd.f32 %v6071, %v6159
        %v6161 = vpop.f32.mrf.mxu0
        %v6162 = vadd.f32 %v6073, %v6161
        %6163 = vmatmul.bf16.gmra.mxu0 %v3118
        %v6164 = vpop.f32.mrf.mxu0
        %v6165 = vadd.f32 %v6076, %v6164
        %v6166 = vpop.f32.mrf.mxu0
        %v6167 = vadd.f32 %v6078, %v6166
        %6168 = vdwg.mxu0
        %6169 = vmatpush.bf16.msra.mxu0 %v5909
        %6170 = vmatpush.bf16.msra.mxu0 %v5907
        %6171 = vmatpush.bf16.msra.mxu0 %v5905
        %6172 = vmatpush.bf16.msra.mxu0 %v5903
        %6173 = vmatpush.bf16.msra.mxu0 %v5901
        %6174 = vmatpush.bf16.msra.mxu0 %v5899
        %6175 = vmatpush.bf16.msra.mxu0 %v5897
        %6176 = vmatpush.bf16.msra.mxu0 %v5895
        %6177 = vmatmul.bf16.gmra.mxu0 %v3059
        %v6178 = vpop.f32.mrf.mxu0
        %v6179 = vadd.f32 %v6090, %v6178
        %v6180 = vpop.f32.mrf.mxu0
        %v6181 = vadd.f32 %v6092, %v6180
        %6182 = vmatmul.bf16.gmra.mxu0 %v3063
        %v6183 = vpop.f32.mrf.mxu0
        %v6184 = vadd.f32 %v6095, %v6183
        %v6185 = vpop.f32.mrf.mxu0
        %v6186 = vadd.f32 %v6097, %v6185
        %6187 = vmatmul.bf16.gmra.mxu0 %v3067
        %v6188 = vpop.f32.mrf.mxu0
        %v6189 = vadd.f32 %v6100, %v6188
        %v6190 = vpop.f32.mrf.mxu0
        %v6191 = vadd.f32 %v6102, %v6190
        %6192 = vmatmul.bf16.gmra.mxu0 %v3071
        %v6193 = vpop.f32.mrf.mxu0
        %v6194 = vadd.f32 %v6105, %v6193
        %v6195 = vpop.f32.mrf.mxu0
        %v6196 = vadd.f32 %v6107, %v6195
        %6197 = vmatmul.bf16.gmra.mxu0 %v3075
        %v6198 = vpop.f32.mrf.mxu0
        %v6199 = vadd.f32 %v6110, %v6198
        %v6200 = vpop.f32.mrf.mxu0
        %v6201 = vadd.f32 %v6112, %v6200
        %6202 = vmatmul.bf16.gmra.mxu0 %v3079
        %v6203 = vpop.f32.mrf.mxu0
        %v6204 = vadd.f32 %v6115, %v6203
        %v6205 = vpop.f32.mrf.mxu0
        %v6206 = vadd.f32 %v6117, %v6205
        %6207 = vmatmul.bf16.gmra.mxu0 %v3083
        %v6208 = vpop.f32.mrf.mxu0
        %v6209 = vadd.f32 %v6120, %v6208
        %v6210 = vpop.f32.mrf.mxu0
        %v6211 = vadd.f32 %v6122, %v6210
        %6212 = vmatmul.bf16.gmra.mxu0 %v3087
        %v6213 = vpop.f32.mrf.mxu0
        %v6214 = vadd.f32 %v6125, %v6213
        %v6215 = vpop.f32.mrf.mxu0
        %v6216 = vadd.f32 %v6127, %v6215
        %6217 = vmatmul.bf16.gmra.mxu0 %v3091
        %v6218 = vpop.f32.mrf.mxu0
        %v6219 = vadd.f32 %v6130, %v6218
        %v6220 = vpop.f32.mrf.mxu0
        %v6221 = vadd.f32 %v6132, %v6220
        %6222 = vmatmul.bf16.gmra.mxu0 %v3095
        %v6223 = vpop.f32.mrf.mxu0
        %v6224 = vadd.f32 %v6135, %v6223
        %v6225 = vpop.f32.mrf.mxu0
        %v6226 = vadd.f32 %v6137, %v6225
        %6227 = vmatmul.bf16.gmra.mxu0 %v3099
        %v6228 = vpop.f32.mrf.mxu0
        %v6229 = vadd.f32 %v6140, %v6228
        %v6230 = vpop.f32.mrf.mxu0
        %v6231 = vadd.f32 %v6142, %v6230
        %6232 = vmatmul.bf16.gmra.mxu0 %v3103
        %v6233 = vpop.f32.mrf.mxu0
        %v6234 = vadd.f32 %v6145, %v6233
        %v6235 = vpop.f32.mrf.mxu0
        %v6236 = vadd.f32 %v6147, %v6235
        %6237 = vmatmul.bf16.gmra.mxu0 %v3107
        %v6238 = vpop.f32.mrf.mxu0
        %v6239 = vadd.f32 %v6150, %v6238
        %v6240 = vpop.f32.mrf.mxu0
        %v6241 = vadd.f32 %v6152, %v6240
        %6242 = vmatmul.bf16.gmra.mxu0 %v3111
        %v6243 = vpop.f32.mrf.mxu0
        %v6244 = vadd.f32 %v6155, %v6243
        %v6245 = vpop.f32.mrf.mxu0
        %v6246 = vadd.f32 %v6157, %v6245
        %6247 = vmatmul.bf16.gmra.mxu0 %v3115
        %v6248 = vpop.f32.mrf.mxu0
        %v6249 = vadd.f32 %v6160, %v6248
        %v6250 = vpop.f32.mrf.mxu0
        %v6251 = vadd.f32 %v6162, %v6250
        %6252 = vmatmul.bf16.gmra.mxu0 %v3119
        %v6253 = vpop.f32.mrf.mxu0
        %v6254 = vadd.f32 %v6165, %v6253
        %v6255 = vpop.f32.mrf.mxu0
        %v6256 = vadd.f32 %v6167, %v6255
        %6257 = vdwg.mxu0
        %6258 = vmatpush.bf16.msra.mxu0 %v5925
        %6259 = vmatpush.bf16.msra.mxu0 %v5923
        %6260 = vmatpush.bf16.msra.mxu0 %v5921
        %6261 = vmatpush.bf16.msra.mxu0 %v5919
        %6262 = vmatpush.bf16.msra.mxu0 %v5917
        %6263 = vmatpush.bf16.msra.mxu0 %v5915
        %6264 = vmatpush.bf16.msra.mxu0 %v5913
        %6265 = vmatpush.bf16.msra.mxu0 %v5911
        %6266 = vmatmul.bf16.gmra.mxu0 %v3060
        %v6267 = vpop.f32.mrf.mxu0
        %v6268 = vadd.f32 %v6179, %v6267
        %v6269 = vpop.f32.mrf.mxu0
        %v6270 = vadd.f32 %v6181, %v6269
        %6271 = vmatmul.bf16.gmra.mxu0 %v3064
        %v6272 = vpop.f32.mrf.mxu0
        %v6273 = vadd.f32 %v6184, %v6272
        %v6274 = vpop.f32.mrf.mxu0
        %v6275 = vadd.f32 %v6186, %v6274
        %6276 = vmatmul.bf16.gmra.mxu0 %v3068
        %v6277 = vpop.f32.mrf.mxu0
        %v6278 = vadd.f32 %v6189, %v6277
        %v6279 = vpop.f32.mrf.mxu0
        %v6280 = vadd.f32 %v6191, %v6279
        %6281 = vmatmul.bf16.gmra.mxu0 %v3072
        %v6282 = vpop.f32.mrf.mxu0
        %v6283 = vadd.f32 %v6194, %v6282
        %v6284 = vpop.f32.mrf.mxu0
        %v6285 = vadd.f32 %v6196, %v6284
        %6286 = vmatmul.bf16.gmra.mxu0 %v3076
        %v6287 = vpop.f32.mrf.mxu0
        %v6288 = vadd.f32 %v6199, %v6287
        %v6289 = vpop.f32.mrf.mxu0
        %v6290 = vadd.f32 %v6201, %v6289
        %6291 = vmatmul.bf16.gmra.mxu0 %v3080
        %v6292 = vpop.f32.mrf.mxu0
        %v6293 = vadd.f32 %v6204, %v6292
        %v6294 = vpop.f32.mrf.mxu0
        %v6295 = vadd.f32 %v6206, %v6294
        %6296 = vmatmul.bf16.gmra.mxu0 %v3084
        %v6297 = vpop.f32.mrf.mxu0
        %v6298 = vadd.f32 %v6209, %v6297
        %v6299 = vpop.f32.mrf.mxu0
        %v6300 = vadd.f32 %v6211, %v6299
        %6301 = vmatmul.bf16.gmra.mxu0 %v3088
        %v6302 = vpop.f32.mrf.mxu0
        %v6303 = vadd.f32 %v6214, %v6302
        %v6304 = vpop.f32.mrf.mxu0
        %v6305 = vadd.f32 %v6216, %v6304
        %6306 = vmatmul.bf16.gmra.mxu0 %v3092
        %v6307 = vpop.f32.mrf.mxu0
        %v6308 = vadd.f32 %v6219, %v6307
        %v6309 = vpop.f32.mrf.mxu0
        %v6310 = vadd.f32 %v6221, %v6309
        %6311 = vmatmul.bf16.gmra.mxu0 %v3096
        %v6312 = vpop.f32.mrf.mxu0
        %v6313 = vadd.f32 %v6224, %v6312
        %v6314 = vpop.f32.mrf.mxu0
        %v6315 = vadd.f32 %v6226, %v6314
        %6316 = vmatmul.bf16.gmra.mxu0 %v3100
        %v6317 = vpop.f32.mrf.mxu0
        %v6318 = vadd.f32 %v6229, %v6317
        %v6319 = vpop.f32.mrf.mxu0
        %v6320 = vadd.f32 %v6231, %v6319
        %6321 = vmatmul.bf16.gmra.mxu0 %v3104
        %v6322 = vpop.f32.mrf.mxu0
        %v6323 = vadd.f32 %v6234, %v6322
        %v6324 = vpop.f32.mrf.mxu0
        %v6325 = vadd.f32 %v6236, %v6324
        %6326 = vmatmul.bf16.gmra.mxu0 %v3108
        %v6327 = vpop.f32.mrf.mxu0
        %v6328 = vadd.f32 %v6239, %v6327
        %v6329 = vpop.f32.mrf.mxu0
        %v6330 = vadd.f32 %v6241, %v6329
        %6331 = vmatmul.bf16.gmra.mxu0 %v3112
        %v6332 = vpop.f32.mrf.mxu0
        %v6333 = vadd.f32 %v6244, %v6332
        %v6334 = vpop.f32.mrf.mxu0
        %v6335 = vadd.f32 %v6246, %v6334
        %6336 = vmatmul.bf16.gmra.mxu0 %v3116
        %v6337 = vpop.f32.mrf.mxu0
        %v6338 = vadd.f32 %v6249, %v6337
        %v6339 = vpop.f32.mrf.mxu0
        %v6340 = vadd.f32 %v6251, %v6339
        %6341 = vmatmul.bf16.gmra.mxu0 %v3120
        %v6342 = vpop.f32.mrf.mxu0
        %v6343 = vadd.f32 %v6254, %v6342
        %v6344 = vpop.f32.mrf.mxu0
        %v6345 = vadd.f32 %v6256, %v6344
        %6346 = vdwg.mxu0
        %6347 = vmatpush.bf16.msra.mxu0 %v5878
        %6348 = vmatpush.bf16.msra.mxu0 %v5876
        %6349 = vmatpush.bf16.msra.mxu0 %v5874
        %6350 = vmatpush.bf16.msra.mxu0 %v5872
        %6351 = vmatpush.bf16.msra.mxu0 %v5870
        %6352 = vmatpush.bf16.msra.mxu0 %v5868
        %6353 = vmatpush.bf16.msra.mxu0 %v5866
        %6354 = vmatpush.bf16.msra.mxu0 %v5864
        %6355 = vmatmul.bf16.gmra.mxu0 %v3057
        %v6356 = vpop.f32.mrf.mxu0
        %v6357 = vadd.f32 %v5668, %v6356
        %v6358 = vpop.f32.mrf.mxu0
        %v6359 = vadd.f32 %v5668, %v6358
        %6360 = vmatmul.bf16.gmra.mxu0 %v3061
        %v6361 = vpop.f32.mrf.mxu0
        %v6362 = vadd.f32 %v5668, %v6361
        %v6363 = vpop.f32.mrf.mxu0
        %v6364 = vadd.f32 %v5668, %v6363
        %6365 = vmatmul.bf16.gmra.mxu0 %v3065
        %v6366 = vpop.f32.mrf.mxu0
        %v6367 = vadd.f32 %v5668, %v6366
        %v6368 = vpop.f32.mrf.mxu0
        %v6369 = vadd.f32 %v5668, %v6368
        %6370 = vmatmul.bf16.gmra.mxu0 %v3069
        %v6371 = vpop.f32.mrf.mxu0
        %v6372 = vadd.f32 %v5668, %v6371
        %v6373 = vpop.f32.mrf.mxu0
        %v6374 = vadd.f32 %v5668, %v6373
        %6375 = vmatmul.bf16.gmra.mxu0 %v3073
        %v6376 = vpop.f32.mrf.mxu0
        %v6377 = vadd.f32 %v5668, %v6376
        %v6378 = vpop.f32.mrf.mxu0
        %v6379 = vadd.f32 %v5668, %v6378
        %6380 = vmatmul.bf16.gmra.mxu0 %v3077
        %v6381 = vpop.f32.mrf.mxu0
        %v6382 = vadd.f32 %v5668, %v6381
        %v6383 = vpop.f32.mrf.mxu0
        %v6384 = vadd.f32 %v5668, %v6383
        %6385 = vmatmul.bf16.gmra.mxu0 %v3081
        %v6386 = vpop.f32.mrf.mxu0
        %v6387 = vadd.f32 %v5668, %v6386
        %v6388 = vpop.f32.mrf.mxu0
        %v6389 = vadd.f32 %v5668, %v6388
        %6390 = vmatmul.bf16.gmra.mxu0 %v3085
        %v6391 = vpop.f32.mrf.mxu0
        %v6392 = vadd.f32 %v5668, %v6391
        %v6393 = vpop.f32.mrf.mxu0
        %v6394 = vadd.f32 %v5668, %v6393
        %6395 = vmatmul.bf16.gmra.mxu0 %v3089
        %v6396 = vpop.f32.mrf.mxu0
        %v6397 = vadd.f32 %v5668, %v6396
        %v6398 = vpop.f32.mrf.mxu0
        %v6399 = vadd.f32 %v5668, %v6398
        %6400 = vmatmul.bf16.gmra.mxu0 %v3093
        %v6401 = vpop.f32.mrf.mxu0
        %v6402 = vadd.f32 %v5668, %v6401
        %v6403 = vpop.f32.mrf.mxu0
        %v6404 = vadd.f32 %v5668, %v6403
        %6405 = vmatmul.bf16.gmra.mxu0 %v3097
        %v6406 = vpop.f32.mrf.mxu0
        %v6407 = vadd.f32 %v5668, %v6406
        %v6408 = vpop.f32.mrf.mxu0
        %v6409 = vadd.f32 %v5668, %v6408
        %6410 = vmatmul.bf16.gmra.mxu0 %v3101
        %v6411 = vpop.f32.mrf.mxu0
        %v6412 = vadd.f32 %v5668, %v6411
        %v6413 = vpop.f32.mrf.mxu0
        %v6414 = vadd.f32 %v5668, %v6413
        %6415 = vmatmul.bf16.gmra.mxu0 %v3105
        %v6416 = vpop.f32.mrf.mxu0
        %v6417 = vadd.f32 %v5668, %v6416
        %v6418 = vpop.f32.mrf.mxu0
        %v6419 = vadd.f32 %v5668, %v6418
        %6420 = vmatmul.bf16.gmra.mxu0 %v3109
        %v6421 = vpop.f32.mrf.mxu0
        %v6422 = vadd.f32 %v5668, %v6421
        %v6423 = vpop.f32.mrf.mxu0
        %v6424 = vadd.f32 %v5668, %v6423
        %6425 = vmatmul.bf16.gmra.mxu0 %v3113
        %v6426 = vpop.f32.mrf.mxu0
        %v6427 = vadd.f32 %v5668, %v6426
        %v6428 = vpop.f32.mrf.mxu0
        %v6429 = vadd.f32 %v5668, %v6428
        %6430 = vmatmul.bf16.gmra.mxu0 %v3117
        %v6431 = vpop.f32.mrf.mxu0
        %v6432 = vadd.f32 %v5668, %v6431
        %v6433 = vpop.f32.mrf.mxu0
        %v6434 = vadd.f32 %v5668, %v6433
        %6435 = vdwg.mxu0
        %6436 = vmatpush.bf16.msra.mxu0 %v5894
        %6437 = vmatpush.bf16.msra.mxu0 %v5892
        %6438 = vmatpush.bf16.msra.mxu0 %v5890
        %6439 = vmatpush.bf16.msra.mxu0 %v5888
        %6440 = vmatpush.bf16.msra.mxu0 %v5886
        %6441 = vmatpush.bf16.msra.mxu0 %v5884
        %6442 = vmatpush.bf16.msra.mxu0 %v5882
        %6443 = vmatpush.bf16.msra.mxu0 %v5880
        %6444 = vmatmul.bf16.gmra.mxu0 %v3058
        %v6445 = vpop.f32.mrf.mxu0
        %v6446 = vadd.f32 %v6357, %v6445
        %v6447 = vpop.f32.mrf.mxu0
        %v6448 = vadd.f32 %v6359, %v6447
        %6449 = vmatmul.bf16.gmra.mxu0 %v3062
        %v6450 = vpop.f32.mrf.mxu0
        %v6451 = vadd.f32 %v6362, %v6450
        %v6452 = vpop.f32.mrf.mxu0
        %v6453 = vadd.f32 %v6364, %v6452
        %6454 = vmatmul.bf16.gmra.mxu0 %v3066
        %v6455 = vpop.f32.mrf.mxu0
        %v6456 = vadd.f32 %v6367, %v6455
        %v6457 = vpop.f32.mrf.mxu0
        %v6458 = vadd.f32 %v6369, %v6457
        %6459 = vmatmul.bf16.gmra.mxu0 %v3070
        %v6460 = vpop.f32.mrf.mxu0
        %v6461 = vadd.f32 %v6372, %v6460
        %v6462 = vpop.f32.mrf.mxu0
        %v6463 = vadd.f32 %v6374, %v6462
        %6464 = vmatmul.bf16.gmra.mxu0 %v3074
        %v6465 = vpop.f32.mrf.mxu0
        %v6466 = vadd.f32 %v6377, %v6465
        %v6467 = vpop.f32.mrf.mxu0
        %v6468 = vadd.f32 %v6379, %v6467
        %6469 = vmatmul.bf16.gmra.mxu0 %v3078
        %v6470 = vpop.f32.mrf.mxu0
        %v6471 = vadd.f32 %v6382, %v6470
        %v6472 = vpop.f32.mrf.mxu0
        %v6473 = vadd.f32 %v6384, %v6472
        %6474 = vmatmul.bf16.gmra.mxu0 %v3082
        %v6475 = vpop.f32.mrf.mxu0
        %v6476 = vadd.f32 %v6387, %v6475
        %v6477 = vpop.f32.mrf.mxu0
        %v6478 = vadd.f32 %v6389, %v6477
        %6479 = vmatmul.bf16.gmra.mxu0 %v3086
        %v6480 = vpop.f32.mrf.mxu0
        %v6481 = vadd.f32 %v6392, %v6480
        %v6482 = vpop.f32.mrf.mxu0
        %v6483 = vadd.f32 %v6394, %v6482
        %6484 = vmatmul.bf16.gmra.mxu0 %v3090
        %v6485 = vpop.f32.mrf.mxu0
        %v6486 = vadd.f32 %v6397, %v6485
        %v6487 = vpop.f32.mrf.mxu0
        %v6488 = vadd.f32 %v6399, %v6487
        %6489 = vmatmul.bf16.gmra.mxu0 %v3094
        %v6490 = vpop.f32.mrf.mxu0
        %v6491 = vadd.f32 %v6402, %v6490
        %v6492 = vpop.f32.mrf.mxu0
        %v6493 = vadd.f32 %v6404, %v6492
        %6494 = vmatmul.bf16.gmra.mxu0 %v3098
        %v6495 = vpop.f32.mrf.mxu0
        %v6496 = vadd.f32 %v6407, %v6495
        %v6497 = vpop.f32.mrf.mxu0
        %v6498 = vadd.f32 %v6409, %v6497
        %6499 = vmatmul.bf16.gmra.mxu0 %v3102
        %v6500 = vpop.f32.mrf.mxu0
        %v6501 = vadd.f32 %v6412, %v6500
        %v6502 = vpop.f32.mrf.mxu0
        %v6503 = vadd.f32 %v6414, %v6502
        %6504 = vmatmul.bf16.gmra.mxu0 %v3106
        %v6505 = vpop.f32.mrf.mxu0
        %v6506 = vadd.f32 %v6417, %v6505
        %v6507 = vpop.f32.mrf.mxu0
        %v6508 = vadd.f32 %v6419, %v6507
        %6509 = vmatmul.bf16.gmra.mxu0 %v3110
        %v6510 = vpop.f32.mrf.mxu0
        %v6511 = vadd.f32 %v6422, %v6510
        %v6512 = vpop.f32.mrf.mxu0
        %v6513 = vadd.f32 %v6424, %v6512
        %6514 = vmatmul.bf16.gmra.mxu0 %v3114
        %v6515 = vpop.f32.mrf.mxu0
        %v6516 = vadd.f32 %v6427, %v6515
        %v6517 = vpop.f32.mrf.mxu0
        %v6518 = vadd.f32 %v6429, %v6517
        %6519 = vmatmul.bf16.gmra.mxu0 %v3118
        %v6520 = vpop.f32.mrf.mxu0
        %v6521 = vadd.f32 %v6432, %v6520
        %v6522 = vpop.f32.mrf.mxu0
        %v6523 = vadd.f32 %v6434, %v6522
        %6524 = vdwg.mxu0
        %6525 = vmatpush.bf16.msra.mxu0 %v5910
        %6526 = vmatpush.bf16.msra.mxu0 %v5908
        %6527 = vmatpush.bf16.msra.mxu0 %v5906
        %6528 = vmatpush.bf16.msra.mxu0 %v5904
        %6529 = vmatpush.bf16.msra.mxu0 %v5902
        %6530 = vmatpush.bf16.msra.mxu0 %v5900
        %6531 = vmatpush.bf16.msra.mxu0 %v5898
        %6532 = vmatpush.bf16.msra.mxu0 %v5896
        %6533 = vmatmul.bf16.gmra.mxu0 %v3059
        %v6534 = vpop.f32.mrf.mxu0
        %v6535 = vadd.f32 %v6446, %v6534
        %v6536 = vpop.f32.mrf.mxu0
        %v6537 = vadd.f32 %v6448, %v6536
        %6538 = vmatmul.bf16.gmra.mxu0 %v3063
        %v6539 = vpop.f32.mrf.mxu0
        %v6540 = vadd.f32 %v6451, %v6539
        %v6541 = vpop.f32.mrf.mxu0
        %v6542 = vadd.f32 %v6453, %v6541
        %6543 = vmatmul.bf16.gmra.mxu0 %v3067
        %v6544 = vpop.f32.mrf.mxu0
        %v6545 = vadd.f32 %v6456, %v6544
        %v6546 = vpop.f32.mrf.mxu0
        %v6547 = vadd.f32 %v6458, %v6546
        %6548 = vmatmul.bf16.gmra.mxu0 %v3071
        %v6549 = vpop.f32.mrf.mxu0
        %v6550 = vadd.f32 %v6461, %v6549
        %v6551 = vpop.f32.mrf.mxu0
        %v6552 = vadd.f32 %v6463, %v6551
        %6553 = vmatmul.bf16.gmra.mxu0 %v3075
        %v6554 = vpop.f32.mrf.mxu0
        %v6555 = vadd.f32 %v6466, %v6554
        %v6556 = vpop.f32.mrf.mxu0
        %v6557 = vadd.f32 %v6468, %v6556
        %6558 = vmatmul.bf16.gmra.mxu0 %v3079
        %v6559 = vpop.f32.mrf.mxu0
        %v6560 = vadd.f32 %v6471, %v6559
        %v6561 = vpop.f32.mrf.mxu0
        %v6562 = vadd.f32 %v6473, %v6561
        %6563 = vmatmul.bf16.gmra.mxu0 %v3083
        %v6564 = vpop.f32.mrf.mxu0
        %v6565 = vadd.f32 %v6476, %v6564
        %v6566 = vpop.f32.mrf.mxu0
        %v6567 = vadd.f32 %v6478, %v6566
        %6568 = vmatmul.bf16.gmra.mxu0 %v3087
        %v6569 = vpop.f32.mrf.mxu0
        %v6570 = vadd.f32 %v6481, %v6569
        %v6571 = vpop.f32.mrf.mxu0
        %v6572 = vadd.f32 %v6483, %v6571
        %6573 = vmatmul.bf16.gmra.mxu0 %v3091
        %v6574 = vpop.f32.mrf.mxu0
        %v6575 = vadd.f32 %v6486, %v6574
        %v6576 = vpop.f32.mrf.mxu0
        %v6577 = vadd.f32 %v6488, %v6576
        %6578 = vmatmul.bf16.gmra.mxu0 %v3095
        %v6579 = vpop.f32.mrf.mxu0
        %v6580 = vadd.f32 %v6491, %v6579
        %v6581 = vpop.f32.mrf.mxu0
        %v6582 = vadd.f32 %v6493, %v6581
        %6583 = vmatmul.bf16.gmra.mxu0 %v3099
        %v6584 = vpop.f32.mrf.mxu0
        %v6585 = vadd.f32 %v6496, %v6584
        %v6586 = vpop.f32.mrf.mxu0
        %v6587 = vadd.f32 %v6498, %v6586
        %6588 = vmatmul.bf16.gmra.mxu0 %v3103
        %v6589 = vpop.f32.mrf.mxu0
        %v6590 = vadd.f32 %v6501, %v6589
        %v6591 = vpop.f32.mrf.mxu0
        %v6592 = vadd.f32 %v6503, %v6591
        %6593 = vmatmul.bf16.gmra.mxu0 %v3107
        %v6594 = vpop.f32.mrf.mxu0
        %v6595 = vadd.f32 %v6506, %v6594
        %v6596 = vpop.f32.mrf.mxu0
        %v6597 = vadd.f32 %v6508, %v6596
        %6598 = vmatmul.bf16.gmra.mxu0 %v3111
        %v6599 = vpop.f32.mrf.mxu0
        %v6600 = vadd.f32 %v6511, %v6599
        %v6601 = vpop.f32.mrf.mxu0
        %v6602 = vadd.f32 %v6513, %v6601
        %6603 = vmatmul.bf16.gmra.mxu0 %v3115
        %v6604 = vpop.f32.mrf.mxu0
        %v6605 = vadd.f32 %v6516, %v6604
        %v6606 = vpop.f32.mrf.mxu0
        %v6607 = vadd.f32 %v6518, %v6606
        %6608 = vmatmul.bf16.gmra.mxu0 %v3119
        %v6609 = vpop.f32.mrf.mxu0
        %v6610 = vadd.f32 %v6521, %v6609
        %v6611 = vpop.f32.mrf.mxu0
        %v6612 = vadd.f32 %v6523, %v6611
        %6613 = vdwg.mxu0
        %6614 = vmatpush.bf16.msra.mxu0 %v5926
        %6615 = vmatpush.bf16.msra.mxu0 %v5924
        %6616 = vmatpush.bf16.msra.mxu0 %v5922
        %6617 = vmatpush.bf16.msra.mxu0 %v5920
        %6618 = vmatpush.bf16.msra.mxu0 %v5918
        %6619 = vmatpush.bf16.msra.mxu0 %v5916
        %6620 = vmatpush.bf16.msra.mxu0 %v5914
        %6621 = vmatpush.bf16.msra.mxu0 %v5912
        %6622 = vmatmul.bf16.gmra.mxu0 %v3060
        %v6623 = vpop.f32.mrf.mxu0
        %v6624 = vadd.f32 %v6535, %v6623
        %v6625 = vpop.f32.mrf.mxu0
        %v6626 = vadd.f32 %v6537, %v6625
        %6627 = vmatmul.bf16.gmra.mxu0 %v3064
        %v6628 = vpop.f32.mrf.mxu0
        %v6629 = vadd.f32 %v6540, %v6628
        %v6630 = vpop.f32.mrf.mxu0
        %v6631 = vadd.f32 %v6542, %v6630
        %6632 = vmatmul.bf16.gmra.mxu0 %v3068
        %v6633 = vpop.f32.mrf.mxu0
        %v6634 = vadd.f32 %v6545, %v6633
        %v6635 = vpop.f32.mrf.mxu0
        %v6636 = vadd.f32 %v6547, %v6635
        %6637 = vmatmul.bf16.gmra.mxu0 %v3072
        %v6638 = vpop.f32.mrf.mxu0
        %v6639 = vadd.f32 %v6550, %v6638
        %v6640 = vpop.f32.mrf.mxu0
        %v6641 = vadd.f32 %v6552, %v6640
        %6642 = vmatmul.bf16.gmra.mxu0 %v3076
        %v6643 = vpop.f32.mrf.mxu0
        %v6644 = vadd.f32 %v6555, %v6643
        %v6645 = vpop.f32.mrf.mxu0
        %v6646 = vadd.f32 %v6557, %v6645
        %6647 = vmatmul.bf16.gmra.mxu0 %v3080
        %v6648 = vpop.f32.mrf.mxu0
        %v6649 = vadd.f32 %v6560, %v6648
        %v6650 = vpop.f32.mrf.mxu0
        %v6651 = vadd.f32 %v6562, %v6650
        %6652 = vmatmul.bf16.gmra.mxu0 %v3084
        %v6653 = vpop.f32.mrf.mxu0
        %v6654 = vadd.f32 %v6565, %v6653
        %v6655 = vpop.f32.mrf.mxu0
        %v6656 = vadd.f32 %v6567, %v6655
        %6657 = vmatmul.bf16.gmra.mxu0 %v3088
        %v6658 = vpop.f32.mrf.mxu0
        %v6659 = vadd.f32 %v6570, %v6658
        %v6660 = vpop.f32.mrf.mxu0
        %v6661 = vadd.f32 %v6572, %v6660
        %6662 = vmatmul.bf16.gmra.mxu0 %v3092
        %v6663 = vpop.f32.mrf.mxu0
        %v6664 = vadd.f32 %v6575, %v6663
        %v6665 = vpop.f32.mrf.mxu0
        %v6666 = vadd.f32 %v6577, %v6665
        %6667 = vmatmul.bf16.gmra.mxu0 %v3096
        %v6668 = vpop.f32.mrf.mxu0
        %v6669 = vadd.f32 %v6580, %v6668
        %v6670 = vpop.f32.mrf.mxu0
        %v6671 = vadd.f32 %v6582, %v6670
        %6672 = vmatmul.bf16.gmra.mxu0 %v3100
        %v6673 = vpop.f32.mrf.mxu0
        %v6674 = vadd.f32 %v6585, %v6673
        %v6675 = vpop.f32.mrf.mxu0
        %v6676 = vadd.f32 %v6587, %v6675
        %6677 = vmatmul.bf16.gmra.mxu0 %v3104
        %v6678 = vpop.f32.mrf.mxu0
        %v6679 = vadd.f32 %v6590, %v6678
        %v6680 = vpop.f32.mrf.mxu0
        %v6681 = vadd.f32 %v6592, %v6680
        %6682 = vmatmul.bf16.gmra.mxu0 %v3108
        %v6683 = vpop.f32.mrf.mxu0
        %v6684 = vadd.f32 %v6595, %v6683
        %v6685 = vpop.f32.mrf.mxu0
        %v6686 = vadd.f32 %v6597, %v6685
        %6687 = vmatmul.bf16.gmra.mxu0 %v3112
        %v6688 = vpop.f32.mrf.mxu0
        %v6689 = vadd.f32 %v6600, %v6688
        %v6690 = vpop.f32.mrf.mxu0
        %v6691 = vadd.f32 %v6602, %v6690
        %6692 = vmatmul.bf16.gmra.mxu0 %v3116
        %v6693 = vpop.f32.mrf.mxu0
        %v6694 = vadd.f32 %v6605, %v6693
        %v6695 = vpop.f32.mrf.mxu0
        %v6696 = vadd.f32 %v6607, %v6695
        %6697 = vmatmul.bf16.gmra.mxu0 %v3120
        %v6698 = vpop.f32.mrf.mxu0
        %v6699 = vadd.f32 %v6610, %v6698
        %v6700 = vpop.f32.mrf.mxu0
        %v6701 = vadd.f32 %v6612, %v6700
        %6702 = vdwg.mxu0
        %v6703 = vmax.f32 %v6268, 0.0
        %v6704 = vmax.f32 %v6624, 0.0
        %v6705 = vmax.f32 %v6270, 0.0
        %v6706 = vmax.f32 %v6626, 0.0
        %v6707 = vmax.f32 %v6273, 0.0
        %v6708 = vmax.f32 %v6629, 0.0
        %v6709 = vmax.f32 %v6275, 0.0
        %v6710 = vmax.f32 %v6631, 0.0
        %v6711 = vmax.f32 %v6278, 0.0
        %v6712 = vmax.f32 %v6634, 0.0
        %v6713 = vmax.f32 %v6280, 0.0
        %v6714 = vmax.f32 %v6636, 0.0
        %v6715 = vmax.f32 %v6283, 0.0
        %v6716 = vmax.f32 %v6639, 0.0
        %v6717 = vmax.f32 %v6285, 0.0
        %v6718 = vmax.f32 %v6641, 0.0
        %v6719 = vmax.f32 %v6288, 0.0
        %v6720 = vmax.f32 %v6644, 0.0
        %v6721 = vmax.f32 %v6290, 0.0
        %v6722 = vmax.f32 %v6646, 0.0
        %v6723 = vmax.f32 %v6293, 0.0
        %v6724 = vmax.f32 %v6649, 0.0
        %v6725 = vmax.f32 %v6295, 0.0
        %v6726 = vmax.f32 %v6651, 0.0
        %v6727 = vmax.f32 %v6298, 0.0
        %v6728 = vmax.f32 %v6654, 0.0
        %v6729 = vmax.f32 %v6300, 0.0
        %v6730 = vmax.f32 %v6656, 0.0
        %v6731 = vmax.f32 %v6303, 0.0
        %v6732 = vmax.f32 %v6659, 0.0
        %v6733 = vmax.f32 %v6305, 0.0
        %v6734 = vmax.f32 %v6661, 0.0
        %v6735 = vmax.f32 %v6308, 0.0
        %v6736 = vmax.f32 %v6664, 0.0
        %v6737 = vmax.f32 %v6310, 0.0
        %v6738 = vmax.f32 %v6666, 0.0
        %v6739 = vmax.f32 %v6313, 0.0
        %v6740 = vmax.f32 %v6669, 0.0
        %v6741 = vmax.f32 %v6315, 0.0
        %v6742 = vmax.f32 %v6671, 0.0
        %v6743 = vmax.f32 %v6318, 0.0
        %v6744 = vmax.f32 %v6674, 0.0
        %v6745 = vmax.f32 %v6320, 0.0
        %v6746 = vmax.f32 %v6676, 0.0
        %v6747 = vmax.f32 %v6323, 0.0
        %v6748 = vmax.f32 %v6679, 0.0
        %v6749 = vmax.f32 %v6325, 0.0
        %v6750 = vmax.f32 %v6681, 0.0
        %v6751 = vmax.f32 %v6328, 0.0
        %v6752 = vmax.f32 %v6684, 0.0
        %v6753 = vmax.f32 %v6330, 0.0
        %v6754 = vmax.f32 %v6686, 0.0
        %v6755 = vmax.f32 %v6333, 0.0
        %v6756 = vmax.f32 %v6689, 0.0
        %v6757 = vmax.f32 %v6335, 0.0
        %v6758 = vmax.f32 %v6691, 0.0
        %v6759 = vmax.f32 %v6338, 0.0
        %v6760 = vmax.f32 %v6694, 0.0
        %v6761 = vmax.f32 %v6340, 0.0
        %v6762 = vmax.f32 %v6696, 0.0
        %v6763 = vmax.f32 %v6343, 0.0
        %v6764 = vmax.f32 %v6699, 0.0
        %v6765 = vmax.f32 %v6345, 0.0
        %v6766 = vmax.f32 %v6701, 0.0
        %v6767 = vadd.f32 %v6703, %v6705
        %v6768 = vadd.f32 %v6767, %v6707
        %v6769 = vadd.f32 %v6768, %v6709
        %v6770 = vadd.f32 %v6769, %v6711
        %v6771 = vadd.f32 %v6770, %v6713
        %v6772 = vadd.f32 %v6771, %v6715
        %v6773 = vadd.f32 %v6772, %v6717
        %v6774 = vadd.f32 %v6773, %v6719
        %v6775 = vadd.f32 %v6774, %v6721
        %v6776 = vadd.f32 %v6775, %v6723
        %v6777 = vadd.f32 %v6776, %v6725
        %v6778 = vadd.f32 %v6777, %v6727
        %v6779 = vadd.f32 %v6778, %v6729
        %v6780 = vadd.f32 %v6779, %v6731
        %v6781 = vadd.f32 %v6780, %v6733
        %v6782 = vadd.f32 %v6781, %v6735
        %v6783 = vadd.f32 %v6782, %v6737
        %v6784 = vadd.f32 %v6783, %v6739
        %v6785 = vadd.f32 %v6784, %v6741
        %v6786 = vadd.f32 %v6785, %v6743
        %v6787 = vadd.f32 %v6786, %v6745
        %v6788 = vadd.f32 %v6787, %v6747
        %v6789 = vadd.f32 %v6788, %v6749
        %v6790 = vadd.f32 %v6789, %v6751
        %v6791 = vadd.f32 %v6790, %v6753
        %v6792 = vadd.f32 %v6791, %v6755
        %v6793 = vadd.f32 %v6792, %v6757
        %v6794 = vadd.f32 %v6793, %v6759
        %v6795 = vadd.f32 %v6794, %v6761
        %v6796 = vadd.f32 %v6795, %v6763
        %v6797 = vadd.f32 %v6796, %v6765
        %v6798 = vrot.slane %v6797, 4
        %v6799 = vadd.f32 %v6797, %v6798
        %v6800 = vrot.slane %v6799, 2
        %v6801 = vadd.f32 %v6799, %v6800
        %v6802 = vrot.slane %v6801, 1
        %v6803 = vadd.f32 %v6801, %v6802
        %v6804 = vadd.f32 %v6704, %v6706
        %v6805 = vadd.f32 %v6804, %v6708
        %v6806 = vadd.f32 %v6805, %v6710
        %v6807 = vadd.f32 %v6806, %v6712
        %v6808 = vadd.f32 %v6807, %v6714
        %v6809 = vadd.f32 %v6808, %v6716
        %v6810 = vadd.f32 %v6809, %v6718
        %v6811 = vadd.f32 %v6810, %v6720
        %v6812 = vadd.f32 %v6811, %v6722
        %v6813 = vadd.f32 %v6812, %v6724
        %v6814 = vadd.f32 %v6813, %v6726
        %v6815 = vadd.f32 %v6814, %v6728
        %v6816 = vadd.f32 %v6815, %v6730
        %v6817 = vadd.f32 %v6816, %v6732
        %v6818 = vadd.f32 %v6817, %v6734
        %v6819 = vadd.f32 %v6818, %v6736
        %v6820 = vadd.f32 %v6819, %v6738
        %v6821 = vadd.f32 %v6820, %v6740
        %v6822 = vadd.f32 %v6821, %v6742
        %v6823 = vadd.f32 %v6822, %v6744
        %v6824 = vadd.f32 %v6823, %v6746
        %v6825 = vadd.f32 %v6824, %v6748
        %v6826 = vadd.f32 %v6825, %v6750
        %v6827 = vadd.f32 %v6826, %v6752
        %v6828 = vadd.f32 %v6827, %v6754
        %v6829 = vadd.f32 %v6828, %v6756
        %v6830 = vadd.f32 %v6829, %v6758
        %v6831 = vadd.f32 %v6830, %v6760
        %v6832 = vadd.f32 %v6831, %v6762
        %v6833 = vadd.f32 %v6832, %v6764
        %v6834 = vadd.f32 %v6833, %v6766
        %v6835 = vrot.slane %v6834, 4
        %v6836 = vadd.f32 %v6834, %v6835
        %v6837 = vrot.slane %v6836, 2
        %v6838 = vadd.f32 %v6836, %v6837
        %v6839 = vrot.slane %v6838, 1
        %v6840 = vadd.f32 %v6838, %v6839
        %v6841 = vld [vmem:[#allocation8 + $0x18] sm:$0xff]
        %v6842 = vld [vmem:[#allocation8 + $0x38] sm:$0xff]
        %v6843 = vld [vmem:[#allocation8 + $0x58] sm:$0xff]
        %v6844 = vld [vmem:[#allocation8 + $0x78] sm:$0xff]
        %v6845 = vld [vmem:[#allocation8 + $0x98] sm:$0xff]
        %v6846 = vld [vmem:[#allocation8 + $0xb8] sm:$0xff]
        %v6847 = vld [vmem:[#allocation8 + $0xd8] sm:$0xff]
        %v6848 = vld [vmem:[#allocation8 + $0xf8] sm:$0xff]
        %v6849 = vld [vmem:[#allocation8 + $0x118] sm:$0xff]
        %v6850 = vld [vmem:[#allocation8 + $0x138] sm:$0xff]
        %v6851 = vld [vmem:[#allocation8 + $0x158] sm:$0xff]
        %v6852 = vld [vmem:[#allocation8 + $0x178] sm:$0xff]
        %v6853 = vld [vmem:[#allocation8 + $0x198] sm:$0xff]
        %v6854 = vld [vmem:[#allocation8 + $0x1b8] sm:$0xff]
        %v6855 = vld [vmem:[#allocation8 + $0x1d8] sm:$0xff]
        %v6856 = vld [vmem:[#allocation8 + $0x1f8] sm:$0xff]
        %v6857 = vld [vmem:[#allocation8 + $0x218] sm:$0xff]
        %v6858 = vld [vmem:[#allocation8 + $0x238] sm:$0xff]
        %v6859 = vld [vmem:[#allocation8 + $0x258] sm:$0xff]
        %v6860 = vld [vmem:[#allocation8 + $0x278] sm:$0xff]
        %v6861 = vld [vmem:[#allocation8 + $0x298] sm:$0xff]
        %v6862 = vld [vmem:[#allocation8 + $0x2b8] sm:$0xff]
        %v6863 = vld [vmem:[#allocation8 + $0x2d8] sm:$0xff]
        %v6864 = vld [vmem:[#allocation8 + $0x2f8] sm:$0xff]
        %v6865 = vld [vmem:[#allocation8 + $0x318] sm:$0xff]
        %v6866 = vld [vmem:[#allocation8 + $0x338] sm:$0xff]
        %v6867 = vld [vmem:[#allocation8 + $0x358] sm:$0xff]
        %v6868 = vld [vmem:[#allocation8 + $0x378] sm:$0xff]
        %v6869 = vld [vmem:[#allocation8 + $0x398] sm:$0xff]
        %v6870 = vld [vmem:[#allocation8 + $0x3b8] sm:$0xff]
        %v6871 = vld [vmem:[#allocation8 + $0x3d8] sm:$0xff]
        %v6872 = vld [vmem:[#allocation8 + $0x3f8] sm:$0xff]
        %v6873 = vld [vmem:[#allocation8 + $0x418] sm:$0xff]
        %v6874 = vld [vmem:[#allocation8 + $0x438] sm:$0xff]
        %v6875 = vld [vmem:[#allocation8 + $0x458] sm:$0xff]
        %v6876 = vld [vmem:[#allocation8 + $0x478] sm:$0xff]
        %v6877 = vld [vmem:[#allocation8 + $0x498] sm:$0xff]
        %v6878 = vld [vmem:[#allocation8 + $0x4b8] sm:$0xff]
        %v6879 = vld [vmem:[#allocation8 + $0x4d8] sm:$0xff]
        %v6880 = vld [vmem:[#allocation8 + $0x4f8] sm:$0xff]
        %v6881 = vld [vmem:[#allocation8 + $0x518] sm:$0xff]
        %v6882 = vld [vmem:[#allocation8 + $0x538] sm:$0xff]
        %v6883 = vld [vmem:[#allocation8 + $0x558] sm:$0xff]
        %v6884 = vld [vmem:[#allocation8 + $0x578] sm:$0xff]
        %v6885 = vld [vmem:[#allocation8 + $0x598] sm:$0xff]
        %v6886 = vld [vmem:[#allocation8 + $0x5b8] sm:$0xff]
        %v6887 = vld [vmem:[#allocation8 + $0x5d8] sm:$0xff]
        %v6888 = vld [vmem:[#allocation8 + $0x5f8] sm:$0xff]
        %v6889 = vld [vmem:[#allocation8 + $0x618] sm:$0xff]
        %v6890 = vld [vmem:[#allocation8 + $0x638] sm:$0xff]
        %v6891 = vld [vmem:[#allocation8 + $0x658] sm:$0xff]
        %v6892 = vld [vmem:[#allocation8 + $0x678] sm:$0xff]
        %v6893 = vld [vmem:[#allocation8 + $0x698] sm:$0xff]
        %v6894 = vld [vmem:[#allocation8 + $0x6b8] sm:$0xff]
        %v6895 = vld [vmem:[#allocation8 + $0x6d8] sm:$0xff]
        %v6896 = vld [vmem:[#allocation8 + $0x6f8] sm:$0xff]
        %v6897 = vld [vmem:[#allocation8 + $0x718] sm:$0xff]
        %v6898 = vld [vmem:[#allocation8 + $0x738] sm:$0xff]
        %v6899 = vld [vmem:[#allocation8 + $0x758] sm:$0xff]
        %v6900 = vld [vmem:[#allocation8 + $0x778] sm:$0xff]
        %v6901 = vld [vmem:[#allocation8 + $0x798] sm:$0xff]
        %v6902 = vld [vmem:[#allocation8 + $0x7b8] sm:$0xff]
        %v6903 = vld [vmem:[#allocation8 + $0x7d8] sm:$0xff]
        %v6904 = vld [vmem:[#allocation8 + $0x7f8] sm:$0xff]
        %v6905 = vld [vmem:[#allocation10 + $0x6] sm:$0x3]
        %v6907 = vperm.slane %v6905, 0
        %v6908 = vperm.slane %v6905, 1
        %v6975 = vunpack.c.l.b16 %v6841
        %v6976 = vunpack.c.h.b16 %v6841
        %v6977 = vunpack.c.l.b16 %v6842
        %v6978 = vunpack.c.h.b16 %v6842
        %v6979 = vunpack.c.l.b16 %v6843
        %v6980 = vunpack.c.h.b16 %v6843
        %v6981 = vunpack.c.l.b16 %v6844
        %v6982 = vunpack.c.h.b16 %v6844
        %v6983 = vunpack.c.l.b16 %v6845
        %v6984 = vunpack.c.h.b16 %v6845
        %v6985 = vunpack.c.l.b16 %v6846
        %v6986 = vunpack.c.h.b16 %v6846
        %v6987 = vunpack.c.l.b16 %v6847
        %v6988 = vunpack.c.h.b16 %v6847
        %v6989 = vunpack.c.l.b16 %v6848
        %v6990 = vunpack.c.h.b16 %v6848
        %v6991 = vunpack.c.l.b16 %v6849
        %v6992 = vunpack.c.h.b16 %v6849
        %v6993 = vunpack.c.l.b16 %v6850
        %v6994 = vunpack.c.h.b16 %v6850
        %v6995 = vunpack.c.l.b16 %v6851
        %v6996 = vunpack.c.h.b16 %v6851
        %v6997 = vunpack.c.l.b16 %v6852
        %v6998 = vunpack.c.h.b16 %v6852
        %v6999 = vunpack.c.l.b16 %v6853
        %v7000 = vunpack.c.h.b16 %v6853
        %v7001 = vunpack.c.l.b16 %v6854
        %v7002 = vunpack.c.h.b16 %v6854
        %v7003 = vunpack.c.l.b16 %v6855
        %v7004 = vunpack.c.h.b16 %v6855
        %v7005 = vunpack.c.l.b16 %v6856
        %v7006 = vunpack.c.h.b16 %v6856
        %v7007 = vunpack.c.l.b16 %v6857
        %v7008 = vunpack.c.h.b16 %v6857
        %v7009 = vunpack.c.l.b16 %v6858
        %v7010 = vunpack.c.h.b16 %v6858
        %v7011 = vunpack.c.l.b16 %v6859
        %v7012 = vunpack.c.h.b16 %v6859
        %v7013 = vunpack.c.l.b16 %v6860
        %v7014 = vunpack.c.h.b16 %v6860
        %v7015 = vunpack.c.l.b16 %v6861
        %v7016 = vunpack.c.h.b16 %v6861
        %v7017 = vunpack.c.l.b16 %v6862
        %v7018 = vunpack.c.h.b16 %v6862
        %v7019 = vunpack.c.l.b16 %v6863
        %v7020 = vunpack.c.h.b16 %v6863
        %v7021 = vunpack.c.l.b16 %v6864
        %v7022 = vunpack.c.h.b16 %v6864
        %v7023 = vunpack.c.l.b16 %v6865
        %v7024 = vunpack.c.h.b16 %v6865
        %v7025 = vunpack.c.l.b16 %v6866
        %v7026 = vunpack.c.h.b16 %v6866
        %v7027 = vunpack.c.l.b16 %v6867
        %v7028 = vunpack.c.h.b16 %v6867
        %v7029 = vunpack.c.l.b16 %v6868
        %v7030 = vunpack.c.h.b16 %v6868
        %v7031 = vunpack.c.l.b16 %v6869
        %v7032 = vunpack.c.h.b16 %v6869
        %v7033 = vunpack.c.l.b16 %v6870
        %v7034 = vunpack.c.h.b16 %v6870
        %v7035 = vunpack.c.l.b16 %v6871
        %v7036 = vunpack.c.h.b16 %v6871
        %v7037 = vunpack.c.l.b16 %v6872
        %v7038 = vunpack.c.h.b16 %v6872
        %v7039 = vunpack.c.l.b16 %v6873
        %v7040 = vunpack.c.h.b16 %v6873
        %v7041 = vunpack.c.l.b16 %v6874
        %v7042 = vunpack.c.h.b16 %v6874
        %v7043 = vunpack.c.l.b16 %v6875
        %v7044 = vunpack.c.h.b16 %v6875
        %v7045 = vunpack.c.l.b16 %v6876
        %v7046 = vunpack.c.h.b16 %v6876
        %v7047 = vunpack.c.l.b16 %v6877
        %v7048 = vunpack.c.h.b16 %v6877
        %v7049 = vunpack.c.l.b16 %v6878
        %v7050 = vunpack.c.h.b16 %v6878
        %v7051 = vunpack.c.l.b16 %v6879
        %v7052 = vunpack.c.h.b16 %v6879
        %v7053 = vunpack.c.l.b16 %v6880
        %v7054 = vunpack.c.h.b16 %v6880
        %v7055 = vunpack.c.l.b16 %v6881
        %v7056 = vunpack.c.h.b16 %v6881
        %v7057 = vunpack.c.l.b16 %v6882
        %v7058 = vunpack.c.h.b16 %v6882
        %v7059 = vunpack.c.l.b16 %v6883
        %v7060 = vunpack.c.h.b16 %v6883
        %v7061 = vunpack.c.l.b16 %v6884
        %v7062 = vunpack.c.h.b16 %v6884
        %v7063 = vunpack.c.l.b16 %v6885
        %v7064 = vunpack.c.h.b16 %v6885
        %v7065 = vunpack.c.l.b16 %v6886
        %v7066 = vunpack.c.h.b16 %v6886
        %v7067 = vunpack.c.l.b16 %v6887
        %v7068 = vunpack.c.h.b16 %v6887
        %v7069 = vunpack.c.l.b16 %v6888
        %v7070 = vunpack.c.h.b16 %v6888
        %v7071 = vunpack.c.l.b16 %v6889
        %v7072 = vunpack.c.h.b16 %v6889
        %v7073 = vunpack.c.l.b16 %v6890
        %v7074 = vunpack.c.h.b16 %v6890
        %v7075 = vunpack.c.l.b16 %v6891
        %v7076 = vunpack.c.h.b16 %v6891
        %v7077 = vunpack.c.l.b16 %v6892
        %v7078 = vunpack.c.h.b16 %v6892
        %v7079 = vunpack.c.l.b16 %v6893
        %v7080 = vunpack.c.h.b16 %v6893
        %v7081 = vunpack.c.l.b16 %v6894
        %v7082 = vunpack.c.h.b16 %v6894
        %v7083 = vunpack.c.l.b16 %v6895
        %v7084 = vunpack.c.h.b16 %v6895
        %v7085 = vunpack.c.l.b16 %v6896
        %v7086 = vunpack.c.h.b16 %v6896
        %v7087 = vunpack.c.l.b16 %v6897
        %v7088 = vunpack.c.h.b16 %v6897
        %v7089 = vunpack.c.l.b16 %v6898
        %v7090 = vunpack.c.h.b16 %v6898
        %v7091 = vunpack.c.l.b16 %v6899
        %v7092 = vunpack.c.h.b16 %v6899
        %v7093 = vunpack.c.l.b16 %v6900
        %v7094 = vunpack.c.h.b16 %v6900
        %v7095 = vunpack.c.l.b16 %v6901
        %v7096 = vunpack.c.h.b16 %v6901
        %v7097 = vunpack.c.l.b16 %v6902
        %v7098 = vunpack.c.h.b16 %v6902
        %v7099 = vunpack.c.l.b16 %v6903
        %v7100 = vunpack.c.h.b16 %v6903
        %v7101 = vunpack.c.l.b16 %v6904
        %v7102 = vunpack.c.h.b16 %v6904
        %v7103 = vpack.c.b16 %v6977, %v6975
        %v7104 = vpack.c.b16 %v6978, %v6976
        %v7105 = vpack.c.b16 %v6981, %v6979
        %v7106 = vpack.c.b16 %v6982, %v6980
        %v7107 = vpack.c.b16 %v6985, %v6983
        %v7108 = vpack.c.b16 %v6986, %v6984
        %v7109 = vpack.c.b16 %v6989, %v6987
        %v7110 = vpack.c.b16 %v6990, %v6988
        %v7111 = vpack.c.b16 %v6993, %v6991
        %v7112 = vpack.c.b16 %v6994, %v6992
        %v7113 = vpack.c.b16 %v6997, %v6995
        %v7114 = vpack.c.b16 %v6998, %v6996
        %v7115 = vpack.c.b16 %v7001, %v6999
        %v7116 = vpack.c.b16 %v7002, %v7000
        %v7117 = vpack.c.b16 %v7005, %v7003
        %v7118 = vpack.c.b16 %v7006, %v7004
        %v7119 = vpack.c.b16 %v7009, %v7007
        %v7120 = vpack.c.b16 %v7010, %v7008
        %v7121 = vpack.c.b16 %v7013, %v7011
        %v7122 = vpack.c.b16 %v7014, %v7012
        %v7123 = vpack.c.b16 %v7017, %v7015
        %v7124 = vpack.c.b16 %v7018, %v7016
        %v7125 = vpack.c.b16 %v7021, %v7019
        %v7126 = vpack.c.b16 %v7022, %v7020
        %v7127 = vpack.c.b16 %v7025, %v7023
        %v7128 = vpack.c.b16 %v7026, %v7024
        %v7129 = vpack.c.b16 %v7029, %v7027
        %v7130 = vpack.c.b16 %v7030, %v7028
        %v7131 = vpack.c.b16 %v7033, %v7031
        %v7132 = vpack.c.b16 %v7034, %v7032
        %v7133 = vpack.c.b16 %v7037, %v7035
        %v7134 = vpack.c.b16 %v7038, %v7036
        %v7135 = vpack.c.b16 %v7041, %v7039
        %v7136 = vpack.c.b16 %v7042, %v7040
        %v7137 = vpack.c.b16 %v7045, %v7043
        %v7138 = vpack.c.b16 %v7046, %v7044
        %v7139 = vpack.c.b16 %v7049, %v7047
        %v7140 = vpack.c.b16 %v7050, %v7048
        %v7141 = vpack.c.b16 %v7053, %v7051
        %v7142 = vpack.c.b16 %v7054, %v7052
        %v7143 = vpack.c.b16 %v7057, %v7055
        %v7144 = vpack.c.b16 %v7058, %v7056
        %v7145 = vpack.c.b16 %v7061, %v7059
        %v7146 = vpack.c.b16 %v7062, %v7060
        %v7147 = vpack.c.b16 %v7065, %v7063
        %v7148 = vpack.c.b16 %v7066, %v7064
        %v7149 = vpack.c.b16 %v7069, %v7067
        %v7150 = vpack.c.b16 %v7070, %v7068
        %v7151 = vpack.c.b16 %v7073, %v7071
        %v7152 = vpack.c.b16 %v7074, %v7072
        %v7153 = vpack.c.b16 %v7077, %v7075
        %v7154 = vpack.c.b16 %v7078, %v7076
        %v7155 = vpack.c.b16 %v7081, %v7079
        %v7156 = vpack.c.b16 %v7082, %v7080
        %v7157 = vpack.c.b16 %v7085, %v7083
        %v7158 = vpack.c.b16 %v7086, %v7084
        %v7159 = vpack.c.b16 %v7089, %v7087
        %v7160 = vpack.c.b16 %v7090, %v7088
        %v7161 = vpack.c.b16 %v7093, %v7091
        %v7162 = vpack.c.b16 %v7094, %v7092
        %v7163 = vpack.c.b16 %v7097, %v7095
        %v7164 = vpack.c.b16 %v7098, %v7096
        %v7165 = vpack.c.b16 %v7101, %v7099
        %v7166 = vpack.c.b16 %v7102, %v7100
        %7231 = vmatpush.bf16.msra.mxu0 %v7117
        %7232 = vmatpush.bf16.msra.mxu0 %v7115
        %7233 = vmatpush.bf16.msra.mxu0 %v7113
        %7234 = vmatpush.bf16.msra.mxu0 %v7111
        %7235 = vmatpush.bf16.msra.mxu0 %v7109
        %7236 = vmatpush.bf16.msra.mxu0 %v7107
        %7237 = vmatpush.bf16.msra.mxu0 %v7105
        %7238 = vmatpush.bf16.msra.mxu0 %v7103
        %7239 = vmatmul.bf16.gmra.mxu0 %v3057
        %v7240 = vpop.f32.mrf.mxu0
        %v7241 = vadd.f32 %v6907, %v7240
        %v7242 = vpop.f32.mrf.mxu0
        %v7243 = vadd.f32 %v6907, %v7242
        %7244 = vmatmul.bf16.gmra.mxu0 %v3061
        %v7245 = vpop.f32.mrf.mxu0
        %v7246 = vadd.f32 %v6907, %v7245
        %v7247 = vpop.f32.mrf.mxu0
        %v7248 = vadd.f32 %v6907, %v7247
        %7249 = vmatmul.bf16.gmra.mxu0 %v3065
        %v7250 = vpop.f32.mrf.mxu0
        %v7251 = vadd.f32 %v6907, %v7250
        %v7252 = vpop.f32.mrf.mxu0
        %v7253 = vadd.f32 %v6907, %v7252
        %7254 = vmatmul.bf16.gmra.mxu0 %v3069
        %v7255 = vpop.f32.mrf.mxu0
        %v7256 = vadd.f32 %v6907, %v7255
        %v7257 = vpop.f32.mrf.mxu0
        %v7258 = vadd.f32 %v6907, %v7257
        %7259 = vmatmul.bf16.gmra.mxu0 %v3073
        %v7260 = vpop.f32.mrf.mxu0
        %v7261 = vadd.f32 %v6907, %v7260
        %v7262 = vpop.f32.mrf.mxu0
        %v7263 = vadd.f32 %v6907, %v7262
        %7264 = vmatmul.bf16.gmra.mxu0 %v3077
        %v7265 = vpop.f32.mrf.mxu0
        %v7266 = vadd.f32 %v6907, %v7265
        %v7267 = vpop.f32.mrf.mxu0
        %v7268 = vadd.f32 %v6907, %v7267
        %7269 = vmatmul.bf16.gmra.mxu0 %v3081
        %v7270 = vpop.f32.mrf.mxu0
        %v7271 = vadd.f32 %v6907, %v7270
        %v7272 = vpop.f32.mrf.mxu0
        %v7273 = vadd.f32 %v6907, %v7272
        %7274 = vmatmul.bf16.gmra.mxu0 %v3085
        %v7275 = vpop.f32.mrf.mxu0
        %v7276 = vadd.f32 %v6907, %v7275
        %v7277 = vpop.f32.mrf.mxu0
        %v7278 = vadd.f32 %v6907, %v7277
        %7279 = vmatmul.bf16.gmra.mxu0 %v3089
        %v7280 = vpop.f32.mrf.mxu0
        %v7281 = vadd.f32 %v6907, %v7280
        %v7282 = vpop.f32.mrf.mxu0
        %v7283 = vadd.f32 %v6907, %v7282
        %7284 = vmatmul.bf16.gmra.mxu0 %v3093
        %v7285 = vpop.f32.mrf.mxu0
        %v7286 = vadd.f32 %v6907, %v7285
        %v7287 = vpop.f32.mrf.mxu0
        %v7288 = vadd.f32 %v6907, %v7287
        %7289 = vmatmul.bf16.gmra.mxu0 %v3097
        %v7290 = vpop.f32.mrf.mxu0
        %v7291 = vadd.f32 %v6907, %v7290
        %v7292 = vpop.f32.mrf.mxu0
        %v7293 = vadd.f32 %v6907, %v7292
        %7294 = vmatmul.bf16.gmra.mxu0 %v3101
        %v7295 = vpop.f32.mrf.mxu0
        %v7296 = vadd.f32 %v6907, %v7295
        %v7297 = vpop.f32.mrf.mxu0
        %v7298 = vadd.f32 %v6907, %v7297
        %7299 = vmatmul.bf16.gmra.mxu0 %v3105
        %v7300 = vpop.f32.mrf.mxu0
        %v7301 = vadd.f32 %v6907, %v7300
        %v7302 = vpop.f32.mrf.mxu0
        %v7303 = vadd.f32 %v6907, %v7302
        %7304 = vmatmul.bf16.gmra.mxu0 %v3109
        %v7305 = vpop.f32.mrf.mxu0
        %v7306 = vadd.f32 %v6907, %v7305
        %v7307 = vpop.f32.mrf.mxu0
        %v7308 = vadd.f32 %v6907, %v7307
        %7309 = vmatmul.bf16.gmra.mxu0 %v3113
        %v7310 = vpop.f32.mrf.mxu0
        %v7311 = vadd.f32 %v6907, %v7310
        %v7312 = vpop.f32.mrf.mxu0
        %v7313 = vadd.f32 %v6907, %v7312
        %7314 = vmatmul.bf16.gmra.mxu0 %v3117
        %v7315 = vpop.f32.mrf.mxu0
        %v7316 = vadd.f32 %v6907, %v7315
        %v7317 = vpop.f32.mrf.mxu0
        %v7318 = vadd.f32 %v6907, %v7317
        %7319 = vdwg.mxu0
        %7320 = vmatpush.bf16.msra.mxu0 %v7133
        %7321 = vmatpush.bf16.msra.mxu0 %v7131
        %7322 = vmatpush.bf16.msra.mxu0 %v7129
        %7323 = vmatpush.bf16.msra.mxu0 %v7127
        %7324 = vmatpush.bf16.msra.mxu0 %v7125
        %7325 = vmatpush.bf16.msra.mxu0 %v7123
        %7326 = vmatpush.bf16.msra.mxu0 %v7121
        %7327 = vmatpush.bf16.msra.mxu0 %v7119
        %7328 = vmatmul.bf16.gmra.mxu0 %v3058
        %v7329 = vpop.f32.mrf.mxu0
        %v7330 = vadd.f32 %v7241, %v7329
        %v7331 = vpop.f32.mrf.mxu0
        %v7332 = vadd.f32 %v7243, %v7331
        %7333 = vmatmul.bf16.gmra.mxu0 %v3062
        %v7334 = vpop.f32.mrf.mxu0
        %v7335 = vadd.f32 %v7246, %v7334
        %v7336 = vpop.f32.mrf.mxu0
        %v7337 = vadd.f32 %v7248, %v7336
        %7338 = vmatmul.bf16.gmra.mxu0 %v3066
        %v7339 = vpop.f32.mrf.mxu0
        %v7340 = vadd.f32 %v7251, %v7339
        %v7341 = vpop.f32.mrf.mxu0
        %v7342 = vadd.f32 %v7253, %v7341
        %7343 = vmatmul.bf16.gmra.mxu0 %v3070
        %v7344 = vpop.f32.mrf.mxu0
        %v7345 = vadd.f32 %v7256, %v7344
        %v7346 = vpop.f32.mrf.mxu0
        %v7347 = vadd.f32 %v7258, %v7346
        %7348 = vmatmul.bf16.gmra.mxu0 %v3074
        %v7349 = vpop.f32.mrf.mxu0
        %v7350 = vadd.f32 %v7261, %v7349
        %v7351 = vpop.f32.mrf.mxu0
        %v7352 = vadd.f32 %v7263, %v7351
        %7353 = vmatmul.bf16.gmra.mxu0 %v3078
        %v7354 = vpop.f32.mrf.mxu0
        %v7355 = vadd.f32 %v7266, %v7354
        %v7356 = vpop.f32.mrf.mxu0
        %v7357 = vadd.f32 %v7268, %v7356
        %7358 = vmatmul.bf16.gmra.mxu0 %v3082
        %v7359 = vpop.f32.mrf.mxu0
        %v7360 = vadd.f32 %v7271, %v7359
        %v7361 = vpop.f32.mrf.mxu0
        %v7362 = vadd.f32 %v7273, %v7361
        %7363 = vmatmul.bf16.gmra.mxu0 %v3086
        %v7364 = vpop.f32.mrf.mxu0
        %v7365 = vadd.f32 %v7276, %v7364
        %v7366 = vpop.f32.mrf.mxu0
        %v7367 = vadd.f32 %v7278, %v7366
        %7368 = vmatmul.bf16.gmra.mxu0 %v3090
        %v7369 = vpop.f32.mrf.mxu0
        %v7370 = vadd.f32 %v7281, %v7369
        %v7371 = vpop.f32.mrf.mxu0
        %v7372 = vadd.f32 %v7283, %v7371
        %7373 = vmatmul.bf16.gmra.mxu0 %v3094
        %v7374 = vpop.f32.mrf.mxu0
        %v7375 = vadd.f32 %v7286, %v7374
        %v7376 = vpop.f32.mrf.mxu0
        %v7377 = vadd.f32 %v7288, %v7376
        %7378 = vmatmul.bf16.gmra.mxu0 %v3098
        %v7379 = vpop.f32.mrf.mxu0
        %v7380 = vadd.f32 %v7291, %v7379
        %v7381 = vpop.f32.mrf.mxu0
        %v7382 = vadd.f32 %v7293, %v7381
        %7383 = vmatmul.bf16.gmra.mxu0 %v3102
        %v7384 = vpop.f32.mrf.mxu0
        %v7385 = vadd.f32 %v7296, %v7384
        %v7386 = vpop.f32.mrf.mxu0
        %v7387 = vadd.f32 %v7298, %v7386
        %7388 = vmatmul.bf16.gmra.mxu0 %v3106
        %v7389 = vpop.f32.mrf.mxu0
        %v7390 = vadd.f32 %v7301, %v7389
        %v7391 = vpop.f32.mrf.mxu0
        %v7392 = vadd.f32 %v7303, %v7391
        %7393 = vmatmul.bf16.gmra.mxu0 %v3110
        %v7394 = vpop.f32.mrf.mxu0
        %v7395 = vadd.f32 %v7306, %v7394
        %v7396 = vpop.f32.mrf.mxu0
        %v7397 = vadd.f32 %v7308, %v7396
        %7398 = vmatmul.bf16.gmra.mxu0 %v3114
        %v7399 = vpop.f32.mrf.mxu0
        %v7400 = vadd.f32 %v7311, %v7399
        %v7401 = vpop.f32.mrf.mxu0
        %v7402 = vadd.f32 %v7313, %v7401
        %7403 = vmatmul.bf16.gmra.mxu0 %v3118
        %v7404 = vpop.f32.mrf.mxu0
        %v7405 = vadd.f32 %v7316, %v7404
        %v7406 = vpop.f32.mrf.mxu0
        %v7407 = vadd.f32 %v7318, %v7406
        %7408 = vdwg.mxu0
        %7409 = vmatpush.bf16.msra.mxu0 %v7149
        %7410 = vmatpush.bf16.msra.mxu0 %v7147
        %7411 = vmatpush.bf16.msra.mxu0 %v7145
        %7412 = vmatpush.bf16.msra.mxu0 %v7143
        %7413 = vmatpush.bf16.msra.mxu0 %v7141
        %7414 = vmatpush.bf16.msra.mxu0 %v7139
        %7415 = vmatpush.bf16.msra.mxu0 %v7137
        %7416 = vmatpush.bf16.msra.mxu0 %v7135
        %7417 = vmatmul.bf16.gmra.mxu0 %v3059
        %v7418 = vpop.f32.mrf.mxu0
        %v7419 = vadd.f32 %v7330, %v7418
        %v7420 = vpop.f32.mrf.mxu0
        %v7421 = vadd.f32 %v7332, %v7420
        %7422 = vmatmul.bf16.gmra.mxu0 %v3063
        %v7423 = vpop.f32.mrf.mxu0
        %v7424 = vadd.f32 %v7335, %v7423
        %v7425 = vpop.f32.mrf.mxu0
        %v7426 = vadd.f32 %v7337, %v7425
        %7427 = vmatmul.bf16.gmra.mxu0 %v3067
        %v7428 = vpop.f32.mrf.mxu0
        %v7429 = vadd.f32 %v7340, %v7428
        %v7430 = vpop.f32.mrf.mxu0
        %v7431 = vadd.f32 %v7342, %v7430
        %7432 = vmatmul.bf16.gmra.mxu0 %v3071
        %v7433 = vpop.f32.mrf.mxu0
        %v7434 = vadd.f32 %v7345, %v7433
        %v7435 = vpop.f32.mrf.mxu0
        %v7436 = vadd.f32 %v7347, %v7435
        %7437 = vmatmul.bf16.gmra.mxu0 %v3075
        %v7438 = vpop.f32.mrf.mxu0
        %v7439 = vadd.f32 %v7350, %v7438
        %v7440 = vpop.f32.mrf.mxu0
        %v7441 = vadd.f32 %v7352, %v7440
        %7442 = vmatmul.bf16.gmra.mxu0 %v3079
        %v7443 = vpop.f32.mrf.mxu0
        %v7444 = vadd.f32 %v7355, %v7443
        %v7445 = vpop.f32.mrf.mxu0
        %v7446 = vadd.f32 %v7357, %v7445
        %7447 = vmatmul.bf16.gmra.mxu0 %v3083
        %v7448 = vpop.f32.mrf.mxu0
        %v7449 = vadd.f32 %v7360, %v7448
        %v7450 = vpop.f32.mrf.mxu0
        %v7451 = vadd.f32 %v7362, %v7450
        %7452 = vmatmul.bf16.gmra.mxu0 %v3087
        %v7453 = vpop.f32.mrf.mxu0
        %v7454 = vadd.f32 %v7365, %v7453
        %v7455 = vpop.f32.mrf.mxu0
        %v7456 = vadd.f32 %v7367, %v7455
        %7457 = vmatmul.bf16.gmra.mxu0 %v3091
        %v7458 = vpop.f32.mrf.mxu0
        %v7459 = vadd.f32 %v7370, %v7458
        %v7460 = vpop.f32.mrf.mxu0
        %v7461 = vadd.f32 %v7372, %v7460
        %7462 = vmatmul.bf16.gmra.mxu0 %v3095
        %v7463 = vpop.f32.mrf.mxu0
        %v7464 = vadd.f32 %v7375, %v7463
        %v7465 = vpop.f32.mrf.mxu0
        %v7466 = vadd.f32 %v7377, %v7465
        %7467 = vmatmul.bf16.gmra.mxu0 %v3099
        %v7468 = vpop.f32.mrf.mxu0
        %v7469 = vadd.f32 %v7380, %v7468
        %v7470 = vpop.f32.mrf.mxu0
        %v7471 = vadd.f32 %v7382, %v7470
        %7472 = vmatmul.bf16.gmra.mxu0 %v3103
        %v7473 = vpop.f32.mrf.mxu0
        %v7474 = vadd.f32 %v7385, %v7473
        %v7475 = vpop.f32.mrf.mxu0
        %v7476 = vadd.f32 %v7387, %v7475
        %7477 = vmatmul.bf16.gmra.mxu0 %v3107
        %v7478 = vpop.f32.mrf.mxu0
        %v7479 = vadd.f32 %v7390, %v7478
        %v7480 = vpop.f32.mrf.mxu0
        %v7481 = vadd.f32 %v7392, %v7480
        %7482 = vmatmul.bf16.gmra.mxu0 %v3111
        %v7483 = vpop.f32.mrf.mxu0
        %v7484 = vadd.f32 %v7395, %v7483
        %v7485 = vpop.f32.mrf.mxu0
        %v7486 = vadd.f32 %v7397, %v7485
        %7487 = vmatmul.bf16.gmra.mxu0 %v3115
        %v7488 = vpop.f32.mrf.mxu0
        %v7489 = vadd.f32 %v7400, %v7488
        %v7490 = vpop.f32.mrf.mxu0
        %v7491 = vadd.f32 %v7402, %v7490
        %7492 = vmatmul.bf16.gmra.mxu0 %v3119
        %v7493 = vpop.f32.mrf.mxu0
        %v7494 = vadd.f32 %v7405, %v7493
        %v7495 = vpop.f32.mrf.mxu0
        %v7496 = vadd.f32 %v7407, %v7495
        %7497 = vdwg.mxu0
        %7498 = vmatpush.bf16.msra.mxu0 %v7165
        %7499 = vmatpush.bf16.msra.mxu0 %v7163
        %7500 = vmatpush.bf16.msra.mxu0 %v7161
        %7501 = vmatpush.bf16.msra.mxu0 %v7159
        %7502 = vmatpush.bf16.msra.mxu0 %v7157
        %7503 = vmatpush.bf16.msra.mxu0 %v7155
        %7504 = vmatpush.bf16.msra.mxu0 %v7153
        %7505 = vmatpush.bf16.msra.mxu0 %v7151
        %7506 = vmatmul.bf16.gmra.mxu0 %v3060
        %v7507 = vpop.f32.mrf.mxu0
        %v7508 = vadd.f32 %v7419, %v7507
        %v7509 = vpop.f32.mrf.mxu0
        %v7510 = vadd.f32 %v7421, %v7509
        %7511 = vmatmul.bf16.gmra.mxu0 %v3064
        %v7512 = vpop.f32.mrf.mxu0
        %v7513 = vadd.f32 %v7424, %v7512
        %v7514 = vpop.f32.mrf.mxu0
        %v7515 = vadd.f32 %v7426, %v7514
        %7516 = vmatmul.bf16.gmra.mxu0 %v3068
        %v7517 = vpop.f32.mrf.mxu0
        %v7518 = vadd.f32 %v7429, %v7517
        %v7519 = vpop.f32.mrf.mxu0
        %v7520 = vadd.f32 %v7431, %v7519
        %7521 = vmatmul.bf16.gmra.mxu0 %v3072
        %v7522 = vpop.f32.mrf.mxu0
        %v7523 = vadd.f32 %v7434, %v7522
        %v7524 = vpop.f32.mrf.mxu0
        %v7525 = vadd.f32 %v7436, %v7524
        %7526 = vmatmul.bf16.gmra.mxu0 %v3076
        %v7527 = vpop.f32.mrf.mxu0
        %v7528 = vadd.f32 %v7439, %v7527
        %v7529 = vpop.f32.mrf.mxu0
        %v7530 = vadd.f32 %v7441, %v7529
        %7531 = vmatmul.bf16.gmra.mxu0 %v3080
        %v7532 = vpop.f32.mrf.mxu0
        %v7533 = vadd.f32 %v7444, %v7532
        %v7534 = vpop.f32.mrf.mxu0
        %v7535 = vadd.f32 %v7446, %v7534
        %7536 = vmatmul.bf16.gmra.mxu0 %v3084
        %v7537 = vpop.f32.mrf.mxu0
        %v7538 = vadd.f32 %v7449, %v7537
        %v7539 = vpop.f32.mrf.mxu0
        %v7540 = vadd.f32 %v7451, %v7539
        %7541 = vmatmul.bf16.gmra.mxu0 %v3088
        %v7542 = vpop.f32.mrf.mxu0
        %v7543 = vadd.f32 %v7454, %v7542
        %v7544 = vpop.f32.mrf.mxu0
        %v7545 = vadd.f32 %v7456, %v7544
        %7546 = vmatmul.bf16.gmra.mxu0 %v3092
        %v7547 = vpop.f32.mrf.mxu0
        %v7548 = vadd.f32 %v7459, %v7547
        %v7549 = vpop.f32.mrf.mxu0
        %v7550 = vadd.f32 %v7461, %v7549
        %7551 = vmatmul.bf16.gmra.mxu0 %v3096
        %v7552 = vpop.f32.mrf.mxu0
        %v7553 = vadd.f32 %v7464, %v7552
        %v7554 = vpop.f32.mrf.mxu0
        %v7555 = vadd.f32 %v7466, %v7554
        %7556 = vmatmul.bf16.gmra.mxu0 %v3100
        %v7557 = vpop.f32.mrf.mxu0
        %v7558 = vadd.f32 %v7469, %v7557
        %v7559 = vpop.f32.mrf.mxu0
        %v7560 = vadd.f32 %v7471, %v7559
        %7561 = vmatmul.bf16.gmra.mxu0 %v3104
        %v7562 = vpop.f32.mrf.mxu0
        %v7563 = vadd.f32 %v7474, %v7562
        %v7564 = vpop.f32.mrf.mxu0
        %v7565 = vadd.f32 %v7476, %v7564
        %7566 = vmatmul.bf16.gmra.mxu0 %v3108
        %v7567 = vpop.f32.mrf.mxu0
        %v7568 = vadd.f32 %v7479, %v7567
        %v7569 = vpop.f32.mrf.mxu0
        %v7570 = vadd.f32 %v7481, %v7569
        %7571 = vmatmul.bf16.gmra.mxu0 %v3112
        %v7572 = vpop.f32.mrf.mxu0
        %v7573 = vadd.f32 %v7484, %v7572
        %v7574 = vpop.f32.mrf.mxu0
        %v7575 = vadd.f32 %v7486, %v7574
        %7576 = vmatmul.bf16.gmra.mxu0 %v3116
        %v7577 = vpop.f32.mrf.mxu0
        %v7578 = vadd.f32 %v7489, %v7577
        %v7579 = vpop.f32.mrf.mxu0
        %v7580 = vadd.f32 %v7491, %v7579
        %7581 = vmatmul.bf16.gmra.mxu0 %v3120
        %v7582 = vpop.f32.mrf.mxu0
        %v7583 = vadd.f32 %v7494, %v7582
        %v7584 = vpop.f32.mrf.mxu0
        %v7585 = vadd.f32 %v7496, %v7584
        %7586 = vdwg.mxu0
        %7587 = vmatpush.bf16.msra.mxu0 %v7118
        %7588 = vmatpush.bf16.msra.mxu0 %v7116
        %7589 = vmatpush.bf16.msra.mxu0 %v7114
        %7590 = vmatpush.bf16.msra.mxu0 %v7112
        %7591 = vmatpush.bf16.msra.mxu0 %v7110
        %7592 = vmatpush.bf16.msra.mxu0 %v7108
        %7593 = vmatpush.bf16.msra.mxu0 %v7106
        %7594 = vmatpush.bf16.msra.mxu0 %v7104
        %7595 = vmatmul.bf16.gmra.mxu0 %v3057
        %v7596 = vpop.f32.mrf.mxu0
        %v7597 = vadd.f32 %v6908, %v7596
        %v7598 = vpop.f32.mrf.mxu0
        %v7599 = vadd.f32 %v6908, %v7598
        %7600 = vmatmul.bf16.gmra.mxu0 %v3061
        %v7601 = vpop.f32.mrf.mxu0
        %v7602 = vadd.f32 %v6908, %v7601
        %v7603 = vpop.f32.mrf.mxu0
        %v7604 = vadd.f32 %v6908, %v7603
        %7605 = vmatmul.bf16.gmra.mxu0 %v3065
        %v7606 = vpop.f32.mrf.mxu0
        %v7607 = vadd.f32 %v6908, %v7606
        %v7608 = vpop.f32.mrf.mxu0
        %v7609 = vadd.f32 %v6908, %v7608
        %7610 = vmatmul.bf16.gmra.mxu0 %v3069
        %v7611 = vpop.f32.mrf.mxu0
        %v7612 = vadd.f32 %v6908, %v7611
        %v7613 = vpop.f32.mrf.mxu0
        %v7614 = vadd.f32 %v6908, %v7613
        %7615 = vmatmul.bf16.gmra.mxu0 %v3073
        %v7616 = vpop.f32.mrf.mxu0
        %v7617 = vadd.f32 %v6908, %v7616
        %v7618 = vpop.f32.mrf.mxu0
        %v7619 = vadd.f32 %v6908, %v7618
        %7620 = vmatmul.bf16.gmra.mxu0 %v3077
        %v7621 = vpop.f32.mrf.mxu0
        %v7622 = vadd.f32 %v6908, %v7621
        %v7623 = vpop.f32.mrf.mxu0
        %v7624 = vadd.f32 %v6908, %v7623
        %7625 = vmatmul.bf16.gmra.mxu0 %v3081
        %v7626 = vpop.f32.mrf.mxu0
        %v7627 = vadd.f32 %v6908, %v7626
        %v7628 = vpop.f32.mrf.mxu0
        %v7629 = vadd.f32 %v6908, %v7628
        %7630 = vmatmul.bf16.gmra.mxu0 %v3085
        %v7631 = vpop.f32.mrf.mxu0
        %v7632 = vadd.f32 %v6908, %v7631
        %v7633 = vpop.f32.mrf.mxu0
        %v7634 = vadd.f32 %v6908, %v7633
        %7635 = vmatmul.bf16.gmra.mxu0 %v3089
        %v7636 = vpop.f32.mrf.mxu0
        %v7637 = vadd.f32 %v6908, %v7636
        %v7638 = vpop.f32.mrf.mxu0
        %v7639 = vadd.f32 %v6908, %v7638
        %7640 = vmatmul.bf16.gmra.mxu0 %v3093
        %v7641 = vpop.f32.mrf.mxu0
        %v7642 = vadd.f32 %v6908, %v7641
        %v7643 = vpop.f32.mrf.mxu0
        %v7644 = vadd.f32 %v6908, %v7643
        %7645 = vmatmul.bf16.gmra.mxu0 %v3097
        %v7646 = vpop.f32.mrf.mxu0
        %v7647 = vadd.f32 %v6908, %v7646
        %v7648 = vpop.f32.mrf.mxu0
        %v7649 = vadd.f32 %v6908, %v7648
        %7650 = vmatmul.bf16.gmra.mxu0 %v3101
        %v7651 = vpop.f32.mrf.mxu0
        %v7652 = vadd.f32 %v6908, %v7651
        %v7653 = vpop.f32.mrf.mxu0
        %v7654 = vadd.f32 %v6908, %v7653
        %7655 = vmatmul.bf16.gmra.mxu0 %v3105
        %v7656 = vpop.f32.mrf.mxu0
        %v7657 = vadd.f32 %v6908, %v7656
        %v7658 = vpop.f32.mrf.mxu0
        %v7659 = vadd.f32 %v6908, %v7658
        %7660 = vmatmul.bf16.gmra.mxu0 %v3109
        %v7661 = vpop.f32.mrf.mxu0
        %v7662 = vadd.f32 %v6908, %v7661
        %v7663 = vpop.f32.mrf.mxu0
        %v7664 = vadd.f32 %v6908, %v7663
        %7665 = vmatmul.bf16.gmra.mxu0 %v3113
        %v7666 = vpop.f32.mrf.mxu0
        %v7667 = vadd.f32 %v6908, %v7666
        %v7668 = vpop.f32.mrf.mxu0
        %v7669 = vadd.f32 %v6908, %v7668
        %7670 = vmatmul.bf16.gmra.mxu0 %v3117
        %v7671 = vpop.f32.mrf.mxu0
        %v7672 = vadd.f32 %v6908, %v7671
        %v7673 = vpop.f32.mrf.mxu0
        %v7674 = vadd.f32 %v6908, %v7673
        %7675 = vdwg.mxu0
        %7676 = vmatpush.bf16.msra.mxu0 %v7134
        %7677 = vmatpush.bf16.msra.mxu0 %v7132
        %7678 = vmatpush.bf16.msra.mxu0 %v7130
        %7679 = vmatpush.bf16.msra.mxu0 %v7128
        %7680 = vmatpush.bf16.msra.mxu0 %v7126
        %7681 = vmatpush.bf16.msra.mxu0 %v7124
        %7682 = vmatpush.bf16.msra.mxu0 %v7122
        %7683 = vmatpush.bf16.msra.mxu0 %v7120
        %7684 = vmatmul.bf16.gmra.mxu0 %v3058
        %v7685 = vpop.f32.mrf.mxu0
        %v7686 = vadd.f32 %v7597, %v7685
        %v7687 = vpop.f32.mrf.mxu0
        %v7688 = vadd.f32 %v7599, %v7687
        %7689 = vmatmul.bf16.gmra.mxu0 %v3062
        %v7690 = vpop.f32.mrf.mxu0
        %v7691 = vadd.f32 %v7602, %v7690
        %v7692 = vpop.f32.mrf.mxu0
        %v7693 = vadd.f32 %v7604, %v7692
        %7694 = vmatmul.bf16.gmra.mxu0 %v3066
        %v7695 = vpop.f32.mrf.mxu0
        %v7696 = vadd.f32 %v7607, %v7695
        %v7697 = vpop.f32.mrf.mxu0
        %v7698 = vadd.f32 %v7609, %v7697
        %7699 = vmatmul.bf16.gmra.mxu0 %v3070
        %v7700 = vpop.f32.mrf.mxu0
        %v7701 = vadd.f32 %v7612, %v7700
        %v7702 = vpop.f32.mrf.mxu0
        %v7703 = vadd.f32 %v7614, %v7702
        %7704 = vmatmul.bf16.gmra.mxu0 %v3074
        %v7705 = vpop.f32.mrf.mxu0
        %v7706 = vadd.f32 %v7617, %v7705
        %v7707 = vpop.f32.mrf.mxu0
        %v7708 = vadd.f32 %v7619, %v7707
        %7709 = vmatmul.bf16.gmra.mxu0 %v3078
        %v7710 = vpop.f32.mrf.mxu0
        %v7711 = vadd.f32 %v7622, %v7710
        %v7712 = vpop.f32.mrf.mxu0
        %v7713 = vadd.f32 %v7624, %v7712
        %7714 = vmatmul.bf16.gmra.mxu0 %v3082
        %v7715 = vpop.f32.mrf.mxu0
        %v7716 = vadd.f32 %v7627, %v7715
        %v7717 = vpop.f32.mrf.mxu0
        %v7718 = vadd.f32 %v7629, %v7717
        %7719 = vmatmul.bf16.gmra.mxu0 %v3086
        %v7720 = vpop.f32.mrf.mxu0
        %v7721 = vadd.f32 %v7632, %v7720
        %v7722 = vpop.f32.mrf.mxu0
        %v7723 = vadd.f32 %v7634, %v7722
        %7724 = vmatmul.bf16.gmra.mxu0 %v3090
        %v7725 = vpop.f32.mrf.mxu0
        %v7726 = vadd.f32 %v7637, %v7725
        %v7727 = vpop.f32.mrf.mxu0
        %v7728 = vadd.f32 %v7639, %v7727
        %7729 = vmatmul.bf16.gmra.mxu0 %v3094
        %v7730 = vpop.f32.mrf.mxu0
        %v7731 = vadd.f32 %v7642, %v7730
        %v7732 = vpop.f32.mrf.mxu0
        %v7733 = vadd.f32 %v7644, %v7732
        %7734 = vmatmul.bf16.gmra.mxu0 %v3098
        %v7735 = vpop.f32.mrf.mxu0
        %v7736 = vadd.f32 %v7647, %v7735
        %v7737 = vpop.f32.mrf.mxu0
        %v7738 = vadd.f32 %v7649, %v7737
        %7739 = vmatmul.bf16.gmra.mxu0 %v3102
        %v7740 = vpop.f32.mrf.mxu0
        %v7741 = vadd.f32 %v7652, %v7740
        %v7742 = vpop.f32.mrf.mxu0
        %v7743 = vadd.f32 %v7654, %v7742
        %7744 = vmatmul.bf16.gmra.mxu0 %v3106
        %v7745 = vpop.f32.mrf.mxu0
        %v7746 = vadd.f32 %v7657, %v7745
        %v7747 = vpop.f32.mrf.mxu0
        %v7748 = vadd.f32 %v7659, %v7747
        %7749 = vmatmul.bf16.gmra.mxu0 %v3110
        %v7750 = vpop.f32.mrf.mxu0
        %v7751 = vadd.f32 %v7662, %v7750
        %v7752 = vpop.f32.mrf.mxu0
        %v7753 = vadd.f32 %v7664, %v7752
        %7754 = vmatmul.bf16.gmra.mxu0 %v3114
        %v7755 = vpop.f32.mrf.mxu0
        %v7756 = vadd.f32 %v7667, %v7755
        %v7757 = vpop.f32.mrf.mxu0
        %v7758 = vadd.f32 %v7669, %v7757
        %7759 = vmatmul.bf16.gmra.mxu0 %v3118
        %v7760 = vpop.f32.mrf.mxu0
        %v7761 = vadd.f32 %v7672, %v7760
        %v7762 = vpop.f32.mrf.mxu0
        %v7763 = vadd.f32 %v7674, %v7762
        %7764 = vdwg.mxu0
        %7765 = vmatpush.bf16.msra.mxu0 %v7150
        %7766 = vmatpush.bf16.msra.mxu0 %v7148
        %7767 = vmatpush.bf16.msra.mxu0 %v7146
        %7768 = vmatpush.bf16.msra.mxu0 %v7144
        %7769 = vmatpush.bf16.msra.mxu0 %v7142
        %7770 = vmatpush.bf16.msra.mxu0 %v7140
        %7771 = vmatpush.bf16.msra.mxu0 %v7138
        %7772 = vmatpush.bf16.msra.mxu0 %v7136
        %7773 = vmatmul.bf16.gmra.mxu0 %v3059
        %v7774 = vpop.f32.mrf.mxu0
        %v7775 = vadd.f32 %v7686, %v7774
        %v7776 = vpop.f32.mrf.mxu0
        %v7777 = vadd.f32 %v7688, %v7776
        %7778 = vmatmul.bf16.gmra.mxu0 %v3063
        %v7779 = vpop.f32.mrf.mxu0
        %v7780 = vadd.f32 %v7691, %v7779
        %v7781 = vpop.f32.mrf.mxu0
        %v7782 = vadd.f32 %v7693, %v7781
        %7783 = vmatmul.bf16.gmra.mxu0 %v3067
        %v7784 = vpop.f32.mrf.mxu0
        %v7785 = vadd.f32 %v7696, %v7784
        %v7786 = vpop.f32.mrf.mxu0
        %v7787 = vadd.f32 %v7698, %v7786
        %7788 = vmatmul.bf16.gmra.mxu0 %v3071
        %v7789 = vpop.f32.mrf.mxu0
        %v7790 = vadd.f32 %v7701, %v7789
        %v7791 = vpop.f32.mrf.mxu0
        %v7792 = vadd.f32 %v7703, %v7791
        %7793 = vmatmul.bf16.gmra.mxu0 %v3075
        %v7794 = vpop.f32.mrf.mxu0
        %v7795 = vadd.f32 %v7706, %v7794
        %v7796 = vpop.f32.mrf.mxu0
        %v7797 = vadd.f32 %v7708, %v7796
        %7798 = vmatmul.bf16.gmra.mxu0 %v3079
        %v7799 = vpop.f32.mrf.mxu0
        %v7800 = vadd.f32 %v7711, %v7799
        %v7801 = vpop.f32.mrf.mxu0
        %v7802 = vadd.f32 %v7713, %v7801
        %7803 = vmatmul.bf16.gmra.mxu0 %v3083
        %v7804 = vpop.f32.mrf.mxu0
        %v7805 = vadd.f32 %v7716, %v7804
        %v7806 = vpop.f32.mrf.mxu0
        %v7807 = vadd.f32 %v7718, %v7806
        %7808 = vmatmul.bf16.gmra.mxu0 %v3087
        %v7809 = vpop.f32.mrf.mxu0
        %v7810 = vadd.f32 %v7721, %v7809
        %v7811 = vpop.f32.mrf.mxu0
        %v7812 = vadd.f32 %v7723, %v7811
        %7813 = vmatmul.bf16.gmra.mxu0 %v3091
        %v7814 = vpop.f32.mrf.mxu0
        %v7815 = vadd.f32 %v7726, %v7814
        %v7816 = vpop.f32.mrf.mxu0
        %v7817 = vadd.f32 %v7728, %v7816
        %7818 = vmatmul.bf16.gmra.mxu0 %v3095
        %v7819 = vpop.f32.mrf.mxu0
        %v7820 = vadd.f32 %v7731, %v7819
        %v7821 = vpop.f32.mrf.mxu0
        %v7822 = vadd.f32 %v7733, %v7821
        %7823 = vmatmul.bf16.gmra.mxu0 %v3099
        %v7824 = vpop.f32.mrf.mxu0
        %v7825 = vadd.f32 %v7736, %v7824
        %v7826 = vpop.f32.mrf.mxu0
        %v7827 = vadd.f32 %v7738, %v7826
        %7828 = vmatmul.bf16.gmra.mxu0 %v3103
        %v7829 = vpop.f32.mrf.mxu0
        %v7830 = vadd.f32 %v7741, %v7829
        %v7831 = vpop.f32.mrf.mxu0
        %v7832 = vadd.f32 %v7743, %v7831
        %7833 = vmatmul.bf16.gmra.mxu0 %v3107
        %v7834 = vpop.f32.mrf.mxu0
        %v7835 = vadd.f32 %v7746, %v7834
        %v7836 = vpop.f32.mrf.mxu0
        %v7837 = vadd.f32 %v7748, %v7836
        %7838 = vmatmul.bf16.gmra.mxu0 %v3111
        %v7839 = vpop.f32.mrf.mxu0
        %v7840 = vadd.f32 %v7751, %v7839
        %v7841 = vpop.f32.mrf.mxu0
        %v7842 = vadd.f32 %v7753, %v7841
        %7843 = vmatmul.bf16.gmra.mxu0 %v3115
        %v7844 = vpop.f32.mrf.mxu0
        %v7845 = vadd.f32 %v7756, %v7844
        %v7846 = vpop.f32.mrf.mxu0
        %v7847 = vadd.f32 %v7758, %v7846
        %7848 = vmatmul.bf16.gmra.mxu0 %v3119
        %v7849 = vpop.f32.mrf.mxu0
        %v7850 = vadd.f32 %v7761, %v7849
        %v7851 = vpop.f32.mrf.mxu0
        %v7852 = vadd.f32 %v7763, %v7851
        %7853 = vdwg.mxu0
        %7854 = vmatpush.bf16.msra.mxu0 %v7166
        %7855 = vmatpush.bf16.msra.mxu0 %v7164
        %7856 = vmatpush.bf16.msra.mxu0 %v7162
        %7857 = vmatpush.bf16.msra.mxu0 %v7160
        %7858 = vmatpush.bf16.msra.mxu0 %v7158
        %7859 = vmatpush.bf16.msra.mxu0 %v7156
        %7860 = vmatpush.bf16.msra.mxu0 %v7154
        %7861 = vmatpush.bf16.msra.mxu0 %v7152
        %7862 = vmatmul.bf16.gmra.mxu0 %v3060
        %v7863 = vpop.f32.mrf.mxu0
        %v7864 = vadd.f32 %v7775, %v7863
        %v7865 = vpop.f32.mrf.mxu0
        %v7866 = vadd.f32 %v7777, %v7865
        %7867 = vmatmul.bf16.gmra.mxu0 %v3064
        %v7868 = vpop.f32.mrf.mxu0
        %v7869 = vadd.f32 %v7780, %v7868
        %v7870 = vpop.f32.mrf.mxu0
        %v7871 = vadd.f32 %v7782, %v7870
        %7872 = vmatmul.bf16.gmra.mxu0 %v3068
        %v7873 = vpop.f32.mrf.mxu0
        %v7874 = vadd.f32 %v7785, %v7873
        %v7875 = vpop.f32.mrf.mxu0
        %v7876 = vadd.f32 %v7787, %v7875
        %7877 = vmatmul.bf16.gmra.mxu0 %v3072
        %v7878 = vpop.f32.mrf.mxu0
        %v7879 = vadd.f32 %v7790, %v7878
        %v7880 = vpop.f32.mrf.mxu0
        %v7881 = vadd.f32 %v7792, %v7880
        %7882 = vmatmul.bf16.gmra.mxu0 %v3076
        %v7883 = vpop.f32.mrf.mxu0
        %v7884 = vadd.f32 %v7795, %v7883
        %v7885 = vpop.f32.mrf.mxu0
        %v7886 = vadd.f32 %v7797, %v7885
        %7887 = vmatmul.bf16.gmra.mxu0 %v3080
        %v7888 = vpop.f32.mrf.mxu0
        %v7889 = vadd.f32 %v7800, %v7888
        %v7890 = vpop.f32.mrf.mxu0
        %v7891 = vadd.f32 %v7802, %v7890
        %7892 = vmatmul.bf16.gmra.mxu0 %v3084
        %v7893 = vpop.f32.mrf.mxu0
        %v7894 = vadd.f32 %v7805, %v7893
        %v7895 = vpop.f32.mrf.mxu0
        %v7896 = vadd.f32 %v7807, %v7895
        %7897 = vmatmul.bf16.gmra.mxu0 %v3088
        %v7898 = vpop.f32.mrf.mxu0
        %v7899 = vadd.f32 %v7810, %v7898
        %v7900 = vpop.f32.mrf.mxu0
        %v7901 = vadd.f32 %v7812, %v7900
        %7902 = vmatmul.bf16.gmra.mxu0 %v3092
        %v7903 = vpop.f32.mrf.mxu0
        %v7904 = vadd.f32 %v7815, %v7903
        %v7905 = vpop.f32.mrf.mxu0
        %v7906 = vadd.f32 %v7817, %v7905
        %7907 = vmatmul.bf16.gmra.mxu0 %v3096
        %v7908 = vpop.f32.mrf.mxu0
        %v7909 = vadd.f32 %v7820, %v7908
        %v7910 = vpop.f32.mrf.mxu0
        %v7911 = vadd.f32 %v7822, %v7910
        %7912 = vmatmul.bf16.gmra.mxu0 %v3100
        %v7913 = vpop.f32.mrf.mxu0
        %v7914 = vadd.f32 %v7825, %v7913
        %v7915 = vpop.f32.mrf.mxu0
        %v7916 = vadd.f32 %v7827, %v7915
        %7917 = vmatmul.bf16.gmra.mxu0 %v3104
        %v7918 = vpop.f32.mrf.mxu0
        %v7919 = vadd.f32 %v7830, %v7918
        %v7920 = vpop.f32.mrf.mxu0
        %v7921 = vadd.f32 %v7832, %v7920
        %7922 = vmatmul.bf16.gmra.mxu0 %v3108
        %v7923 = vpop.f32.mrf.mxu0
        %v7924 = vadd.f32 %v7835, %v7923
        %v7925 = vpop.f32.mrf.mxu0
        %v7926 = vadd.f32 %v7837, %v7925
        %7927 = vmatmul.bf16.gmra.mxu0 %v3112
        %v7928 = vpop.f32.mrf.mxu0
        %v7929 = vadd.f32 %v7840, %v7928
        %v7930 = vpop.f32.mrf.mxu0
        %v7931 = vadd.f32 %v7842, %v7930
        %7932 = vmatmul.bf16.gmra.mxu0 %v3116
        %v7933 = vpop.f32.mrf.mxu0
        %v7934 = vadd.f32 %v7845, %v7933
        %v7935 = vpop.f32.mrf.mxu0
        %v7936 = vadd.f32 %v7847, %v7935
        %7937 = vmatmul.bf16.gmra.mxu0 %v3120
        %v7938 = vpop.f32.mrf.mxu0
        %v7939 = vadd.f32 %v7850, %v7938
        %v7940 = vpop.f32.mrf.mxu0
        %v7941 = vadd.f32 %v7852, %v7940
        %7942 = vdwg.mxu0
        %v7943 = vmax.f32 %v7508, 0.0
        %v7944 = vmax.f32 %v7864, 0.0
        %v7945 = vmax.f32 %v7510, 0.0
        %v7946 = vmax.f32 %v7866, 0.0
        %v7947 = vmax.f32 %v7513, 0.0
        %v7948 = vmax.f32 %v7869, 0.0
        %v7949 = vmax.f32 %v7515, 0.0
        %v7950 = vmax.f32 %v7871, 0.0
        %v7951 = vmax.f32 %v7518, 0.0
        %v7952 = vmax.f32 %v7874, 0.0
        %v7953 = vmax.f32 %v7520, 0.0
        %v7954 = vmax.f32 %v7876, 0.0
        %v7955 = vmax.f32 %v7523, 0.0
        %v7956 = vmax.f32 %v7879, 0.0
        %v7957 = vmax.f32 %v7525, 0.0
        %v7958 = vmax.f32 %v7881, 0.0
        %v7959 = vmax.f32 %v7528, 0.0
        %v7960 = vmax.f32 %v7884, 0.0
        %v7961 = vmax.f32 %v7530, 0.0
        %v7962 = vmax.f32 %v7886, 0.0
        %v7963 = vmax.f32 %v7533, 0.0
        %v7964 = vmax.f32 %v7889, 0.0
        %v7965 = vmax.f32 %v7535, 0.0
        %v7966 = vmax.f32 %v7891, 0.0
        %v7967 = vmax.f32 %v7538, 0.0
        %v7968 = vmax.f32 %v7894, 0.0
        %v7969 = vmax.f32 %v7540, 0.0
        %v7970 = vmax.f32 %v7896, 0.0
        %v7971 = vmax.f32 %v7543, 0.0
        %v7972 = vmax.f32 %v7899, 0.0
        %v7973 = vmax.f32 %v7545, 0.0
        %v7974 = vmax.f32 %v7901, 0.0
        %v7975 = vmax.f32 %v7548, 0.0
        %v7976 = vmax.f32 %v7904, 0.0
        %v7977 = vmax.f32 %v7550, 0.0
        %v7978 = vmax.f32 %v7906, 0.0
        %v7979 = vmax.f32 %v7553, 0.0
        %v7980 = vmax.f32 %v7909, 0.0
        %v7981 = vmax.f32 %v7555, 0.0
        %v7982 = vmax.f32 %v7911, 0.0
        %v7983 = vmax.f32 %v7558, 0.0
        %v7984 = vmax.f32 %v7914, 0.0
        %v7985 = vmax.f32 %v7560, 0.0
        %v7986 = vmax.f32 %v7916, 0.0
        %v7987 = vmax.f32 %v7563, 0.0
        %v7988 = vmax.f32 %v7919, 0.0
        %v7989 = vmax.f32 %v7565, 0.0
        %v7990 = vmax.f32 %v7921, 0.0
        %v7991 = vmax.f32 %v7568, 0.0
        %v7992 = vmax.f32 %v7924, 0.0
        %v7993 = vmax.f32 %v7570, 0.0
        %v7994 = vmax.f32 %v7926, 0.0
        %v7995 = vmax.f32 %v7573, 0.0
        %v7996 = vmax.f32 %v7929, 0.0
        %v7997 = vmax.f32 %v7575, 0.0
        %v7998 = vmax.f32 %v7931, 0.0
        %v7999 = vmax.f32 %v7578, 0.0
        %v8000 = vmax.f32 %v7934, 0.0
        %v8001 = vmax.f32 %v7580, 0.0
        %v8002 = vmax.f32 %v7936, 0.0
        %v8003 = vmax.f32 %v7583, 0.0
        %v8004 = vmax.f32 %v7939, 0.0
        %v8005 = vmax.f32 %v7585, 0.0
        %v8006 = vmax.f32 %v7941, 0.0
        %v8007 = vadd.f32 %v7943, %v7945
        %v8008 = vadd.f32 %v8007, %v7947
        %v8009 = vadd.f32 %v8008, %v7949
        %v8010 = vadd.f32 %v8009, %v7951
        %v8011 = vadd.f32 %v8010, %v7953
        %v8012 = vadd.f32 %v8011, %v7955
        %v8013 = vadd.f32 %v8012, %v7957
        %v8014 = vadd.f32 %v8013, %v7959
        %v8015 = vadd.f32 %v8014, %v7961
        %v8016 = vadd.f32 %v8015, %v7963
        %v8017 = vadd.f32 %v8016, %v7965
        %v8018 = vadd.f32 %v8017, %v7967
        %v8019 = vadd.f32 %v8018, %v7969
        %v8020 = vadd.f32 %v8019, %v7971
        %v8021 = vadd.f32 %v8020, %v7973
        %v8022 = vadd.f32 %v8021, %v7975
        %v8023 = vadd.f32 %v8022, %v7977
        %v8024 = vadd.f32 %v8023, %v7979
        %v8025 = vadd.f32 %v8024, %v7981
        %v8026 = vadd.f32 %v8025, %v7983
        %v8027 = vadd.f32 %v8026, %v7985
        %v8028 = vadd.f32 %v8027, %v7987
        %v8029 = vadd.f32 %v8028, %v7989
        %v8030 = vadd.f32 %v8029, %v7991
        %v8031 = vadd.f32 %v8030, %v7993
        %v8032 = vadd.f32 %v8031, %v7995
        %v8033 = vadd.f32 %v8032, %v7997
        %v8034 = vadd.f32 %v8033, %v7999
        %v8035 = vadd.f32 %v8034, %v8001
        %v8036 = vadd.f32 %v8035, %v8003
        %v8037 = vadd.f32 %v8036, %v8005
        %v8038 = vrot.slane %v8037, 4
        %v8039 = vadd.f32 %v8037, %v8038
        %v8040 = vrot.slane %v8039, 2
        %v8041 = vadd.f32 %v8039, %v8040
        %v8042 = vrot.slane %v8041, 1
        %v8043 = vadd.f32 %v8041, %v8042
        %v8044 = vadd.f32 %v7944, %v7946
        %v8045 = vadd.f32 %v8044, %v7948
        %v8046 = vadd.f32 %v8045, %v7950
        %v8047 = vadd.f32 %v8046, %v7952
        %v8048 = vadd.f32 %v8047, %v7954
        %v8049 = vadd.f32 %v8048, %v7956
        %v8050 = vadd.f32 %v8049, %v7958
        %v8051 = vadd.f32 %v8050, %v7960
        %v8052 = vadd.f32 %v8051, %v7962
        %v8053 = vadd.f32 %v8052, %v7964
        %v8054 = vadd.f32 %v8053, %v7966
        %v8055 = vadd.f32 %v8054, %v7968
        %v8056 = vadd.f32 %v8055, %v7970
        %v8057 = vadd.f32 %v8056, %v7972
        %v8058 = vadd.f32 %v8057, %v7974
        %v8059 = vadd.f32 %v8058, %v7976
        %v8060 = vadd.f32 %v8059, %v7978
        %v8061 = vadd.f32 %v8060, %v7980
        %v8062 = vadd.f32 %v8061, %v7982
        %v8063 = vadd.f32 %v8062, %v7984
        %v8064 = vadd.f32 %v8063, %v7986
        %v8065 = vadd.f32 %v8064, %v7988
        %v8066 = vadd.f32 %v8065, %v7990
        %v8067 = vadd.f32 %v8066, %v7992
        %v8068 = vadd.f32 %v8067, %v7994
        %v8069 = vadd.f32 %v8068, %v7996
        %v8070 = vadd.f32 %v8069, %v7998
        %v8071 = vadd.f32 %v8070, %v8000
        %v8072 = vadd.f32 %v8071, %v8002
        %v8073 = vadd.f32 %v8072, %v8004
        %v8074 = vadd.f32 %v8073, %v8006
        %v8075 = vrot.slane %v8074, 4
        %v8076 = vadd.f32 %v8074, %v8075
        %v8077 = vrot.slane %v8076, 2
        %v8078 = vadd.f32 %v8076, %v8077
        %v8079 = vrot.slane %v8078, 1
        %v8080 = vadd.f32 %v8078, %v8079
        %v8083 = vrot.slane %v4360, 7
        %vm8084 = vcmask 1040384
        %v8085 = vsel %vm8084, %v4323, %v8083
        %v8089 = vrot.slane %v5600, 7
        %v8090 = vsel %vm8084, %v5563, %v8089
        %v8091 = vrot.slane %v8090, 6
        %v8095 = vrot.slane %v6840, 7
        %v8096 = vsel %vm8084, %v6803, %v8095
        %v8097 = vrot.slane %v8096, 4
        %v8101 = vrot.slane %v8080, 7
        %v8102 = vsel %vm8084, %v8043, %v8101
        %v8103 = vrot.slane %v8102, 2
        %v8105 = vlaneseq
        %vm8106 = vcmp.ge.s32.totalorder %v8105, 0
        %vm8107 = vcmp.lt.s32.totalorder %v8105, 256
        %vm8108 = vmand %vm8106, %vm8107
        %v8109 = vsel %vm8108, %v8085, %v8091
        %vm8110 = vcmp.lt.s32.totalorder %v8105, 512
        %vm8111 = vmand %vm8106, %vm8110
        %v8112 = vsel %vm8111, %v8109, %v8097
        %vm8113 = vcmp.lt.s32.totalorder %v8105, 768
        %vm8114 = vmand %vm8106, %vm8113
        %v8115 = vsel %vm8114, %v8112, %v8103
        %8116 = vst [vmem:[%s429] sm:$0xff] %v8115
        %s8117 = sand.u32 %s244, 1
        %s8118 = scalar_lea.sflag [#allocation4], %s8117
        %s8119 = sand.u32 %s244, 1
        %s8120 = smul.addr %s8119, 8
        %s8121 = scalar_lea.vmem [#allocation11], %s8120
        // Predicated region
        $region77: #{tpu_custom_call.1} parent=55 // pred_check
          %p8122 = pneg %p254
        $region78: #{tpu_custom_call.1} parent=55 // pred_check_branch
          %8124 = sbr.rel (%p8122) target = $region80
        $region79: #{tpu_custom_call.1} parent=55 // pred_region
          %8126 = vsyncadd %s8118, 0
          %s8127 = smul.addr %s31, 8
          %s8128 = smul.addr %s30, 8
          %s8129 = sadd.s32 %s8127, %s8128
          %s8130 = scalar_lea.hbm %s9, %s8129
          %s8132 = sshll.u32 %s8121, 4
          %s8133 = int_to_ptr.vmem [resolvable:$true] %s8132
          %s8134 = sshll.u32 %s8130, 4
          %s8135 = int_to_ptr.hbm [resolvable:$true] %s8134
          %8137 = dma.vmem_to_hbm [thread:$0]  %s8133, 128, %s8135, %s8118
        $region80: #{tpu_custom_call.1} parent=55 // pred_fallthru
          _
      $region56: #{tpu_custom_call.1} parent=5 // pred_fallthru
        _
      %p8138 = scmp.le.s32.totalorder 2, %s21
      // Predicated region
      $region81: #{tpu_custom_call.1} parent=5 // pred_check
        %p8139 = pneg %p8138
      $region82: #{tpu_custom_call.1} parent=5 // pred_check_branch
        %8141 = sbr.rel (%p8139) target = $region84
      $region83: #{tpu_custom_call.1} parent=5 // pred_region
        %s8142 = ssub.s32 %s21, 2
        // Predicated region
        $region85: #{tpu_custom_call.1} parent=83 // pred_check
          %p8143 = pneg %p260
        $region86: #{tpu_custom_call.1} parent=83 // pred_check_branch
          %8145 = sbr.rel (%p8143) target = $region88
        $region87: #{tpu_custom_call.1} parent=83 // pred_region
          %s8146 = sand.u32 %s245, 1
          %s8147 = scalar_lea.sflag [#allocation4], %s8146
          %s8148 = sand.u32 %s245, 1
          %s8149 = smul.addr %s8148, 8
          %s8150 = scalar_lea.vmem [#allocation11], %s8149
          %8152 = dma.done %s8147, 128
        $region88: #{tpu_custom_call.1} parent=83 // pred_fallthru
          _
      $region84: #{tpu_custom_call.1} parent=5 // pred_fallthru
        _
    $region6: #{tpu_custom_call.1} parent=1 // loop_footer
      %s25 = sadd.s32 1, %s21
    $region7: #{tpu_custom_call.1} parent=1 // loop_footer_branch
      %20 = sbr.rel target = $region3
    $region8: #{tpu_custom_call.1} parent=1 // loop_exit
      _
    %8153 = vsyncpa [#allocation3], 1
    %s8154 = scalar_lea.sflag [#allocation3], 1
    %8155 = vsyncpa %s8154, 1
    %8156 = vsyncpa [#allocation6], 1
    %8157 = vsyncpa [#allocation9], 1
    %8158 = vsyncpa [#allocation4], 1
    %s8159 = scalar_lea.sflag [#allocation4], 1
    %8160 = vsyncpa %s8159, 1

</llo_original>
